<compile_context>
chip_gen: v6e
topology: v6e:2x2x1
jax: 0.10.0
libtpu: 0.0.40
codegen_flags: <defaults>
</compile_context>

<pallas_src>
import functools

import numpy as np
import jax
import jax.numpy as jnp
from jax import lax
from jax.experimental import pallas as pl
from jax.experimental.pallas import tpu as pltpu


_C1 = 0.01 ** 2
_C2 = 0.03 ** 2
_EPS = 1e-12   # kornia ssim adds eps=1e-12 to the denominator by default


# ---------------------------------------------------------------------------
# Kernel 1: per-image local histogram (hard binning + block average pooling)
# ---------------------------------------------------------------------------
def _local_hist_kernel(x_ref, srb_ref, scb_ref, o_ref, *, n_bins, m_tile):
    H, W = x_ref.shape[1], x_ref.shape[2]
    # images stacked along sublanes (pure layout reshape: last dim W stays the lane dim)
    x = x_ref[...].reshape(m_tile * H, W)
    # bin index computed once; each bin mask is a single equality compare
    b = jnp.clip(jnp.floor(x * n_bins), 0.0, n_bins - 1.0)
    # n_bins one-hot masks stacked along lanes (every piece is W=128-lane aligned)
    mask = jnp.concatenate(
        [(b == float(k)).astype(srb_ref.dtype) for k in range(n_bins)], axis=1)
    # batched row pool: ONE MXU op for the whole tile (MXU rows = m_tile*hd, not 8)
    rowp = jnp.dot(srb_ref[...], mask, preferred_element_type=jnp.float32)
    # batched column pool: ONE MXU op; bf16 exact here (values are multiples of 1/downscale)
    o_ref[...] = jnp.dot(rowp.astype(scb_ref.dtype), scb_ref[...],
                         preferred_element_type=jnp.float32)


def local_hist(images, n_bins, downscale):
    """images: (M, H, W) in [0,1] -> (M, n_bins, H//downscale, W//downscale) bin fractions."""
    M, H, W = images.shape
    hd, wd = H // downscale, W // downscale

    pow2 = (downscale & (downscale - 1)) == 0
    wdtype = jnp.bfloat16 if pow2 else jnp.float32   # bf16 only when bit-exact

    # --- tile size: as few grid steps as the VMEM budget allows, rounded to an even count ---
    per_img = (2 * H * W * 4            # double-buffered f32 input block
               + H * n_bins * W * 2     # bf16 one-hot mask
               + hd * n_bins * W * 4)   # f32 row-pooled tile
    budget = 20 * 1024 * 1024
    cap = max(1, budget // per_img)
    # keep the kron'd row-pool weight (quadratic in m_tile) under ~4 MiB as well
    cap = min(cap, max(1, int((4 * 1024 * 1024 / (hd * H * 2)) ** 0.5)))
    if M <= 1:
        steps = 1
    else:
        steps = max(2, -(-M // cap))
        steps += steps % 2              # even grid length -> v7x two-core balance
    m_tile = -(-M // steps)
    m_pad = m_tile * steps
    if m_pad != M:
        images = jnp.concatenate(
            [images, jnp.zeros((m_pad - M, H, W), images.dtype)], axis=0)

    inv = 1.0 / np.float64(downscale)
    sr = np.kron(np.eye(hd, dtype=np.float64), np.full((1, downscale), inv))    # (hd, H)
    srb = np.kron(np.eye(m_tile, dtype=np.float64), sr)        # (m_tile*hd, m_tile*H)
    sc = np.kron(np.eye(wd, dtype=np.float64), np.full((downscale, 1), inv))    # (W, wd)
    scb = np.kron(np.eye(n_bins, dtype=np.float64), sc)        # (n_bins*W, n_bins*wd)

    cparams = {"dimension_semantics": ("parallel",)}
    live_est = per_img * m_tile + 2 * srb.size * 2 + 2 * scb.size * 2
    if live_est > 12 * 1024 * 1024:     # only override the scoped-VMEM default when needed
        cparams["vmem_limit_bytes"] = min(int(live_est * 2), 100 * 1024 * 1024)

    out = pl.pallas_call(
        functools.partial(_local_hist_kernel, n_bins=n_bins, m_tile=m_tile),
        out_shape=jax.ShapeDtypeStruct((m_pad * hd, n_bins * wd), jnp.float32),
        grid=(steps,),
        in_specs=[
            pl.BlockSpec((m_tile, H, W), lambda i: (i, 0, 0)),
            pl.BlockSpec((m_tile * hd, m_tile * H), lambda i: (0, 0)),
            pl.BlockSpec((n_bins * W, n_bins * wd), lambda i: (0, 0)),
        ],
        out_specs=pl.BlockSpec((m_tile * hd, n_bins * wd), lambda i: (i, 0)),
        compiler_params=pltpu.CompilerParams(**cparams),
    )(images, jnp.asarray(srb, wdtype), jnp.asarray(scb, wdtype))

    # out[m*hd + i, k*wd + j] = hist[m, k, i, j]
    out = out.reshape(m_pad, hd, n_bins, wd).transpose(0, 2, 1, 3)
    return out[:M]


# ---------------------------------------------------------------------------
# Kernel 2: masked SSIM loss for one exposure pair (grid of 2: over / under)
# ---------------------------------------------------------------------------
def _ssim_pair_kernel(gt_ref, oth_ref, msk_ref, gr_ref, o_ref,
                      *, g_taps, wd, wp_pad, n_valid):
    gt = gt_ref[...]        # (hp, G)   G = n_maps*wp_pad, maps along lanes
    oth = oth_ref[0]        # (hp, G)   darken hist (over pair) / brighten hist (under pair)
    m = msk_ref[0]          # (hp, G)   exposure mask, already broadcast over bins on host
    gr = gr_ref[...]        # (hd, hp)  row Gaussian filter ('same' reflect as 'valid' on pad)

    a = gt * m
    b = oth * m
    # all 5 filter inputs concatenated along lanes -> one lane-dense matmul for the row filter
    planes = jnp.concatenate([a, b, a * a, b * b, a * b], axis=1)        # (hp, 5G)
    rowf = jnp.dot(gr, planes, preferred_element_type=jnp.float32)       # (hd, 5G)  keep f32

    # 5-tap column filter along lanes: rolls (XLU) + scaled adds; valid lanes never wrap.
    L = rowf.shape[1]
    colf = g_taps[0] * rowf
    for t in range(1, len(g_taps)):
        colf = colf + g_taps[t] * pltpu.roll(rowf, shift=L - t, axis=1)

    G = gt.shape[1]
    mu1, mu2 = colf[:, 0:G], colf[:, G:2 * G]
    faa, fbb, fab = colf[:, 2 * G:3 * G], colf[:, 3 * G:4 * G], colf[:, 4 * G:5 * G]

    mu1_sq = mu1 * mu1
    mu2_sq = mu2 * mu2
    mu12 = mu1 * mu2
    s1 = faa - mu1_sq
    s2 = fbb - mu2_sq
    s12 = fab - mu12
    num = (2.0 * mu12 + _C1) * (2.0 * s12 + _C2)
    den = (mu1_sq + mu2_sq + _C1) * (s1 + s2 + _C2) + _EPS

    # per-lane validity (first wd lanes of every wp_pad-wide map block), generated in-kernel
    lane = lax.broadcasted_iota(jnp.int32, num.shape, 1)
    valid = (lane % wp_pad) < wd
    den = jnp.where(valid, den, 1.0)          # keep junk pad lanes finite (masked out below)
    loss_map = jnp.clip((1.0 - num / den) * 0.5, 0.0, 1.0)

    pair_loss = jnp.sum(jnp.where(valid, loss_map, 0.0)) * (1.0 / n_valid)
    o_ref[...] = jnp.full(o_ref.shape, pair_loss, dtype=jnp.float32)


def _gaussian_1d(window_size, sigma):
    x = np.arange(window_size, dtype=np.float64) - (window_size - 1) / 2.0
    g = np.exp(-(x ** 2) / (2.0 * sigma ** 2))
    return (g / g.sum()).astype(np.float32)


# ---------------------------------------------------------------------------
# Module forward
# ---------------------------------------------------------------------------
def intermediate_histogram_loss(img, gt, brighten, darken, *,
                                n_bins=8, downscale=16, window_size=5, sigma=1.5,
                                exposure_threshold=0.5):
    bs, c, H, W = gt.shape
    hd, wd = H // downscale, W // downscale
    pad = window_size // 2
    hp, wp = hd + 2 * pad, wd + 2 * pad
    wp_pad = -(-wp // 8) * 8          # pad each map's lane block (12 -> 16)
    n_bc = bs * c
    n_maps = n_bc * n_bins
    G = n_maps * wp_pad

    # ---- kernel 1: per-bin local histograms for gt / darken / brighten (one batched call) ----
    stacked = jnp.concatenate([gt, darken, brighten], axis=0).reshape(3 * n_bc, H, W)
    hists = local_hist(stacked, n_bins, downscale)            # (3*n_bc, n_bins, hd, wd)
    gt_h, dk_h, br_h = hists[:n_bc], hists[n_bc:2 * n_bc], hists[2 * n_bc:]

    # ---- host-side layout: maps along lanes (map order = (b, c, bin)), reflect 'same' pad ----
    def pad_layout(maps):                                     # (n, hd, wd) -> (hp, n*wp_pad)
        n = maps.shape[0]
        x = jnp.pad(maps, ((0, 0), (pad, pad), (pad, pad)), mode="reflect")
        x = jnp.pad(x, ((0, 0), (0, 0), (0, wp_pad - wp)))
        return x.transpose(1, 0, 2).reshape(hp, n * wp_pad)

    def hist_layout(h):                                       # (n_bc, n_bins, hd, wd)
        return pad_layout(h.reshape(n_maps, hd, wd))

    gt_l = hist_layout(gt_h)                                              # (hp, G)
    oth = jnp.stack([hist_layout(dk_h), hist_layout(br_h)], axis=0)       # (2, hp, G)

    # F.interpolate(img, size=down_size) with default 'nearest' == strided subsample
    down_x = img[:, :, ::downscale, ::downscale].reshape(n_bc, hd, wd)
    ov = (down_x > exposure_threshold).astype(jnp.float32)
    un = 1.0 - ov

    # exposure masks pre-broadcast over the bin axis on the host (same map ordering as hists)
    def mask_layout(mk):                                      # (n_bc, hd, wd) -> (hp, G)
        mm = jnp.broadcast_to(mk[:, None], (n_bc, n_bins, hd, wd)).reshape(n_maps, hd, wd)
        return pad_layout(mm)

    msk = jnp.stack([mask_layout(ov), mask_layout(un)], axis=0)           # (2, hp, G)

    # separable 5-tap Gaussian: row filter as matmul operand, column filter as taps
    g1 = _gaussian_1d(window_size, sigma)
    gr = np.zeros((hd, hp), np.float32)
    for i in range(hd):
        gr[i, i:i + window_size] = g1

    pair = pl.pallas_call(
        functools.partial(_ssim_pair_kernel,
                          g_taps=tuple(float(v) for v in g1),
                          wd=wd, wp_pad=wp_pad,
                          n_valid=float(n_maps * hd * wd)),
        out_shape=jax.ShapeDtypeStruct((2, 8, 128), jnp.float32),
        grid=(2,),
        in_specs=[
            pl.BlockSpec((hp, G), lambda i: (0, 0)),
            pl.BlockSpec((1, hp, G), lambda i: (i, 0, 0)),
            pl.BlockSpec((1, hp, G), lambda i: (i, 0, 0)),
            pl.BlockSpec((hd, hp), lambda i: (0, 0)),
        ],
        out_specs=pl.BlockSpec((1, 8, 128), lambda i: (i, 0, 0)),
        compiler_params=pltpu.CompilerParams(dimension_semantics=("parallel",)),
    )(gt_l, oth, msk, jnp.asarray(gr))

    return 0.5 * (pair[0, 0, 0] + pair[1, 0, 0])


if __name__ == "__main__":
    key = jax.random.PRNGKey(0)
    bs, c, H, W = 2, 3, 128, 128          # downscale=16 -> 8x8 histogram maps
    k1, k2 = jax.random.split(key, 2)
    img = jax.random.uniform(k1, (bs, c, H, W), dtype=jnp.float32)
    gt = jax.random.uniform(k2, (bs, c, H, W), dtype=jnp.float32)
    brighten = jnp.clip(img * 1.4 + 0.05, 0.0, 1.0)
    darken = jnp.clip(img * 0.6, 0.0, 1.0)

    @jax.jit
    def loss_fn(img, gt, brighten, darken):
        return intermediate_histogram_loss(img, gt, brighten, darken,
                                           n_bins=8, downscale=16)

    loss = loss_fn(img, gt, brighten, darken)
    jax.block_until_ready(loss)
    assert loss.shape == () and bool(jnp.isfinite(loss))
    print("KERNEL_OK")
</pallas_src>

<mosaic_0001>
module attributes {stable_mosaic.version = 11 : i64} {
  func.func @_local_hist_kernel(%arg0: i32, %arg1: memref<9x128x128xf32, #tpu.memory_space<vmem>>, %arg2: memref<72x1152xbf16, #tpu.memory_space<vmem>>, %arg3: memref<1024x64xbf16, #tpu.memory_space<vmem>>, %arg4: memref<72x64xf32, #tpu.memory_space<vmem>>) attributes {dimension_semantics = [#tpu.dimension_semantics<parallel>], iteration_bounds = array<i64: 2>, scalar_prefetch = 0 : i64, scratch_operands = 0 : i64, tpu.core_type = #tpu.core_type<tc>, window_params = [{transform_indices = @transform_0, window_bounds = array<i64: 9, 128, 128>}, {pipeline_mode = #tpu.pipeline_mode<synchronous>, transform_indices = @transform_1, window_bounds = array<i64: 72, 1152>}, {pipeline_mode = #tpu.pipeline_mode<synchronous>, transform_indices = @transform_2, window_bounds = array<i64: 1024, 64>}, {transform_indices = @transform_3, window_bounds = array<i64: 72, 64>}]} {
    %c0 = arith.constant 0 : index
    %c0_0 = arith.constant 0 : index
    %c0_1 = arith.constant 0 : index
    %0 = vector.load %arg1[%c0, %c0_0, %c0_1] : memref<9x128x128xf32, #tpu.memory_space<vmem>>, vector<9x128x128xf32>
    %1 = vector.shape_cast %0 : vector<9x128x128xf32> to vector<1152x128xf32>
    %cst = arith.constant 8.000000e+00 : f32
    %2 = vector.broadcast %cst : f32 to vector<1152x128xf32>
    %3 = arith.mulf %1, %2 : vector<1152x128xf32>
    %4 = math.floor %3 : vector<1152x128xf32>
    %cst_2 = arith.constant 0.000000e+00 : f32
    %cst_3 = arith.constant 7.000000e+00 : f32
    %5 = vector.broadcast %cst_2 : f32 to vector<1152x128xf32>
    %6 = arith.maximumf %5, %4 : vector<1152x128xf32>
    %7 = vector.broadcast %cst_3 : f32 to vector<1152x128xf32>
    %8 = arith.minimumf %7, %6 : vector<1152x128xf32>
    %cst_4 = arith.constant 0.000000e+00 : f32
    %9 = vector.broadcast %cst_4 : f32 to vector<1152x128xf32>
    %10 = arith.cmpf oeq, %8, %9 : vector<1152x128xf32>
    %11 = arith.extui %10 : vector<1152x128xi1> to vector<1152x128xi32>
    %12 = arith.sitofp %11 : vector<1152x128xi32> to vector<1152x128xf32>
    %13 = arith.truncf %12 : vector<1152x128xf32> to vector<1152x128xbf16>
    %cst_5 = arith.constant 1.000000e+00 : f32
    %14 = vector.broadcast %cst_5 : f32 to vector<1152x128xf32>
    %15 = arith.cmpf oeq, %8, %14 : vector<1152x128xf32>
    %16 = arith.extui %15 : vector<1152x128xi1> to vector<1152x128xi32>
    %17 = arith.sitofp %16 : vector<1152x128xi32> to vector<1152x128xf32>
    %18 = arith.truncf %17 : vector<1152x128xf32> to vector<1152x128xbf16>
    %cst_6 = arith.constant 2.000000e+00 : f32
    %19 = vector.broadcast %cst_6 : f32 to vector<1152x128xf32>
    %20 = arith.cmpf oeq, %8, %19 : vector<1152x128xf32>
    %21 = arith.extui %20 : vector<1152x128xi1> to vector<1152x128xi32>
    %22 = arith.sitofp %21 : vector<1152x128xi32> to vector<1152x128xf32>
    %23 = arith.truncf %22 : vector<1152x128xf32> to vector<1152x128xbf16>
    %cst_7 = arith.constant 3.000000e+00 : f32
    %24 = vector.broadcast %cst_7 : f32 to vector<1152x128xf32>
    %25 = arith.cmpf oeq, %8, %24 : vector<1152x128xf32>
    %26 = arith.extui %25 : vector<1152x128xi1> to vector<1152x128xi32>
    %27 = arith.sitofp %26 : vector<1152x128xi32> to vector<1152x128xf32>
    %28 = arith.truncf %27 : vector<1152x128xf32> to vector<1152x128xbf16>
    %cst_8 = arith.constant 4.000000e+00 : f32
    %29 = vector.broadcast %cst_8 : f32 to vector<1152x128xf32>
    %30 = arith.cmpf oeq, %8, %29 : vector<1152x128xf32>
    %31 = arith.extui %30 : vector<1152x128xi1> to vector<1152x128xi32>
    %32 = arith.sitofp %31 : vector<1152x128xi32> to vector<1152x128xf32>
    %33 = arith.truncf %32 : vector<1152x128xf32> to vector<1152x128xbf16>
    %cst_9 = arith.constant 5.000000e+00 : f32
    %34 = vector.broadcast %cst_9 : f32 to vector<1152x128xf32>
    %35 = arith.cmpf oeq, %8, %34 : vector<1152x128xf32>
    %36 = arith.extui %35 : vector<1152x128xi1> to vector<1152x128xi32>
    %37 = arith.sitofp %36 : vector<1152x128xi32> to vector<1152x128xf32>
    %38 = arith.truncf %37 : vector<1152x128xf32> to vector<1152x128xbf16>
    %cst_10 = arith.constant 6.000000e+00 : f32
    %39 = vector.broadcast %cst_10 : f32 to vector<1152x128xf32>
    %40 = arith.cmpf oeq, %8, %39 : vector<1152x128xf32>
    %41 = arith.extui %40 : vector<1152x128xi1> to vector<1152x128xi32>
    %42 = arith.sitofp %41 : vector<1152x128xi32> to vector<1152x128xf32>
    %43 = arith.truncf %42 : vector<1152x128xf32> to vector<1152x128xbf16>
    %cst_11 = arith.constant 7.000000e+00 : f32
    %44 = vector.broadcast %cst_11 : f32 to vector<1152x128xf32>
    %45 = arith.cmpf oeq, %8, %44 : vector<1152x128xf32>
    %46 = arith.extui %45 : vector<1152x128xi1> to vector<1152x128xi32>
    %47 = arith.sitofp %46 : vector<1152x128xi32> to vector<1152x128xf32>
    %48 = arith.truncf %47 : vector<1152x128xf32> to vector<1152x128xbf16>
    %49 = tpu.concatenate %13, %18, %23, %28, %33, %38, %43, %48 in 1 : vector<1152x128xbf16>, vector<1152x128xbf16>, vector<1152x128xbf16>, vector<1152x128xbf16>, vector<1152x128xbf16>, vector<1152x128xbf16>, vector<1152x128xbf16>, vector<1152x128xbf16> -> vector<1152x1024xbf16>
    %c0_12 = arith.constant 0 : index
    %c0_13 = arith.constant 0 : index
    %50 = vector.load %arg2[%c0_12, %c0_13] : memref<72x1152xbf16, #tpu.memory_space<vmem>>, vector<72x1152xbf16>
    %cst_14 = arith.constant dense<0.000000e+00> : vector<72x1024xf32>
    %51 = tpu.matmul %50, %49, %cst_14 {dimension_numbers = #tpu.dot_dimension_numbers<[1], [0], [0], [1], [0, 0, 1, 1], [], []>} : vector<72x1152xbf16>, vector<1152x1024xbf16>, vector<72x1024xf32> -> vector<72x1024xf32>
    %52 = arith.truncf %51 : vector<72x1024xf32> to vector<72x1024xbf16>
    %c0_15 = arith.constant 0 : index
    %c0_16 = arith.constant 0 : index
    %53 = vector.load %arg3[%c0_15, %c0_16] : memref<1024x64xbf16, #tpu.memory_space<vmem>>, vector<1024x64xbf16>
    %cst_17 = arith.constant dense<0.000000e+00> : vector<72x64xf32>
    %54 = tpu.matmul %52, %53, %cst_17 {dimension_numbers = #tpu.dot_dimension_numbers<[1], [0], [0], [1], [0, 0, 1, 1], [], []>} : vector<72x1024xbf16>, vector<1024x64xbf16>, vector<72x64xf32> -> vector<72x64xf32>
    %c0_18 = arith.constant 0 : index
    %c0_19 = arith.constant 0 : index
    %55 = vector.load %arg4[%c0_18, %c0_19] : memref<72x64xf32, #tpu.memory_space<vmem>>, vector<72x64xf32>
    tpu.vector_store %arg4[%c0_18, %c0_19], %54 {strides = array<i32>} : memref<72x64xf32, #tpu.memory_space<vmem>>, vector<72x64xf32>,
    return
  }
  func.func @transform_0(%arg0: i32) -> (i32, i32, i32) {
    %c0_i32 = arith.constant 0 : i32
    %c0_i32_0 = arith.constant 0 : i32
    %c0_i32_1 = arith.constant 0 : i32
    return %arg0, %c0_i32, %c0_i32_0 : i32, i32, i32
  }
  func.func @transform_1(%arg0: i32) -> (i32, i32) {
    %c0_i32 = arith.constant 0 : i32
    %c0_i32_0 = arith.constant 0 : i32
    %c0_i32_1 = arith.constant 0 : i32
    return %c0_i32, %c0_i32_0 : i32, i32
  }
  func.func @transform_2(%arg0: i32) -> (i32, i32) {
    %c0_i32 = arith.constant 0 : i32
    %c0_i32_0 = arith.constant 0 : i32
    %c0_i32_1 = arith.constant 0 : i32
    return %c0_i32, %c0_i32_0 : i32, i32
  }
  func.func @transform_3(%arg0: i32) -> (i32, i32) {
    %c0_i32 = arith.constant 0 : i32
    %c0_i32_0 = arith.constant 0 : i32
    return %arg0, %c0_i32 : i32, i32
  }
}

module attributes {stable_mosaic.version = 11 : i64} {
  func.func @_ssim_pair_kernel(%arg0: i32, %arg1: memref<12x768xf32, #tpu.memory_space<vmem>>, %arg2: memref<1x12x768xf32, #tpu.memory_space<vmem>>, %arg3: memref<1x12x768xf32, #tpu.memory_space<vmem>>, %arg4: memref<8x12xf32, #tpu.memory_space<vmem>>, %arg5: memref<1x8x128xf32, #tpu.memory_space<vmem>>) attributes {dimension_semantics = [#tpu.dimension_semantics<parallel>], iteration_bounds = array<i64: 2>, scalar_prefetch = 0 : i64, scratch_operands = 0 : i64, tpu.core_type = #tpu.core_type<tc>, window_params = [{pipeline_mode = #tpu.pipeline_mode<synchronous>, transform_indices = @transform_0, window_bounds = array<i64: 12, 768>}, {transform_indices = @transform_1, window_bounds = array<i64: 1, 12, 768>}, {transform_indices = @transform_2, window_bounds = array<i64: 1, 12, 768>}, {pipeline_mode = #tpu.pipeline_mode<synchronous>, transform_indices = @transform_3, window_bounds = array<i64: 8, 12>}, {transform_indices = @transform_4, window_bounds = array<i64: 1, 8, 128>}]} {
    %c0 = arith.constant 0 : index
    %c0_0 = arith.constant 0 : index
    %0 = vector.load %arg1[%c0, %c0_0] : memref<12x768xf32, #tpu.memory_space<vmem>>, vector<12x768xf32>
    %c0_1 = arith.constant 0 : index
    %c0_2 = arith.constant 0 : index
    %c0_3 = arith.constant 0 : index
    %1 = vector.load %arg2[%c0_1, %c0_2, %c0_3] : memref<1x12x768xf32, #tpu.memory_space<vmem>>, vector<1x12x768xf32>
    %2 = vector.shape_cast %1 : vector<1x12x768xf32> to vector<12x768xf32>
    %c0_4 = arith.constant 0 : index
    %c0_5 = arith.constant 0 : index
    %c0_6 = arith.constant 0 : index
    %3 = vector.load %arg3[%c0_4, %c0_5, %c0_6] : memref<1x12x768xf32, #tpu.memory_space<vmem>>, vector<1x12x768xf32>
    %4 = vector.shape_cast %3 : vector<1x12x768xf32> to vector<12x768xf32>
    %c0_7 = arith.constant 0 : index
    %c0_8 = arith.constant 0 : index
    %5 = vector.load %arg4[%c0_7, %c0_8] : memref<8x12xf32, #tpu.memory_space<vmem>>, vector<8x12xf32>
    %6 = arith.mulf %0, %4 : vector<12x768xf32>
    %7 = arith.mulf %2, %4 : vector<12x768xf32>
    %8 = arith.mulf %6, %6 : vector<12x768xf32>
    %9 = arith.mulf %7, %7 : vector<12x768xf32>
    %10 = arith.mulf %6, %7 : vector<12x768xf32>
    %11 = tpu.concatenate %6, %7, %8, %9, %10 in 1 : vector<12x768xf32>, vector<12x768xf32>, vector<12x768xf32>, vector<12x768xf32>, vector<12x768xf32> -> vector<12x3840xf32>
    %cst = arith.constant dense<0.000000e+00> : vector<8x3840xf32>
    %12 = tpu.matmul %5, %11, %cst {dimension_numbers = #tpu.dot_dimension_numbers<[1], [0], [0], [1], [0, 0, 1, 1], [], []>} : vector<8x12xf32>, vector<12x3840xf32>, vector<8x3840xf32> -> vector<8x3840xf32>
    %cst_9 = arith.constant 0.120078385 : f32
    %13 = vector.broadcast %cst_9 : f32 to vector<8x3840xf32>
    %14 = arith.mulf %13, %12 : vector<8x3840xf32>
    %c3839_i32 = arith.constant 3839 : i32
    %15 = tpu.dynamic_rotate %12 by %c3839_i32 dim 1 : vector<8x3840xf32>, i32 -> vector<8x3840xf32>
    %cst_10 = arith.constant 0.233880758 : f32
    %16 = vector.broadcast %cst_10 : f32 to vector<8x3840xf32>
    %17 = arith.mulf %16, %15 : vector<8x3840xf32>
    %18 = arith.addf %14, %17 : vector<8x3840xf32>
    %c3838_i32 = arith.constant 3838 : i32
    %19 = tpu.dynamic_rotate %12 by %c3838_i32 dim 1 : vector<8x3840xf32>, i32 -> vector<8x3840xf32>
    %cst_11 = arith.constant 0.292081714 : f32
    %20 = vector.broadcast %cst_11 : f32 to vector<8x3840xf32>
    %21 = arith.mulf %20, %19 : vector<8x3840xf32>
    %22 = arith.addf %18, %21 : vector<8x3840xf32>
    %c3837_i32 = arith.constant 3837 : i32
    %23 = tpu.dynamic_rotate %12 by %c3837_i32 dim 1 : vector<8x3840xf32>, i32 -> vector<8x3840xf32>
    %cst_12 = arith.constant 0.233880758 : f32
    %24 = vector.broadcast %cst_12 : f32 to vector<8x3840xf32>
    %25 = arith.mulf %24, %23 : vector<8x3840xf32>
    %26 = arith.addf %22, %25 : vector<8x3840xf32>
    %c3836_i32 = arith.constant 3836 : i32
    %27 = tpu.dynamic_rotate %12 by %c3836_i32 dim 1 : vector<8x3840xf32>, i32 -> vector<8x3840xf32>
    %cst_13 = arith.constant 0.120078385 : f32
    %28 = vector.broadcast %cst_13 : f32 to vector<8x3840xf32>
    %29 = arith.mulf %28, %27 : vector<8x3840xf32>
    %30 = arith.addf %26, %29 : vector<8x3840xf32>
    %31 = vector.extract_strided_slice %30 {offsets = [0, 0], sizes = [8, 768], strides = [1, 1]} : vector<8x3840xf32> to vector<8x768xf32>
    %32 = vector.extract_strided_slice %30 {offsets = [0, 768], sizes = [8, 768], strides = [1, 1]} : vector<8x3840xf32> to vector<8x768xf32>
    %33 = vector.extract_strided_slice %30 {offsets = [0, 1536], sizes = [8, 768], strides = [1, 1]} : vector<8x3840xf32> to vector<8x768xf32>
    %34 = vector.extract_strided_slice %30 {offsets = [0, 2304], sizes = [8, 768], strides = [1, 1]} : vector<8x3840xf32> to vector<8x768xf32>
    %35 = vector.extract_strided_slice %30 {offsets = [0, 3072], sizes = [8, 768], strides = [1, 1]} : vector<8x3840xf32> to vector<8x768xf32>
    %36 = arith.mulf %31, %31 : vector<8x768xf32>
    %37 = arith.mulf %32, %32 : vector<8x768xf32>
    %38 = arith.mulf %31, %32 : vector<8x768xf32>
    %39 = arith.subf %33, %36 : vector<8x768xf32>
    %40 = arith.subf %34, %37 : vector<8x768xf32>
    %41 = arith.subf %35, %38 : vector<8x768xf32>
    %cst_14 = arith.constant 2.000000e+00 : f32
    %42 = vector.broadcast %cst_14 : f32 to vector<8x768xf32>
    %43 = arith.mulf %42, %38 : vector<8x768xf32>
    %cst_15 = arith.constant 9.99999974E-5 : f32
    %44 = vector.broadcast %cst_15 : f32 to vector<8x768xf32>
    %45 = arith.addf %43, %44 : vector<8x768xf32>
    %cst_16 = arith.constant 2.000000e+00 : f32
    %46 = vector.broadcast %cst_16 : f32 to vector<8x768xf32>
    %47 = arith.mulf %46, %41 : vector<8x768xf32>
    %cst_17 = arith.constant 8.99999984E-4 : f32
    %48 = vector.broadcast %cst_17 : f32 to vector<8x768xf32>
    %49 = arith.addf %47, %48 : vector<8x768xf32>
    %50 = arith.mulf %45, %49 : vector<8x768xf32>
    %51 = arith.addf %36, %37 : vector<8x768xf32>
    %cst_18 = arith.constant 9.99999974E-5 : f32
    %52 = vector.broadcast %cst_18 : f32 to vector<8x768xf32>
    %53 = arith.addf %51, %52 : vector<8x768xf32>
    %54 = arith.addf %39, %40 : vector<8x768xf32>
    %cst_19 = arith.constant 8.99999984E-4 : f32
    %55 = vector.broadcast %cst_19 : f32 to vector<8x768xf32>
    %56 = arith.addf %54, %55 : vector<8x768xf32>
    %57 = arith.mulf %53, %56 : vector<8x768xf32>
    %cst_20 = arith.constant 9.99999996E-13 : f32
    %58 = vector.broadcast %cst_20 : f32 to vector<8x768xf32>
    %59 = arith.addf %57, %58 : vector<8x768xf32>
    %60 = tpu.iota {dimensions = array<i32: 1>} : vector<8x768xi32>
    %c16_i32 = arith.constant 16 : i32
    %c0_i32 = arith.constant 0 : i32
    %61 = arith.cmpi eq, %c16_i32, %c0_i32 : i32
    %c1_i32 = arith.constant 1 : i32
    %62 = arith.select %61, %c1_i32, %c16_i32 : i32
    %63 = vector.broadcast %62 : i32 to vector<8x768xi32>
    %64 = arith.remsi %60, %63 : vector<8x768xi32>
    %c0_i32_21 = arith.constant 0 : i32
    %65 = vector.broadcast %c0_i32_21 : i32 to vector<8x768xi32>
    %66 = arith.cmpi ne, %64, %65 : vector<8x768xi32>
    %c0_i32_22 = arith.constant 0 : i32
    %67 = vector.broadcast %c0_i32_22 : i32 to vector<8x768xi32>
    %68 = arith.cmpi slt, %64, %67 : vector<8x768xi32>
    %c0_i32_23 = arith.constant 0 : i32
    %69 = arith.cmpi slt, %62, %c0_i32_23 : i32
    %70 = vector.broadcast %69 : i1 to vector<8x768xi1>
    %71 = vector.broadcast %70 : vector<8x768xi1> to vector<8x768xi1>
    %72 = arith.xori %68, %71 : vector<8x768xi1>
    %73 = arith.andi %72, %66 : vector<8x768xi1>
    %74 = vector.broadcast %62 : i32 to vector<8x768xi32>
    %75 = arith.addi %64, %74 : vector<8x768xi32>
    %76 = arith.select %73, %75, %64 : vector<8x768xi1>, vector<8x768xi32>
    %c8_i32 = arith.constant 8 : i32
    %77 = vector.broadcast %c8_i32 : i32 to vector<8x768xi32>
    %78 = arith.cmpi slt, %76, %77 : vector<8x768xi32>
    %cst_24 = arith.constant 1.000000e+00 : f32
    %79 = vector.broadcast %cst_24 : f32 to vector<8x768xf32>
    %80 = arith.select %78, %59, %79 : vector<8x768xi1>, vector<8x768xf32>
    %81 = arith.divf %50, %80 : vector<8x768xf32>
    %cst_25 = arith.constant 1.000000e+00 : f32
    %82 = vector.broadcast %cst_25 : f32 to vector<8x768xf32>
    %83 = arith.subf %82, %81 : vector<8x768xf32>
    %cst_26 = arith.constant 5.000000e-01 : f32
    %84 = vector.broadcast %cst_26 : f32 to vector<8x768xf32>
    %85 = arith.mulf %83, %84 : vector<8x768xf32>
    %cst_27 = arith.constant 0.000000e+00 : f32
    %cst_28 = arith.constant 1.000000e+00 : f32
    %86 = vector.broadcast %cst_27 : f32 to vector<8x768xf32>
    %87 = arith.maximumf %86, %85 : vector<8x768xf32>
    %88 = vector.broadcast %cst_28 : f32 to vector<8x768xf32>
    %89 = arith.minimumf %88, %87 : vector<8x768xf32>
    %cst_29 = arith.constant 0.000000e+00 : f32
    %90 = vector.broadcast %cst_29 : f32 to vector<8x768xf32>
    %91 = arith.select %78, %89, %90 : vector<8x768xi1>, vector<8x768xf32>
    %92 = vector.shape_cast %91 : vector<8x768xf32> to vector<1x8x768xf32>
    %cst_30 = arith.constant dense<0.000000e+00> : vector<1xf32>
    %93 = vector.multi_reduction <add>, %92, %cst_30 [1, 2] : vector<1x8x768xf32> to vector<1xf32>
    %94 = vector.shape_cast %93 : vector<1xf32> to vector<1x1x1xf32>
    %95 = vector.extract %94[0, 0, 0] : f32 from vector<1x1x1xf32>
    %cst_31 = arith.constant 3.25520843E-4 : f32
    %96 = arith.mulf %95, %cst_31 : f32
    %97 = vector.broadcast %96 : f32 to vector<1x8x128xf32>
    %c0_32 = arith.constant 0 : index
    %c0_33 = arith.constant 0 : index
    %c0_34 = arith.constant 0 : index
    %98 = vector.load %arg5[%c0_32, %c0_33, %c0_34] : memref<1x8x128xf32, #tpu.memory_space<vmem>>, vector<1x8x128xf32>
    tpu.vector_store %arg5[%c0_32, %c0_33, %c0_34], %97 {strides = array<i32>} : memref<1x8x128xf32, #tpu.memory_space<vmem>>, vector<1x8x128xf32>,
    return
  }
  func.func @transform_0(%arg0: i32) -> (i32, i32) {
    %c0_i32 = arith.constant 0 : i32
    %c0_i32_0 = arith.constant 0 : i32
    %c0_i32_1 = arith.constant 0 : i32
    return %c0_i32, %c0_i32_0 : i32, i32
  }
  func.func @transform_1(%arg0: i32) -> (i32, i32, i32) {
    %c0_i32 = arith.constant 0 : i32
    %c0_i32_0 = arith.constant 0 : i32
    %c0_i32_1 = arith.constant 0 : i32
    return %arg0, %c0_i32, %c0_i32_0 : i32, i32, i32
  }
  func.func @transform_2(%arg0: i32) -> (i32, i32, i32) {
    %c0_i32 = arith.constant 0 : i32
    %c0_i32_0 = arith.constant 0 : i32
    %c0_i32_1 = arith.constant 0 : i32
    return %arg0, %c0_i32, %c0_i32_0 : i32, i32, i32
  }
  func.func @transform_3(%arg0: i32) -> (i32, i32) {
    %c0_i32 = arith.constant 0 : i32
    %c0_i32_0 = arith.constant 0 : i32
    %c0_i32_1 = arith.constant 0 : i32
    return %c0_i32, %c0_i32_0 : i32, i32
  }
  func.func @transform_4(%arg0: i32) -> (i32, i32, i32) {
    %c0_i32 = arith.constant 0 : i32
    %c0_i32_0 = arith.constant 0 : i32
    %c0_i32_1 = arith.constant 0 : i32
    return %arg0, %c0_i32, %c0_i32_0 : i32, i32, i32
  }
}

</mosaic_0001>

<llo_original>
// kernel: loss_fn.3
$region0: #{loss_fn.3}
  #allocation0 [shape = 'u32[]', space=smem, size = 0x4, offset = 0x4, fixed_abs, tag = 'smem constant byte address 0x4 - core index']
  #allocation1 [shape = 'u32[144,128]{1,0:T(1,128)}', space=vmem, size = 0x12000, scoped, tag = 'internal scratch']
  %s0 = inlined_call_operand.vmem [shape: f32[12,768], index: 0, kind: input, shape index: {}]
  %s1 = inlined_call_operand.vmem [shape: f32[2,12,768], index: 1, kind: input, shape index: {}]
  %s2 = inlined_call_operand.vmem [shape: f32[2,12,768], index: 2, kind: input, shape index: {}]
  %s3 = inlined_call_operand.vmem [shape: f32[8,12], index: 3, kind: input, shape index: {}]
  %s4 = inlined_call_operand.vmem [shape: f32[2,8,128], index: 4, kind: output, shape index: {}]
  %s5 = sld [smem:[#allocation0]]
  $region49: #{loss_fn.3} parent=0
    _
  %s7 = ssub.s32 1, %s5
  %s8 = scalar_select 0, %s7, %s5
  loop: start=0, step=1, limit=4
  $region2: #{loss_fn.3} parent=0 // loop_pre_header
    _
  $region3: #{loss_fn.3} parent=0 // loop_header
    %s10 = sphi 0, %s14
    %p11 = scmp.ge.s32.totalorder %s10, 4
    %s18 = sphi 0, %s18
    %s20 = sphi 0, %s18
    %s21 = sphi 0, %s20
    %s35 = sphi 0, %s21
    %s41 = sphi 0, %s43
    %s44 = sphi 0, %s41
    %s45 = sphi 0, %s44
    %s61 = sphi 0, %s45
    %s67 = sphi 0, %s69
    %s70 = sphi 0, %s67
    %s71 = sphi 0, %s70
    %s87 = sphi 0, %s71
    %s91 = sphi 0, %s91
    %s93 = sphi 0, %s91
    %s94 = sphi 0, %s93
    %s108 = sphi 0, %s94
    %s114 = sphi 0, %s116
    %s117 = sphi 0, %s114
    %s118 = sphi 0, %s117
    %s134 = sphi 0, %s118
  $region4: #{loss_fn.3} parent=0 // loop_header_branch
    %13 = sbr.rel (%p11) target = $region8
  $region5: #{loss_fn.3} parent=0 // loop_body
    %s15 = ssub.s32 %s10, 1
    %s16 = ssub.s32 %s10, 2
    %s17 = sadd.s32 %s10, 1
    %s19 = sadd.s32 %s18, 1
    %p22 = scmp.eq.s32.totalorder %s10, 1
    %p23 = scmp.ne.s32.totalorder %s18, %s20
    %p24 = scmp.eq.s32.totalorder %s10, 0
    %p25 = por %p23, %p24
    %p26 = scmp.ne.s32.totalorder %s18, %s20
    %p27 = scmp.eq.s32.totalorder %s15, 1
    %p28 = por %p26, %p27
    %p29 = scmp.ne.s32.totalorder %s20, %s21
    %p30 = scmp.eq.s32.totalorder %s15, 0
    %p31 = por %p29, %p30
    %p32 = scmp.ne.s32.totalorder %s20, %s21
    %p33 = scmp.eq.s32.totalorder %s16, 1
    %p34 = por %p32, %p33
    %p36 = scmp.ne.s32.totalorder %s21, %s35
    %p37 = scmp.eq.s32.totalorder %s16, 0
    %p38 = por %p36, %p37
    %s39 = ssub.s32 %s10, %s17
    %p40 = scmp.eq.s32.totalorder %s39, 0
    %s42 = sadd.s32 %s41, 1
    %s43 = scalar_select %p40, %s41, %s42
    %p46 = pneg %p40
    %p47 = scmp.eq.s32.totalorder %s10, 1
    %p48 = por %p46, %p47
    %p49 = scmp.ne.s32.totalorder %s41, %s44
    %p50 = scmp.eq.s32.totalorder %s10, 0
    %p51 = por %p49, %p50
    %p52 = scmp.ne.s32.totalorder %s41, %s44
    %p53 = scmp.eq.s32.totalorder %s15, 1
    %p54 = por %p52, %p53
    %p55 = scmp.ne.s32.totalorder %s44, %s45
    %p56 = scmp.eq.s32.totalorder %s15, 0
    %p57 = por %p55, %p56
    %p58 = scmp.ne.s32.totalorder %s44, %s45
    %p59 = scmp.eq.s32.totalorder %s16, 1
    %p60 = por %p58, %p59
    %p62 = scmp.ne.s32.totalorder %s45, %s61
    %p63 = scmp.eq.s32.totalorder %s16, 0
    %p64 = por %p62, %p63
    %s65 = ssub.s32 %s10, %s17
    %p66 = scmp.eq.s32.totalorder %s65, 0
    %s68 = sadd.s32 %s67, 1
    %s69 = scalar_select %p66, %s67, %s68
    %p72 = pneg %p66
    %p73 = scmp.eq.s32.totalorder %s10, 1
    %p74 = por %p72, %p73
    %p75 = scmp.ne.s32.totalorder %s67, %s70
    %p76 = scmp.eq.s32.totalorder %s10, 0
    %p77 = por %p75, %p76
    %p78 = scmp.ne.s32.totalorder %s67, %s70
    %p79 = scmp.eq.s32.totalorder %s15, 1
    %p80 = por %p78, %p79
    %p81 = scmp.ne.s32.totalorder %s70, %s71
    %p82 = scmp.eq.s32.totalorder %s15, 0
    %p83 = por %p81, %p82
    %p84 = scmp.ne.s32.totalorder %s70, %s71
    %p85 = scmp.eq.s32.totalorder %s16, 1
    %p86 = por %p84, %p85
    %p88 = scmp.ne.s32.totalorder %s71, %s87
    %p89 = scmp.eq.s32.totalorder %s16, 0
    %p90 = por %p88, %p89
    %s92 = sadd.s32 %s91, 1
    %p95 = scmp.eq.s32.totalorder %s10, 1
    %p96 = scmp.ne.s32.totalorder %s91, %s93
    %p97 = scmp.eq.s32.totalorder %s10, 0
    %p98 = por %p96, %p97
    %p99 = scmp.ne.s32.totalorder %s91, %s93
    %p100 = scmp.eq.s32.totalorder %s15, 1
    %p101 = por %p99, %p100
    %p102 = scmp.ne.s32.totalorder %s93, %s94
    %p103 = scmp.eq.s32.totalorder %s15, 0
    %p104 = por %p102, %p103
    %p105 = scmp.ne.s32.totalorder %s93, %s94
    %p106 = scmp.eq.s32.totalorder %s16, 1
    %p107 = por %p105, %p106
    %p109 = scmp.ne.s32.totalorder %s94, %s108
    %p110 = scmp.eq.s32.totalorder %s16, 0
    %p111 = por %p109, %p110
    %s112 = ssub.s32 %s10, %s17
    %p113 = scmp.eq.s32.totalorder %s112, 0
    %s115 = sadd.s32 %s114, 1
    %s116 = scalar_select %p113, %s114, %s115
    %p119 = pneg %p113
    %p120 = scmp.eq.s32.totalorder %s10, 1
    %p121 = por %p119, %p120
    %p122 = scmp.ne.s32.totalorder %s114, %s117
    %p123 = scmp.eq.s32.totalorder %s10, 0
    %p124 = por %p122, %p123
    %p125 = scmp.ne.s32.totalorder %s114, %s117
    %p126 = scmp.eq.s32.totalorder %s15, 1
    %p127 = por %p125, %p126
    %p128 = scmp.ne.s32.totalorder %s117, %s118
    %p129 = scmp.eq.s32.totalorder %s15, 0
    %p130 = por %p128, %p129
    %p131 = scmp.ne.s32.totalorder %s117, %s118
    %p132 = scmp.eq.s32.totalorder %s16, 1
    %p133 = por %p131, %p132
    %p135 = scmp.ne.s32.totalorder %s118, %s134
    %p136 = scmp.eq.s32.totalorder %s16, 0
    %p137 = por %p135, %p136
    %p138 = scmp.le.s32.totalorder 1, %s10
    %p139 = scmp.lt.s32.totalorder %s10, 3
    %p140 = pnand %p138, %p139
    %p141 = pneg %p140
    // Predicated region
    $region9: #{loss_fn.3} parent=5 // pred_check
      _
    $region10: #{loss_fn.3} parent=5 // pred_check_branch
      %143 = sbr.rel (%p140) target = $region12
    $region11: #{loss_fn.3} parent=5 // pred_region
      %s144 = ssub.s32 %s10, 1
      // Predicated region
      $region13: #{loss_fn.3} parent=11 // pred_check
        %p145 = pneg %p31
      $region14: #{loss_fn.3} parent=11 // pred_check_branch
        %147 = sbr.rel (%p145) target = $region16
      $region15: #{loss_fn.3} parent=11 // pred_region
        _
      $region16: #{loss_fn.3} parent=11 // pred_fallthru
        _
      // Predicated region
      $region17: #{loss_fn.3} parent=11 // pred_check
        %p148 = pneg %p104
      $region18: #{loss_fn.3} parent=11 // pred_check_branch
        %150 = sbr.rel (%p148) target = $region20
      $region19: #{loss_fn.3} parent=11 // pred_region
        _
      $region20: #{loss_fn.3} parent=11 // pred_fallthru
        _
    $region12: #{loss_fn.3} parent=5 // pred_fallthru
      _
    %p151 = scmp.lt.s32.totalorder %s10, 2
    // Predicated region
    $region21: #{loss_fn.3} parent=5 // pred_check
      %p152 = pneg %p151
    $region22: #{loss_fn.3} parent=5 // pred_check_branch
      %154 = sbr.rel (%p152) target = $region24
    $region23: #{loss_fn.3} parent=5 // pred_region
      // Predicated region
      $region25: #{loss_fn.3} parent=23 // pred_check
        %p155 = pneg %p51
      $region26: #{loss_fn.3} parent=23 // pred_check_branch
        %157 = sbr.rel (%p155) target = $region28
      $region27: #{loss_fn.3} parent=23 // pred_region
        %p158 = scmp.lt.s32.totalorder %s10, 1
        %s159 = scalar_select %p158, %s10, 1
        %s160 = smul.addr %s159, 12
        %s161 = smul.addr %s160, 8
        %s162 = scalar_lea.vmem %s1, %s161
      $region28: #{loss_fn.3} parent=23 // pred_fallthru
        _
      // Predicated region
      $region29: #{loss_fn.3} parent=23 // pred_check
        %p163 = pneg %p77
      $region30: #{loss_fn.3} parent=23 // pred_check_branch
        %165 = sbr.rel (%p163) target = $region32
      $region31: #{loss_fn.3} parent=23 // pred_region
        %p166 = scmp.lt.s32.totalorder %s10, 1
        %s167 = scalar_select %p166, %s10, 1
        %s168 = smul.addr %s167, 12
        %s169 = smul.addr %s168, 8
        %s170 = scalar_lea.vmem %s2, %s169
      $region32: #{loss_fn.3} parent=23 // pred_fallthru
        _
    $region24: #{loss_fn.3} parent=5 // pred_fallthru
      _
    %p171 = scmp.le.s32.totalorder 1, %s10
    %p172 = scmp.lt.s32.totalorder %s10, 3
    %p173 = pnand %p171, %p172
    %p174 = pneg %p173
    // Predicated region
    $region33: #{loss_fn.3} parent=5 // pred_check
      _
    $region34: #{loss_fn.3} parent=5 // pred_check_branch
      %176 = sbr.rel (%p173) target = $region36
    $region35: #{loss_fn.3} parent=5 // pred_region
      %s177 = ssub.s32 %s10, 1
      %p178 = pneg %p31
      %p179 = pneg %p28
      %p180 = scmp.lt.s32.totalorder %s15, 1
      %s181 = scalar_select %p180, %s15, 1
      %s182 = smul.addr %s181, 12
      %s183 = smul.addr %s182, 8
      %s184 = scalar_lea.vmem %s1, %s183
      %p185 = pneg %p57
      %p186 = pneg %p54
      %p187 = scmp.lt.s32.totalorder %s15, 1
      %s188 = scalar_select %p187, %s15, 1
      %s189 = smul.addr %s188, 12
      %s190 = smul.addr %s189, 8
      %s191 = scalar_lea.vmem %s2, %s190
      %p192 = pneg %p83
      %p193 = pneg %p80
      %p194 = pneg %p104
      %p195 = pneg %p101
      %p196 = pneg %p130
      %p197 = pneg %p127
      %p198 = scmp.lt.s32.totalorder %s15, 1
      %s199 = scalar_select %p198, %s15, 1
      %s200 = smul.addr %s199, 8
      %s201 = scalar_lea.vmem %s4, %s200
      %p202 = scmp.lt.s32.totalorder %s15, 1
      %s203 = scalar_select %p202, %s15, 1
      %s204 = smul.addr %s203, 12
      %s205 = smul.addr %s204, 8
      %s206 = scalar_lea.vmem %s1, %s205
      %p207 = scmp.lt.s32.totalorder %s15, 1
      %s208 = scalar_select %p207, %s15, 1
      %s209 = smul.addr %s208, 12
      %s210 = smul.addr %s209, 8
      %s211 = scalar_lea.vmem %s2, %s210
      %p212 = scmp.lt.s32.totalorder %s15, 1
      %s213 = scalar_select %p212, %s15, 1
      %s214 = smul.addr %s213, 8
      %s215 = scalar_lea.vmem %s4, %s214
      %v216 = vld [vmem:[%s0] sm:$0xff]
      %v217 = vld [vmem:[%s0 + $0x8] sm:$0xff]
      %v218 = vld [vmem:[%s0 + $0x10] sm:$0xff]
      %v219 = vld [vmem:[%s0 + $0x18] sm:$0xff]
      %v220 = vld [vmem:[%s0 + $0x20] sm:$0xff]
      %v221 = vld [vmem:[%s0 + $0x28] sm:$0xff]
      %v222 = vld [vmem:[%s0 + $0x30] sm:$0xf]
      %v223 = vld [vmem:[%s0 + $0x38] sm:$0xf]
      %v224 = vld [vmem:[%s0 + $0x40] sm:$0xf]
      %v225 = vld [vmem:[%s0 + $0x48] sm:$0xf]
      %v226 = vld [vmem:[%s0 + $0x50] sm:$0xf]
      %v227 = vld [vmem:[%s0 + $0x58] sm:$0xf]
      %v228 = vld [vmem:[%s206] sm:$0xff]
      %v229 = vld [vmem:[%s206 + $0x8] sm:$0xff]
      %v230 = vld [vmem:[%s206 + $0x10] sm:$0xff]
      %v231 = vld [vmem:[%s206 + $0x18] sm:$0xff]
      %v232 = vld [vmem:[%s206 + $0x20] sm:$0xff]
      %v233 = vld [vmem:[%s206 + $0x28] sm:$0xff]
      %v234 = vld [vmem:[%s206 + $0x30] sm:$0xf]
      %v235 = vld [vmem:[%s206 + $0x38] sm:$0xf]
      %v236 = vld [vmem:[%s206 + $0x40] sm:$0xf]
      %v237 = vld [vmem:[%s206 + $0x48] sm:$0xf]
      %v238 = vld [vmem:[%s206 + $0x50] sm:$0xf]
      %v239 = vld [vmem:[%s206 + $0x58] sm:$0xf]
      %v240 = vld [vmem:[%s211] sm:$0xff]
      %v241 = vld [vmem:[%s211 + $0x8] sm:$0xff]
      %v242 = vld [vmem:[%s211 + $0x10] sm:$0xff]
      %v243 = vld [vmem:[%s211 + $0x18] sm:$0xff]
      %v244 = vld [vmem:[%s211 + $0x20] sm:$0xff]
      %v245 = vld [vmem:[%s211 + $0x28] sm:$0xff]
      %v246 = vld [vmem:[%s211 + $0x30] sm:$0xf]
      %v247 = vld [vmem:[%s211 + $0x38] sm:$0xf]
      %v248 = vld [vmem:[%s211 + $0x40] sm:$0xf]
      %v249 = vld [vmem:[%s211 + $0x48] sm:$0xf]
      %v250 = vld [vmem:[%s211 + $0x50] sm:$0xf]
      %v251 = vld [vmem:[%s211 + $0x58] sm:$0xf]
      %v252 = vld [vmem:[%s3] sm:$0xff]
      %v253 = vmul.f32 %v216, %v240
      %v254 = vmul.f32 %v217, %v241
      %v255 = vmul.f32 %v218, %v242
      %v256 = vmul.f32 %v219, %v243
      %v257 = vmul.f32 %v220, %v244
      %v258 = vmul.f32 %v221, %v245
      %v259 = vmul.f32 %v222, %v246
      %v260 = vmul.f32 %v223, %v247
      %v261 = vmul.f32 %v224, %v248
      %v262 = vmul.f32 %v225, %v249
      %v263 = vmul.f32 %v226, %v250
      %v264 = vmul.f32 %v227, %v251
      %v265 = vmul.f32 %v228, %v240
      %v266 = vmul.f32 %v229, %v241
      %v267 = vmul.f32 %v230, %v242
      %v268 = vmul.f32 %v231, %v243
      %v269 = vmul.f32 %v232, %v244
      %v270 = vmul.f32 %v233, %v245
      %v271 = vmul.f32 %v234, %v246
      %v272 = vmul.f32 %v235, %v247
      %v273 = vmul.f32 %v236, %v248
      %v274 = vmul.f32 %v237, %v249
      %v275 = vmul.f32 %v238, %v250
      %v276 = vmul.f32 %v239, %v251
      %v277 = vmul.f32 %v253, %v253
      %v278 = vmul.f32 %v254, %v254
      %v279 = vmul.f32 %v255, %v255
      %v280 = vmul.f32 %v256, %v256
      %v281 = vmul.f32 %v257, %v257
      %v282 = vmul.f32 %v258, %v258
      %v283 = vmul.f32 %v259, %v259
      %v284 = vmul.f32 %v260, %v260
      %v285 = vmul.f32 %v261, %v261
      %v286 = vmul.f32 %v262, %v262
      %v287 = vmul.f32 %v263, %v263
      %v288 = vmul.f32 %v264, %v264
      %v289 = vmul.f32 %v265, %v265
      %v290 = vmul.f32 %v266, %v266
      %v291 = vmul.f32 %v267, %v267
      %v292 = vmul.f32 %v268, %v268
      %v293 = vmul.f32 %v269, %v269
      %v294 = vmul.f32 %v270, %v270
      %v295 = vmul.f32 %v271, %v271
      %v296 = vmul.f32 %v272, %v272
      %v297 = vmul.f32 %v273, %v273
      %v298 = vmul.f32 %v274, %v274
      %v299 = vmul.f32 %v275, %v275
      %v300 = vmul.f32 %v276, %v276
      %v301 = vmul.f32 %v253, %v265
      %v302 = vmul.f32 %v254, %v266
      %v303 = vmul.f32 %v255, %v267
      %v304 = vmul.f32 %v256, %v268
      %v305 = vmul.f32 %v257, %v269
      %v306 = vmul.f32 %v258, %v270
      %v307 = vmul.f32 %v259, %v271
      %v308 = vmul.f32 %v260, %v272
      %v309 = vmul.f32 %v261, %v273
      %v310 = vmul.f32 %v262, %v274
      %v311 = vmul.f32 %v263, %v275
      %v312 = vmul.f32 %v264, %v276
      %vm313 = vcmask 97280
      %v315 = vsel %vm313, %v252, 0
      %vm317 = vcmask 1043456
      %v319 = vsel %vm317, %v259, 0
      %v322 = vsel %vm317, %v260, 0
      %v325 = vsel %vm317, %v261, 0
      %v328 = vsel %vm317, %v262, 0
      %v331 = vsel %vm317, %v263, 0
      %v334 = vsel %vm317, %v264, 0
      %v337 = vsel %vm317, %v271, 0
      %v340 = vsel %vm317, %v272, 0
      %v343 = vsel %vm317, %v273, 0
      %v346 = vsel %vm317, %v274, 0
      %v349 = vsel %vm317, %v275, 0
      %v352 = vsel %vm317, %v276, 0
      %v355 = vsel %vm317, %v283, 0
      %v358 = vsel %vm317, %v284, 0
      %v361 = vsel %vm317, %v285, 0
      %v364 = vsel %vm317, %v286, 0
      %v367 = vsel %vm317, %v287, 0
      %v370 = vsel %vm317, %v288, 0
      %v373 = vsel %vm317, %v295, 0
      %v376 = vsel %vm317, %v296, 0
      %v379 = vsel %vm317, %v297, 0
      %v382 = vsel %vm317, %v298, 0
      %v385 = vsel %vm317, %v299, 0
      %v388 = vsel %vm317, %v300, 0
      %v391 = vsel %vm317, %v307, 0
      %v394 = vsel %vm317, %v308, 0
      %v397 = vsel %vm317, %v309, 0
      %v400 = vsel %vm317, %v310, 0
      %v403 = vsel %vm317, %v311, 0
      %v406 = vsel %vm317, %v312, 0
      %408 = vmatprep.subr.mxu0 0.0
      %409 = vmatpush1.msra.mxu0 0.0
      %410 = vmatprep.subr.mxu0 0.0
      %411 = vmatpush1.msra.mxu0 0.0
      %412 = vmatprep.subr.mxu0 0.0
      %413 = vmatpush1.msra.mxu0 0.0
      %414 = vmatprep.subr.mxu0 0.0
      %415 = vmatpush1.msra.mxu0 0.0
      %416 = vmatprep.subr.mxu0 0.0
      %417 = vmatpush1.msra.mxu0 0.0
      %418 = vmatprep.subr.mxu0 0.0
      %419 = vmatpush1.msra.mxu0 0.0
      %420 = vmatprep.subr.mxu0 0.0
      %421 = vmatpush1.msra.mxu0 0.0
      %422 = vmatprep.subr.mxu0 0.0
      %423 = vmatpush1.msra.mxu0 0.0
      %424 = vmatprep.subr.mxu0 0.0
      %425 = vmatpush1.msra.mxu0 0.0
      %426 = vmatprep.subr.mxu0 0.0
      %427 = vmatpush1.msra.mxu0 0.0
      %428 = vmatprep.subr.mxu0 0.0
      %429 = vmatpush1.msra.mxu0 0.0
      %430 = vmatprep.subr.mxu0 0.0
      %431 = vmatpush1.msra.mxu0 0.0
      %432 = vmatprep.subr.mxu0 0.0
      %433 = vmatpush1.msra.mxu0 0.0
      %434 = vmatprep.subr.mxu0 0.0
      %435 = vmatpush1.msra.mxu0 0.0
      %436 = vmatprep.subr.mxu0 %v322
      %437 = vmatpush1.msra.mxu0 %v319
      %438 = vmatprep.subr.mxu0 %v254
      %439 = vmatpush1.msra.mxu0 %v253
      %440 = vmatprep.subr.mxu0 0.0
      %441 = vmatpush2.msra.mxu0 0.0
      %442 = vmatprep.subr.mxu0 0.0
      %443 = vmatpush2.msra.mxu0 0.0
      %444 = vmatprep.subr.mxu0 0.0
      %445 = vmatpush2.msra.mxu0 0.0
      %446 = vmatprep.subr.mxu0 0.0
      %447 = vmatpush2.msra.mxu0 0.0
      %448 = vmatprep.subr.mxu0 0.0
      %449 = vmatpush2.msra.mxu0 0.0
      %450 = vmatprep.subr.mxu0 0.0
      %451 = vmatpush2.msra.mxu0 0.0
      %452 = vmatprep.subr.mxu0 0.0
      %453 = vmatpush2.msra.mxu0 0.0
      %454 = vmatprep.subr.mxu0 0.0
      %455 = vmatpush2.msra.mxu0 0.0
      %456 = vmatprep.subr.mxu0 0.0
      %457 = vmatpush2.msra.mxu0 0.0
      %458 = vmatprep.subr.mxu0 0.0
      %459 = vmatpush2.msra.mxu0 0.0
      %460 = vmatprep.subr.mxu0 0.0
      %461 = vmatpush2.msra.mxu0 0.0
      %462 = vmatprep.subr.mxu0 0.0
      %463 = vmatpush2.msra.mxu0 0.0
      %464 = vmatprep.subr.mxu0 0.0
      %465 = vmatpush2.msra.mxu0 0.0
      %466 = vmatprep.subr.mxu0 0.0
      %467 = vmatpush2.msra.mxu0 0.0
      %468 = vmatprep.subr.mxu0 0.0
      %469 = vmatpush2.msra.mxu0 0.0
      %470 = vmatprep.subr.mxu0 0.0
      %471 = vmatpush2.msra.mxu0 0.0
      %472 = vmatprep.mubr.f32.mxu0 0.0
      %473 = vmatmul.mubr.f32.gmra.mxu0 %v315
      %v474 = vpop.f32.mrf.mxu0
      %v475 = vadd.f32 0.0, %v474
      %v476 = vpop.f32.mrf.mxu0
      %v477 = vadd.f32 0.0, %v476
      %478 = vdwg.mxu0
      %479 = vmatprep.subr.mxu0 0.0
      %480 = vmatpush1.msra.mxu0 0.0
      %481 = vmatprep.subr.mxu0 0.0
      %482 = vmatpush1.msra.mxu0 0.0
      %483 = vmatprep.subr.mxu0 0.0
      %484 = vmatpush1.msra.mxu0 0.0
      %485 = vmatprep.subr.mxu0 0.0
      %486 = vmatpush1.msra.mxu0 0.0
      %487 = vmatprep.subr.mxu0 0.0
      %488 = vmatpush1.msra.mxu0 0.0
      %489 = vmatprep.subr.mxu0 0.0
      %490 = vmatpush1.msra.mxu0 0.0
      %491 = vmatprep.subr.mxu0 0.0
      %492 = vmatpush1.msra.mxu0 0.0
      %493 = vmatprep.subr.mxu0 0.0
      %494 = vmatpush1.msra.mxu0 0.0
      %495 = vmatprep.subr.mxu0 0.0
      %496 = vmatpush1.msra.mxu0 0.0
      %497 = vmatprep.subr.mxu0 0.0
      %498 = vmatpush1.msra.mxu0 0.0
      %499 = vmatprep.subr.mxu0 0.0
      %500 = vmatpush1.msra.mxu0 0.0
      %501 = vmatprep.subr.mxu0 0.0
      %502 = vmatpush1.msra.mxu0 0.0
      %503 = vmatprep.subr.mxu0 0.0
      %504 = vmatpush1.msra.mxu0 0.0
      %505 = vmatprep.subr.mxu0 0.0
      %506 = vmatpush1.msra.mxu0 0.0
      %507 = vmatprep.subr.mxu0 %v328
      %508 = vmatpush1.msra.mxu0 %v325
      %509 = vmatprep.subr.mxu0 %v256
      %510 = vmatpush1.msra.mxu0 %v255
      %511 = vmatprep.subr.mxu0 0.0
      %512 = vmatpush2.msra.mxu0 0.0
      %513 = vmatprep.subr.mxu0 0.0
      %514 = vmatpush2.msra.mxu0 0.0
      %515 = vmatprep.subr.mxu0 0.0
      %516 = vmatpush2.msra.mxu0 0.0
      %517 = vmatprep.subr.mxu0 0.0
      %518 = vmatpush2.msra.mxu0 0.0
      %519 = vmatprep.subr.mxu0 0.0
      %520 = vmatpush2.msra.mxu0 0.0
      %521 = vmatprep.subr.mxu0 0.0
      %522 = vmatpush2.msra.mxu0 0.0
      %523 = vmatprep.subr.mxu0 0.0
      %524 = vmatpush2.msra.mxu0 0.0
      %525 = vmatprep.subr.mxu0 0.0
      %526 = vmatpush2.msra.mxu0 0.0
      %527 = vmatprep.subr.mxu0 0.0
      %528 = vmatpush2.msra.mxu0 0.0
      %529 = vmatprep.subr.mxu0 0.0
      %530 = vmatpush2.msra.mxu0 0.0
      %531 = vmatprep.subr.mxu0 0.0
      %532 = vmatpush2.msra.mxu0 0.0
      %533 = vmatprep.subr.mxu0 0.0
      %534 = vmatpush2.msra.mxu0 0.0
      %535 = vmatprep.subr.mxu0 0.0
      %536 = vmatpush2.msra.mxu0 0.0
      %537 = vmatprep.subr.mxu0 0.0
      %538 = vmatpush2.msra.mxu0 0.0
      %539 = vmatprep.subr.mxu0 0.0
      %540 = vmatpush2.msra.mxu0 0.0
      %541 = vmatprep.subr.mxu0 0.0
      %542 = vmatpush2.msra.mxu0 0.0
      %543 = vmatprep.mubr.f32.mxu0 0.0
      %544 = vmatmul.mubr.f32.gmra.mxu0 %v315
      %v545 = vpop.f32.mrf.mxu0
      %v546 = vadd.f32 0.0, %v545
      %v547 = vpop.f32.mrf.mxu0
      %v548 = vadd.f32 0.0, %v547
      %549 = vdwg.mxu0
      %550 = vmatprep.subr.mxu0 0.0
      %551 = vmatpush1.msra.mxu0 0.0
      %552 = vmatprep.subr.mxu0 0.0
      %553 = vmatpush1.msra.mxu0 0.0
      %554 = vmatprep.subr.mxu0 0.0
      %555 = vmatpush1.msra.mxu0 0.0
      %556 = vmatprep.subr.mxu0 0.0
      %557 = vmatpush1.msra.mxu0 0.0
      %558 = vmatprep.subr.mxu0 0.0
      %559 = vmatpush1.msra.mxu0 0.0
      %560 = vmatprep.subr.mxu0 0.0
      %561 = vmatpush1.msra.mxu0 0.0
      %562 = vmatprep.subr.mxu0 0.0
      %563 = vmatpush1.msra.mxu0 0.0
      %564 = vmatprep.subr.mxu0 0.0
      %565 = vmatpush1.msra.mxu0 0.0
      %566 = vmatprep.subr.mxu0 0.0
      %567 = vmatpush1.msra.mxu0 0.0
      %568 = vmatprep.subr.mxu0 0.0
      %569 = vmatpush1.msra.mxu0 0.0
      %570 = vmatprep.subr.mxu0 0.0
      %571 = vmatpush1.msra.mxu0 0.0
      %572 = vmatprep.subr.mxu0 0.0
      %573 = vmatpush1.msra.mxu0 0.0
      %574 = vmatprep.subr.mxu0 0.0
      %575 = vmatpush1.msra.mxu0 0.0
      %576 = vmatprep.subr.mxu0 0.0
      %577 = vmatpush1.msra.mxu0 0.0
      %578 = vmatprep.subr.mxu0 %v334
      %579 = vmatpush1.msra.mxu0 %v331
      %580 = vmatprep.subr.mxu0 %v258
      %581 = vmatpush1.msra.mxu0 %v257
      %582 = vmatprep.subr.mxu0 0.0
      %583 = vmatpush2.msra.mxu0 0.0
      %584 = vmatprep.subr.mxu0 0.0
      %585 = vmatpush2.msra.mxu0 0.0
      %586 = vmatprep.subr.mxu0 0.0
      %587 = vmatpush2.msra.mxu0 0.0
      %588 = vmatprep.subr.mxu0 0.0
      %589 = vmatpush2.msra.mxu0 0.0
      %590 = vmatprep.subr.mxu0 0.0
      %591 = vmatpush2.msra.mxu0 0.0
      %592 = vmatprep.subr.mxu0 0.0
      %593 = vmatpush2.msra.mxu0 0.0
      %594 = vmatprep.subr.mxu0 0.0
      %595 = vmatpush2.msra.mxu0 0.0
      %596 = vmatprep.subr.mxu0 0.0
      %597 = vmatpush2.msra.mxu0 0.0
      %598 = vmatprep.subr.mxu0 0.0
      %599 = vmatpush2.msra.mxu0 0.0
      %600 = vmatprep.subr.mxu0 0.0
      %601 = vmatpush2.msra.mxu0 0.0
      %602 = vmatprep.subr.mxu0 0.0
      %603 = vmatpush2.msra.mxu0 0.0
      %604 = vmatprep.subr.mxu0 0.0
      %605 = vmatpush2.msra.mxu0 0.0
      %606 = vmatprep.subr.mxu0 0.0
      %607 = vmatpush2.msra.mxu0 0.0
      %608 = vmatprep.subr.mxu0 0.0
      %609 = vmatpush2.msra.mxu0 0.0
      %610 = vmatprep.subr.mxu0 0.0
      %611 = vmatpush2.msra.mxu0 0.0
      %612 = vmatprep.subr.mxu0 0.0
      %613 = vmatpush2.msra.mxu0 0.0
      %614 = vmatprep.mubr.f32.mxu0 0.0
      %615 = vmatmul.mubr.f32.gmra.mxu0 %v315
      %v616 = vpop.f32.mrf.mxu0
      %v617 = vadd.f32 0.0, %v616
      %v618 = vpop.f32.mrf.mxu0
      %v619 = vadd.f32 0.0, %v618
      %620 = vdwg.mxu0
      %621 = vmatprep.subr.mxu0 0.0
      %622 = vmatpush1.msra.mxu0 0.0
      %623 = vmatprep.subr.mxu0 0.0
      %624 = vmatpush1.msra.mxu0 0.0
      %625 = vmatprep.subr.mxu0 0.0
      %626 = vmatpush1.msra.mxu0 0.0
      %627 = vmatprep.subr.mxu0 0.0
      %628 = vmatpush1.msra.mxu0 0.0
      %629 = vmatprep.subr.mxu0 0.0
      %630 = vmatpush1.msra.mxu0 0.0
      %631 = vmatprep.subr.mxu0 0.0
      %632 = vmatpush1.msra.mxu0 0.0
      %633 = vmatprep.subr.mxu0 0.0
      %634 = vmatpush1.msra.mxu0 0.0
      %635 = vmatprep.subr.mxu0 0.0
      %636 = vmatpush1.msra.mxu0 0.0
      %637 = vmatprep.subr.mxu0 0.0
      %638 = vmatpush1.msra.mxu0 0.0
      %639 = vmatprep.subr.mxu0 0.0
      %640 = vmatpush1.msra.mxu0 0.0
      %641 = vmatprep.subr.mxu0 0.0
      %642 = vmatpush1.msra.mxu0 0.0
      %643 = vmatprep.subr.mxu0 0.0
      %644 = vmatpush1.msra.mxu0 0.0
      %645 = vmatprep.subr.mxu0 0.0
      %646 = vmatpush1.msra.mxu0 0.0
      %647 = vmatprep.subr.mxu0 0.0
      %648 = vmatpush1.msra.mxu0 0.0
      %649 = vmatprep.subr.mxu0 %v340
      %650 = vmatpush1.msra.mxu0 %v337
      %651 = vmatprep.subr.mxu0 %v266
      %652 = vmatpush1.msra.mxu0 %v265
      %653 = vmatprep.subr.mxu0 0.0
      %654 = vmatpush2.msra.mxu0 0.0
      %655 = vmatprep.subr.mxu0 0.0
      %656 = vmatpush2.msra.mxu0 0.0
      %657 = vmatprep.subr.mxu0 0.0
      %658 = vmatpush2.msra.mxu0 0.0
      %659 = vmatprep.subr.mxu0 0.0
      %660 = vmatpush2.msra.mxu0 0.0
      %661 = vmatprep.subr.mxu0 0.0
      %662 = vmatpush2.msra.mxu0 0.0
      %663 = vmatprep.subr.mxu0 0.0
      %664 = vmatpush2.msra.mxu0 0.0
      %665 = vmatprep.subr.mxu0 0.0
      %666 = vmatpush2.msra.mxu0 0.0
      %667 = vmatprep.subr.mxu0 0.0
      %668 = vmatpush2.msra.mxu0 0.0
      %669 = vmatprep.subr.mxu0 0.0
      %670 = vmatpush2.msra.mxu0 0.0
      %671 = vmatprep.subr.mxu0 0.0
      %672 = vmatpush2.msra.mxu0 0.0
      %673 = vmatprep.subr.mxu0 0.0
      %674 = vmatpush2.msra.mxu0 0.0
      %675 = vmatprep.subr.mxu0 0.0
      %676 = vmatpush2.msra.mxu0 0.0
      %677 = vmatprep.subr.mxu0 0.0
      %678 = vmatpush2.msra.mxu0 0.0
      %679 = vmatprep.subr.mxu0 0.0
      %680 = vmatpush2.msra.mxu0 0.0
      %681 = vmatprep.subr.mxu0 0.0
      %682 = vmatpush2.msra.mxu0 0.0
      %683 = vmatprep.subr.mxu0 0.0
      %684 = vmatpush2.msra.mxu0 0.0
      %685 = vmatprep.mubr.f32.mxu0 0.0
      %686 = vmatmul.mubr.f32.gmra.mxu0 %v315
      %v687 = vpop.f32.mrf.mxu0
      %v688 = vadd.f32 0.0, %v687
      %v689 = vpop.f32.mrf.mxu0
      %v690 = vadd.f32 0.0, %v689
      %691 = vdwg.mxu0
      %692 = vmatprep.subr.mxu0 0.0
      %693 = vmatpush1.msra.mxu0 0.0
      %694 = vmatprep.subr.mxu0 0.0
      %695 = vmatpush1.msra.mxu0 0.0
      %696 = vmatprep.subr.mxu0 0.0
      %697 = vmatpush1.msra.mxu0 0.0
      %698 = vmatprep.subr.mxu0 0.0
      %699 = vmatpush1.msra.mxu0 0.0
      %700 = vmatprep.subr.mxu0 0.0
      %701 = vmatpush1.msra.mxu0 0.0
      %702 = vmatprep.subr.mxu0 0.0
      %703 = vmatpush1.msra.mxu0 0.0
      %704 = vmatprep.subr.mxu0 0.0
      %705 = vmatpush1.msra.mxu0 0.0
      %706 = vmatprep.subr.mxu0 0.0
      %707 = vmatpush1.msra.mxu0 0.0
      %708 = vmatprep.subr.mxu0 0.0
      %709 = vmatpush1.msra.mxu0 0.0
      %710 = vmatprep.subr.mxu0 0.0
      %711 = vmatpush1.msra.mxu0 0.0
      %712 = vmatprep.subr.mxu0 0.0
      %713 = vmatpush1.msra.mxu0 0.0
      %714 = vmatprep.subr.mxu0 0.0
      %715 = vmatpush1.msra.mxu0 0.0
      %716 = vmatprep.subr.mxu0 0.0
      %717 = vmatpush1.msra.mxu0 0.0
      %718 = vmatprep.subr.mxu0 0.0
      %719 = vmatpush1.msra.mxu0 0.0
      %720 = vmatprep.subr.mxu0 %v346
      %721 = vmatpush1.msra.mxu0 %v343
      %722 = vmatprep.subr.mxu0 %v268
      %723 = vmatpush1.msra.mxu0 %v267
      %724 = vmatprep.subr.mxu0 0.0
      %725 = vmatpush2.msra.mxu0 0.0
      %726 = vmatprep.subr.mxu0 0.0
      %727 = vmatpush2.msra.mxu0 0.0
      %728 = vmatprep.subr.mxu0 0.0
      %729 = vmatpush2.msra.mxu0 0.0
      %730 = vmatprep.subr.mxu0 0.0
      %731 = vmatpush2.msra.mxu0 0.0
      %732 = vmatprep.subr.mxu0 0.0
      %733 = vmatpush2.msra.mxu0 0.0
      %734 = vmatprep.subr.mxu0 0.0
      %735 = vmatpush2.msra.mxu0 0.0
      %736 = vmatprep.subr.mxu0 0.0
      %737 = vmatpush2.msra.mxu0 0.0
      %738 = vmatprep.subr.mxu0 0.0
      %739 = vmatpush2.msra.mxu0 0.0
      %740 = vmatprep.subr.mxu0 0.0
      %741 = vmatpush2.msra.mxu0 0.0
      %742 = vmatprep.subr.mxu0 0.0
      %743 = vmatpush2.msra.mxu0 0.0
      %744 = vmatprep.subr.mxu0 0.0
      %745 = vmatpush2.msra.mxu0 0.0
      %746 = vmatprep.subr.mxu0 0.0
      %747 = vmatpush2.msra.mxu0 0.0
      %748 = vmatprep.subr.mxu0 0.0
      %749 = vmatpush2.msra.mxu0 0.0
      %750 = vmatprep.subr.mxu0 0.0
      %751 = vmatpush2.msra.mxu0 0.0
      %752 = vmatprep.subr.mxu0 0.0
      %753 = vmatpush2.msra.mxu0 0.0
      %754 = vmatprep.subr.mxu0 0.0
      %755 = vmatpush2.msra.mxu0 0.0
      %756 = vmatprep.mubr.f32.mxu0 0.0
      %757 = vmatmul.mubr.f32.gmra.mxu0 %v315
      %v758 = vpop.f32.mrf.mxu0
      %v759 = vadd.f32 0.0, %v758
      %v760 = vpop.f32.mrf.mxu0
      %v761 = vadd.f32 0.0, %v760
      %762 = vdwg.mxu0
      %763 = vmatprep.subr.mxu0 0.0
      %764 = vmatpush1.msra.mxu0 0.0
      %765 = vmatprep.subr.mxu0 0.0
      %766 = vmatpush1.msra.mxu0 0.0
      %767 = vmatprep.subr.mxu0 0.0
      %768 = vmatpush1.msra.mxu0 0.0
      %769 = vmatprep.subr.mxu0 0.0
      %770 = vmatpush1.msra.mxu0 0.0
      %771 = vmatprep.subr.mxu0 0.0
      %772 = vmatpush1.msra.mxu0 0.0
      %773 = vmatprep.subr.mxu0 0.0
      %774 = vmatpush1.msra.mxu0 0.0
      %775 = vmatprep.subr.mxu0 0.0
      %776 = vmatpush1.msra.mxu0 0.0
      %777 = vmatprep.subr.mxu0 0.0
      %778 = vmatpush1.msra.mxu0 0.0
      %779 = vmatprep.subr.mxu0 0.0
      %780 = vmatpush1.msra.mxu0 0.0
      %781 = vmatprep.subr.mxu0 0.0
      %782 = vmatpush1.msra.mxu0 0.0
      %783 = vmatprep.subr.mxu0 0.0
      %784 = vmatpush1.msra.mxu0 0.0
      %785 = vmatprep.subr.mxu0 0.0
      %786 = vmatpush1.msra.mxu0 0.0
      %787 = vmatprep.subr.mxu0 0.0
      %788 = vmatpush1.msra.mxu0 0.0
      %789 = vmatprep.subr.mxu0 0.0
      %790 = vmatpush1.msra.mxu0 0.0
      %791 = vmatprep.subr.mxu0 %v352
      %792 = vmatpush1.msra.mxu0 %v349
      %793 = vmatprep.subr.mxu0 %v270
      %794 = vmatpush1.msra.mxu0 %v269
      %795 = vmatprep.subr.mxu0 0.0
      %796 = vmatpush2.msra.mxu0 0.0
      %797 = vmatprep.subr.mxu0 0.0
      %798 = vmatpush2.msra.mxu0 0.0
      %799 = vmatprep.subr.mxu0 0.0
      %800 = vmatpush2.msra.mxu0 0.0
      %801 = vmatprep.subr.mxu0 0.0
      %802 = vmatpush2.msra.mxu0 0.0
      %803 = vmatprep.subr.mxu0 0.0
      %804 = vmatpush2.msra.mxu0 0.0
      %805 = vmatprep.subr.mxu0 0.0
      %806 = vmatpush2.msra.mxu0 0.0
      %807 = vmatprep.subr.mxu0 0.0
      %808 = vmatpush2.msra.mxu0 0.0
      %809 = vmatprep.subr.mxu0 0.0
      %810 = vmatpush2.msra.mxu0 0.0
      %811 = vmatprep.subr.mxu0 0.0
      %812 = vmatpush2.msra.mxu0 0.0
      %813 = vmatprep.subr.mxu0 0.0
      %814 = vmatpush2.msra.mxu0 0.0
      %815 = vmatprep.subr.mxu0 0.0
      %816 = vmatpush2.msra.mxu0 0.0
      %817 = vmatprep.subr.mxu0 0.0
      %818 = vmatpush2.msra.mxu0 0.0
      %819 = vmatprep.subr.mxu0 0.0
      %820 = vmatpush2.msra.mxu0 0.0
      %821 = vmatprep.subr.mxu0 0.0
      %822 = vmatpush2.msra.mxu0 0.0
      %823 = vmatprep.subr.mxu0 0.0
      %824 = vmatpush2.msra.mxu0 0.0
      %825 = vmatprep.subr.mxu0 0.0
      %826 = vmatpush2.msra.mxu0 0.0
      %827 = vmatprep.mubr.f32.mxu0 0.0
      %828 = vmatmul.mubr.f32.gmra.mxu0 %v315
      %v829 = vpop.f32.mrf.mxu0
      %v830 = vadd.f32 0.0, %v829
      %v831 = vpop.f32.mrf.mxu0
      %v832 = vadd.f32 0.0, %v831
      %833 = vdwg.mxu0
      %834 = vmatprep.subr.mxu0 0.0
      %835 = vmatpush1.msra.mxu0 0.0
      %836 = vmatprep.subr.mxu0 0.0
      %837 = vmatpush1.msra.mxu0 0.0
      %838 = vmatprep.subr.mxu0 0.0
      %839 = vmatpush1.msra.mxu0 0.0
      %840 = vmatprep.subr.mxu0 0.0
      %841 = vmatpush1.msra.mxu0 0.0
      %842 = vmatprep.subr.mxu0 0.0
      %843 = vmatpush1.msra.mxu0 0.0
      %844 = vmatprep.subr.mxu0 0.0
      %845 = vmatpush1.msra.mxu0 0.0
      %846 = vmatprep.subr.mxu0 0.0
      %847 = vmatpush1.msra.mxu0 0.0
      %848 = vmatprep.subr.mxu0 0.0
      %849 = vmatpush1.msra.mxu0 0.0
      %850 = vmatprep.subr.mxu0 0.0
      %851 = vmatpush1.msra.mxu0 0.0
      %852 = vmatprep.subr.mxu0 0.0
      %853 = vmatpush1.msra.mxu0 0.0
      %854 = vmatprep.subr.mxu0 0.0
      %855 = vmatpush1.msra.mxu0 0.0
      %856 = vmatprep.subr.mxu0 0.0
      %857 = vmatpush1.msra.mxu0 0.0
      %858 = vmatprep.subr.mxu0 0.0
      %859 = vmatpush1.msra.mxu0 0.0
      %860 = vmatprep.subr.mxu0 0.0
      %861 = vmatpush1.msra.mxu0 0.0
      %862 = vmatprep.subr.mxu0 %v358
      %863 = vmatpush1.msra.mxu0 %v355
      %864 = vmatprep.subr.mxu0 %v278
      %865 = vmatpush1.msra.mxu0 %v277
      %866 = vmatprep.subr.mxu0 0.0
      %867 = vmatpush2.msra.mxu0 0.0
      %868 = vmatprep.subr.mxu0 0.0
      %869 = vmatpush2.msra.mxu0 0.0
      %870 = vmatprep.subr.mxu0 0.0
      %871 = vmatpush2.msra.mxu0 0.0
      %872 = vmatprep.subr.mxu0 0.0
      %873 = vmatpush2.msra.mxu0 0.0
      %874 = vmatprep.subr.mxu0 0.0
      %875 = vmatpush2.msra.mxu0 0.0
      %876 = vmatprep.subr.mxu0 0.0
      %877 = vmatpush2.msra.mxu0 0.0
      %878 = vmatprep.subr.mxu0 0.0
      %879 = vmatpush2.msra.mxu0 0.0
      %880 = vmatprep.subr.mxu0 0.0
      %881 = vmatpush2.msra.mxu0 0.0
      %882 = vmatprep.subr.mxu0 0.0
      %883 = vmatpush2.msra.mxu0 0.0
      %884 = vmatprep.subr.mxu0 0.0
      %885 = vmatpush2.msra.mxu0 0.0
      %886 = vmatprep.subr.mxu0 0.0
      %887 = vmatpush2.msra.mxu0 0.0
      %888 = vmatprep.subr.mxu0 0.0
      %889 = vmatpush2.msra.mxu0 0.0
      %890 = vmatprep.subr.mxu0 0.0
      %891 = vmatpush2.msra.mxu0 0.0
      %892 = vmatprep.subr.mxu0 0.0
      %893 = vmatpush2.msra.mxu0 0.0
      %894 = vmatprep.subr.mxu0 0.0
      %895 = vmatpush2.msra.mxu0 0.0
      %896 = vmatprep.subr.mxu0 0.0
      %897 = vmatpush2.msra.mxu0 0.0
      %898 = vmatprep.mubr.f32.mxu0 0.0
      %899 = vmatmul.mubr.f32.gmra.mxu0 %v315
      %v900 = vpop.f32.mrf.mxu0
      %v901 = vadd.f32 0.0, %v900
      %v902 = vpop.f32.mrf.mxu0
      %v903 = vadd.f32 0.0, %v902
      %904 = vdwg.mxu0
      %905 = vmatprep.subr.mxu0 0.0
      %906 = vmatpush1.msra.mxu0 0.0
      %907 = vmatprep.subr.mxu0 0.0
      %908 = vmatpush1.msra.mxu0 0.0
      %909 = vmatprep.subr.mxu0 0.0
      %910 = vmatpush1.msra.mxu0 0.0
      %911 = vmatprep.subr.mxu0 0.0
      %912 = vmatpush1.msra.mxu0 0.0
      %913 = vmatprep.subr.mxu0 0.0
      %914 = vmatpush1.msra.mxu0 0.0
      %915 = vmatprep.subr.mxu0 0.0
      %916 = vmatpush1.msra.mxu0 0.0
      %917 = vmatprep.subr.mxu0 0.0
      %918 = vmatpush1.msra.mxu0 0.0
      %919 = vmatprep.subr.mxu0 0.0
      %920 = vmatpush1.msra.mxu0 0.0
      %921 = vmatprep.subr.mxu0 0.0
      %922 = vmatpush1.msra.mxu0 0.0
      %923 = vmatprep.subr.mxu0 0.0
      %924 = vmatpush1.msra.mxu0 0.0
      %925 = vmatprep.subr.mxu0 0.0
      %926 = vmatpush1.msra.mxu0 0.0
      %927 = vmatprep.subr.mxu0 0.0
      %928 = vmatpush1.msra.mxu0 0.0
      %929 = vmatprep.subr.mxu0 0.0
      %930 = vmatpush1.msra.mxu0 0.0
      %931 = vmatprep.subr.mxu0 0.0
      %932 = vmatpush1.msra.mxu0 0.0
      %933 = vmatprep.subr.mxu0 %v364
      %934 = vmatpush1.msra.mxu0 %v361
      %935 = vmatprep.subr.mxu0 %v280
      %936 = vmatpush1.msra.mxu0 %v279
      %937 = vmatprep.subr.mxu0 0.0
      %938 = vmatpush2.msra.mxu0 0.0
      %939 = vmatprep.subr.mxu0 0.0
      %940 = vmatpush2.msra.mxu0 0.0
      %941 = vmatprep.subr.mxu0 0.0
      %942 = vmatpush2.msra.mxu0 0.0
      %943 = vmatprep.subr.mxu0 0.0
      %944 = vmatpush2.msra.mxu0 0.0
      %945 = vmatprep.subr.mxu0 0.0
      %946 = vmatpush2.msra.mxu0 0.0
      %947 = vmatprep.subr.mxu0 0.0
      %948 = vmatpush2.msra.mxu0 0.0
      %949 = vmatprep.subr.mxu0 0.0
      %950 = vmatpush2.msra.mxu0 0.0
      %951 = vmatprep.subr.mxu0 0.0
      %952 = vmatpush2.msra.mxu0 0.0
      %953 = vmatprep.subr.mxu0 0.0
      %954 = vmatpush2.msra.mxu0 0.0
      %955 = vmatprep.subr.mxu0 0.0
      %956 = vmatpush2.msra.mxu0 0.0
      %957 = vmatprep.subr.mxu0 0.0
      %958 = vmatpush2.msra.mxu0 0.0
      %959 = vmatprep.subr.mxu0 0.0
      %960 = vmatpush2.msra.mxu0 0.0
      %961 = vmatprep.subr.mxu0 0.0
      %962 = vmatpush2.msra.mxu0 0.0
      %963 = vmatprep.subr.mxu0 0.0
      %964 = vmatpush2.msra.mxu0 0.0
      %965 = vmatprep.subr.mxu0 0.0
      %966 = vmatpush2.msra.mxu0 0.0
      %967 = vmatprep.subr.mxu0 0.0
      %968 = vmatpush2.msra.mxu0 0.0
      %969 = vmatprep.mubr.f32.mxu0 0.0
      %970 = vmatmul.mubr.f32.gmra.mxu0 %v315
      %v971 = vpop.f32.mrf.mxu0
      %v972 = vadd.f32 0.0, %v971
      %v973 = vpop.f32.mrf.mxu0
      %v974 = vadd.f32 0.0, %v973
      %975 = vdwg.mxu0
      %976 = vmatprep.subr.mxu0 0.0
      %977 = vmatpush1.msra.mxu0 0.0
      %978 = vmatprep.subr.mxu0 0.0
      %979 = vmatpush1.msra.mxu0 0.0
      %980 = vmatprep.subr.mxu0 0.0
      %981 = vmatpush1.msra.mxu0 0.0
      %982 = vmatprep.subr.mxu0 0.0
      %983 = vmatpush1.msra.mxu0 0.0
      %984 = vmatprep.subr.mxu0 0.0
      %985 = vmatpush1.msra.mxu0 0.0
      %986 = vmatprep.subr.mxu0 0.0
      %987 = vmatpush1.msra.mxu0 0.0
      %988 = vmatprep.subr.mxu0 0.0
      %989 = vmatpush1.msra.mxu0 0.0
      %990 = vmatprep.subr.mxu0 0.0
      %991 = vmatpush1.msra.mxu0 0.0
      %992 = vmatprep.subr.mxu0 0.0
      %993 = vmatpush1.msra.mxu0 0.0
      %994 = vmatprep.subr.mxu0 0.0
      %995 = vmatpush1.msra.mxu0 0.0
      %996 = vmatprep.subr.mxu0 0.0
      %997 = vmatpush1.msra.mxu0 0.0
      %998 = vmatprep.subr.mxu0 0.0
      %999 = vmatpush1.msra.mxu0 0.0
      %1000 = vmatprep.subr.mxu0 0.0
      %1001 = vmatpush1.msra.mxu0 0.0
      %1002 = vmatprep.subr.mxu0 0.0
      %1003 = vmatpush1.msra.mxu0 0.0
      %1004 = vmatprep.subr.mxu0 %v370
      %1005 = vmatpush1.msra.mxu0 %v367
      %1006 = vmatprep.subr.mxu0 %v282
      %1007 = vmatpush1.msra.mxu0 %v281
      %1008 = vmatprep.subr.mxu0 0.0
      %1009 = vmatpush2.msra.mxu0 0.0
      %1010 = vmatprep.subr.mxu0 0.0
      %1011 = vmatpush2.msra.mxu0 0.0
      %1012 = vmatprep.subr.mxu0 0.0
      %1013 = vmatpush2.msra.mxu0 0.0
      %1014 = vmatprep.subr.mxu0 0.0
      %1015 = vmatpush2.msra.mxu0 0.0
      %1016 = vmatprep.subr.mxu0 0.0
      %1017 = vmatpush2.msra.mxu0 0.0
      %1018 = vmatprep.subr.mxu0 0.0
      %1019 = vmatpush2.msra.mxu0 0.0
      %1020 = vmatprep.subr.mxu0 0.0
      %1021 = vmatpush2.msra.mxu0 0.0
      %1022 = vmatprep.subr.mxu0 0.0
      %1023 = vmatpush2.msra.mxu0 0.0
      %1024 = vmatprep.subr.mxu0 0.0
      %1025 = vmatpush2.msra.mxu0 0.0
      %1026 = vmatprep.subr.mxu0 0.0
      %1027 = vmatpush2.msra.mxu0 0.0
      %1028 = vmatprep.subr.mxu0 0.0
      %1029 = vmatpush2.msra.mxu0 0.0
      %1030 = vmatprep.subr.mxu0 0.0
      %1031 = vmatpush2.msra.mxu0 0.0
      %1032 = vmatprep.subr.mxu0 0.0
      %1033 = vmatpush2.msra.mxu0 0.0
      %1034 = vmatprep.subr.mxu0 0.0
      %1035 = vmatpush2.msra.mxu0 0.0
      %1036 = vmatprep.subr.mxu0 0.0
      %1037 = vmatpush2.msra.mxu0 0.0
      %1038 = vmatprep.subr.mxu0 0.0
      %1039 = vmatpush2.msra.mxu0 0.0
      %1040 = vmatprep.mubr.f32.mxu0 0.0
      %1041 = vmatmul.mubr.f32.gmra.mxu0 %v315
      %v1042 = vpop.f32.mrf.mxu0
      %v1043 = vadd.f32 0.0, %v1042
      %v1044 = vpop.f32.mrf.mxu0
      %v1045 = vadd.f32 0.0, %v1044
      %1046 = vdwg.mxu0
      %1047 = vmatprep.subr.mxu0 0.0
      %1048 = vmatpush1.msra.mxu0 0.0
      %1049 = vmatprep.subr.mxu0 0.0
      %1050 = vmatpush1.msra.mxu0 0.0
      %1051 = vmatprep.subr.mxu0 0.0
      %1052 = vmatpush1.msra.mxu0 0.0
      %1053 = vmatprep.subr.mxu0 0.0
      %1054 = vmatpush1.msra.mxu0 0.0
      %1055 = vmatprep.subr.mxu0 0.0
      %1056 = vmatpush1.msra.mxu0 0.0
      %1057 = vmatprep.subr.mxu0 0.0
      %1058 = vmatpush1.msra.mxu0 0.0
      %1059 = vmatprep.subr.mxu0 0.0
      %1060 = vmatpush1.msra.mxu0 0.0
      %1061 = vmatprep.subr.mxu0 0.0
      %1062 = vmatpush1.msra.mxu0 0.0
      %1063 = vmatprep.subr.mxu0 0.0
      %1064 = vmatpush1.msra.mxu0 0.0
      %1065 = vmatprep.subr.mxu0 0.0
      %1066 = vmatpush1.msra.mxu0 0.0
      %1067 = vmatprep.subr.mxu0 0.0
      %1068 = vmatpush1.msra.mxu0 0.0
      %1069 = vmatprep.subr.mxu0 0.0
      %1070 = vmatpush1.msra.mxu0 0.0
      %1071 = vmatprep.subr.mxu0 0.0
      %1072 = vmatpush1.msra.mxu0 0.0
      %1073 = vmatprep.subr.mxu0 0.0
      %1074 = vmatpush1.msra.mxu0 0.0
      %1075 = vmatprep.subr.mxu0 %v376
      %1076 = vmatpush1.msra.mxu0 %v373
      %1077 = vmatprep.subr.mxu0 %v290
      %1078 = vmatpush1.msra.mxu0 %v289
      %1079 = vmatprep.subr.mxu0 0.0
      %1080 = vmatpush2.msra.mxu0 0.0
      %1081 = vmatprep.subr.mxu0 0.0
      %1082 = vmatpush2.msra.mxu0 0.0
      %1083 = vmatprep.subr.mxu0 0.0
      %1084 = vmatpush2.msra.mxu0 0.0
      %1085 = vmatprep.subr.mxu0 0.0
      %1086 = vmatpush2.msra.mxu0 0.0
      %1087 = vmatprep.subr.mxu0 0.0
      %1088 = vmatpush2.msra.mxu0 0.0
      %1089 = vmatprep.subr.mxu0 0.0
      %1090 = vmatpush2.msra.mxu0 0.0
      %1091 = vmatprep.subr.mxu0 0.0
      %1092 = vmatpush2.msra.mxu0 0.0
      %1093 = vmatprep.subr.mxu0 0.0
      %1094 = vmatpush2.msra.mxu0 0.0
      %1095 = vmatprep.subr.mxu0 0.0
      %1096 = vmatpush2.msra.mxu0 0.0
      %1097 = vmatprep.subr.mxu0 0.0
      %1098 = vmatpush2.msra.mxu0 0.0
      %1099 = vmatprep.subr.mxu0 0.0
      %1100 = vmatpush2.msra.mxu0 0.0
      %1101 = vmatprep.subr.mxu0 0.0
      %1102 = vmatpush2.msra.mxu0 0.0
      %1103 = vmatprep.subr.mxu0 0.0
      %1104 = vmatpush2.msra.mxu0 0.0
      %1105 = vmatprep.subr.mxu0 0.0
      %1106 = vmatpush2.msra.mxu0 0.0
      %1107 = vmatprep.subr.mxu0 0.0
      %1108 = vmatpush2.msra.mxu0 0.0
      %1109 = vmatprep.subr.mxu0 0.0
      %1110 = vmatpush2.msra.mxu0 0.0
      %1111 = vmatprep.mubr.f32.mxu0 0.0
      %1112 = vmatmul.mubr.f32.gmra.mxu0 %v315
      %v1113 = vpop.f32.mrf.mxu0
      %v1114 = vadd.f32 0.0, %v1113
      %v1115 = vpop.f32.mrf.mxu0
      %v1116 = vadd.f32 0.0, %v1115
      %1117 = vdwg.mxu0
      %1118 = vmatprep.subr.mxu0 0.0
      %1119 = vmatpush1.msra.mxu0 0.0
      %1120 = vmatprep.subr.mxu0 0.0
      %1121 = vmatpush1.msra.mxu0 0.0
      %1122 = vmatprep.subr.mxu0 0.0
      %1123 = vmatpush1.msra.mxu0 0.0
      %1124 = vmatprep.subr.mxu0 0.0
      %1125 = vmatpush1.msra.mxu0 0.0
      %1126 = vmatprep.subr.mxu0 0.0
      %1127 = vmatpush1.msra.mxu0 0.0
      %1128 = vmatprep.subr.mxu0 0.0
      %1129 = vmatpush1.msra.mxu0 0.0
      %1130 = vmatprep.subr.mxu0 0.0
      %1131 = vmatpush1.msra.mxu0 0.0
      %1132 = vmatprep.subr.mxu0 0.0
      %1133 = vmatpush1.msra.mxu0 0.0
      %1134 = vmatprep.subr.mxu0 0.0
      %1135 = vmatpush1.msra.mxu0 0.0
      %1136 = vmatprep.subr.mxu0 0.0
      %1137 = vmatpush1.msra.mxu0 0.0
      %1138 = vmatprep.subr.mxu0 0.0
      %1139 = vmatpush1.msra.mxu0 0.0
      %1140 = vmatprep.subr.mxu0 0.0
      %1141 = vmatpush1.msra.mxu0 0.0
      %1142 = vmatprep.subr.mxu0 0.0
      %1143 = vmatpush1.msra.mxu0 0.0
      %1144 = vmatprep.subr.mxu0 0.0
      %1145 = vmatpush1.msra.mxu0 0.0
      %1146 = vmatprep.subr.mxu0 %v382
      %1147 = vmatpush1.msra.mxu0 %v379
      %1148 = vmatprep.subr.mxu0 %v292
      %1149 = vmatpush1.msra.mxu0 %v291
      %1150 = vmatprep.subr.mxu0 0.0
      %1151 = vmatpush2.msra.mxu0 0.0
      %1152 = vmatprep.subr.mxu0 0.0
      %1153 = vmatpush2.msra.mxu0 0.0
      %1154 = vmatprep.subr.mxu0 0.0
      %1155 = vmatpush2.msra.mxu0 0.0
      %1156 = vmatprep.subr.mxu0 0.0
      %1157 = vmatpush2.msra.mxu0 0.0
      %1158 = vmatprep.subr.mxu0 0.0
      %1159 = vmatpush2.msra.mxu0 0.0
      %1160 = vmatprep.subr.mxu0 0.0
      %1161 = vmatpush2.msra.mxu0 0.0
      %1162 = vmatprep.subr.mxu0 0.0
      %1163 = vmatpush2.msra.mxu0 0.0
      %1164 = vmatprep.subr.mxu0 0.0
      %1165 = vmatpush2.msra.mxu0 0.0
      %1166 = vmatprep.subr.mxu0 0.0
      %1167 = vmatpush2.msra.mxu0 0.0
      %1168 = vmatprep.subr.mxu0 0.0
      %1169 = vmatpush2.msra.mxu0 0.0
      %1170 = vmatprep.subr.mxu0 0.0
      %1171 = vmatpush2.msra.mxu0 0.0
      %1172 = vmatprep.subr.mxu0 0.0
      %1173 = vmatpush2.msra.mxu0 0.0
      %1174 = vmatprep.subr.mxu0 0.0
      %1175 = vmatpush2.msra.mxu0 0.0
      %1176 = vmatprep.subr.mxu0 0.0
      %1177 = vmatpush2.msra.mxu0 0.0
      %1178 = vmatprep.subr.mxu0 0.0
      %1179 = vmatpush2.msra.mxu0 0.0
      %1180 = vmatprep.subr.mxu0 0.0
      %1181 = vmatpush2.msra.mxu0 0.0
      %1182 = vmatprep.mubr.f32.mxu0 0.0
      %1183 = vmatmul.mubr.f32.gmra.mxu0 %v315
      %v1184 = vpop.f32.mrf.mxu0
      %v1185 = vadd.f32 0.0, %v1184
      %v1186 = vpop.f32.mrf.mxu0
      %v1187 = vadd.f32 0.0, %v1186
      %1188 = vdwg.mxu0
      %1189 = vmatprep.subr.mxu0 0.0
      %1190 = vmatpush1.msra.mxu0 0.0
      %1191 = vmatprep.subr.mxu0 0.0
      %1192 = vmatpush1.msra.mxu0 0.0
      %1193 = vmatprep.subr.mxu0 0.0
      %1194 = vmatpush1.msra.mxu0 0.0
      %1195 = vmatprep.subr.mxu0 0.0
      %1196 = vmatpush1.msra.mxu0 0.0
      %1197 = vmatprep.subr.mxu0 0.0
      %1198 = vmatpush1.msra.mxu0 0.0
      %1199 = vmatprep.subr.mxu0 0.0
      %1200 = vmatpush1.msra.mxu0 0.0
      %1201 = vmatprep.subr.mxu0 0.0
      %1202 = vmatpush1.msra.mxu0 0.0
      %1203 = vmatprep.subr.mxu0 0.0
      %1204 = vmatpush1.msra.mxu0 0.0
      %1205 = vmatprep.subr.mxu0 0.0
      %1206 = vmatpush1.msra.mxu0 0.0
      %1207 = vmatprep.subr.mxu0 0.0
      %1208 = vmatpush1.msra.mxu0 0.0
      %1209 = vmatprep.subr.mxu0 0.0
      %1210 = vmatpush1.msra.mxu0 0.0
      %1211 = vmatprep.subr.mxu0 0.0
      %1212 = vmatpush1.msra.mxu0 0.0
      %1213 = vmatprep.subr.mxu0 0.0
      %1214 = vmatpush1.msra.mxu0 0.0
      %1215 = vmatprep.subr.mxu0 0.0
      %1216 = vmatpush1.msra.mxu0 0.0
      %1217 = vmatprep.subr.mxu0 %v388
      %1218 = vmatpush1.msra.mxu0 %v385
      %1219 = vmatprep.subr.mxu0 %v294
      %1220 = vmatpush1.msra.mxu0 %v293
      %1221 = vmatprep.subr.mxu0 0.0
      %1222 = vmatpush2.msra.mxu0 0.0
      %1223 = vmatprep.subr.mxu0 0.0
      %1224 = vmatpush2.msra.mxu0 0.0
      %1225 = vmatprep.subr.mxu0 0.0
      %1226 = vmatpush2.msra.mxu0 0.0
      %1227 = vmatprep.subr.mxu0 0.0
      %1228 = vmatpush2.msra.mxu0 0.0
      %1229 = vmatprep.subr.mxu0 0.0
      %1230 = vmatpush2.msra.mxu0 0.0
      %1231 = vmatprep.subr.mxu0 0.0
      %1232 = vmatpush2.msra.mxu0 0.0
      %1233 = vmatprep.subr.mxu0 0.0
      %1234 = vmatpush2.msra.mxu0 0.0
      %1235 = vmatprep.subr.mxu0 0.0
      %1236 = vmatpush2.msra.mxu0 0.0
      %1237 = vmatprep.subr.mxu0 0.0
      %1238 = vmatpush2.msra.mxu0 0.0
      %1239 = vmatprep.subr.mxu0 0.0
      %1240 = vmatpush2.msra.mxu0 0.0
      %1241 = vmatprep.subr.mxu0 0.0
      %1242 = vmatpush2.msra.mxu0 0.0
      %1243 = vmatprep.subr.mxu0 0.0
      %1244 = vmatpush2.msra.mxu0 0.0
      %1245 = vmatprep.subr.mxu0 0.0
      %1246 = vmatpush2.msra.mxu0 0.0
      %1247 = vmatprep.subr.mxu0 0.0
      %1248 = vmatpush2.msra.mxu0 0.0
      %1249 = vmatprep.subr.mxu0 0.0
      %1250 = vmatpush2.msra.mxu0 0.0
      %1251 = vmatprep.subr.mxu0 0.0
      %1252 = vmatpush2.msra.mxu0 0.0
      %1253 = vmatprep.mubr.f32.mxu0 0.0
      %1254 = vmatmul.mubr.f32.gmra.mxu0 %v315
      %v1255 = vpop.f32.mrf.mxu0
      %v1256 = vadd.f32 0.0, %v1255
      %v1257 = vpop.f32.mrf.mxu0
      %v1258 = vadd.f32 0.0, %v1257
      %1259 = vdwg.mxu0
      %1260 = vmatprep.subr.mxu0 0.0
      %1261 = vmatpush1.msra.mxu0 0.0
      %1262 = vmatprep.subr.mxu0 0.0
      %1263 = vmatpush1.msra.mxu0 0.0
      %1264 = vmatprep.subr.mxu0 0.0
      %1265 = vmatpush1.msra.mxu0 0.0
      %1266 = vmatprep.subr.mxu0 0.0
      %1267 = vmatpush1.msra.mxu0 0.0
      %1268 = vmatprep.subr.mxu0 0.0
      %1269 = vmatpush1.msra.mxu0 0.0
      %1270 = vmatprep.subr.mxu0 0.0
      %1271 = vmatpush1.msra.mxu0 0.0
      %1272 = vmatprep.subr.mxu0 0.0
      %1273 = vmatpush1.msra.mxu0 0.0
      %1274 = vmatprep.subr.mxu0 0.0
      %1275 = vmatpush1.msra.mxu0 0.0
      %1276 = vmatprep.subr.mxu0 0.0
      %1277 = vmatpush1.msra.mxu0 0.0
      %1278 = vmatprep.subr.mxu0 0.0
      %1279 = vmatpush1.msra.mxu0 0.0
      %1280 = vmatprep.subr.mxu0 0.0
      %1281 = vmatpush1.msra.mxu0 0.0
      %1282 = vmatprep.subr.mxu0 0.0
      %1283 = vmatpush1.msra.mxu0 0.0
      %1284 = vmatprep.subr.mxu0 0.0
      %1285 = vmatpush1.msra.mxu0 0.0
      %1286 = vmatprep.subr.mxu0 0.0
      %1287 = vmatpush1.msra.mxu0 0.0
      %1288 = vmatprep.subr.mxu0 %v394
      %1289 = vmatpush1.msra.mxu0 %v391
      %1290 = vmatprep.subr.mxu0 %v302
      %1291 = vmatpush1.msra.mxu0 %v301
      %1292 = vmatprep.subr.mxu0 0.0
      %1293 = vmatpush2.msra.mxu0 0.0
      %1294 = vmatprep.subr.mxu0 0.0
      %1295 = vmatpush2.msra.mxu0 0.0
      %1296 = vmatprep.subr.mxu0 0.0
      %1297 = vmatpush2.msra.mxu0 0.0
      %1298 = vmatprep.subr.mxu0 0.0
      %1299 = vmatpush2.msra.mxu0 0.0
      %1300 = vmatprep.subr.mxu0 0.0
      %1301 = vmatpush2.msra.mxu0 0.0
      %1302 = vmatprep.subr.mxu0 0.0
      %1303 = vmatpush2.msra.mxu0 0.0
      %1304 = vmatprep.subr.mxu0 0.0
      %1305 = vmatpush2.msra.mxu0 0.0
      %1306 = vmatprep.subr.mxu0 0.0
      %1307 = vmatpush2.msra.mxu0 0.0
      %1308 = vmatprep.subr.mxu0 0.0
      %1309 = vmatpush2.msra.mxu0 0.0
      %1310 = vmatprep.subr.mxu0 0.0
      %1311 = vmatpush2.msra.mxu0 0.0
      %1312 = vmatprep.subr.mxu0 0.0
      %1313 = vmatpush2.msra.mxu0 0.0
      %1314 = vmatprep.subr.mxu0 0.0
      %1315 = vmatpush2.msra.mxu0 0.0
      %1316 = vmatprep.subr.mxu0 0.0
      %1317 = vmatpush2.msra.mxu0 0.0
      %1318 = vmatprep.subr.mxu0 0.0
      %1319 = vmatpush2.msra.mxu0 0.0
      %1320 = vmatprep.subr.mxu0 0.0
      %1321 = vmatpush2.msra.mxu0 0.0
      %1322 = vmatprep.subr.mxu0 0.0
      %1323 = vmatpush2.msra.mxu0 0.0
      %1324 = vmatprep.mubr.f32.mxu0 0.0
      %1325 = vmatmul.mubr.f32.gmra.mxu0 %v315
      %v1326 = vpop.f32.mrf.mxu0
      %v1327 = vadd.f32 0.0, %v1326
      %v1328 = vpop.f32.mrf.mxu0
      %v1329 = vadd.f32 0.0, %v1328
      %1330 = vdwg.mxu0
      %1331 = vmatprep.subr.mxu0 0.0
      %1332 = vmatpush1.msra.mxu0 0.0
      %1333 = vmatprep.subr.mxu0 0.0
      %1334 = vmatpush1.msra.mxu0 0.0
      %1335 = vmatprep.subr.mxu0 0.0
      %1336 = vmatpush1.msra.mxu0 0.0
      %1337 = vmatprep.subr.mxu0 0.0
      %1338 = vmatpush1.msra.mxu0 0.0
      %1339 = vmatprep.subr.mxu0 0.0
      %1340 = vmatpush1.msra.mxu0 0.0
      %1341 = vmatprep.subr.mxu0 0.0
      %1342 = vmatpush1.msra.mxu0 0.0
      %1343 = vmatprep.subr.mxu0 0.0
      %1344 = vmatpush1.msra.mxu0 0.0
      %1345 = vmatprep.subr.mxu0 0.0
      %1346 = vmatpush1.msra.mxu0 0.0
      %1347 = vmatprep.subr.mxu0 0.0
      %1348 = vmatpush1.msra.mxu0 0.0
      %1349 = vmatprep.subr.mxu0 0.0
      %1350 = vmatpush1.msra.mxu0 0.0
      %1351 = vmatprep.subr.mxu0 0.0
      %1352 = vmatpush1.msra.mxu0 0.0
      %1353 = vmatprep.subr.mxu0 0.0
      %1354 = vmatpush1.msra.mxu0 0.0
      %1355 = vmatprep.subr.mxu0 0.0
      %1356 = vmatpush1.msra.mxu0 0.0
      %1357 = vmatprep.subr.mxu0 0.0
      %1358 = vmatpush1.msra.mxu0 0.0
      %1359 = vmatprep.subr.mxu0 %v400
      %1360 = vmatpush1.msra.mxu0 %v397
      %1361 = vmatprep.subr.mxu0 %v304
      %1362 = vmatpush1.msra.mxu0 %v303
      %1363 = vmatprep.subr.mxu0 0.0
      %1364 = vmatpush2.msra.mxu0 0.0
      %1365 = vmatprep.subr.mxu0 0.0
      %1366 = vmatpush2.msra.mxu0 0.0
      %1367 = vmatprep.subr.mxu0 0.0
      %1368 = vmatpush2.msra.mxu0 0.0
      %1369 = vmatprep.subr.mxu0 0.0
      %1370 = vmatpush2.msra.mxu0 0.0
      %1371 = vmatprep.subr.mxu0 0.0
      %1372 = vmatpush2.msra.mxu0 0.0
      %1373 = vmatprep.subr.mxu0 0.0
      %1374 = vmatpush2.msra.mxu0 0.0
      %1375 = vmatprep.subr.mxu0 0.0
      %1376 = vmatpush2.msra.mxu0 0.0
      %1377 = vmatprep.subr.mxu0 0.0
      %1378 = vmatpush2.msra.mxu0 0.0
      %1379 = vmatprep.subr.mxu0 0.0
      %1380 = vmatpush2.msra.mxu0 0.0
      %1381 = vmatprep.subr.mxu0 0.0
      %1382 = vmatpush2.msra.mxu0 0.0
      %1383 = vmatprep.subr.mxu0 0.0
      %1384 = vmatpush2.msra.mxu0 0.0
      %1385 = vmatprep.subr.mxu0 0.0
      %1386 = vmatpush2.msra.mxu0 0.0
      %1387 = vmatprep.subr.mxu0 0.0
      %1388 = vmatpush2.msra.mxu0 0.0
      %1389 = vmatprep.subr.mxu0 0.0
      %1390 = vmatpush2.msra.mxu0 0.0
      %1391 = vmatprep.subr.mxu0 0.0
      %1392 = vmatpush2.msra.mxu0 0.0
      %1393 = vmatprep.subr.mxu0 0.0
      %1394 = vmatpush2.msra.mxu0 0.0
      %1395 = vmatprep.mubr.f32.mxu0 0.0
      %1396 = vmatmul.mubr.f32.gmra.mxu0 %v315
      %v1397 = vpop.f32.mrf.mxu0
      %v1398 = vadd.f32 0.0, %v1397
      %v1399 = vpop.f32.mrf.mxu0
      %v1400 = vadd.f32 0.0, %v1399
      %1401 = vdwg.mxu0
      %1402 = vmatprep.subr.mxu0 0.0
      %1403 = vmatpush1.msra.mxu0 0.0
      %1404 = vmatprep.subr.mxu0 0.0
      %1405 = vmatpush1.msra.mxu0 0.0
      %1406 = vmatprep.subr.mxu0 0.0
      %1407 = vmatpush1.msra.mxu0 0.0
      %1408 = vmatprep.subr.mxu0 0.0
      %1409 = vmatpush1.msra.mxu0 0.0
      %1410 = vmatprep.subr.mxu0 0.0
      %1411 = vmatpush1.msra.mxu0 0.0
      %1412 = vmatprep.subr.mxu0 0.0
      %1413 = vmatpush1.msra.mxu0 0.0
      %1414 = vmatprep.subr.mxu0 0.0
      %1415 = vmatpush1.msra.mxu0 0.0
      %1416 = vmatprep.subr.mxu0 0.0
      %1417 = vmatpush1.msra.mxu0 0.0
      %1418 = vmatprep.subr.mxu0 0.0
      %1419 = vmatpush1.msra.mxu0 0.0
      %1420 = vmatprep.subr.mxu0 0.0
      %1421 = vmatpush1.msra.mxu0 0.0
      %1422 = vmatprep.subr.mxu0 0.0
      %1423 = vmatpush1.msra.mxu0 0.0
      %1424 = vmatprep.subr.mxu0 0.0
      %1425 = vmatpush1.msra.mxu0 0.0
      %1426 = vmatprep.subr.mxu0 0.0
      %1427 = vmatpush1.msra.mxu0 0.0
      %1428 = vmatprep.subr.mxu0 0.0
      %1429 = vmatpush1.msra.mxu0 0.0
      %1430 = vmatprep.subr.mxu0 %v406
      %1431 = vmatpush1.msra.mxu0 %v403
      %1432 = vmatprep.subr.mxu0 %v306
      %1433 = vmatpush1.msra.mxu0 %v305
      %1434 = vmatprep.subr.mxu0 0.0
      %1435 = vmatpush2.msra.mxu0 0.0
      %1436 = vmatprep.subr.mxu0 0.0
      %1437 = vmatpush2.msra.mxu0 0.0
      %1438 = vmatprep.subr.mxu0 0.0
      %1439 = vmatpush2.msra.mxu0 0.0
      %1440 = vmatprep.subr.mxu0 0.0
      %1441 = vmatpush2.msra.mxu0 0.0
      %1442 = vmatprep.subr.mxu0 0.0
      %1443 = vmatpush2.msra.mxu0 0.0
      %1444 = vmatprep.subr.mxu0 0.0
      %1445 = vmatpush2.msra.mxu0 0.0
      %1446 = vmatprep.subr.mxu0 0.0
      %1447 = vmatpush2.msra.mxu0 0.0
      %1448 = vmatprep.subr.mxu0 0.0
      %1449 = vmatpush2.msra.mxu0 0.0
      %1450 = vmatprep.subr.mxu0 0.0
      %1451 = vmatpush2.msra.mxu0 0.0
      %1452 = vmatprep.subr.mxu0 0.0
      %1453 = vmatpush2.msra.mxu0 0.0
      %1454 = vmatprep.subr.mxu0 0.0
      %1455 = vmatpush2.msra.mxu0 0.0
      %1456 = vmatprep.subr.mxu0 0.0
      %1457 = vmatpush2.msra.mxu0 0.0
      %1458 = vmatprep.subr.mxu0 0.0
      %1459 = vmatpush2.msra.mxu0 0.0
      %1460 = vmatprep.subr.mxu0 0.0
      %1461 = vmatpush2.msra.mxu0 0.0
      %1462 = vmatprep.subr.mxu0 0.0
      %1463 = vmatpush2.msra.mxu0 0.0
      %1464 = vmatprep.subr.mxu0 0.0
      %1465 = vmatpush2.msra.mxu0 0.0
      %1466 = vmatprep.mubr.f32.mxu0 0.0
      %1467 = vmatmul.mubr.f32.gmra.mxu0 %v315
      %v1468 = vpop.f32.mrf.mxu0
      %v1469 = vadd.f32 0.0, %v1468
      %v1470 = vpop.f32.mrf.mxu0
      %v1471 = vadd.f32 0.0, %v1470
      %1472 = vdwg.mxu0
      %v1473 = vmul.f32 %v475, 0.120078385
      %v1474 = vmul.f32 %v477, 0.120078385
      %v1475 = vmul.f32 %v546, 0.120078385
      %v1476 = vmul.f32 %v548, 0.120078385
      %v1477 = vmul.f32 %v617, 0.120078385
      %v1478 = vmul.f32 %v619, 0.120078385
      %v1479 = vmul.f32 %v688, 0.120078385
      %v1480 = vmul.f32 %v690, 0.120078385
      %v1481 = vmul.f32 %v759, 0.120078385
      %v1482 = vmul.f32 %v761, 0.120078385
      %v1483 = vmul.f32 %v830, 0.120078385
      %v1484 = vmul.f32 %v832, 0.120078385
      %v1485 = vmul.f32 %v901, 0.120078385
      %v1486 = vmul.f32 %v903, 0.120078385
      %v1487 = vmul.f32 %v972, 0.120078385
      %v1488 = vmul.f32 %v974, 0.120078385
      %v1489 = vmul.f32 %v1043, 0.120078385
      %v1490 = vmul.f32 %v1045, 0.120078385
      %v1491 = vmul.f32 %v1114, 0.120078385
      %v1492 = vmul.f32 %v1116, 0.120078385
      %v1493 = vmul.f32 %v1185, 0.120078385
      %v1494 = vmul.f32 %v1187, 0.120078385
      %v1495 = vmul.f32 %v1256, 0.120078385
      %v1496 = vmul.f32 %v1258, 0.120078385
      %v1497 = vmul.f32 %v1327, 0.120078385
      %v1498 = vmul.f32 %v1329, 0.120078385
      %v1499 = vmul.f32 %v1398, 0.120078385
      %v1500 = vmul.f32 %v1400, 0.120078385
      %v1501 = vmul.f32 %v1469, 0.120078385
      %v1502 = vmul.f32 %v1471, 0.120078385
      %1503 = vrot.lane.b32.xlu0 %v475, 127
      %v1504 = vpop.permute.xlu0 %1503
      %1505 = vrot.lane.b32.xlu0 %v477, 127
      %v1506 = vpop.permute.xlu0 %1505
      %1507 = vrot.lane.b32.xlu0 %v546, 127
      %v1508 = vpop.permute.xlu0 %1507
      %1509 = vrot.lane.b32.xlu0 %v548, 127
      %v1510 = vpop.permute.xlu0 %1509
      %1511 = vrot.lane.b32.xlu0 %v617, 127
      %v1512 = vpop.permute.xlu0 %1511
      %1513 = vrot.lane.b32.xlu0 %v619, 127
      %v1514 = vpop.permute.xlu0 %1513
      %1515 = vrot.lane.b32.xlu0 %v688, 127
      %v1516 = vpop.permute.xlu0 %1515
      %1517 = vrot.lane.b32.xlu0 %v690, 127
      %v1518 = vpop.permute.xlu0 %1517
      %1519 = vrot.lane.b32.xlu0 %v759, 127
      %v1520 = vpop.permute.xlu0 %1519
      %1521 = vrot.lane.b32.xlu0 %v761, 127
      %v1522 = vpop.permute.xlu0 %1521
      %1523 = vrot.lane.b32.xlu0 %v830, 127
      %v1524 = vpop.permute.xlu0 %1523
      %1525 = vrot.lane.b32.xlu0 %v832, 127
      %v1526 = vpop.permute.xlu0 %1525
      %1527 = vrot.lane.b32.xlu0 %v901, 127
      %v1528 = vpop.permute.xlu0 %1527
      %1529 = vrot.lane.b32.xlu0 %v903, 127
      %v1530 = vpop.permute.xlu0 %1529
      %1531 = vrot.lane.b32.xlu0 %v972, 127
      %v1532 = vpop.permute.xlu0 %1531
      %1533 = vrot.lane.b32.xlu0 %v974, 127
      %v1534 = vpop.permute.xlu0 %1533
      %1535 = vrot.lane.b32.xlu0 %v1043, 127
      %v1536 = vpop.permute.xlu0 %1535
      %1537 = vrot.lane.b32.xlu0 %v1045, 127
      %v1538 = vpop.permute.xlu0 %1537
      %1539 = vrot.lane.b32.xlu0 %v1114, 127
      %v1540 = vpop.permute.xlu0 %1539
      %1541 = vrot.lane.b32.xlu0 %v1116, 127
      %v1542 = vpop.permute.xlu0 %1541
      %1543 = vrot.lane.b32.xlu0 %v1185, 127
      %v1544 = vpop.permute.xlu0 %1543
      %1545 = vrot.lane.b32.xlu0 %v1187, 127
      %v1546 = vpop.permute.xlu0 %1545
      %1547 = vrot.lane.b32.xlu0 %v1256, 127
      %v1548 = vpop.permute.xlu0 %1547
      %1549 = vrot.lane.b32.xlu0 %v1258, 127
      %v1550 = vpop.permute.xlu0 %1549
      %1551 = vrot.lane.b32.xlu0 %v1327, 127
      %v1552 = vpop.permute.xlu0 %1551
      %1553 = vrot.lane.b32.xlu0 %v1329, 127
      %v1554 = vpop.permute.xlu0 %1553
      %1555 = vrot.lane.b32.xlu0 %v1398, 127
      %v1556 = vpop.permute.xlu0 %1555
      %1557 = vrot.lane.b32.xlu0 %v1400, 127
      %v1558 = vpop.permute.xlu0 %1557
      %1559 = vrot.lane.b32.xlu0 %v1469, 127
      %v1560 = vpop.permute.xlu0 %1559
      %1561 = vrot.lane.b32.xlu0 %v1471, 127
      %v1562 = vpop.permute.xlu0 %1561
      %v1563 = vlaneseq
      %v1564 = vand.u32 %v1563, 127
      %vm1565 = vcmp.lt.s32.totalorder %v1564, 127
      %v1566 = vsel %vm1565, %v1560, %v1562
      %v1567 = vsel %vm1565, %v1558, %v1560
      %v1568 = vsel %vm1565, %v1556, %v1558
      %v1569 = vsel %vm1565, %v1554, %v1556
      %v1570 = vsel %vm1565, %v1552, %v1554
      %v1571 = vsel %vm1565, %v1550, %v1552
      %v1572 = vsel %vm1565, %v1548, %v1550
      %v1573 = vsel %vm1565, %v1546, %v1548
      %v1574 = vsel %vm1565, %v1544, %v1546
      %v1575 = vsel %vm1565, %v1542, %v1544
      %v1576 = vsel %vm1565, %v1540, %v1542
      %v1577 = vsel %vm1565, %v1538, %v1540
      %v1578 = vsel %vm1565, %v1536, %v1538
      %v1579 = vsel %vm1565, %v1534, %v1536
      %v1580 = vsel %vm1565, %v1532, %v1534
      %v1581 = vsel %vm1565, %v1530, %v1532
      %v1582 = vsel %vm1565, %v1528, %v1530
      %v1583 = vsel %vm1565, %v1526, %v1528
      %v1584 = vsel %vm1565, %v1524, %v1526
      %v1585 = vsel %vm1565, %v1522, %v1524
      %v1586 = vsel %vm1565, %v1520, %v1522
      %v1587 = vsel %vm1565, %v1518, %v1520
      %v1588 = vsel %vm1565, %v1516, %v1518
      %v1589 = vsel %vm1565, %v1514, %v1516
      %v1590 = vsel %vm1565, %v1512, %v1514
      %v1591 = vsel %vm1565, %v1510, %v1512
      %v1592 = vsel %vm1565, %v1508, %v1510
      %v1593 = vsel %vm1565, %v1506, %v1508
      %v1594 = vsel %vm1565, %v1504, %v1506
      %v1595 = vsel %vm1565, %v1562, %v1504
      %v1596 = vmul.f32 %v1594, 0.23388076
      %v1597 = vmul.f32 %v1593, 0.23388076
      %v1598 = vmul.f32 %v1592, 0.23388076
      %v1599 = vmul.f32 %v1591, 0.23388076
      %v1600 = vmul.f32 %v1590, 0.23388076
      %v1601 = vmul.f32 %v1589, 0.23388076
      %v1602 = vmul.f32 %v1588, 0.23388076
      %v1603 = vmul.f32 %v1587, 0.23388076
      %v1604 = vmul.f32 %v1586, 0.23388076
      %v1605 = vmul.f32 %v1585, 0.23388076
      %v1606 = vmul.f32 %v1584, 0.23388076
      %v1607 = vmul.f32 %v1583, 0.23388076
      %v1608 = vmul.f32 %v1582, 0.23388076
      %v1609 = vmul.f32 %v1581, 0.23388076
      %v1610 = vmul.f32 %v1580, 0.23388076
      %v1611 = vmul.f32 %v1579, 0.23388076
      %v1612 = vmul.f32 %v1578, 0.23388076
      %v1613 = vmul.f32 %v1577, 0.23388076
      %v1614 = vmul.f32 %v1576, 0.23388076
      %v1615 = vmul.f32 %v1575, 0.23388076
      %v1616 = vmul.f32 %v1574, 0.23388076
      %v1617 = vmul.f32 %v1573, 0.23388076
      %v1618 = vmul.f32 %v1572, 0.23388076
      %v1619 = vmul.f32 %v1571, 0.23388076
      %v1620 = vmul.f32 %v1570, 0.23388076
      %v1621 = vmul.f32 %v1569, 0.23388076
      %v1622 = vmul.f32 %v1568, 0.23388076
      %v1623 = vmul.f32 %v1567, 0.23388076
      %v1624 = vmul.f32 %v1566, 0.23388076
      %v1625 = vmul.f32 %v1595, 0.23388076
      %v1626 = vadd.f32 %v1473, %v1596
      %v1627 = vadd.f32 %v1474, %v1597
      %v1628 = vadd.f32 %v1475, %v1598
      %v1629 = vadd.f32 %v1476, %v1599
      %v1630 = vadd.f32 %v1477, %v1600
      %v1631 = vadd.f32 %v1478, %v1601
      %v1632 = vadd.f32 %v1479, %v1602
      %v1633 = vadd.f32 %v1480, %v1603
      %v1634 = vadd.f32 %v1481, %v1604
      %v1635 = vadd.f32 %v1482, %v1605
      %v1636 = vadd.f32 %v1483, %v1606
      %v1637 = vadd.f32 %v1484, %v1607
      %v1638 = vadd.f32 %v1485, %v1608
      %v1639 = vadd.f32 %v1486, %v1609
      %v1640 = vadd.f32 %v1487, %v1610
      %v1641 = vadd.f32 %v1488, %v1611
      %v1642 = vadd.f32 %v1489, %v1612
      %v1643 = vadd.f32 %v1490, %v1613
      %v1644 = vadd.f32 %v1491, %v1614
      %v1645 = vadd.f32 %v1492, %v1615
      %v1646 = vadd.f32 %v1493, %v1616
      %v1647 = vadd.f32 %v1494, %v1617
      %v1648 = vadd.f32 %v1495, %v1618
      %v1649 = vadd.f32 %v1496, %v1619
      %v1650 = vadd.f32 %v1497, %v1620
      %v1651 = vadd.f32 %v1498, %v1621
      %v1652 = vadd.f32 %v1499, %v1622
      %v1653 = vadd.f32 %v1500, %v1623
      %v1654 = vadd.f32 %v1501, %v1624
      %v1655 = vadd.f32 %v1502, %v1625
      %1656 = vrot.lane.b32.xlu0 %v475, 126
      %v1657 = vpop.permute.xlu0 %1656
      %1658 = vrot.lane.b32.xlu0 %v477, 126
      %v1659 = vpop.permute.xlu0 %1658
      %1660 = vrot.lane.b32.xlu0 %v546, 126
      %v1661 = vpop.permute.xlu0 %1660
      %1662 = vrot.lane.b32.xlu0 %v548, 126
      %v1663 = vpop.permute.xlu0 %1662
      %1664 = vrot.lane.b32.xlu0 %v617, 126
      %v1665 = vpop.permute.xlu0 %1664
      %1666 = vrot.lane.b32.xlu0 %v619, 126
      %v1667 = vpop.permute.xlu0 %1666
      %1668 = vrot.lane.b32.xlu0 %v688, 126
      %v1669 = vpop.permute.xlu0 %1668
      %1670 = vrot.lane.b32.xlu0 %v690, 126
      %v1671 = vpop.permute.xlu0 %1670
      %1672 = vrot.lane.b32.xlu0 %v759, 126
      %v1673 = vpop.permute.xlu0 %1672
      %1674 = vrot.lane.b32.xlu0 %v761, 126
      %v1675 = vpop.permute.xlu0 %1674
      %1676 = vrot.lane.b32.xlu0 %v830, 126
      %v1677 = vpop.permute.xlu0 %1676
      %1678 = vrot.lane.b32.xlu0 %v832, 126
      %v1679 = vpop.permute.xlu0 %1678
      %1680 = vrot.lane.b32.xlu0 %v901, 126
      %v1681 = vpop.permute.xlu0 %1680
      %1682 = vrot.lane.b32.xlu0 %v903, 126
      %v1683 = vpop.permute.xlu0 %1682
      %1684 = vrot.lane.b32.xlu0 %v972, 126
      %v1685 = vpop.permute.xlu0 %1684
      %1686 = vrot.lane.b32.xlu0 %v974, 126
      %v1687 = vpop.permute.xlu0 %1686
      %1688 = vrot.lane.b32.xlu0 %v1043, 126
      %v1689 = vpop.permute.xlu0 %1688
      %1690 = vrot.lane.b32.xlu0 %v1045, 126
      %v1691 = vpop.permute.xlu0 %1690
      %1692 = vrot.lane.b32.xlu0 %v1114, 126
      %v1693 = vpop.permute.xlu0 %1692
      %1694 = vrot.lane.b32.xlu0 %v1116, 126
      %v1695 = vpop.permute.xlu0 %1694
      %1696 = vrot.lane.b32.xlu0 %v1185, 126
      %v1697 = vpop.permute.xlu0 %1696
      %1698 = vrot.lane.b32.xlu0 %v1187, 126
      %v1699 = vpop.permute.xlu0 %1698
      %1700 = vrot.lane.b32.xlu0 %v1256, 126
      %v1701 = vpop.permute.xlu0 %1700
      %1702 = vrot.lane.b32.xlu0 %v1258, 126
      %v1703 = vpop.permute.xlu0 %1702
      %1704 = vrot.lane.b32.xlu0 %v1327, 126
      %v1705 = vpop.permute.xlu0 %1704
      %1706 = vrot.lane.b32.xlu0 %v1329, 126
      %v1707 = vpop.permute.xlu0 %1706
      %1708 = vrot.lane.b32.xlu0 %v1398, 126
      %v1709 = vpop.permute.xlu0 %1708
      %1710 = vrot.lane.b32.xlu0 %v1400, 126
      %v1711 = vpop.permute.xlu0 %1710
      %1712 = vrot.lane.b32.xlu0 %v1469, 126
      %v1713 = vpop.permute.xlu0 %1712
      %1714 = vrot.lane.b32.xlu0 %v1471, 126
      %v1715 = vpop.permute.xlu0 %1714
      %vm1716 = vcmp.lt.s32.totalorder %v1564, 126
      %v1717 = vsel %vm1716, %v1713, %v1715
      %v1718 = vsel %vm1716, %v1711, %v1713
      %v1719 = vsel %vm1716, %v1709, %v1711
      %v1720 = vsel %vm1716, %v1707, %v1709
      %v1721 = vsel %vm1716, %v1705, %v1707
      %v1722 = vsel %vm1716, %v1703, %v1705
      %v1723 = vsel %vm1716, %v1701, %v1703
      %v1724 = vsel %vm1716, %v1699, %v1701
      %v1725 = vsel %vm1716, %v1697, %v1699
      %v1726 = vsel %vm1716, %v1695, %v1697
      %v1727 = vsel %vm1716, %v1693, %v1695
      %v1728 = vsel %vm1716, %v1691, %v1693
      %v1729 = vsel %vm1716, %v1689, %v1691
      %v1730 = vsel %vm1716, %v1687, %v1689
      %v1731 = vsel %vm1716, %v1685, %v1687
      %v1732 = vsel %vm1716, %v1683, %v1685
      %v1733 = vsel %vm1716, %v1681, %v1683
      %v1734 = vsel %vm1716, %v1679, %v1681
      %v1735 = vsel %vm1716, %v1677, %v1679
      %v1736 = vsel %vm1716, %v1675, %v1677
      %v1737 = vsel %vm1716, %v1673, %v1675
      %v1738 = vsel %vm1716, %v1671, %v1673
      %v1739 = vsel %vm1716, %v1669, %v1671
      %v1740 = vsel %vm1716, %v1667, %v1669
      %v1741 = vsel %vm1716, %v1665, %v1667
      %v1742 = vsel %vm1716, %v1663, %v1665
      %v1743 = vsel %vm1716, %v1661, %v1663
      %v1744 = vsel %vm1716, %v1659, %v1661
      %v1745 = vsel %vm1716, %v1657, %v1659
      %v1746 = vsel %vm1716, %v1715, %v1657
      %v1747 = vmul.f32 %v1745, 0.2920817
      %v1748 = vmul.f32 %v1744, 0.2920817
      %v1749 = vmul.f32 %v1743, 0.2920817
      %v1750 = vmul.f32 %v1742, 0.2920817
      %v1751 = vmul.f32 %v1741, 0.2920817
      %v1752 = vmul.f32 %v1740, 0.2920817
      %v1753 = vmul.f32 %v1739, 0.2920817
      %v1754 = vmul.f32 %v1738, 0.2920817
      %v1755 = vmul.f32 %v1737, 0.2920817
      %v1756 = vmul.f32 %v1736, 0.2920817
      %v1757 = vmul.f32 %v1735, 0.2920817
      %v1758 = vmul.f32 %v1734, 0.2920817
      %v1759 = vmul.f32 %v1733, 0.2920817
      %v1760 = vmul.f32 %v1732, 0.2920817
      %v1761 = vmul.f32 %v1731, 0.2920817
      %v1762 = vmul.f32 %v1730, 0.2920817
      %v1763 = vmul.f32 %v1729, 0.2920817
      %v1764 = vmul.f32 %v1728, 0.2920817
      %v1765 = vmul.f32 %v1727, 0.2920817
      %v1766 = vmul.f32 %v1726, 0.2920817
      %v1767 = vmul.f32 %v1725, 0.2920817
      %v1768 = vmul.f32 %v1724, 0.2920817
      %v1769 = vmul.f32 %v1723, 0.2920817
      %v1770 = vmul.f32 %v1722, 0.2920817
      %v1771 = vmul.f32 %v1721, 0.2920817
      %v1772 = vmul.f32 %v1720, 0.2920817
      %v1773 = vmul.f32 %v1719, 0.2920817
      %v1774 = vmul.f32 %v1718, 0.2920817
      %v1775 = vmul.f32 %v1717, 0.2920817
      %v1776 = vmul.f32 %v1746, 0.2920817
      %v1777 = vadd.f32 %v1626, %v1747
      %v1778 = vadd.f32 %v1627, %v1748
      %v1779 = vadd.f32 %v1628, %v1749
      %v1780 = vadd.f32 %v1629, %v1750
      %v1781 = vadd.f32 %v1630, %v1751
      %v1782 = vadd.f32 %v1631, %v1752
      %v1783 = vadd.f32 %v1632, %v1753
      %v1784 = vadd.f32 %v1633, %v1754
      %v1785 = vadd.f32 %v1634, %v1755
      %v1786 = vadd.f32 %v1635, %v1756
      %v1787 = vadd.f32 %v1636, %v1757
      %v1788 = vadd.f32 %v1637, %v1758
      %v1789 = vadd.f32 %v1638, %v1759
      %v1790 = vadd.f32 %v1639, %v1760
      %v1791 = vadd.f32 %v1640, %v1761
      %v1792 = vadd.f32 %v1641, %v1762
      %v1793 = vadd.f32 %v1642, %v1763
      %v1794 = vadd.f32 %v1643, %v1764
      %v1795 = vadd.f32 %v1644, %v1765
      %v1796 = vadd.f32 %v1645, %v1766
      %v1797 = vadd.f32 %v1646, %v1767
      %v1798 = vadd.f32 %v1647, %v1768
      %v1799 = vadd.f32 %v1648, %v1769
      %v1800 = vadd.f32 %v1649, %v1770
      %v1801 = vadd.f32 %v1650, %v1771
      %v1802 = vadd.f32 %v1651, %v1772
      %v1803 = vadd.f32 %v1652, %v1773
      %v1804 = vadd.f32 %v1653, %v1774
      %v1805 = vadd.f32 %v1654, %v1775
      %v1806 = vadd.f32 %v1655, %v1776
      %1807 = vrot.lane.b32.xlu0 %v475, 125
      %v1808 = vpop.permute.xlu0 %1807
      %1809 = vrot.lane.b32.xlu0 %v477, 125
      %v1810 = vpop.permute.xlu0 %1809
      %1811 = vrot.lane.b32.xlu0 %v546, 125
      %v1812 = vpop.permute.xlu0 %1811
      %1813 = vrot.lane.b32.xlu0 %v548, 125
      %v1814 = vpop.permute.xlu0 %1813
      %1815 = vrot.lane.b32.xlu0 %v617, 125
      %v1816 = vpop.permute.xlu0 %1815
      %1817 = vrot.lane.b32.xlu0 %v619, 125
      %v1818 = vpop.permute.xlu0 %1817
      %1819 = vrot.lane.b32.xlu0 %v688, 125
      %v1820 = vpop.permute.xlu0 %1819
      %1821 = vrot.lane.b32.xlu0 %v690, 125
      %v1822 = vpop.permute.xlu0 %1821
      %1823 = vrot.lane.b32.xlu0 %v759, 125
      %v1824 = vpop.permute.xlu0 %1823
      %1825 = vrot.lane.b32.xlu0 %v761, 125
      %v1826 = vpop.permute.xlu0 %1825
      %1827 = vrot.lane.b32.xlu0 %v830, 125
      %v1828 = vpop.permute.xlu0 %1827
      %1829 = vrot.lane.b32.xlu0 %v832, 125
      %v1830 = vpop.permute.xlu0 %1829
      %1831 = vrot.lane.b32.xlu0 %v901, 125
      %v1832 = vpop.permute.xlu0 %1831
      %1833 = vrot.lane.b32.xlu0 %v903, 125
      %v1834 = vpop.permute.xlu0 %1833
      %1835 = vrot.lane.b32.xlu0 %v972, 125
      %v1836 = vpop.permute.xlu0 %1835
      %1837 = vrot.lane.b32.xlu0 %v974, 125
      %v1838 = vpop.permute.xlu0 %1837
      %1839 = vrot.lane.b32.xlu0 %v1043, 125
      %v1840 = vpop.permute.xlu0 %1839
      %1841 = vrot.lane.b32.xlu0 %v1045, 125
      %v1842 = vpop.permute.xlu0 %1841
      %1843 = vrot.lane.b32.xlu0 %v1114, 125
      %v1844 = vpop.permute.xlu0 %1843
      %1845 = vrot.lane.b32.xlu0 %v1116, 125
      %v1846 = vpop.permute.xlu0 %1845
      %1847 = vrot.lane.b32.xlu0 %v1185, 125
      %v1848 = vpop.permute.xlu0 %1847
      %1849 = vrot.lane.b32.xlu0 %v1187, 125
      %v1850 = vpop.permute.xlu0 %1849
      %1851 = vrot.lane.b32.xlu0 %v1256, 125
      %v1852 = vpop.permute.xlu0 %1851
      %1853 = vrot.lane.b32.xlu0 %v1258, 125
      %v1854 = vpop.permute.xlu0 %1853
      %1855 = vrot.lane.b32.xlu0 %v1327, 125
      %v1856 = vpop.permute.xlu0 %1855
      %1857 = vrot.lane.b32.xlu0 %v1329, 125
      %v1858 = vpop.permute.xlu0 %1857
      %1859 = vrot.lane.b32.xlu0 %v1398, 125
      %v1860 = vpop.permute.xlu0 %1859
      %1861 = vrot.lane.b32.xlu0 %v1400, 125
      %v1862 = vpop.permute.xlu0 %1861
      %1863 = vrot.lane.b32.xlu0 %v1469, 125
      %v1864 = vpop.permute.xlu0 %1863
      %1865 = vrot.lane.b32.xlu0 %v1471, 125
      %v1866 = vpop.permute.xlu0 %1865
      %vm1867 = vcmp.lt.s32.totalorder %v1564, 125
      %v1868 = vsel %vm1867, %v1864, %v1866
      %v1869 = vsel %vm1867, %v1862, %v1864
      %v1870 = vsel %vm1867, %v1860, %v1862
      %v1871 = vsel %vm1867, %v1858, %v1860
      %v1872 = vsel %vm1867, %v1856, %v1858
      %v1873 = vsel %vm1867, %v1854, %v1856
      %v1874 = vsel %vm1867, %v1852, %v1854
      %v1875 = vsel %vm1867, %v1850, %v1852
      %v1876 = vsel %vm1867, %v1848, %v1850
      %v1877 = vsel %vm1867, %v1846, %v1848
      %v1878 = vsel %vm1867, %v1844, %v1846
      %v1879 = vsel %vm1867, %v1842, %v1844
      %v1880 = vsel %vm1867, %v1840, %v1842
      %v1881 = vsel %vm1867, %v1838, %v1840
      %v1882 = vsel %vm1867, %v1836, %v1838
      %v1883 = vsel %vm1867, %v1834, %v1836
      %v1884 = vsel %vm1867, %v1832, %v1834
      %v1885 = vsel %vm1867, %v1830, %v1832
      %v1886 = vsel %vm1867, %v1828, %v1830
      %v1887 = vsel %vm1867, %v1826, %v1828
      %v1888 = vsel %vm1867, %v1824, %v1826
      %v1889 = vsel %vm1867, %v1822, %v1824
      %v1890 = vsel %vm1867, %v1820, %v1822
      %v1891 = vsel %vm1867, %v1818, %v1820
      %v1892 = vsel %vm1867, %v1816, %v1818
      %v1893 = vsel %vm1867, %v1814, %v1816
      %v1894 = vsel %vm1867, %v1812, %v1814
      %v1895 = vsel %vm1867, %v1810, %v1812
      %v1896 = vsel %vm1867, %v1808, %v1810
      %v1897 = vsel %vm1867, %v1866, %v1808
      %v1898 = vmul.f32 %v1896, 0.23388076
      %v1899 = vmul.f32 %v1895, 0.23388076
      %v1900 = vmul.f32 %v1894, 0.23388076
      %v1901 = vmul.f32 %v1893, 0.23388076
      %v1902 = vmul.f32 %v1892, 0.23388076
      %v1903 = vmul.f32 %v1891, 0.23388076
      %v1904 = vmul.f32 %v1890, 0.23388076
      %v1905 = vmul.f32 %v1889, 0.23388076
      %v1906 = vmul.f32 %v1888, 0.23388076
      %v1907 = vmul.f32 %v1887, 0.23388076
      %v1908 = vmul.f32 %v1886, 0.23388076
      %v1909 = vmul.f32 %v1885, 0.23388076
      %v1910 = vmul.f32 %v1884, 0.23388076
      %v1911 = vmul.f32 %v1883, 0.23388076
      %v1912 = vmul.f32 %v1882, 0.23388076
      %v1913 = vmul.f32 %v1881, 0.23388076
      %v1914 = vmul.f32 %v1880, 0.23388076
      %v1915 = vmul.f32 %v1879, 0.23388076
      %v1916 = vmul.f32 %v1878, 0.23388076
      %v1917 = vmul.f32 %v1877, 0.23388076
      %v1918 = vmul.f32 %v1876, 0.23388076
      %v1919 = vmul.f32 %v1875, 0.23388076
      %v1920 = vmul.f32 %v1874, 0.23388076
      %v1921 = vmul.f32 %v1873, 0.23388076
      %v1922 = vmul.f32 %v1872, 0.23388076
      %v1923 = vmul.f32 %v1871, 0.23388076
      %v1924 = vmul.f32 %v1870, 0.23388076
      %v1925 = vmul.f32 %v1869, 0.23388076
      %v1926 = vmul.f32 %v1868, 0.23388076
      %v1927 = vmul.f32 %v1897, 0.23388076
      %v1928 = vadd.f32 %v1777, %v1898
      %v1929 = vadd.f32 %v1778, %v1899
      %v1930 = vadd.f32 %v1779, %v1900
      %v1931 = vadd.f32 %v1780, %v1901
      %v1932 = vadd.f32 %v1781, %v1902
      %v1933 = vadd.f32 %v1782, %v1903
      %v1934 = vadd.f32 %v1783, %v1904
      %v1935 = vadd.f32 %v1784, %v1905
      %v1936 = vadd.f32 %v1785, %v1906
      %v1937 = vadd.f32 %v1786, %v1907
      %v1938 = vadd.f32 %v1787, %v1908
      %v1939 = vadd.f32 %v1788, %v1909
      %v1940 = vadd.f32 %v1789, %v1910
      %v1941 = vadd.f32 %v1790, %v1911
      %v1942 = vadd.f32 %v1791, %v1912
      %v1943 = vadd.f32 %v1792, %v1913
      %v1944 = vadd.f32 %v1793, %v1914
      %v1945 = vadd.f32 %v1794, %v1915
      %v1946 = vadd.f32 %v1795, %v1916
      %v1947 = vadd.f32 %v1796, %v1917
      %v1948 = vadd.f32 %v1797, %v1918
      %v1949 = vadd.f32 %v1798, %v1919
      %v1950 = vadd.f32 %v1799, %v1920
      %v1951 = vadd.f32 %v1800, %v1921
      %v1952 = vadd.f32 %v1801, %v1922
      %v1953 = vadd.f32 %v1802, %v1923
      %v1954 = vadd.f32 %v1803, %v1924
      %v1955 = vadd.f32 %v1804, %v1925
      %v1956 = vadd.f32 %v1805, %v1926
      %v1957 = vadd.f32 %v1806, %v1927
      %1958 = vrot.lane.b32.xlu0 %v475, 124
      %v1959 = vpop.permute.xlu0 %1958
      %1960 = vrot.lane.b32.xlu0 %v477, 124
      %v1961 = vpop.permute.xlu0 %1960
      %1962 = vrot.lane.b32.xlu0 %v546, 124
      %v1963 = vpop.permute.xlu0 %1962
      %1964 = vrot.lane.b32.xlu0 %v548, 124
      %v1965 = vpop.permute.xlu0 %1964
      %1966 = vrot.lane.b32.xlu0 %v617, 124
      %v1967 = vpop.permute.xlu0 %1966
      %1968 = vrot.lane.b32.xlu0 %v619, 124
      %v1969 = vpop.permute.xlu0 %1968
      %1970 = vrot.lane.b32.xlu0 %v688, 124
      %v1971 = vpop.permute.xlu0 %1970
      %1972 = vrot.lane.b32.xlu0 %v690, 124
      %v1973 = vpop.permute.xlu0 %1972
      %1974 = vrot.lane.b32.xlu0 %v759, 124
      %v1975 = vpop.permute.xlu0 %1974
      %1976 = vrot.lane.b32.xlu0 %v761, 124
      %v1977 = vpop.permute.xlu0 %1976
      %1978 = vrot.lane.b32.xlu0 %v830, 124
      %v1979 = vpop.permute.xlu0 %1978
      %1980 = vrot.lane.b32.xlu0 %v832, 124
      %v1981 = vpop.permute.xlu0 %1980
      %1982 = vrot.lane.b32.xlu0 %v901, 124
      %v1983 = vpop.permute.xlu0 %1982
      %1984 = vrot.lane.b32.xlu0 %v903, 124
      %v1985 = vpop.permute.xlu0 %1984
      %1986 = vrot.lane.b32.xlu0 %v972, 124
      %v1987 = vpop.permute.xlu0 %1986
      %1988 = vrot.lane.b32.xlu0 %v974, 124
      %v1989 = vpop.permute.xlu0 %1988
      %1990 = vrot.lane.b32.xlu0 %v1043, 124
      %v1991 = vpop.permute.xlu0 %1990
      %1992 = vrot.lane.b32.xlu0 %v1045, 124
      %v1993 = vpop.permute.xlu0 %1992
      %1994 = vrot.lane.b32.xlu0 %v1114, 124
      %v1995 = vpop.permute.xlu0 %1994
      %1996 = vrot.lane.b32.xlu0 %v1116, 124
      %v1997 = vpop.permute.xlu0 %1996
      %1998 = vrot.lane.b32.xlu0 %v1185, 124
      %v1999 = vpop.permute.xlu0 %1998
      %2000 = vrot.lane.b32.xlu0 %v1187, 124
      %v2001 = vpop.permute.xlu0 %2000
      %2002 = vrot.lane.b32.xlu0 %v1256, 124
      %v2003 = vpop.permute.xlu0 %2002
      %2004 = vrot.lane.b32.xlu0 %v1258, 124
      %v2005 = vpop.permute.xlu0 %2004
      %2006 = vrot.lane.b32.xlu0 %v1327, 124
      %v2007 = vpop.permute.xlu0 %2006
      %2008 = vrot.lane.b32.xlu0 %v1329, 124
      %v2009 = vpop.permute.xlu0 %2008
      %2010 = vrot.lane.b32.xlu0 %v1398, 124
      %v2011 = vpop.permute.xlu0 %2010
      %2012 = vrot.lane.b32.xlu0 %v1400, 124
      %v2013 = vpop.permute.xlu0 %2012
      %2014 = vrot.lane.b32.xlu0 %v1469, 124
      %v2015 = vpop.permute.xlu0 %2014
      %2016 = vrot.lane.b32.xlu0 %v1471, 124
      %v2017 = vpop.permute.xlu0 %2016
      %vm2018 = vcmp.lt.s32.totalorder %v1564, 124
      %v2019 = vsel %vm2018, %v2015, %v2017
      %v2020 = vsel %vm2018, %v2013, %v2015
      %v2021 = vsel %vm2018, %v2011, %v2013
      %v2022 = vsel %vm2018, %v2009, %v2011
      %v2023 = vsel %vm2018, %v2007, %v2009
      %v2024 = vsel %vm2018, %v2005, %v2007
      %v2025 = vsel %vm2018, %v2003, %v2005
      %v2026 = vsel %vm2018, %v2001, %v2003
      %v2027 = vsel %vm2018, %v1999, %v2001
      %v2028 = vsel %vm2018, %v1997, %v1999
      %v2029 = vsel %vm2018, %v1995, %v1997
      %v2030 = vsel %vm2018, %v1993, %v1995
      %v2031 = vsel %vm2018, %v1991, %v1993
      %v2032 = vsel %vm2018, %v1989, %v1991
      %v2033 = vsel %vm2018, %v1987, %v1989
      %v2034 = vsel %vm2018, %v1985, %v1987
      %v2035 = vsel %vm2018, %v1983, %v1985
      %v2036 = vsel %vm2018, %v1981, %v1983
      %v2037 = vsel %vm2018, %v1979, %v1981
      %v2038 = vsel %vm2018, %v1977, %v1979
      %v2039 = vsel %vm2018, %v1975, %v1977
      %v2040 = vsel %vm2018, %v1973, %v1975
      %v2041 = vsel %vm2018, %v1971, %v1973
      %v2042 = vsel %vm2018, %v1969, %v1971
      %v2043 = vsel %vm2018, %v1967, %v1969
      %v2044 = vsel %vm2018, %v1965, %v1967
      %v2045 = vsel %vm2018, %v1963, %v1965
      %v2046 = vsel %vm2018, %v1961, %v1963
      %v2047 = vsel %vm2018, %v1959, %v1961
      %v2048 = vsel %vm2018, %v2017, %v1959
      %v2049 = vmul.f32 %v2047, 0.120078385
      %v2050 = vmul.f32 %v2046, 0.120078385
      %v2051 = vmul.f32 %v2045, 0.120078385
      %v2052 = vmul.f32 %v2044, 0.120078385
      %v2053 = vmul.f32 %v2043, 0.120078385
      %v2054 = vmul.f32 %v2042, 0.120078385
      %v2055 = vmul.f32 %v2041, 0.120078385
      %v2056 = vmul.f32 %v2040, 0.120078385
      %v2057 = vmul.f32 %v2039, 0.120078385
      %v2058 = vmul.f32 %v2038, 0.120078385
      %v2059 = vmul.f32 %v2037, 0.120078385
      %v2060 = vmul.f32 %v2036, 0.120078385
      %v2061 = vmul.f32 %v2035, 0.120078385
      %v2062 = vmul.f32 %v2034, 0.120078385
      %v2063 = vmul.f32 %v2033, 0.120078385
      %v2064 = vmul.f32 %v2032, 0.120078385
      %v2065 = vmul.f32 %v2031, 0.120078385
      %v2066 = vmul.f32 %v2030, 0.120078385
      %v2067 = vmul.f32 %v2029, 0.120078385
      %v2068 = vmul.f32 %v2028, 0.120078385
      %v2069 = vmul.f32 %v2027, 0.120078385
      %v2070 = vmul.f32 %v2026, 0.120078385
      %v2071 = vmul.f32 %v2025, 0.120078385
      %v2072 = vmul.f32 %v2024, 0.120078385
      %v2073 = vmul.f32 %v2023, 0.120078385
      %v2074 = vmul.f32 %v2022, 0.120078385
      %v2075 = vmul.f32 %v2021, 0.120078385
      %v2076 = vmul.f32 %v2020, 0.120078385
      %v2077 = vmul.f32 %v2019, 0.120078385
      %v2078 = vmul.f32 %v2048, 0.120078385
      %v2079 = vadd.f32 %v1928, %v2049
      %v2080 = vadd.f32 %v1929, %v2050
      %v2081 = vadd.f32 %v1930, %v2051
      %v2082 = vadd.f32 %v1931, %v2052
      %v2083 = vadd.f32 %v1932, %v2053
      %v2084 = vadd.f32 %v1933, %v2054
      %v2085 = vadd.f32 %v1934, %v2055
      %v2086 = vadd.f32 %v1935, %v2056
      %v2087 = vadd.f32 %v1936, %v2057
      %v2088 = vadd.f32 %v1937, %v2058
      %v2089 = vadd.f32 %v1938, %v2059
      %v2090 = vadd.f32 %v1939, %v2060
      %v2091 = vadd.f32 %v1940, %v2061
      %v2092 = vadd.f32 %v1941, %v2062
      %v2093 = vadd.f32 %v1942, %v2063
      %v2094 = vadd.f32 %v1943, %v2064
      %v2095 = vadd.f32 %v1944, %v2065
      %v2096 = vadd.f32 %v1945, %v2066
      %v2097 = vadd.f32 %v1946, %v2067
      %v2098 = vadd.f32 %v1947, %v2068
      %v2099 = vadd.f32 %v1948, %v2069
      %v2100 = vadd.f32 %v1949, %v2070
      %v2101 = vadd.f32 %v1950, %v2071
      %v2102 = vadd.f32 %v1951, %v2072
      %v2103 = vadd.f32 %v1952, %v2073
      %v2104 = vadd.f32 %v1953, %v2074
      %v2105 = vadd.f32 %v1954, %v2075
      %v2106 = vadd.f32 %v1955, %v2076
      %v2107 = vadd.f32 %v1956, %v2077
      %v2108 = vadd.f32 %v1957, %v2078
      %v2109 = vmul.f32 %v2079, %v2079
      %v2110 = vmul.f32 %v2080, %v2080
      %v2111 = vmul.f32 %v2081, %v2081
      %v2112 = vmul.f32 %v2082, %v2082
      %v2113 = vmul.f32 %v2083, %v2083
      %v2114 = vmul.f32 %v2084, %v2084
      %v2115 = vmul.f32 %v2085, %v2085
      %v2116 = vmul.f32 %v2086, %v2086
      %v2117 = vmul.f32 %v2087, %v2087
      %v2118 = vmul.f32 %v2088, %v2088
      %v2119 = vmul.f32 %v2089, %v2089
      %v2120 = vmul.f32 %v2090, %v2090
      %v2121 = vmul.f32 %v2079, %v2085
      %v2122 = vmul.f32 %v2080, %v2086
      %v2123 = vmul.f32 %v2081, %v2087
      %v2124 = vmul.f32 %v2082, %v2088
      %v2125 = vmul.f32 %v2083, %v2089
      %v2126 = vmul.f32 %v2084, %v2090
      %v2127 = vsub.f32 %v2091, %v2109
      %v2128 = vsub.f32 %v2092, %v2110
      %v2129 = vsub.f32 %v2093, %v2111
      %v2130 = vsub.f32 %v2094, %v2112
      %v2131 = vsub.f32 %v2095, %v2113
      %v2132 = vsub.f32 %v2096, %v2114
      %v2133 = vsub.f32 %v2097, %v2115
      %v2134 = vsub.f32 %v2098, %v2116
      %v2135 = vsub.f32 %v2099, %v2117
      %v2136 = vsub.f32 %v2100, %v2118
      %v2137 = vsub.f32 %v2101, %v2119
      %v2138 = vsub.f32 %v2102, %v2120
      %v2139 = vsub.f32 %v2103, %v2121
      %v2140 = vsub.f32 %v2104, %v2122
      %v2141 = vsub.f32 %v2105, %v2123
      %v2142 = vsub.f32 %v2106, %v2124
      %v2143 = vsub.f32 %v2107, %v2125
      %v2144 = vsub.f32 %v2108, %v2126
      %v2145 = vmul.f32 %v2121, 2.0
      %v2146 = vmul.f32 %v2122, 2.0
      %v2147 = vmul.f32 %v2123, 2.0
      %v2148 = vmul.f32 %v2124, 2.0
      %v2149 = vmul.f32 %v2125, 2.0
      %v2150 = vmul.f32 %v2126, 2.0
      %v2151 = vadd.f32 %v2145, 0.0001
      %v2152 = vadd.f32 %v2146, 0.0001
      %v2153 = vadd.f32 %v2147, 0.0001
      %v2154 = vadd.f32 %v2148, 0.0001
      %v2155 = vadd.f32 %v2149, 0.0001
      %v2156 = vadd.f32 %v2150, 0.0001
      %v2157 = vmul.f32 %v2139, 2.0
      %v2158 = vmul.f32 %v2140, 2.0
      %v2159 = vmul.f32 %v2141, 2.0
      %v2160 = vmul.f32 %v2142, 2.0
      %v2161 = vmul.f32 %v2143, 2.0
      %v2162 = vmul.f32 %v2144, 2.0
      %v2163 = vadd.f32 %v2157, 0.0009
      %v2164 = vadd.f32 %v2158, 0.0009
      %v2165 = vadd.f32 %v2159, 0.0009
      %v2166 = vadd.f32 %v2160, 0.0009
      %v2167 = vadd.f32 %v2161, 0.0009
      %v2168 = vadd.f32 %v2162, 0.0009
      %v2169 = vmul.f32 %v2151, %v2163
      %v2170 = vmul.f32 %v2152, %v2164
      %v2171 = vmul.f32 %v2153, %v2165
      %v2172 = vmul.f32 %v2154, %v2166
      %v2173 = vmul.f32 %v2155, %v2167
      %v2174 = vmul.f32 %v2156, %v2168
      %v2175 = vadd.f32 %v2109, %v2115
      %v2176 = vadd.f32 %v2110, %v2116
      %v2177 = vadd.f32 %v2111, %v2117
      %v2178 = vadd.f32 %v2112, %v2118
      %v2179 = vadd.f32 %v2113, %v2119
      %v2180 = vadd.f32 %v2114, %v2120
      %v2181 = vadd.f32 %v2175, 0.0001
      %v2182 = vadd.f32 %v2176, 0.0001
      %v2183 = vadd.f32 %v2177, 0.0001
      %v2184 = vadd.f32 %v2178, 0.0001
      %v2185 = vadd.f32 %v2179, 0.0001
      %v2186 = vadd.f32 %v2180, 0.0001
      %v2187 = vadd.f32 %v2127, %v2133
      %v2188 = vadd.f32 %v2128, %v2134
      %v2189 = vadd.f32 %v2129, %v2135
      %v2190 = vadd.f32 %v2130, %v2136
      %v2191 = vadd.f32 %v2131, %v2137
      %v2192 = vadd.f32 %v2132, %v2138
      %v2193 = vadd.f32 %v2187, 0.0009
      %v2194 = vadd.f32 %v2188, 0.0009
      %v2195 = vadd.f32 %v2189, 0.0009
      %v2196 = vadd.f32 %v2190, 0.0009
      %v2197 = vadd.f32 %v2191, 0.0009
      %v2198 = vadd.f32 %v2192, 0.0009
      %v2199 = vmul.f32 %v2181, %v2193
      %v2200 = vmul.f32 %v2182, %v2194
      %v2201 = vmul.f32 %v2183, %v2195
      %v2202 = vmul.f32 %v2184, %v2196
      %v2203 = vmul.f32 %v2185, %v2197
      %v2204 = vmul.f32 %v2186, %v2198
      %v2205 = vadd.f32 %v2199, 1e-12
      %v2206 = vadd.f32 %v2200, 1e-12
      %v2207 = vadd.f32 %v2201, 1e-12
      %v2208 = vadd.f32 %v2202, 1e-12
      %v2209 = vadd.f32 %v2203, 1e-12
      %v2210 = vadd.f32 %v2204, 1e-12
      %v2211 = vadd.s32 %v1564, 128
      %v2212 = vadd.s32 %v1564, 256
      %v2213 = vadd.s32 %v1564, 384
      %v2214 = vadd.s32 %v1564, 512
      %v2215 = vadd.s32 %v1564, 640
      %vm2216 = vcmp.lt.s32.totalorder %v1564, 0
      %v2217 = vsub.s32 0, %v1564
      %v2218 = vsel %vm2216, %v2217, %v1564
      %v2219 = vshrl.u32 %v2218, 4
      %v2220 = vand.u32 %v2218, 15
      %v2221 = vsub.s32 0, %v2220
      %v2222 = vsel %vm2216, %v2221, %v2220
      %vm2223 = vcmp.lt.s32.totalorder %v2211, 0
      %v2224 = vsub.s32 0, %v2211
      %v2225 = vsel %vm2223, %v2224, %v2211
      %v2226 = vshrl.u32 %v2225, 4
      %v2227 = vand.u32 %v2225, 15
      %v2228 = vsub.s32 0, %v2227
      %v2229 = vsel %vm2223, %v2228, %v2227
      %vm2230 = vcmp.lt.s32.totalorder %v2212, 0
      %v2231 = vsub.s32 0, %v2212
      %v2232 = vsel %vm2230, %v2231, %v2212
      %v2233 = vshrl.u32 %v2232, 4
      %v2234 = vand.u32 %v2232, 15
      %v2235 = vsub.s32 0, %v2234
      %v2236 = vsel %vm2230, %v2235, %v2234
      %vm2237 = vcmp.lt.s32.totalorder %v2213, 0
      %v2238 = vsub.s32 0, %v2213
      %v2239 = vsel %vm2237, %v2238, %v2213
      %v2240 = vshrl.u32 %v2239, 4
      %v2241 = vand.u32 %v2239, 15
      %v2242 = vsub.s32 0, %v2241
      %v2243 = vsel %vm2237, %v2242, %v2241
      %vm2244 = vcmp.lt.s32.totalorder %v2214, 0
      %v2245 = vsub.s32 0, %v2214
      %v2246 = vsel %vm2244, %v2245, %v2214
      %v2247 = vshrl.u32 %v2246, 4
      %v2248 = vand.u32 %v2246, 15
      %v2249 = vsub.s32 0, %v2248
      %v2250 = vsel %vm2244, %v2249, %v2248
      %vm2251 = vcmp.lt.s32.totalorder %v2215, 0
      %v2252 = vsub.s32 0, %v2215
      %v2253 = vsel %vm2251, %v2252, %v2215
      %v2254 = vshrl.u32 %v2253, 4
      %v2255 = vand.u32 %v2253, 15
      %v2256 = vsub.s32 0, %v2255
      %v2257 = vsel %vm2251, %v2256, %v2255
      %vm2258 = vcmp.ne.s32.totalorder %v2222, 0
      %vm2259 = vcmp.ne.s32.totalorder %v2229, 0
      %vm2260 = vcmp.ne.s32.totalorder %v2236, 0
      %vm2261 = vcmp.ne.s32.totalorder %v2243, 0
      %vm2262 = vcmp.ne.s32.totalorder %v2250, 0
      %vm2263 = vcmp.ne.s32.totalorder %v2257, 0
      %vm2264 = vcmp.lt.s32.totalorder %v2222, 0
      %vm2265 = vcmp.lt.s32.totalorder %v2229, 0
      %vm2266 = vcmp.lt.s32.totalorder %v2236, 0
      %vm2267 = vcmp.lt.s32.totalorder %v2243, 0
      %vm2268 = vcmp.lt.s32.totalorder %v2250, 0
      %vm2269 = vcmp.lt.s32.totalorder %v2257, 0
      %vm2270 = vmand %vm2264, %vm2258
      %vm2271 = vmand %vm2265, %vm2259
      %vm2272 = vmand %vm2266, %vm2260
      %vm2273 = vmand %vm2267, %vm2261
      %vm2274 = vmand %vm2268, %vm2262
      %vm2275 = vmand %vm2269, %vm2263
      %v2276 = vadd.s32 %v2222, 16
      %v2277 = vadd.s32 %v2229, 16
      %v2278 = vadd.s32 %v2236, 16
      %v2279 = vadd.s32 %v2243, 16
      %v2280 = vadd.s32 %v2250, 16
      %v2281 = vadd.s32 %v2257, 16
      %v2282 = vsel %vm2270, %v2276, %v2222
      %v2283 = vsel %vm2271, %v2277, %v2229
      %v2284 = vsel %vm2272, %v2278, %v2236
      %v2285 = vsel %vm2273, %v2279, %v2243
      %v2286 = vsel %vm2274, %v2280, %v2250
      %v2287 = vsel %vm2275, %v2281, %v2257
      %vm2288 = vcmp.lt.s32.totalorder %v2282, 8
      %vm2289 = vcmp.lt.s32.totalorder %v2283, 8
      %vm2290 = vcmp.lt.s32.totalorder %v2284, 8
      %vm2291 = vcmp.lt.s32.totalorder %v2285, 8
      %vm2292 = vcmp.lt.s32.totalorder %v2286, 8
      %vm2293 = vcmp.lt.s32.totalorder %v2287, 8
      %v2294 = vsel %vm2288, %v2205, 1.0
      %v2295 = vsel %vm2289, %v2206, 1.0
      %v2296 = vsel %vm2290, %v2207, 1.0
      %v2297 = vsel %vm2291, %v2208, 1.0
      %v2298 = vsel %vm2292, %v2209, 1.0
      %v2299 = vsel %vm2293, %v2210, 1.0
      %v2300 = vrcp.pop %v2294
      %v2301 = vmul.f32 %v2169, %v2300
      %v2302 = vrcp.pop %v2295
      %v2303 = vmul.f32 %v2170, %v2302
      %v2304 = vrcp.pop %v2296
      %v2305 = vmul.f32 %v2171, %v2304
      %v2306 = vrcp.pop %v2297
      %v2307 = vmul.f32 %v2172, %v2306
      %v2308 = vrcp.pop %v2298
      %v2309 = vmul.f32 %v2173, %v2308
      %v2310 = vrcp.pop %v2299
      %v2311 = vmul.f32 %v2174, %v2310
      %v2312 = vsub.f32 1.0, %v2301
      %v2313 = vsub.f32 1.0, %v2303
      %v2314 = vsub.f32 1.0, %v2305
      %v2315 = vsub.f32 1.0, %v2307
      %v2316 = vsub.f32 1.0, %v2309
      %v2317 = vsub.f32 1.0, %v2311
      %v2318 = vmul.f32 %v2312, 0.5
      %v2319 = vmul.f32 %v2313, 0.5
      %v2320 = vmul.f32 %v2314, 0.5
      %v2321 = vmul.f32 %v2315, 0.5
      %v2322 = vmul.f32 %v2316, 0.5
      %v2323 = vmul.f32 %v2317, 0.5
      %v2324 = vmax.f32 %v2318, 0.0
      %v2325 = vmax.f32 %v2319, 0.0
      %v2326 = vmax.f32 %v2320, 0.0
      %v2327 = vmax.f32 %v2321, 0.0
      %v2328 = vmax.f32 %v2322, 0.0
      %v2329 = vmax.f32 %v2323, 0.0
      %v2330 = vmin.f32 %v2324, 1.0
      %v2331 = vmin.f32 %v2325, 1.0
      %v2332 = vmin.f32 %v2326, 1.0
      %v2333 = vmin.f32 %v2327, 1.0
      %v2334 = vmin.f32 %v2328, 1.0
      %v2335 = vmin.f32 %v2329, 1.0
      %v2336 = vsel %vm2288, %v2330, 0.0
      %v2337 = vsel %vm2289, %v2331, 0.0
      %v2338 = vsel %vm2290, %v2332, 0.0
      %v2339 = vsel %vm2291, %v2333, 0.0
      %v2340 = vsel %vm2292, %v2334, 0.0
      %v2341 = vsel %vm2293, %v2335, 0.0
      %v2342 = vadd.f32 %v2336, %v2337
      %v2343 = vadd.f32 %v2342, %v2338
      %v2344 = vadd.f32 %v2343, %v2339
      %v2345 = vadd.f32 %v2344, %v2340
      %v2346 = vadd.f32 %v2345, %v2341
      %2347 = vadd.xlane.f32.xlu0 %v2346
      %v2348 = vpop.xlane.xlu0 %2347
      %v2349 = vrot.slane %v2348, 4
      %v2350 = vadd.f32 %v2348, %v2349
      %v2351 = vrot.slane %v2350, 2
      %v2352 = vadd.f32 %v2350, %v2351
      %v2353 = vrot.slane %v2352, 1
      %v2354 = vadd.f32 %v2352, %v2353
      %s2355 = vtos %v2354
      %s2356 = smul.f32 %s2355, 0.00032552084
      %v2357 = vstv %s2356
      %2358 = vst [vmem:[%s215] sm:$0xff] %v2357
      %p2359 = scmp.lt.s32.totalorder %s15, 1
      %s2360 = scalar_select %p2359, %s15, 1
      %s2361 = smul.addr %s2360, 8
      %s2362 = scalar_lea.vmem %s4, %s2361
      // Predicated region
      $region37: #{loss_fn.3} parent=35 // pred_check
        %p2363 = pneg %p127
      $region38: #{loss_fn.3} parent=35 // pred_check_branch
        %2365 = sbr.rel (%p2363) target = $region40
      $region39: #{loss_fn.3} parent=35 // pred_region
        _
      $region40: #{loss_fn.3} parent=35 // pred_fallthru
        _
    $region36: #{loss_fn.3} parent=5 // pred_fallthru
      _
    %p2366 = scmp.le.s32.totalorder 2, %s10
    // Predicated region
    $region41: #{loss_fn.3} parent=5 // pred_check
      %p2367 = pneg %p2366
    $region42: #{loss_fn.3} parent=5 // pred_check_branch
      %2369 = sbr.rel (%p2367) target = $region44
    $region43: #{loss_fn.3} parent=5 // pred_region
      %s2370 = ssub.s32 %s10, 2
      // Predicated region
      $region45: #{loss_fn.3} parent=43 // pred_check
        %p2371 = pneg %p133
      $region46: #{loss_fn.3} parent=43 // pred_check_branch
        %2373 = sbr.rel (%p2371) target = $region48
      $region47: #{loss_fn.3} parent=43 // pred_region
        %p2374 = scmp.lt.s32.totalorder %s16, 1
        %s2375 = scalar_select %p2374, %s16, 1
        %s2376 = smul.addr %s2375, 8
        %s2377 = scalar_lea.vmem %s4, %s2376
      $region48: #{loss_fn.3} parent=43 // pred_fallthru
        _
    $region44: #{loss_fn.3} parent=5 // pred_fallthru
      _
  $region6: #{loss_fn.3} parent=0 // loop_footer
    %s14 = sadd.s32 1, %s10
  $region7: #{loss_fn.3} parent=0 // loop_footer_branch
    %9 = sbr.rel target = $region3
  $region8: #{loss_fn.3} parent=0 // loop_exit
    _

// kernel: loss_fn.2
$region0: #{loss_fn.2}
  #allocation0 [shape = 'u32[]', space=smem, size = 0x4, offset = 0x4, fixed_abs, tag = 'smem constant byte address 0x4 - core index']
  #allocation1 [shape = 'u32[144,128]{1,0:T(1,128)}', space=vmem, size = 0x12000, scoped, tag = 'internal scratch']
  %s0 = inlined_call_operand.vmem [shape: f32[18,128,128], index: 0, kind: input, shape index: {}]
  %s1 = inlined_call_operand.vmem [shape: bf16[72,1152], index: 1, kind: input, shape index: {}]
  %s2 = inlined_call_operand.vmem [shape: bf16[1024,64], index: 2, kind: input, shape index: {}]
  %s3 = inlined_call_operand.vmem [shape: f32[144,64], index: 3, kind: output, shape index: {}]
  %s4 = sld [smem:[#allocation0]]
  $region45: #{loss_fn.2} parent=0
    _
  %s6 = ssub.s32 1, %s4
  %s7 = scalar_select 0, %s6, %s4
  loop: start=0, step=1, limit=4
  $region2: #{loss_fn.2} parent=0 // loop_pre_header
    _
  $region3: #{loss_fn.2} parent=0 // loop_header
    %s9 = sphi 0, %s13
    %p10 = scmp.ge.s32.totalorder %s9, 4
    %s19 = sphi 0, %s21
    %s22 = sphi 0, %s19
    %s23 = sphi 0, %s22
    %s39 = sphi 0, %s23
    %s43 = sphi 0, %s43
    %s45 = sphi 0, %s43
    %s46 = sphi 0, %s45
    %s60 = sphi 0, %s46
    %s64 = sphi 0, %s64
    %s66 = sphi 0, %s64
    %s67 = sphi 0, %s66
    %s81 = sphi 0, %s67
    %s87 = sphi 0, %s89
    %s90 = sphi 0, %s87
    %s91 = sphi 0, %s90
    %s107 = sphi 0, %s91
  $region4: #{loss_fn.2} parent=0 // loop_header_branch
    %12 = sbr.rel (%p10) target = $region8
  $region5: #{loss_fn.2} parent=0 // loop_body
    %s14 = ssub.s32 %s9, 1
    %s15 = ssub.s32 %s9, 2
    %s16 = sadd.s32 %s9, 1
    %s17 = ssub.s32 %s9, %s16
    %p18 = scmp.eq.s32.totalorder %s17, 0
    %s20 = sadd.s32 %s19, 1
    %s21 = scalar_select %p18, %s19, %s20
    %p24 = pneg %p18
    %p25 = scmp.eq.s32.totalorder %s9, 1
    %p26 = por %p24, %p25
    %p27 = scmp.ne.s32.totalorder %s19, %s22
    %p28 = scmp.eq.s32.totalorder %s9, 0
    %p29 = por %p27, %p28
    %p30 = scmp.ne.s32.totalorder %s19, %s22
    %p31 = scmp.eq.s32.totalorder %s14, 1
    %p32 = por %p30, %p31
    %p33 = scmp.ne.s32.totalorder %s22, %s23
    %p34 = scmp.eq.s32.totalorder %s14, 0
    %p35 = por %p33, %p34
    %p36 = scmp.ne.s32.totalorder %s22, %s23
    %p37 = scmp.eq.s32.totalorder %s15, 1
    %p38 = por %p36, %p37
    %p40 = scmp.ne.s32.totalorder %s23, %s39
    %p41 = scmp.eq.s32.totalorder %s15, 0
    %p42 = por %p40, %p41
    %s44 = sadd.s32 %s43, 1
    %p47 = scmp.eq.s32.totalorder %s9, 1
    %p48 = scmp.ne.s32.totalorder %s43, %s45
    %p49 = scmp.eq.s32.totalorder %s9, 0
    %p50 = por %p48, %p49
    %p51 = scmp.ne.s32.totalorder %s43, %s45
    %p52 = scmp.eq.s32.totalorder %s14, 1
    %p53 = por %p51, %p52
    %p54 = scmp.ne.s32.totalorder %s45, %s46
    %p55 = scmp.eq.s32.totalorder %s14, 0
    %p56 = por %p54, %p55
    %p57 = scmp.ne.s32.totalorder %s45, %s46
    %p58 = scmp.eq.s32.totalorder %s15, 1
    %p59 = por %p57, %p58
    %p61 = scmp.ne.s32.totalorder %s46, %s60
    %p62 = scmp.eq.s32.totalorder %s15, 0
    %p63 = por %p61, %p62
    %s65 = sadd.s32 %s64, 1
    %p68 = scmp.eq.s32.totalorder %s9, 1
    %p69 = scmp.ne.s32.totalorder %s64, %s66
    %p70 = scmp.eq.s32.totalorder %s9, 0
    %p71 = por %p69, %p70
    %p72 = scmp.ne.s32.totalorder %s64, %s66
    %p73 = scmp.eq.s32.totalorder %s14, 1
    %p74 = por %p72, %p73
    %p75 = scmp.ne.s32.totalorder %s66, %s67
    %p76 = scmp.eq.s32.totalorder %s14, 0
    %p77 = por %p75, %p76
    %p78 = scmp.ne.s32.totalorder %s66, %s67
    %p79 = scmp.eq.s32.totalorder %s15, 1
    %p80 = por %p78, %p79
    %p82 = scmp.ne.s32.totalorder %s67, %s81
    %p83 = scmp.eq.s32.totalorder %s15, 0
    %p84 = por %p82, %p83
    %s85 = ssub.s32 %s9, %s16
    %p86 = scmp.eq.s32.totalorder %s85, 0
    %s88 = sadd.s32 %s87, 1
    %s89 = scalar_select %p86, %s87, %s88
    %p92 = pneg %p86
    %p93 = scmp.eq.s32.totalorder %s9, 1
    %p94 = por %p92, %p93
    %p95 = scmp.ne.s32.totalorder %s87, %s90
    %p96 = scmp.eq.s32.totalorder %s9, 0
    %p97 = por %p95, %p96
    %p98 = scmp.ne.s32.totalorder %s87, %s90
    %p99 = scmp.eq.s32.totalorder %s14, 1
    %p100 = por %p98, %p99
    %p101 = scmp.ne.s32.totalorder %s90, %s91
    %p102 = scmp.eq.s32.totalorder %s14, 0
    %p103 = por %p101, %p102
    %p104 = scmp.ne.s32.totalorder %s90, %s91
    %p105 = scmp.eq.s32.totalorder %s15, 1
    %p106 = por %p104, %p105
    %p108 = scmp.ne.s32.totalorder %s91, %s107
    %p109 = scmp.eq.s32.totalorder %s15, 0
    %p110 = por %p108, %p109
    %p111 = scmp.le.s32.totalorder 1, %s9
    %p112 = scmp.lt.s32.totalorder %s9, 3
    %p113 = pnand %p111, %p112
    %p114 = pneg %p113
    // Predicated region
    $region9: #{loss_fn.2} parent=5 // pred_check
      _
    $region10: #{loss_fn.2} parent=5 // pred_check_branch
      %116 = sbr.rel (%p113) target = $region12
    $region11: #{loss_fn.2} parent=5 // pred_region
      %s117 = ssub.s32 %s9, 1
      // Predicated region
      $region13: #{loss_fn.2} parent=11 // pred_check
        %p118 = pneg %p56
      $region14: #{loss_fn.2} parent=11 // pred_check_branch
        %120 = sbr.rel (%p118) target = $region16
      $region15: #{loss_fn.2} parent=11 // pred_region
        _
      $region16: #{loss_fn.2} parent=11 // pred_fallthru
        _
      // Predicated region
      $region17: #{loss_fn.2} parent=11 // pred_check
        %p121 = pneg %p77
      $region18: #{loss_fn.2} parent=11 // pred_check_branch
        %123 = sbr.rel (%p121) target = $region20
      $region19: #{loss_fn.2} parent=11 // pred_region
        _
      $region20: #{loss_fn.2} parent=11 // pred_fallthru
        _
    $region12: #{loss_fn.2} parent=5 // pred_fallthru
      _
    %p124 = scmp.lt.s32.totalorder %s9, 2
    // Predicated region
    $region21: #{loss_fn.2} parent=5 // pred_check
      %p125 = pneg %p124
    $region22: #{loss_fn.2} parent=5 // pred_check_branch
      %127 = sbr.rel (%p125) target = $region24
    $region23: #{loss_fn.2} parent=5 // pred_region
      // Predicated region
      $region25: #{loss_fn.2} parent=23 // pred_check
        %p128 = pneg %p29
      $region26: #{loss_fn.2} parent=23 // pred_check_branch
        %130 = sbr.rel (%p128) target = $region28
      $region27: #{loss_fn.2} parent=23 // pred_region
        %s131 = smul.u32 9, %s9
        %p132 = scmp.lt.s32.totalorder %s131, 17
        %s133 = scalar_select %p132, %s131, 17
        %s134 = smul.addr %s133, 16
        %s135 = smul.addr %s134, 8
        %s136 = scalar_lea.vmem %s0, %s135
        %s137 = smul.u32 9, %s9
      $region28: #{loss_fn.2} parent=23 // pred_fallthru
        _
    $region24: #{loss_fn.2} parent=5 // pred_fallthru
      _
    %p138 = scmp.le.s32.totalorder 1, %s9
    %p139 = scmp.lt.s32.totalorder %s9, 3
    %p140 = pnand %p138, %p139
    %p141 = pneg %p140
    // Predicated region
    $region29: #{loss_fn.2} parent=5 // pred_check
      _
    $region30: #{loss_fn.2} parent=5 // pred_check_branch
      %143 = sbr.rel (%p140) target = $region32
    $region31: #{loss_fn.2} parent=5 // pred_region
      %s144 = ssub.s32 %s9, 1
      %s145 = smul.u32 9, %s14
      %p146 = scmp.lt.s32.totalorder %s145, 17
      %s147 = scalar_select %p146, %s145, 17
      %s148 = smul.addr %s147, 16
      %s149 = smul.addr %s148, 8
      %s150 = scalar_lea.vmem %s0, %s149
      %p151 = pneg %p35
      %p152 = pneg %p32
      %p153 = pneg %p56
      %p154 = pneg %p53
      %p155 = pneg %p77
      %p156 = pneg %p74
      %p157 = pneg %p103
      %p158 = pneg %p100
      %s159 = smul.u32 9, %s14
      %p160 = scmp.lt.s32.totalorder %s159, 17
      %s161 = scalar_select %p160, %s159, 17
      %s162 = smul.addr %s161, 8
      %s163 = scalar_lea.vmem %s3, %s162
      %s164 = smul.u32 9, %s14
      %p165 = scmp.lt.s32.totalorder %s164, 17
      %s166 = scalar_select %p165, %s164, 17
      %s167 = smul.addr %s166, 16
      %s168 = smul.addr %s167, 8
      %s169 = scalar_lea.vmem %s0, %s168
      %s170 = smul.u32 9, %s14
      %s171 = smul.u32 9, %s14
      %p172 = scmp.lt.s32.totalorder %s171, 17
      %s173 = scalar_select %p172, %s171, 17
      %s174 = smul.addr %s173, 8
      %s175 = scalar_lea.vmem %s3, %s174
      %s176 = smul.u32 9, %s14
      %v178 = vld [vmem:[%s169] sm:$0xff]
      %v179 = vld [vmem:[%s169 + $0x8] sm:$0xff]
      %v180 = vld [vmem:[%s169 + $0x10] sm:$0xff]
      %v181 = vld [vmem:[%s169 + $0x18] sm:$0xff]
      %v182 = vld [vmem:[%s169 + $0x20] sm:$0xff]
      %v183 = vld [vmem:[%s169 + $0x28] sm:$0xff]
      %v184 = vld [vmem:[%s169 + $0x30] sm:$0xff]
      %v185 = vld [vmem:[%s169 + $0x38] sm:$0xff]
      %v186 = vld [vmem:[%s169 + $0x40] sm:$0xff]
      %v187 = vld [vmem:[%s169 + $0x48] sm:$0xff]
      %v188 = vld [vmem:[%s169 + $0x50] sm:$0xff]
      %v189 = vld [vmem:[%s169 + $0x58] sm:$0xff]
      %v190 = vld [vmem:[%s169 + $0x60] sm:$0xff]
      %v191 = vld [vmem:[%s169 + $0x68] sm:$0xff]
      %v192 = vld [vmem:[%s169 + $0x70] sm:$0xff]
      %v193 = vld [vmem:[%s169 + $0x78] sm:$0xff]
      %v194 = vld [vmem:[%s169 + $0x80] sm:$0xff]
      %v195 = vld [vmem:[%s169 + $0x88] sm:$0xff]
      %v196 = vld [vmem:[%s169 + $0x90] sm:$0xff]
      %v197 = vld [vmem:[%s169 + $0x98] sm:$0xff]
      %v198 = vld [vmem:[%s169 + $0xa0] sm:$0xff]
      %v199 = vld [vmem:[%s169 + $0xa8] sm:$0xff]
      %v200 = vld [vmem:[%s169 + $0xb0] sm:$0xff]
      %v201 = vld [vmem:[%s169 + $0xb8] sm:$0xff]
      %v202 = vld [vmem:[%s169 + $0xc0] sm:$0xff]
      %v203 = vld [vmem:[%s169 + $0xc8] sm:$0xff]
      %v204 = vld [vmem:[%s169 + $0xd0] sm:$0xff]
      %v205 = vld [vmem:[%s169 + $0xd8] sm:$0xff]
      %v206 = vld [vmem:[%s169 + $0xe0] sm:$0xff]
      %v207 = vld [vmem:[%s169 + $0xe8] sm:$0xff]
      %v208 = vld [vmem:[%s169 + $0xf0] sm:$0xff]
      %v209 = vld [vmem:[%s169 + $0xf8] sm:$0xff]
      %v210 = vld [vmem:[%s169 + $0x100] sm:$0xff]
      %v211 = vld [vmem:[%s169 + $0x108] sm:$0xff]
      %v212 = vld [vmem:[%s169 + $0x110] sm:$0xff]
      %v213 = vld [vmem:[%s169 + $0x118] sm:$0xff]
      %v214 = vld [vmem:[%s169 + $0x120] sm:$0xff]
      %v215 = vld [vmem:[%s169 + $0x128] sm:$0xff]
      %v216 = vld [vmem:[%s169 + $0x130] sm:$0xff]
      %v217 = vld [vmem:[%s169 + $0x138] sm:$0xff]
      %v218 = vld [vmem:[%s169 + $0x140] sm:$0xff]
      %v219 = vld [vmem:[%s169 + $0x148] sm:$0xff]
      %v220 = vld [vmem:[%s169 + $0x150] sm:$0xff]
      %v221 = vld [vmem:[%s169 + $0x158] sm:$0xff]
      %v222 = vld [vmem:[%s169 + $0x160] sm:$0xff]
      %v223 = vld [vmem:[%s169 + $0x168] sm:$0xff]
      %v224 = vld [vmem:[%s169 + $0x170] sm:$0xff]
      %v225 = vld [vmem:[%s169 + $0x178] sm:$0xff]
      %v226 = vld [vmem:[%s169 + $0x180] sm:$0xff]
      %v227 = vld [vmem:[%s169 + $0x188] sm:$0xff]
      %v228 = vld [vmem:[%s169 + $0x190] sm:$0xff]
      %v229 = vld [vmem:[%s169 + $0x198] sm:$0xff]
      %v230 = vld [vmem:[%s169 + $0x1a0] sm:$0xff]
      %v231 = vld [vmem:[%s169 + $0x1a8] sm:$0xff]
      %v232 = vld [vmem:[%s169 + $0x1b0] sm:$0xff]
      %v233 = vld [vmem:[%s169 + $0x1b8] sm:$0xff]
      %v234 = vld [vmem:[%s169 + $0x1c0] sm:$0xff]
      %v235 = vld [vmem:[%s169 + $0x1c8] sm:$0xff]
      %v236 = vld [vmem:[%s169 + $0x1d0] sm:$0xff]
      %v237 = vld [vmem:[%s169 + $0x1d8] sm:$0xff]
      %v238 = vld [vmem:[%s169 + $0x1e0] sm:$0xff]
      %v239 = vld [vmem:[%s169 + $0x1e8] sm:$0xff]
      %v240 = vld [vmem:[%s169 + $0x1f0] sm:$0xff]
      %v241 = vld [vmem:[%s169 + $0x1f8] sm:$0xff]
      %v242 = vld [vmem:[%s169 + $0x200] sm:$0xff]
      %v243 = vld [vmem:[%s169 + $0x208] sm:$0xff]
      %v244 = vld [vmem:[%s169 + $0x210] sm:$0xff]
      %v245 = vld [vmem:[%s169 + $0x218] sm:$0xff]
      %v246 = vld [vmem:[%s169 + $0x220] sm:$0xff]
      %v247 = vld [vmem:[%s169 + $0x228] sm:$0xff]
      %v248 = vld [vmem:[%s169 + $0x230] sm:$0xff]
      %v249 = vld [vmem:[%s169 + $0x238] sm:$0xff]
      %v250 = vld [vmem:[%s169 + $0x240] sm:$0xff]
      %v251 = vld [vmem:[%s169 + $0x248] sm:$0xff]
      %v252 = vld [vmem:[%s169 + $0x250] sm:$0xff]
      %v253 = vld [vmem:[%s169 + $0x258] sm:$0xff]
      %v254 = vld [vmem:[%s169 + $0x260] sm:$0xff]
      %v255 = vld [vmem:[%s169 + $0x268] sm:$0xff]
      %v256 = vld [vmem:[%s169 + $0x270] sm:$0xff]
      %v257 = vld [vmem:[%s169 + $0x278] sm:$0xff]
      %v258 = vld [vmem:[%s169 + $0x280] sm:$0xff]
      %v259 = vld [vmem:[%s169 + $0x288] sm:$0xff]
      %v260 = vld [vmem:[%s169 + $0x290] sm:$0xff]
      %v261 = vld [vmem:[%s169 + $0x298] sm:$0xff]
      %v262 = vld [vmem:[%s169 + $0x2a0] sm:$0xff]
      %v263 = vld [vmem:[%s169 + $0x2a8] sm:$0xff]
      %v264 = vld [vmem:[%s169 + $0x2b0] sm:$0xff]
      %v265 = vld [vmem:[%s169 + $0x2b8] sm:$0xff]
      %v266 = vld [vmem:[%s169 + $0x2c0] sm:$0xff]
      %v267 = vld [vmem:[%s169 + $0x2c8] sm:$0xff]
      %v268 = vld [vmem:[%s169 + $0x2d0] sm:$0xff]
      %v269 = vld [vmem:[%s169 + $0x2d8] sm:$0xff]
      %v270 = vld [vmem:[%s169 + $0x2e0] sm:$0xff]
      %v271 = vld [vmem:[%s169 + $0x2e8] sm:$0xff]
      %v272 = vld [vmem:[%s169 + $0x2f0] sm:$0xff]
      %v273 = vld [vmem:[%s169 + $0x2f8] sm:$0xff]
      %v274 = vld [vmem:[%s169 + $0x300] sm:$0xff]
      %v275 = vld [vmem:[%s169 + $0x308] sm:$0xff]
      %v276 = vld [vmem:[%s169 + $0x310] sm:$0xff]
      %v277 = vld [vmem:[%s169 + $0x318] sm:$0xff]
      %v278 = vld [vmem:[%s169 + $0x320] sm:$0xff]
      %v279 = vld [vmem:[%s169 + $0x328] sm:$0xff]
      %v280 = vld [vmem:[%s169 + $0x330] sm:$0xff]
      %v281 = vld [vmem:[%s169 + $0x338] sm:$0xff]
      %v282 = vld [vmem:[%s169 + $0x340] sm:$0xff]
      %v283 = vld [vmem:[%s169 + $0x348] sm:$0xff]
      %v284 = vld [vmem:[%s169 + $0x350] sm:$0xff]
      %v285 = vld [vmem:[%s169 + $0x358] sm:$0xff]
      %v286 = vld [vmem:[%s169 + $0x360] sm:$0xff]
      %v287 = vld [vmem:[%s169 + $0x368] sm:$0xff]
      %v288 = vld [vmem:[%s169 + $0x370] sm:$0xff]
      %v289 = vld [vmem:[%s169 + $0x378] sm:$0xff]
      %v290 = vld [vmem:[%s169 + $0x380] sm:$0xff]
      %v291 = vld [vmem:[%s169 + $0x388] sm:$0xff]
      %v292 = vld [vmem:[%s169 + $0x390] sm:$0xff]
      %v293 = vld [vmem:[%s169 + $0x398] sm:$0xff]
      %v294 = vld [vmem:[%s169 + $0x3a0] sm:$0xff]
      %v295 = vld [vmem:[%s169 + $0x3a8] sm:$0xff]
      %v296 = vld [vmem:[%s169 + $0x3b0] sm:$0xff]
      %v297 = vld [vmem:[%s169 + $0x3b8] sm:$0xff]
      %v298 = vld [vmem:[%s169 + $0x3c0] sm:$0xff]
      %v299 = vld [vmem:[%s169 + $0x3c8] sm:$0xff]
      %v300 = vld [vmem:[%s169 + $0x3d0] sm:$0xff]
      %v301 = vld [vmem:[%s169 + $0x3d8] sm:$0xff]
      %v302 = vld [vmem:[%s169 + $0x3e0] sm:$0xff]
      %v303 = vld [vmem:[%s169 + $0x3e8] sm:$0xff]
      %v304 = vld [vmem:[%s169 + $0x3f0] sm:$0xff]
      %v305 = vld [vmem:[%s169 + $0x3f8] sm:$0xff]
      %v306 = vld [vmem:[%s169 + $0x400] sm:$0xff]
      %v307 = vld [vmem:[%s169 + $0x408] sm:$0xff]
      %v308 = vld [vmem:[%s169 + $0x410] sm:$0xff]
      %v309 = vld [vmem:[%s169 + $0x418] sm:$0xff]
      %v310 = vld [vmem:[%s169 + $0x420] sm:$0xff]
      %v311 = vld [vmem:[%s169 + $0x428] sm:$0xff]
      %v312 = vld [vmem:[%s169 + $0x430] sm:$0xff]
      %v313 = vld [vmem:[%s169 + $0x438] sm:$0xff]
      %v314 = vld [vmem:[%s169 + $0x440] sm:$0xff]
      %v315 = vld [vmem:[%s169 + $0x448] sm:$0xff]
      %v316 = vld [vmem:[%s169 + $0x450] sm:$0xff]
      %v317 = vld [vmem:[%s169 + $0x458] sm:$0xff]
      %v318 = vld [vmem:[%s169 + $0x460] sm:$0xff]
      %v319 = vld [vmem:[%s169 + $0x468] sm:$0xff]
      %v320 = vld [vmem:[%s169 + $0x470] sm:$0xff]
      %v321 = vld [vmem:[%s169 + $0x478] sm:$0xff]
      %v322 = vmul.f32 %v178, 8.0
      %v323 = vmul.f32 %v179, 8.0
      %v324 = vmul.f32 %v180, 8.0
      %v325 = vmul.f32 %v181, 8.0
      %v326 = vmul.f32 %v182, 8.0
      %v327 = vmul.f32 %v183, 8.0
      %v328 = vmul.f32 %v184, 8.0
      %v329 = vmul.f32 %v185, 8.0
      %v330 = vmul.f32 %v186, 8.0
      %v331 = vmul.f32 %v187, 8.0
      %v332 = vmul.f32 %v188, 8.0
      %v333 = vmul.f32 %v189, 8.0
      %v334 = vmul.f32 %v190, 8.0
      %v335 = vmul.f32 %v191, 8.0
      %v336 = vmul.f32 %v192, 8.0
      %v337 = vmul.f32 %v193, 8.0
      %v338 = vmul.f32 %v194, 8.0
      %v339 = vmul.f32 %v195, 8.0
      %v340 = vmul.f32 %v196, 8.0
      %v341 = vmul.f32 %v197, 8.0
      %v342 = vmul.f32 %v198, 8.0
      %v343 = vmul.f32 %v199, 8.0
      %v344 = vmul.f32 %v200, 8.0
      %v345 = vmul.f32 %v201, 8.0
      %v346 = vmul.f32 %v202, 8.0
      %v347 = vmul.f32 %v203, 8.0
      %v348 = vmul.f32 %v204, 8.0
      %v349 = vmul.f32 %v205, 8.0
      %v350 = vmul.f32 %v206, 8.0
      %v351 = vmul.f32 %v207, 8.0
      %v352 = vmul.f32 %v208, 8.0
      %v353 = vmul.f32 %v209, 8.0
      %v354 = vmul.f32 %v210, 8.0
      %v355 = vmul.f32 %v211, 8.0
      %v356 = vmul.f32 %v212, 8.0
      %v357 = vmul.f32 %v213, 8.0
      %v358 = vmul.f32 %v214, 8.0
      %v359 = vmul.f32 %v215, 8.0
      %v360 = vmul.f32 %v216, 8.0
      %v361 = vmul.f32 %v217, 8.0
      %v362 = vmul.f32 %v218, 8.0
      %v363 = vmul.f32 %v219, 8.0
      %v364 = vmul.f32 %v220, 8.0
      %v365 = vmul.f32 %v221, 8.0
      %v366 = vmul.f32 %v222, 8.0
      %v367 = vmul.f32 %v223, 8.0
      %v368 = vmul.f32 %v224, 8.0
      %v369 = vmul.f32 %v225, 8.0
      %v370 = vmul.f32 %v226, 8.0
      %v371 = vmul.f32 %v227, 8.0
      %v372 = vmul.f32 %v228, 8.0
      %v373 = vmul.f32 %v229, 8.0
      %v374 = vmul.f32 %v230, 8.0
      %v375 = vmul.f32 %v231, 8.0
      %v376 = vmul.f32 %v232, 8.0
      %v377 = vmul.f32 %v233, 8.0
      %v378 = vmul.f32 %v234, 8.0
      %v379 = vmul.f32 %v235, 8.0
      %v380 = vmul.f32 %v236, 8.0
      %v381 = vmul.f32 %v237, 8.0
      %v382 = vmul.f32 %v238, 8.0
      %v383 = vmul.f32 %v239, 8.0
      %v384 = vmul.f32 %v240, 8.0
      %v385 = vmul.f32 %v241, 8.0
      %v386 = vmul.f32 %v242, 8.0
      %v387 = vmul.f32 %v243, 8.0
      %v388 = vmul.f32 %v244, 8.0
      %v389 = vmul.f32 %v245, 8.0
      %v390 = vmul.f32 %v246, 8.0
      %v391 = vmul.f32 %v247, 8.0
      %v392 = vmul.f32 %v248, 8.0
      %v393 = vmul.f32 %v249, 8.0
      %v394 = vmul.f32 %v250, 8.0
      %v395 = vmul.f32 %v251, 8.0
      %v396 = vmul.f32 %v252, 8.0
      %v397 = vmul.f32 %v253, 8.0
      %v398 = vmul.f32 %v254, 8.0
      %v399 = vmul.f32 %v255, 8.0
      %v400 = vmul.f32 %v256, 8.0
      %v401 = vmul.f32 %v257, 8.0
      %v402 = vmul.f32 %v258, 8.0
      %v403 = vmul.f32 %v259, 8.0
      %v404 = vmul.f32 %v260, 8.0
      %v405 = vmul.f32 %v261, 8.0
      %v406 = vmul.f32 %v262, 8.0
      %v407 = vmul.f32 %v263, 8.0
      %v408 = vmul.f32 %v264, 8.0
      %v409 = vmul.f32 %v265, 8.0
      %v410 = vmul.f32 %v266, 8.0
      %v411 = vmul.f32 %v267, 8.0
      %v412 = vmul.f32 %v268, 8.0
      %v413 = vmul.f32 %v269, 8.0
      %v414 = vmul.f32 %v270, 8.0
      %v415 = vmul.f32 %v271, 8.0
      %v416 = vmul.f32 %v272, 8.0
      %v417 = vmul.f32 %v273, 8.0
      %v418 = vmul.f32 %v274, 8.0
      %v419 = vmul.f32 %v275, 8.0
      %v420 = vmul.f32 %v276, 8.0
      %v421 = vmul.f32 %v277, 8.0
      %v422 = vmul.f32 %v278, 8.0
      %v423 = vmul.f32 %v279, 8.0
      %v424 = vmul.f32 %v280, 8.0
      %v425 = vmul.f32 %v281, 8.0
      %v426 = vmul.f32 %v282, 8.0
      %v427 = vmul.f32 %v283, 8.0
      %v428 = vmul.f32 %v284, 8.0
      %v429 = vmul.f32 %v285, 8.0
      %v430 = vmul.f32 %v286, 8.0
      %v431 = vmul.f32 %v287, 8.0
      %v432 = vmul.f32 %v288, 8.0
      %v433 = vmul.f32 %v289, 8.0
      %v434 = vmul.f32 %v290, 8.0
      %v435 = vmul.f32 %v291, 8.0
      %v436 = vmul.f32 %v292, 8.0
      %v437 = vmul.f32 %v293, 8.0
      %v438 = vmul.f32 %v294, 8.0
      %v439 = vmul.f32 %v295, 8.0
      %v440 = vmul.f32 %v296, 8.0
      %v441 = vmul.f32 %v297, 8.0
      %v442 = vmul.f32 %v298, 8.0
      %v443 = vmul.f32 %v299, 8.0
      %v444 = vmul.f32 %v300, 8.0
      %v445 = vmul.f32 %v301, 8.0
      %v446 = vmul.f32 %v302, 8.0
      %v447 = vmul.f32 %v303, 8.0
      %v448 = vmul.f32 %v304, 8.0
      %v449 = vmul.f32 %v305, 8.0
      %v450 = vmul.f32 %v306, 8.0
      %v451 = vmul.f32 %v307, 8.0
      %v452 = vmul.f32 %v308, 8.0
      %v453 = vmul.f32 %v309, 8.0
      %v454 = vmul.f32 %v310, 8.0
      %v455 = vmul.f32 %v311, 8.0
      %v456 = vmul.f32 %v312, 8.0
      %v457 = vmul.f32 %v313, 8.0
      %v458 = vmul.f32 %v314, 8.0
      %v459 = vmul.f32 %v315, 8.0
      %v460 = vmul.f32 %v316, 8.0
      %v461 = vmul.f32 %v317, 8.0
      %v462 = vmul.f32 %v318, 8.0
      %v463 = vmul.f32 %v319, 8.0
      %v464 = vmul.f32 %v320, 8.0
      %v465 = vmul.f32 %v321, 8.0
      %v466 = vfloor.f32 %v322
      %v467 = vfloor.f32 %v323
      %v468 = vfloor.f32 %v324
      %v469 = vfloor.f32 %v325
      %v470 = vfloor.f32 %v326
      %v471 = vfloor.f32 %v327
      %v472 = vfloor.f32 %v328
      %v473 = vfloor.f32 %v329
      %v474 = vfloor.f32 %v330
      %v475 = vfloor.f32 %v331
      %v476 = vfloor.f32 %v332
      %v477 = vfloor.f32 %v333
      %v478 = vfloor.f32 %v334
      %v479 = vfloor.f32 %v335
      %v480 = vfloor.f32 %v336
      %v481 = vfloor.f32 %v337
      %v482 = vfloor.f32 %v338
      %v483 = vfloor.f32 %v339
      %v484 = vfloor.f32 %v340
      %v485 = vfloor.f32 %v341
      %v486 = vfloor.f32 %v342
      %v487 = vfloor.f32 %v343
      %v488 = vfloor.f32 %v344
      %v489 = vfloor.f32 %v345
      %v490 = vfloor.f32 %v346
      %v491 = vfloor.f32 %v347
      %v492 = vfloor.f32 %v348
      %v493 = vfloor.f32 %v349
      %v494 = vfloor.f32 %v350
      %v495 = vfloor.f32 %v351
      %v496 = vfloor.f32 %v352
      %v497 = vfloor.f32 %v353
      %v498 = vfloor.f32 %v354
      %v499 = vfloor.f32 %v355
      %v500 = vfloor.f32 %v356
      %v501 = vfloor.f32 %v357
      %v502 = vfloor.f32 %v358
      %v503 = vfloor.f32 %v359
      %v504 = vfloor.f32 %v360
      %v505 = vfloor.f32 %v361
      %v506 = vfloor.f32 %v362
      %v507 = vfloor.f32 %v363
      %v508 = vfloor.f32 %v364
      %v509 = vfloor.f32 %v365
      %v510 = vfloor.f32 %v366
      %v511 = vfloor.f32 %v367
      %v512 = vfloor.f32 %v368
      %v513 = vfloor.f32 %v369
      %v514 = vfloor.f32 %v370
      %v515 = vfloor.f32 %v371
      %v516 = vfloor.f32 %v372
      %v517 = vfloor.f32 %v373
      %v518 = vfloor.f32 %v374
      %v519 = vfloor.f32 %v375
      %v520 = vfloor.f32 %v376
      %v521 = vfloor.f32 %v377
      %v522 = vfloor.f32 %v378
      %v523 = vfloor.f32 %v379
      %v524 = vfloor.f32 %v380
      %v525 = vfloor.f32 %v381
      %v526 = vfloor.f32 %v382
      %v527 = vfloor.f32 %v383
      %v528 = vfloor.f32 %v384
      %v529 = vfloor.f32 %v385
      %v530 = vfloor.f32 %v386
      %v531 = vfloor.f32 %v387
      %v532 = vfloor.f32 %v388
      %v533 = vfloor.f32 %v389
      %v534 = vfloor.f32 %v390
      %v535 = vfloor.f32 %v391
      %v536 = vfloor.f32 %v392
      %v537 = vfloor.f32 %v393
      %v538 = vfloor.f32 %v394
      %v539 = vfloor.f32 %v395
      %v540 = vfloor.f32 %v396
      %v541 = vfloor.f32 %v397
      %v542 = vfloor.f32 %v398
      %v543 = vfloor.f32 %v399
      %v544 = vfloor.f32 %v400
      %v545 = vfloor.f32 %v401
      %v546 = vfloor.f32 %v402
      %v547 = vfloor.f32 %v403
      %v548 = vfloor.f32 %v404
      %v549 = vfloor.f32 %v405
      %v550 = vfloor.f32 %v406
      %v551 = vfloor.f32 %v407
      %v552 = vfloor.f32 %v408
      %v553 = vfloor.f32 %v409
      %v554 = vfloor.f32 %v410
      %v555 = vfloor.f32 %v411
      %v556 = vfloor.f32 %v412
      %v557 = vfloor.f32 %v413
      %v558 = vfloor.f32 %v414
      %v559 = vfloor.f32 %v415
      %v560 = vfloor.f32 %v416
      %v561 = vfloor.f32 %v417
      %v562 = vfloor.f32 %v418
      %v563 = vfloor.f32 %v419
      %v564 = vfloor.f32 %v420
      %v565 = vfloor.f32 %v421
      %v566 = vfloor.f32 %v422
      %v567 = vfloor.f32 %v423
      %v568 = vfloor.f32 %v424
      %v569 = vfloor.f32 %v425
      %v570 = vfloor.f32 %v426
      %v571 = vfloor.f32 %v427
      %v572 = vfloor.f32 %v428
      %v573 = vfloor.f32 %v429
      %v574 = vfloor.f32 %v430
      %v575 = vfloor.f32 %v431
      %v576 = vfloor.f32 %v432
      %v577 = vfloor.f32 %v433
      %v578 = vfloor.f32 %v434
      %v579 = vfloor.f32 %v435
      %v580 = vfloor.f32 %v436
      %v581 = vfloor.f32 %v437
      %v582 = vfloor.f32 %v438
      %v583 = vfloor.f32 %v439
      %v584 = vfloor.f32 %v440
      %v585 = vfloor.f32 %v441
      %v586 = vfloor.f32 %v442
      %v587 = vfloor.f32 %v443
      %v588 = vfloor.f32 %v444
      %v589 = vfloor.f32 %v445
      %v590 = vfloor.f32 %v446
      %v591 = vfloor.f32 %v447
      %v592 = vfloor.f32 %v448
      %v593 = vfloor.f32 %v449
      %v594 = vfloor.f32 %v450
      %v595 = vfloor.f32 %v451
      %v596 = vfloor.f32 %v452
      %v597 = vfloor.f32 %v453
      %v598 = vfloor.f32 %v454
      %v599 = vfloor.f32 %v455
      %v600 = vfloor.f32 %v456
      %v601 = vfloor.f32 %v457
      %v602 = vfloor.f32 %v458
      %v603 = vfloor.f32 %v459
      %v604 = vfloor.f32 %v460
      %v605 = vfloor.f32 %v461
      %v606 = vfloor.f32 %v462
      %v607 = vfloor.f32 %v463
      %v608 = vfloor.f32 %v464
      %v609 = vfloor.f32 %v465
      %v610 = vmax.f32 %v466, 0.0
      %v611 = vmax.f32 %v467, 0.0
      %v612 = vmax.f32 %v468, 0.0
      %v613 = vmax.f32 %v469, 0.0
      %v614 = vmax.f32 %v470, 0.0
      %v615 = vmax.f32 %v471, 0.0
      %v616 = vmax.f32 %v472, 0.0
      %v617 = vmax.f32 %v473, 0.0
      %v618 = vmax.f32 %v474, 0.0
      %v619 = vmax.f32 %v475, 0.0
      %v620 = vmax.f32 %v476, 0.0
      %v621 = vmax.f32 %v477, 0.0
      %v622 = vmax.f32 %v478, 0.0
      %v623 = vmax.f32 %v479, 0.0
      %v624 = vmax.f32 %v480, 0.0
      %v625 = vmax.f32 %v481, 0.0
      %v626 = vmax.f32 %v482, 0.0
      %v627 = vmax.f32 %v483, 0.0
      %v628 = vmax.f32 %v484, 0.0
      %v629 = vmax.f32 %v485, 0.0
      %v630 = vmax.f32 %v486, 0.0
      %v631 = vmax.f32 %v487, 0.0
      %v632 = vmax.f32 %v488, 0.0
      %v633 = vmax.f32 %v489, 0.0
      %v634 = vmax.f32 %v490, 0.0
      %v635 = vmax.f32 %v491, 0.0
      %v636 = vmax.f32 %v492, 0.0
      %v637 = vmax.f32 %v493, 0.0
      %v638 = vmax.f32 %v494, 0.0
      %v639 = vmax.f32 %v495, 0.0
      %v640 = vmax.f32 %v496, 0.0
      %v641 = vmax.f32 %v497, 0.0
      %v642 = vmax.f32 %v498, 0.0
      %v643 = vmax.f32 %v499, 0.0
      %v644 = vmax.f32 %v500, 0.0
      %v645 = vmax.f32 %v501, 0.0
      %v646 = vmax.f32 %v502, 0.0
      %v647 = vmax.f32 %v503, 0.0
      %v648 = vmax.f32 %v504, 0.0
      %v649 = vmax.f32 %v505, 0.0
      %v650 = vmax.f32 %v506, 0.0
      %v651 = vmax.f32 %v507, 0.0
      %v652 = vmax.f32 %v508, 0.0
      %v653 = vmax.f32 %v509, 0.0
      %v654 = vmax.f32 %v510, 0.0
      %v655 = vmax.f32 %v511, 0.0
      %v656 = vmax.f32 %v512, 0.0
      %v657 = vmax.f32 %v513, 0.0
      %v658 = vmax.f32 %v514, 0.0
      %v659 = vmax.f32 %v515, 0.0
      %v660 = vmax.f32 %v516, 0.0
      %v661 = vmax.f32 %v517, 0.0
      %v662 = vmax.f32 %v518, 0.0
      %v663 = vmax.f32 %v519, 0.0
      %v664 = vmax.f32 %v520, 0.0
      %v665 = vmax.f32 %v521, 0.0
      %v666 = vmax.f32 %v522, 0.0
      %v667 = vmax.f32 %v523, 0.0
      %v668 = vmax.f32 %v524, 0.0
      %v669 = vmax.f32 %v525, 0.0
      %v670 = vmax.f32 %v526, 0.0
      %v671 = vmax.f32 %v527, 0.0
      %v672 = vmax.f32 %v528, 0.0
      %v673 = vmax.f32 %v529, 0.0
      %v674 = vmax.f32 %v530, 0.0
      %v675 = vmax.f32 %v531, 0.0
      %v676 = vmax.f32 %v532, 0.0
      %v677 = vmax.f32 %v533, 0.0
      %v678 = vmax.f32 %v534, 0.0
      %v679 = vmax.f32 %v535, 0.0
      %v680 = vmax.f32 %v536, 0.0
      %v681 = vmax.f32 %v537, 0.0
      %v682 = vmax.f32 %v538, 0.0
      %v683 = vmax.f32 %v539, 0.0
      %v684 = vmax.f32 %v540, 0.0
      %v685 = vmax.f32 %v541, 0.0
      %v686 = vmax.f32 %v542, 0.0
      %v687 = vmax.f32 %v543, 0.0
      %v688 = vmax.f32 %v544, 0.0
      %v689 = vmax.f32 %v545, 0.0
      %v690 = vmax.f32 %v546, 0.0
      %v691 = vmax.f32 %v547, 0.0
      %v692 = vmax.f32 %v548, 0.0
      %v693 = vmax.f32 %v549, 0.0
      %v694 = vmax.f32 %v550, 0.0
      %v695 = vmax.f32 %v551, 0.0
      %v696 = vmax.f32 %v552, 0.0
      %v697 = vmax.f32 %v553, 0.0
      %v698 = vmax.f32 %v554, 0.0
      %v699 = vmax.f32 %v555, 0.0
      %v700 = vmax.f32 %v556, 0.0
      %v701 = vmax.f32 %v557, 0.0
      %v702 = vmax.f32 %v558, 0.0
      %v703 = vmax.f32 %v559, 0.0
      %v704 = vmax.f32 %v560, 0.0
      %v705 = vmax.f32 %v561, 0.0
      %v706 = vmax.f32 %v562, 0.0
      %v707 = vmax.f32 %v563, 0.0
      %v708 = vmax.f32 %v564, 0.0
      %v709 = vmax.f32 %v565, 0.0
      %v710 = vmax.f32 %v566, 0.0
      %v711 = vmax.f32 %v567, 0.0
      %v712 = vmax.f32 %v568, 0.0
      %v713 = vmax.f32 %v569, 0.0
      %v714 = vmax.f32 %v570, 0.0
      %v715 = vmax.f32 %v571, 0.0
      %v716 = vmax.f32 %v572, 0.0
      %v717 = vmax.f32 %v573, 0.0
      %v718 = vmax.f32 %v574, 0.0
      %v719 = vmax.f32 %v575, 0.0
      %v720 = vmax.f32 %v576, 0.0
      %v721 = vmax.f32 %v577, 0.0
      %v722 = vmax.f32 %v578, 0.0
      %v723 = vmax.f32 %v579, 0.0
      %v724 = vmax.f32 %v580, 0.0
      %v725 = vmax.f32 %v581, 0.0
      %v726 = vmax.f32 %v582, 0.0
      %v727 = vmax.f32 %v583, 0.0
      %v728 = vmax.f32 %v584, 0.0
      %v729 = vmax.f32 %v585, 0.0
      %v730 = vmax.f32 %v586, 0.0
      %v731 = vmax.f32 %v587, 0.0
      %v732 = vmax.f32 %v588, 0.0
      %v733 = vmax.f32 %v589, 0.0
      %v734 = vmax.f32 %v590, 0.0
      %v735 = vmax.f32 %v591, 0.0
      %v736 = vmax.f32 %v592, 0.0
      %v737 = vmax.f32 %v593, 0.0
      %v738 = vmax.f32 %v594, 0.0
      %v739 = vmax.f32 %v595, 0.0
      %v740 = vmax.f32 %v596, 0.0
      %v741 = vmax.f32 %v597, 0.0
      %v742 = vmax.f32 %v598, 0.0
      %v743 = vmax.f32 %v599, 0.0
      %v744 = vmax.f32 %v600, 0.0
      %v745 = vmax.f32 %v601, 0.0
      %v746 = vmax.f32 %v602, 0.0
      %v747 = vmax.f32 %v603, 0.0
      %v748 = vmax.f32 %v604, 0.0
      %v749 = vmax.f32 %v605, 0.0
      %v750 = vmax.f32 %v606, 0.0
      %v751 = vmax.f32 %v607, 0.0
      %v752 = vmax.f32 %v608, 0.0
      %v753 = vmax.f32 %v609, 0.0
      %v754 = vmin.f32 %v610, 7.0
      %v755 = vmin.f32 %v611, 7.0
      %v756 = vmin.f32 %v612, 7.0
      %v757 = vmin.f32 %v613, 7.0
      %v758 = vmin.f32 %v614, 7.0
      %v759 = vmin.f32 %v615, 7.0
      %v760 = vmin.f32 %v616, 7.0
      %v761 = vmin.f32 %v617, 7.0
      %v762 = vmin.f32 %v618, 7.0
      %v763 = vmin.f32 %v619, 7.0
      %v764 = vmin.f32 %v620, 7.0
      %v765 = vmin.f32 %v621, 7.0
      %v766 = vmin.f32 %v622, 7.0
      %v767 = vmin.f32 %v623, 7.0
      %v768 = vmin.f32 %v624, 7.0
      %v769 = vmin.f32 %v625, 7.0
      %v770 = vmin.f32 %v626, 7.0
      %v771 = vmin.f32 %v627, 7.0
      %v772 = vmin.f32 %v628, 7.0
      %v773 = vmin.f32 %v629, 7.0
      %v774 = vmin.f32 %v630, 7.0
      %v775 = vmin.f32 %v631, 7.0
      %v776 = vmin.f32 %v632, 7.0
      %v777 = vmin.f32 %v633, 7.0
      %v778 = vmin.f32 %v634, 7.0
      %v779 = vmin.f32 %v635, 7.0
      %v780 = vmin.f32 %v636, 7.0
      %v781 = vmin.f32 %v637, 7.0
      %v782 = vmin.f32 %v638, 7.0
      %v783 = vmin.f32 %v639, 7.0
      %v784 = vmin.f32 %v640, 7.0
      %v785 = vmin.f32 %v641, 7.0
      %v786 = vmin.f32 %v642, 7.0
      %v787 = vmin.f32 %v643, 7.0
      %v788 = vmin.f32 %v644, 7.0
      %v789 = vmin.f32 %v645, 7.0
      %v790 = vmin.f32 %v646, 7.0
      %v791 = vmin.f32 %v647, 7.0
      %v792 = vmin.f32 %v648, 7.0
      %v793 = vmin.f32 %v649, 7.0
      %v794 = vmin.f32 %v650, 7.0
      %v795 = vmin.f32 %v651, 7.0
      %v796 = vmin.f32 %v652, 7.0
      %v797 = vmin.f32 %v653, 7.0
      %v798 = vmin.f32 %v654, 7.0
      %v799 = vmin.f32 %v655, 7.0
      %v800 = vmin.f32 %v656, 7.0
      %v801 = vmin.f32 %v657, 7.0
      %v802 = vmin.f32 %v658, 7.0
      %v803 = vmin.f32 %v659, 7.0
      %v804 = vmin.f32 %v660, 7.0
      %v805 = vmin.f32 %v661, 7.0
      %v806 = vmin.f32 %v662, 7.0
      %v807 = vmin.f32 %v663, 7.0
      %v808 = vmin.f32 %v664, 7.0
      %v809 = vmin.f32 %v665, 7.0
      %v810 = vmin.f32 %v666, 7.0
      %v811 = vmin.f32 %v667, 7.0
      %v812 = vmin.f32 %v668, 7.0
      %v813 = vmin.f32 %v669, 7.0
      %v814 = vmin.f32 %v670, 7.0
      %v815 = vmin.f32 %v671, 7.0
      %v816 = vmin.f32 %v672, 7.0
      %v817 = vmin.f32 %v673, 7.0
      %v818 = vmin.f32 %v674, 7.0
      %v819 = vmin.f32 %v675, 7.0
      %v820 = vmin.f32 %v676, 7.0
      %v821 = vmin.f32 %v677, 7.0
      %v822 = vmin.f32 %v678, 7.0
      %v823 = vmin.f32 %v679, 7.0
      %v824 = vmin.f32 %v680, 7.0
      %v825 = vmin.f32 %v681, 7.0
      %v826 = vmin.f32 %v682, 7.0
      %v827 = vmin.f32 %v683, 7.0
      %v828 = vmin.f32 %v684, 7.0
      %v829 = vmin.f32 %v685, 7.0
      %v830 = vmin.f32 %v686, 7.0
      %v831 = vmin.f32 %v687, 7.0
      %v832 = vmin.f32 %v688, 7.0
      %v833 = vmin.f32 %v689, 7.0
      %v834 = vmin.f32 %v690, 7.0
      %v835 = vmin.f32 %v691, 7.0
      %v836 = vmin.f32 %v692, 7.0
      %v837 = vmin.f32 %v693, 7.0
      %v838 = vmin.f32 %v694, 7.0
      %v839 = vmin.f32 %v695, 7.0
      %v840 = vmin.f32 %v696, 7.0
      %v841 = vmin.f32 %v697, 7.0
      %v842 = vmin.f32 %v698, 7.0
      %v843 = vmin.f32 %v699, 7.0
      %v844 = vmin.f32 %v700, 7.0
      %v845 = vmin.f32 %v701, 7.0
      %v846 = vmin.f32 %v702, 7.0
      %v847 = vmin.f32 %v703, 7.0
      %v848 = vmin.f32 %v704, 7.0
      %v849 = vmin.f32 %v705, 7.0
      %v850 = vmin.f32 %v706, 7.0
      %v851 = vmin.f32 %v707, 7.0
      %v852 = vmin.f32 %v708, 7.0
      %v853 = vmin.f32 %v709, 7.0
      %v854 = vmin.f32 %v710, 7.0
      %v855 = vmin.f32 %v711, 7.0
      %v856 = vmin.f32 %v712, 7.0
      %v857 = vmin.f32 %v713, 7.0
      %v858 = vmin.f32 %v714, 7.0
      %v859 = vmin.f32 %v715, 7.0
      %v860 = vmin.f32 %v716, 7.0
      %v861 = vmin.f32 %v717, 7.0
      %v862 = vmin.f32 %v718, 7.0
      %v863 = vmin.f32 %v719, 7.0
      %v864 = vmin.f32 %v720, 7.0
      %v865 = vmin.f32 %v721, 7.0
      %v866 = vmin.f32 %v722, 7.0
      %v867 = vmin.f32 %v723, 7.0
      %v868 = vmin.f32 %v724, 7.0
      %v869 = vmin.f32 %v725, 7.0
      %v870 = vmin.f32 %v726, 7.0
      %v871 = vmin.f32 %v727, 7.0
      %v872 = vmin.f32 %v728, 7.0
      %v873 = vmin.f32 %v729, 7.0
      %v874 = vmin.f32 %v730, 7.0
      %v875 = vmin.f32 %v731, 7.0
      %v876 = vmin.f32 %v732, 7.0
      %v877 = vmin.f32 %v733, 7.0
      %v878 = vmin.f32 %v734, 7.0
      %v879 = vmin.f32 %v735, 7.0
      %v880 = vmin.f32 %v736, 7.0
      %v881 = vmin.f32 %v737, 7.0
      %v882 = vmin.f32 %v738, 7.0
      %v883 = vmin.f32 %v739, 7.0
      %v884 = vmin.f32 %v740, 7.0
      %v885 = vmin.f32 %v741, 7.0
      %v886 = vmin.f32 %v742, 7.0
      %v887 = vmin.f32 %v743, 7.0
      %v888 = vmin.f32 %v744, 7.0
      %v889 = vmin.f32 %v745, 7.0
      %v890 = vmin.f32 %v746, 7.0
      %v891 = vmin.f32 %v747, 7.0
      %v892 = vmin.f32 %v748, 7.0
      %v893 = vmin.f32 %v749, 7.0
      %v894 = vmin.f32 %v750, 7.0
      %v895 = vmin.f32 %v751, 7.0
      %v896 = vmin.f32 %v752, 7.0
      %v897 = vmin.f32 %v753, 7.0
      %vm898 = vcmp.eq.f32.partialorder %v754, 0.0
      %vm899 = vcmp.eq.f32.partialorder %v755, 0.0
      %vm900 = vcmp.eq.f32.partialorder %v756, 0.0
      %vm901 = vcmp.eq.f32.partialorder %v757, 0.0
      %vm902 = vcmp.eq.f32.partialorder %v758, 0.0
      %vm903 = vcmp.eq.f32.partialorder %v759, 0.0
      %vm904 = vcmp.eq.f32.partialorder %v760, 0.0
      %vm905 = vcmp.eq.f32.partialorder %v761, 0.0
      %vm906 = vcmp.eq.f32.partialorder %v762, 0.0
      %vm907 = vcmp.eq.f32.partialorder %v763, 0.0
      %vm908 = vcmp.eq.f32.partialorder %v764, 0.0
      %vm909 = vcmp.eq.f32.partialorder %v765, 0.0
      %vm910 = vcmp.eq.f32.partialorder %v766, 0.0
      %vm911 = vcmp.eq.f32.partialorder %v767, 0.0
      %vm912 = vcmp.eq.f32.partialorder %v768, 0.0
      %vm913 = vcmp.eq.f32.partialorder %v769, 0.0
      %vm914 = vcmp.eq.f32.partialorder %v770, 0.0
      %vm915 = vcmp.eq.f32.partialorder %v771, 0.0
      %vm916 = vcmp.eq.f32.partialorder %v772, 0.0
      %vm917 = vcmp.eq.f32.partialorder %v773, 0.0
      %vm918 = vcmp.eq.f32.partialorder %v774, 0.0
      %vm919 = vcmp.eq.f32.partialorder %v775, 0.0
      %vm920 = vcmp.eq.f32.partialorder %v776, 0.0
      %vm921 = vcmp.eq.f32.partialorder %v777, 0.0
      %vm922 = vcmp.eq.f32.partialorder %v778, 0.0
      %vm923 = vcmp.eq.f32.partialorder %v779, 0.0
      %vm924 = vcmp.eq.f32.partialorder %v780, 0.0
      %vm925 = vcmp.eq.f32.partialorder %v781, 0.0
      %vm926 = vcmp.eq.f32.partialorder %v782, 0.0
      %vm927 = vcmp.eq.f32.partialorder %v783, 0.0
      %vm928 = vcmp.eq.f32.partialorder %v784, 0.0
      %vm929 = vcmp.eq.f32.partialorder %v785, 0.0
      %vm930 = vcmp.eq.f32.partialorder %v786, 0.0
      %vm931 = vcmp.eq.f32.partialorder %v787, 0.0
      %vm932 = vcmp.eq.f32.partialorder %v788, 0.0
      %vm933 = vcmp.eq.f32.partialorder %v789, 0.0
      %vm934 = vcmp.eq.f32.partialorder %v790, 0.0
      %vm935 = vcmp.eq.f32.partialorder %v791, 0.0
      %vm936 = vcmp.eq.f32.partialorder %v792, 0.0
      %vm937 = vcmp.eq.f32.partialorder %v793, 0.0
      %vm938 = vcmp.eq.f32.partialorder %v794, 0.0
      %vm939 = vcmp.eq.f32.partialorder %v795, 0.0
      %vm940 = vcmp.eq.f32.partialorder %v796, 0.0
      %vm941 = vcmp.eq.f32.partialorder %v797, 0.0
      %vm942 = vcmp.eq.f32.partialorder %v798, 0.0
      %vm943 = vcmp.eq.f32.partialorder %v799, 0.0
      %vm944 = vcmp.eq.f32.partialorder %v800, 0.0
      %vm945 = vcmp.eq.f32.partialorder %v801, 0.0
      %vm946 = vcmp.eq.f32.partialorder %v802, 0.0
      %vm947 = vcmp.eq.f32.partialorder %v803, 0.0
      %vm948 = vcmp.eq.f32.partialorder %v804, 0.0
      %vm949 = vcmp.eq.f32.partialorder %v805, 0.0
      %vm950 = vcmp.eq.f32.partialorder %v806, 0.0
      %vm951 = vcmp.eq.f32.partialorder %v807, 0.0
      %vm952 = vcmp.eq.f32.partialorder %v808, 0.0
      %vm953 = vcmp.eq.f32.partialorder %v809, 0.0
      %vm954 = vcmp.eq.f32.partialorder %v810, 0.0
      %vm955 = vcmp.eq.f32.partialorder %v811, 0.0
      %vm956 = vcmp.eq.f32.partialorder %v812, 0.0
      %vm957 = vcmp.eq.f32.partialorder %v813, 0.0
      %vm958 = vcmp.eq.f32.partialorder %v814, 0.0
      %vm959 = vcmp.eq.f32.partialorder %v815, 0.0
      %vm960 = vcmp.eq.f32.partialorder %v816, 0.0
      %vm961 = vcmp.eq.f32.partialorder %v817, 0.0
      %vm962 = vcmp.eq.f32.partialorder %v818, 0.0
      %vm963 = vcmp.eq.f32.partialorder %v819, 0.0
      %vm964 = vcmp.eq.f32.partialorder %v820, 0.0
      %vm965 = vcmp.eq.f32.partialorder %v821, 0.0
      %vm966 = vcmp.eq.f32.partialorder %v822, 0.0
      %vm967 = vcmp.eq.f32.partialorder %v823, 0.0
      %vm968 = vcmp.eq.f32.partialorder %v824, 0.0
      %vm969 = vcmp.eq.f32.partialorder %v825, 0.0
      %vm970 = vcmp.eq.f32.partialorder %v826, 0.0
      %vm971 = vcmp.eq.f32.partialorder %v827, 0.0
      %vm972 = vcmp.eq.f32.partialorder %v828, 0.0
      %vm973 = vcmp.eq.f32.partialorder %v829, 0.0
      %vm974 = vcmp.eq.f32.partialorder %v830, 0.0
      %vm975 = vcmp.eq.f32.partialorder %v831, 0.0
      %vm976 = vcmp.eq.f32.partialorder %v832, 0.0
      %vm977 = vcmp.eq.f32.partialorder %v833, 0.0
      %vm978 = vcmp.eq.f32.partialorder %v834, 0.0
      %vm979 = vcmp.eq.f32.partialorder %v835, 0.0
      %vm980 = vcmp.eq.f32.partialorder %v836, 0.0
      %vm981 = vcmp.eq.f32.partialorder %v837, 0.0
      %vm982 = vcmp.eq.f32.partialorder %v838, 0.0
      %vm983 = vcmp.eq.f32.partialorder %v839, 0.0
      %vm984 = vcmp.eq.f32.partialorder %v840, 0.0
      %vm985 = vcmp.eq.f32.partialorder %v841, 0.0
      %vm986 = vcmp.eq.f32.partialorder %v842, 0.0
      %vm987 = vcmp.eq.f32.partialorder %v843, 0.0
      %vm988 = vcmp.eq.f32.partialorder %v844, 0.0
      %vm989 = vcmp.eq.f32.partialorder %v845, 0.0
      %vm990 = vcmp.eq.f32.partialorder %v846, 0.0
      %vm991 = vcmp.eq.f32.partialorder %v847, 0.0
      %vm992 = vcmp.eq.f32.partialorder %v848, 0.0
      %vm993 = vcmp.eq.f32.partialorder %v849, 0.0
      %vm994 = vcmp.eq.f32.partialorder %v850, 0.0
      %vm995 = vcmp.eq.f32.partialorder %v851, 0.0
      %vm996 = vcmp.eq.f32.partialorder %v852, 0.0
      %vm997 = vcmp.eq.f32.partialorder %v853, 0.0
      %vm998 = vcmp.eq.f32.partialorder %v854, 0.0
      %vm999 = vcmp.eq.f32.partialorder %v855, 0.0
      %vm1000 = vcmp.eq.f32.partialorder %v856, 0.0
      %vm1001 = vcmp.eq.f32.partialorder %v857, 0.0
      %vm1002 = vcmp.eq.f32.partialorder %v858, 0.0
      %vm1003 = vcmp.eq.f32.partialorder %v859, 0.0
      %vm1004 = vcmp.eq.f32.partialorder %v860, 0.0
      %vm1005 = vcmp.eq.f32.partialorder %v861, 0.0
      %vm1006 = vcmp.eq.f32.partialorder %v862, 0.0
      %vm1007 = vcmp.eq.f32.partialorder %v863, 0.0
      %vm1008 = vcmp.eq.f32.partialorder %v864, 0.0
      %vm1009 = vcmp.eq.f32.partialorder %v865, 0.0
      %vm1010 = vcmp.eq.f32.partialorder %v866, 0.0
      %vm1011 = vcmp.eq.f32.partialorder %v867, 0.0
      %vm1012 = vcmp.eq.f32.partialorder %v868, 0.0
      %vm1013 = vcmp.eq.f32.partialorder %v869, 0.0
      %vm1014 = vcmp.eq.f32.partialorder %v870, 0.0
      %vm1015 = vcmp.eq.f32.partialorder %v871, 0.0
      %vm1016 = vcmp.eq.f32.partialorder %v872, 0.0
      %vm1017 = vcmp.eq.f32.partialorder %v873, 0.0
      %vm1018 = vcmp.eq.f32.partialorder %v874, 0.0
      %vm1019 = vcmp.eq.f32.partialorder %v875, 0.0
      %vm1020 = vcmp.eq.f32.partialorder %v876, 0.0
      %vm1021 = vcmp.eq.f32.partialorder %v877, 0.0
      %vm1022 = vcmp.eq.f32.partialorder %v878, 0.0
      %vm1023 = vcmp.eq.f32.partialorder %v879, 0.0
      %vm1024 = vcmp.eq.f32.partialorder %v880, 0.0
      %vm1025 = vcmp.eq.f32.partialorder %v881, 0.0
      %vm1026 = vcmp.eq.f32.partialorder %v882, 0.0
      %vm1027 = vcmp.eq.f32.partialorder %v883, 0.0
      %vm1028 = vcmp.eq.f32.partialorder %v884, 0.0
      %vm1029 = vcmp.eq.f32.partialorder %v885, 0.0
      %vm1030 = vcmp.eq.f32.partialorder %v886, 0.0
      %vm1031 = vcmp.eq.f32.partialorder %v887, 0.0
      %vm1032 = vcmp.eq.f32.partialorder %v888, 0.0
      %vm1033 = vcmp.eq.f32.partialorder %v889, 0.0
      %vm1034 = vcmp.eq.f32.partialorder %v890, 0.0
      %vm1035 = vcmp.eq.f32.partialorder %v891, 0.0
      %vm1036 = vcmp.eq.f32.partialorder %v892, 0.0
      %vm1037 = vcmp.eq.f32.partialorder %v893, 0.0
      %vm1038 = vcmp.eq.f32.partialorder %v894, 0.0
      %vm1039 = vcmp.eq.f32.partialorder %v895, 0.0
      %vm1040 = vcmp.eq.f32.partialorder %v896, 0.0
      %vm1041 = vcmp.eq.f32.partialorder %v897, 0.0
      %v1042 = vsel %vm898, 1, 0
      %v1043 = vsel %vm899, 1, 0
      %v1044 = vsel %vm900, 1, 0
      %v1045 = vsel %vm901, 1, 0
      %v1046 = vsel %vm902, 1, 0
      %v1047 = vsel %vm903, 1, 0
      %v1048 = vsel %vm904, 1, 0
      %v1049 = vsel %vm905, 1, 0
      %v1050 = vsel %vm906, 1, 0
      %v1051 = vsel %vm907, 1, 0
      %v1052 = vsel %vm908, 1, 0
      %v1053 = vsel %vm909, 1, 0
      %v1054 = vsel %vm910, 1, 0
      %v1055 = vsel %vm911, 1, 0
      %v1056 = vsel %vm912, 1, 0
      %v1057 = vsel %vm913, 1, 0
      %v1058 = vsel %vm914, 1, 0
      %v1059 = vsel %vm915, 1, 0
      %v1060 = vsel %vm916, 1, 0
      %v1061 = vsel %vm917, 1, 0
      %v1062 = vsel %vm918, 1, 0
      %v1063 = vsel %vm919, 1, 0
      %v1064 = vsel %vm920, 1, 0
      %v1065 = vsel %vm921, 1, 0
      %v1066 = vsel %vm922, 1, 0
      %v1067 = vsel %vm923, 1, 0
      %v1068 = vsel %vm924, 1, 0
      %v1069 = vsel %vm925, 1, 0
      %v1070 = vsel %vm926, 1, 0
      %v1071 = vsel %vm927, 1, 0
      %v1072 = vsel %vm928, 1, 0
      %v1073 = vsel %vm929, 1, 0
      %v1074 = vsel %vm930, 1, 0
      %v1075 = vsel %vm931, 1, 0
      %v1076 = vsel %vm932, 1, 0
      %v1077 = vsel %vm933, 1, 0
      %v1078 = vsel %vm934, 1, 0
      %v1079 = vsel %vm935, 1, 0
      %v1080 = vsel %vm936, 1, 0
      %v1081 = vsel %vm937, 1, 0
      %v1082 = vsel %vm938, 1, 0
      %v1083 = vsel %vm939, 1, 0
      %v1084 = vsel %vm940, 1, 0
      %v1085 = vsel %vm941, 1, 0
      %v1086 = vsel %vm942, 1, 0
      %v1087 = vsel %vm943, 1, 0
      %v1088 = vsel %vm944, 1, 0
      %v1089 = vsel %vm945, 1, 0
      %v1090 = vsel %vm946, 1, 0
      %v1091 = vsel %vm947, 1, 0
      %v1092 = vsel %vm948, 1, 0
      %v1093 = vsel %vm949, 1, 0
      %v1094 = vsel %vm950, 1, 0
      %v1095 = vsel %vm951, 1, 0
      %v1096 = vsel %vm952, 1, 0
      %v1097 = vsel %vm953, 1, 0
      %v1098 = vsel %vm954, 1, 0
      %v1099 = vsel %vm955, 1, 0
      %v1100 = vsel %vm956, 1, 0
      %v1101 = vsel %vm957, 1, 0
      %v1102 = vsel %vm958, 1, 0
      %v1103 = vsel %vm959, 1, 0
      %v1104 = vsel %vm960, 1, 0
      %v1105 = vsel %vm961, 1, 0
      %v1106 = vsel %vm962, 1, 0
      %v1107 = vsel %vm963, 1, 0
      %v1108 = vsel %vm964, 1, 0
      %v1109 = vsel %vm965, 1, 0
      %v1110 = vsel %vm966, 1, 0
      %v1111 = vsel %vm967, 1, 0
      %v1112 = vsel %vm968, 1, 0
      %v1113 = vsel %vm969, 1, 0
      %v1114 = vsel %vm970, 1, 0
      %v1115 = vsel %vm971, 1, 0
      %v1116 = vsel %vm972, 1, 0
      %v1117 = vsel %vm973, 1, 0
      %v1118 = vsel %vm974, 1, 0
      %v1119 = vsel %vm975, 1, 0
      %v1120 = vsel %vm976, 1, 0
      %v1121 = vsel %vm977, 1, 0
      %v1122 = vsel %vm978, 1, 0
      %v1123 = vsel %vm979, 1, 0
      %v1124 = vsel %vm980, 1, 0
      %v1125 = vsel %vm981, 1, 0
      %v1126 = vsel %vm982, 1, 0
      %v1127 = vsel %vm983, 1, 0
      %v1128 = vsel %vm984, 1, 0
      %v1129 = vsel %vm985, 1, 0
      %v1130 = vsel %vm986, 1, 0
      %v1131 = vsel %vm987, 1, 0
      %v1132 = vsel %vm988, 1, 0
      %v1133 = vsel %vm989, 1, 0
      %v1134 = vsel %vm990, 1, 0
      %v1135 = vsel %vm991, 1, 0
      %v1136 = vsel %vm992, 1, 0
      %v1137 = vsel %vm993, 1, 0
      %v1138 = vsel %vm994, 1, 0
      %v1139 = vsel %vm995, 1, 0
      %v1140 = vsel %vm996, 1, 0
      %v1141 = vsel %vm997, 1, 0
      %v1142 = vsel %vm998, 1, 0
      %v1143 = vsel %vm999, 1, 0
      %v1144 = vsel %vm1000, 1, 0
      %v1145 = vsel %vm1001, 1, 0
      %v1146 = vsel %vm1002, 1, 0
      %v1147 = vsel %vm1003, 1, 0
      %v1148 = vsel %vm1004, 1, 0
      %v1149 = vsel %vm1005, 1, 0
      %v1150 = vsel %vm1006, 1, 0
      %v1151 = vsel %vm1007, 1, 0
      %v1152 = vsel %vm1008, 1, 0
      %v1153 = vsel %vm1009, 1, 0
      %v1154 = vsel %vm1010, 1, 0
      %v1155 = vsel %vm1011, 1, 0
      %v1156 = vsel %vm1012, 1, 0
      %v1157 = vsel %vm1013, 1, 0
      %v1158 = vsel %vm1014, 1, 0
      %v1159 = vsel %vm1015, 1, 0
      %v1160 = vsel %vm1016, 1, 0
      %v1161 = vsel %vm1017, 1, 0
      %v1162 = vsel %vm1018, 1, 0
      %v1163 = vsel %vm1019, 1, 0
      %v1164 = vsel %vm1020, 1, 0
      %v1165 = vsel %vm1021, 1, 0
      %v1166 = vsel %vm1022, 1, 0
      %v1167 = vsel %vm1023, 1, 0
      %v1168 = vsel %vm1024, 1, 0
      %v1169 = vsel %vm1025, 1, 0
      %v1170 = vsel %vm1026, 1, 0
      %v1171 = vsel %vm1027, 1, 0
      %v1172 = vsel %vm1028, 1, 0
      %v1173 = vsel %vm1029, 1, 0
      %v1174 = vsel %vm1030, 1, 0
      %v1175 = vsel %vm1031, 1, 0
      %v1176 = vsel %vm1032, 1, 0
      %v1177 = vsel %vm1033, 1, 0
      %v1178 = vsel %vm1034, 1, 0
      %v1179 = vsel %vm1035, 1, 0
      %v1180 = vsel %vm1036, 1, 0
      %v1181 = vsel %vm1037, 1, 0
      %v1182 = vsel %vm1038, 1, 0
      %v1183 = vsel %vm1039, 1, 0
      %v1184 = vsel %vm1040, 1, 0
      %v1185 = vsel %vm1041, 1, 0
      %v1186 = vcvt.s32.f32 %v1042
      %v1187 = vcvt.s32.f32 %v1043
      %v1188 = vcvt.s32.f32 %v1044
      %v1189 = vcvt.s32.f32 %v1045
      %v1190 = vcvt.s32.f32 %v1046
      %v1191 = vcvt.s32.f32 %v1047
      %v1192 = vcvt.s32.f32 %v1048
      %v1193 = vcvt.s32.f32 %v1049
      %v1194 = vcvt.s32.f32 %v1050
      %v1195 = vcvt.s32.f32 %v1051
      %v1196 = vcvt.s32.f32 %v1052
      %v1197 = vcvt.s32.f32 %v1053
      %v1198 = vcvt.s32.f32 %v1054
      %v1199 = vcvt.s32.f32 %v1055
      %v1200 = vcvt.s32.f32 %v1056
      %v1201 = vcvt.s32.f32 %v1057
      %v1202 = vcvt.s32.f32 %v1058
      %v1203 = vcvt.s32.f32 %v1059
      %v1204 = vcvt.s32.f32 %v1060
      %v1205 = vcvt.s32.f32 %v1061
      %v1206 = vcvt.s32.f32 %v1062
      %v1207 = vcvt.s32.f32 %v1063
      %v1208 = vcvt.s32.f32 %v1064
      %v1209 = vcvt.s32.f32 %v1065
      %v1210 = vcvt.s32.f32 %v1066
      %v1211 = vcvt.s32.f32 %v1067
      %v1212 = vcvt.s32.f32 %v1068
      %v1213 = vcvt.s32.f32 %v1069
      %v1214 = vcvt.s32.f32 %v1070
      %v1215 = vcvt.s32.f32 %v1071
      %v1216 = vcvt.s32.f32 %v1072
      %v1217 = vcvt.s32.f32 %v1073
      %v1218 = vcvt.s32.f32 %v1074
      %v1219 = vcvt.s32.f32 %v1075
      %v1220 = vcvt.s32.f32 %v1076
      %v1221 = vcvt.s32.f32 %v1077
      %v1222 = vcvt.s32.f32 %v1078
      %v1223 = vcvt.s32.f32 %v1079
      %v1224 = vcvt.s32.f32 %v1080
      %v1225 = vcvt.s32.f32 %v1081
      %v1226 = vcvt.s32.f32 %v1082
      %v1227 = vcvt.s32.f32 %v1083
      %v1228 = vcvt.s32.f32 %v1084
      %v1229 = vcvt.s32.f32 %v1085
      %v1230 = vcvt.s32.f32 %v1086
      %v1231 = vcvt.s32.f32 %v1087
      %v1232 = vcvt.s32.f32 %v1088
      %v1233 = vcvt.s32.f32 %v1089
      %v1234 = vcvt.s32.f32 %v1090
      %v1235 = vcvt.s32.f32 %v1091
      %v1236 = vcvt.s32.f32 %v1092
      %v1237 = vcvt.s32.f32 %v1093
      %v1238 = vcvt.s32.f32 %v1094
      %v1239 = vcvt.s32.f32 %v1095
      %v1240 = vcvt.s32.f32 %v1096
      %v1241 = vcvt.s32.f32 %v1097
      %v1242 = vcvt.s32.f32 %v1098
      %v1243 = vcvt.s32.f32 %v1099
      %v1244 = vcvt.s32.f32 %v1100
      %v1245 = vcvt.s32.f32 %v1101
      %v1246 = vcvt.s32.f32 %v1102
      %v1247 = vcvt.s32.f32 %v1103
      %v1248 = vcvt.s32.f32 %v1104
      %v1249 = vcvt.s32.f32 %v1105
      %v1250 = vcvt.s32.f32 %v1106
      %v1251 = vcvt.s32.f32 %v1107
      %v1252 = vcvt.s32.f32 %v1108
      %v1253 = vcvt.s32.f32 %v1109
      %v1254 = vcvt.s32.f32 %v1110
      %v1255 = vcvt.s32.f32 %v1111
      %v1256 = vcvt.s32.f32 %v1112
      %v1257 = vcvt.s32.f32 %v1113
      %v1258 = vcvt.s32.f32 %v1114
      %v1259 = vcvt.s32.f32 %v1115
      %v1260 = vcvt.s32.f32 %v1116
      %v1261 = vcvt.s32.f32 %v1117
      %v1262 = vcvt.s32.f32 %v1118
      %v1263 = vcvt.s32.f32 %v1119
      %v1264 = vcvt.s32.f32 %v1120
      %v1265 = vcvt.s32.f32 %v1121
      %v1266 = vcvt.s32.f32 %v1122
      %v1267 = vcvt.s32.f32 %v1123
      %v1268 = vcvt.s32.f32 %v1124
      %v1269 = vcvt.s32.f32 %v1125
      %v1270 = vcvt.s32.f32 %v1126
      %v1271 = vcvt.s32.f32 %v1127
      %v1272 = vcvt.s32.f32 %v1128
      %v1273 = vcvt.s32.f32 %v1129
      %v1274 = vcvt.s32.f32 %v1130
      %v1275 = vcvt.s32.f32 %v1131
      %v1276 = vcvt.s32.f32 %v1132
      %v1277 = vcvt.s32.f32 %v1133
      %v1278 = vcvt.s32.f32 %v1134
      %v1279 = vcvt.s32.f32 %v1135
      %v1280 = vcvt.s32.f32 %v1136
      %v1281 = vcvt.s32.f32 %v1137
      %v1282 = vcvt.s32.f32 %v1138
      %v1283 = vcvt.s32.f32 %v1139
      %v1284 = vcvt.s32.f32 %v1140
      %v1285 = vcvt.s32.f32 %v1141
      %v1286 = vcvt.s32.f32 %v1142
      %v1287 = vcvt.s32.f32 %v1143
      %v1288 = vcvt.s32.f32 %v1144
      %v1289 = vcvt.s32.f32 %v1145
      %v1290 = vcvt.s32.f32 %v1146
      %v1291 = vcvt.s32.f32 %v1147
      %v1292 = vcvt.s32.f32 %v1148
      %v1293 = vcvt.s32.f32 %v1149
      %v1294 = vcvt.s32.f32 %v1150
      %v1295 = vcvt.s32.f32 %v1151
      %v1296 = vcvt.s32.f32 %v1152
      %v1297 = vcvt.s32.f32 %v1153
      %v1298 = vcvt.s32.f32 %v1154
      %v1299 = vcvt.s32.f32 %v1155
      %v1300 = vcvt.s32.f32 %v1156
      %v1301 = vcvt.s32.f32 %v1157
      %v1302 = vcvt.s32.f32 %v1158
      %v1303 = vcvt.s32.f32 %v1159
      %v1304 = vcvt.s32.f32 %v1160
      %v1305 = vcvt.s32.f32 %v1161
      %v1306 = vcvt.s32.f32 %v1162
      %v1307 = vcvt.s32.f32 %v1163
      %v1308 = vcvt.s32.f32 %v1164
      %v1309 = vcvt.s32.f32 %v1165
      %v1310 = vcvt.s32.f32 %v1166
      %v1311 = vcvt.s32.f32 %v1167
      %v1312 = vcvt.s32.f32 %v1168
      %v1313 = vcvt.s32.f32 %v1169
      %v1314 = vcvt.s32.f32 %v1170
      %v1315 = vcvt.s32.f32 %v1171
      %v1316 = vcvt.s32.f32 %v1172
      %v1317 = vcvt.s32.f32 %v1173
      %v1318 = vcvt.s32.f32 %v1174
      %v1319 = vcvt.s32.f32 %v1175
      %v1320 = vcvt.s32.f32 %v1176
      %v1321 = vcvt.s32.f32 %v1177
      %v1322 = vcvt.s32.f32 %v1178
      %v1323 = vcvt.s32.f32 %v1179
      %v1324 = vcvt.s32.f32 %v1180
      %v1325 = vcvt.s32.f32 %v1181
      %v1326 = vcvt.s32.f32 %v1182
      %v1327 = vcvt.s32.f32 %v1183
      %v1328 = vcvt.s32.f32 %v1184
      %v1329 = vcvt.s32.f32 %v1185
      %v1330 = vpack.c.bf16 %v1187, %v1186
      %v1331 = vpack.c.bf16 %v1189, %v1188
      %v1332 = vpack.c.bf16 %v1191, %v1190
      %v1333 = vpack.c.bf16 %v1193, %v1192
      %v1334 = vpack.c.bf16 %v1195, %v1194
      %v1335 = vpack.c.bf16 %v1197, %v1196
      %v1336 = vpack.c.bf16 %v1199, %v1198
      %v1337 = vpack.c.bf16 %v1201, %v1200
      %v1338 = vpack.c.bf16 %v1203, %v1202
      %v1339 = vpack.c.bf16 %v1205, %v1204
      %v1340 = vpack.c.bf16 %v1207, %v1206
      %v1341 = vpack.c.bf16 %v1209, %v1208
      %v1342 = vpack.c.bf16 %v1211, %v1210
      %v1343 = vpack.c.bf16 %v1213, %v1212
      %v1344 = vpack.c.bf16 %v1215, %v1214
      %v1345 = vpack.c.bf16 %v1217, %v1216
      %v1346 = vpack.c.bf16 %v1219, %v1218
      %v1347 = vpack.c.bf16 %v1221, %v1220
      %v1348 = vpack.c.bf16 %v1223, %v1222
      %v1349 = vpack.c.bf16 %v1225, %v1224
      %v1350 = vpack.c.bf16 %v1227, %v1226
      %v1351 = vpack.c.bf16 %v1229, %v1228
      %v1352 = vpack.c.bf16 %v1231, %v1230
      %v1353 = vpack.c.bf16 %v1233, %v1232
      %v1354 = vpack.c.bf16 %v1235, %v1234
      %v1355 = vpack.c.bf16 %v1237, %v1236
      %v1356 = vpack.c.bf16 %v1239, %v1238
      %v1357 = vpack.c.bf16 %v1241, %v1240
      %v1358 = vpack.c.bf16 %v1243, %v1242
      %v1359 = vpack.c.bf16 %v1245, %v1244
      %v1360 = vpack.c.bf16 %v1247, %v1246
      %v1361 = vpack.c.bf16 %v1249, %v1248
      %v1362 = vpack.c.bf16 %v1251, %v1250
      %v1363 = vpack.c.bf16 %v1253, %v1252
      %v1364 = vpack.c.bf16 %v1255, %v1254
      %v1365 = vpack.c.bf16 %v1257, %v1256
      %v1366 = vpack.c.bf16 %v1259, %v1258
      %v1367 = vpack.c.bf16 %v1261, %v1260
      %v1368 = vpack.c.bf16 %v1263, %v1262
      %v1369 = vpack.c.bf16 %v1265, %v1264
      %v1370 = vpack.c.bf16 %v1267, %v1266
      %v1371 = vpack.c.bf16 %v1269, %v1268
      %v1372 = vpack.c.bf16 %v1271, %v1270
      %v1373 = vpack.c.bf16 %v1273, %v1272
      %v1374 = vpack.c.bf16 %v1275, %v1274
      %v1375 = vpack.c.bf16 %v1277, %v1276
      %v1376 = vpack.c.bf16 %v1279, %v1278
      %v1377 = vpack.c.bf16 %v1281, %v1280
      %v1378 = vpack.c.bf16 %v1283, %v1282
      %v1379 = vpack.c.bf16 %v1285, %v1284
      %v1380 = vpack.c.bf16 %v1287, %v1286
      %v1381 = vpack.c.bf16 %v1289, %v1288
      %v1382 = vpack.c.bf16 %v1291, %v1290
      %v1383 = vpack.c.bf16 %v1293, %v1292
      %v1384 = vpack.c.bf16 %v1295, %v1294
      %v1385 = vpack.c.bf16 %v1297, %v1296
      %v1386 = vpack.c.bf16 %v1299, %v1298
      %v1387 = vpack.c.bf16 %v1301, %v1300
      %v1388 = vpack.c.bf16 %v1303, %v1302
      %v1389 = vpack.c.bf16 %v1305, %v1304
      %v1390 = vpack.c.bf16 %v1307, %v1306
      %v1391 = vpack.c.bf16 %v1309, %v1308
      %v1392 = vpack.c.bf16 %v1311, %v1310
      %v1393 = vpack.c.bf16 %v1313, %v1312
      %v1394 = vpack.c.bf16 %v1315, %v1314
      %v1395 = vpack.c.bf16 %v1317, %v1316
      %v1396 = vpack.c.bf16 %v1319, %v1318
      %v1397 = vpack.c.bf16 %v1321, %v1320
      %v1398 = vpack.c.bf16 %v1323, %v1322
      %v1399 = vpack.c.bf16 %v1325, %v1324
      %v1400 = vpack.c.bf16 %v1327, %v1326
      %v1401 = vpack.c.bf16 %v1329, %v1328
      %vm1402 = vcmp.eq.f32.partialorder %v754, 1.0
      %vm1403 = vcmp.eq.f32.partialorder %v755, 1.0
      %vm1404 = vcmp.eq.f32.partialorder %v756, 1.0
      %vm1405 = vcmp.eq.f32.partialorder %v757, 1.0
      %vm1406 = vcmp.eq.f32.partialorder %v758, 1.0
      %vm1407 = vcmp.eq.f32.partialorder %v759, 1.0
      %vm1408 = vcmp.eq.f32.partialorder %v760, 1.0
      %vm1409 = vcmp.eq.f32.partialorder %v761, 1.0
      %vm1410 = vcmp.eq.f32.partialorder %v762, 1.0
      %vm1411 = vcmp.eq.f32.partialorder %v763, 1.0
      %vm1412 = vcmp.eq.f32.partialorder %v764, 1.0
      %vm1413 = vcmp.eq.f32.partialorder %v765, 1.0
      %vm1414 = vcmp.eq.f32.partialorder %v766, 1.0
      %vm1415 = vcmp.eq.f32.partialorder %v767, 1.0
      %vm1416 = vcmp.eq.f32.partialorder %v768, 1.0
      %vm1417 = vcmp.eq.f32.partialorder %v769, 1.0
      %vm1418 = vcmp.eq.f32.partialorder %v770, 1.0
      %vm1419 = vcmp.eq.f32.partialorder %v771, 1.0
      %vm1420 = vcmp.eq.f32.partialorder %v772, 1.0
      %vm1421 = vcmp.eq.f32.partialorder %v773, 1.0
      %vm1422 = vcmp.eq.f32.partialorder %v774, 1.0
      %vm1423 = vcmp.eq.f32.partialorder %v775, 1.0
      %vm1424 = vcmp.eq.f32.partialorder %v776, 1.0
      %vm1425 = vcmp.eq.f32.partialorder %v777, 1.0
      %vm1426 = vcmp.eq.f32.partialorder %v778, 1.0
      %vm1427 = vcmp.eq.f32.partialorder %v779, 1.0
      %vm1428 = vcmp.eq.f32.partialorder %v780, 1.0
      %vm1429 = vcmp.eq.f32.partialorder %v781, 1.0
      %vm1430 = vcmp.eq.f32.partialorder %v782, 1.0
      %vm1431 = vcmp.eq.f32.partialorder %v783, 1.0
      %vm1432 = vcmp.eq.f32.partialorder %v784, 1.0
      %vm1433 = vcmp.eq.f32.partialorder %v785, 1.0
      %vm1434 = vcmp.eq.f32.partialorder %v786, 1.0
      %vm1435 = vcmp.eq.f32.partialorder %v787, 1.0
      %vm1436 = vcmp.eq.f32.partialorder %v788, 1.0
      %vm1437 = vcmp.eq.f32.partialorder %v789, 1.0
      %vm1438 = vcmp.eq.f32.partialorder %v790, 1.0
      %vm1439 = vcmp.eq.f32.partialorder %v791, 1.0
      %vm1440 = vcmp.eq.f32.partialorder %v792, 1.0
      %vm1441 = vcmp.eq.f32.partialorder %v793, 1.0
      %vm1442 = vcmp.eq.f32.partialorder %v794, 1.0
      %vm1443 = vcmp.eq.f32.partialorder %v795, 1.0
      %vm1444 = vcmp.eq.f32.partialorder %v796, 1.0
      %vm1445 = vcmp.eq.f32.partialorder %v797, 1.0
      %vm1446 = vcmp.eq.f32.partialorder %v798, 1.0
      %vm1447 = vcmp.eq.f32.partialorder %v799, 1.0
      %vm1448 = vcmp.eq.f32.partialorder %v800, 1.0
      %vm1449 = vcmp.eq.f32.partialorder %v801, 1.0
      %vm1450 = vcmp.eq.f32.partialorder %v802, 1.0
      %vm1451 = vcmp.eq.f32.partialorder %v803, 1.0
      %vm1452 = vcmp.eq.f32.partialorder %v804, 1.0
      %vm1453 = vcmp.eq.f32.partialorder %v805, 1.0
      %vm1454 = vcmp.eq.f32.partialorder %v806, 1.0
      %vm1455 = vcmp.eq.f32.partialorder %v807, 1.0
      %vm1456 = vcmp.eq.f32.partialorder %v808, 1.0
      %vm1457 = vcmp.eq.f32.partialorder %v809, 1.0
      %vm1458 = vcmp.eq.f32.partialorder %v810, 1.0
      %vm1459 = vcmp.eq.f32.partialorder %v811, 1.0
      %vm1460 = vcmp.eq.f32.partialorder %v812, 1.0
      %vm1461 = vcmp.eq.f32.partialorder %v813, 1.0
      %vm1462 = vcmp.eq.f32.partialorder %v814, 1.0
      %vm1463 = vcmp.eq.f32.partialorder %v815, 1.0
      %vm1464 = vcmp.eq.f32.partialorder %v816, 1.0
      %vm1465 = vcmp.eq.f32.partialorder %v817, 1.0
      %vm1466 = vcmp.eq.f32.partialorder %v818, 1.0
      %vm1467 = vcmp.eq.f32.partialorder %v819, 1.0
      %vm1468 = vcmp.eq.f32.partialorder %v820, 1.0
      %vm1469 = vcmp.eq.f32.partialorder %v821, 1.0
      %vm1470 = vcmp.eq.f32.partialorder %v822, 1.0
      %vm1471 = vcmp.eq.f32.partialorder %v823, 1.0
      %vm1472 = vcmp.eq.f32.partialorder %v824, 1.0
      %vm1473 = vcmp.eq.f32.partialorder %v825, 1.0
      %vm1474 = vcmp.eq.f32.partialorder %v826, 1.0
      %vm1475 = vcmp.eq.f32.partialorder %v827, 1.0
      %vm1476 = vcmp.eq.f32.partialorder %v828, 1.0
      %vm1477 = vcmp.eq.f32.partialorder %v829, 1.0
      %vm1478 = vcmp.eq.f32.partialorder %v830, 1.0
      %vm1479 = vcmp.eq.f32.partialorder %v831, 1.0
      %vm1480 = vcmp.eq.f32.partialorder %v832, 1.0
      %vm1481 = vcmp.eq.f32.partialorder %v833, 1.0
      %vm1482 = vcmp.eq.f32.partialorder %v834, 1.0
      %vm1483 = vcmp.eq.f32.partialorder %v835, 1.0
      %vm1484 = vcmp.eq.f32.partialorder %v836, 1.0
      %vm1485 = vcmp.eq.f32.partialorder %v837, 1.0
      %vm1486 = vcmp.eq.f32.partialorder %v838, 1.0
      %vm1487 = vcmp.eq.f32.partialorder %v839, 1.0
      %vm1488 = vcmp.eq.f32.partialorder %v840, 1.0
      %vm1489 = vcmp.eq.f32.partialorder %v841, 1.0
      %vm1490 = vcmp.eq.f32.partialorder %v842, 1.0
      %vm1491 = vcmp.eq.f32.partialorder %v843, 1.0
      %vm1492 = vcmp.eq.f32.partialorder %v844, 1.0
      %vm1493 = vcmp.eq.f32.partialorder %v845, 1.0
      %vm1494 = vcmp.eq.f32.partialorder %v846, 1.0
      %vm1495 = vcmp.eq.f32.partialorder %v847, 1.0
      %vm1496 = vcmp.eq.f32.partialorder %v848, 1.0
      %vm1497 = vcmp.eq.f32.partialorder %v849, 1.0
      %vm1498 = vcmp.eq.f32.partialorder %v850, 1.0
      %vm1499 = vcmp.eq.f32.partialorder %v851, 1.0
      %vm1500 = vcmp.eq.f32.partialorder %v852, 1.0
      %vm1501 = vcmp.eq.f32.partialorder %v853, 1.0
      %vm1502 = vcmp.eq.f32.partialorder %v854, 1.0
      %vm1503 = vcmp.eq.f32.partialorder %v855, 1.0
      %vm1504 = vcmp.eq.f32.partialorder %v856, 1.0
      %vm1505 = vcmp.eq.f32.partialorder %v857, 1.0
      %vm1506 = vcmp.eq.f32.partialorder %v858, 1.0
      %vm1507 = vcmp.eq.f32.partialorder %v859, 1.0
      %vm1508 = vcmp.eq.f32.partialorder %v860, 1.0
      %vm1509 = vcmp.eq.f32.partialorder %v861, 1.0
      %vm1510 = vcmp.eq.f32.partialorder %v862, 1.0
      %vm1511 = vcmp.eq.f32.partialorder %v863, 1.0
      %vm1512 = vcmp.eq.f32.partialorder %v864, 1.0
      %vm1513 = vcmp.eq.f32.partialorder %v865, 1.0
      %vm1514 = vcmp.eq.f32.partialorder %v866, 1.0
      %vm1515 = vcmp.eq.f32.partialorder %v867, 1.0
      %vm1516 = vcmp.eq.f32.partialorder %v868, 1.0
      %vm1517 = vcmp.eq.f32.partialorder %v869, 1.0
      %vm1518 = vcmp.eq.f32.partialorder %v870, 1.0
      %vm1519 = vcmp.eq.f32.partialorder %v871, 1.0
      %vm1520 = vcmp.eq.f32.partialorder %v872, 1.0
      %vm1521 = vcmp.eq.f32.partialorder %v873, 1.0
      %vm1522 = vcmp.eq.f32.partialorder %v874, 1.0
      %vm1523 = vcmp.eq.f32.partialorder %v875, 1.0
      %vm1524 = vcmp.eq.f32.partialorder %v876, 1.0
      %vm1525 = vcmp.eq.f32.partialorder %v877, 1.0
      %vm1526 = vcmp.eq.f32.partialorder %v878, 1.0
      %vm1527 = vcmp.eq.f32.partialorder %v879, 1.0
      %vm1528 = vcmp.eq.f32.partialorder %v880, 1.0
      %vm1529 = vcmp.eq.f32.partialorder %v881, 1.0
      %vm1530 = vcmp.eq.f32.partialorder %v882, 1.0
      %vm1531 = vcmp.eq.f32.partialorder %v883, 1.0
      %vm1532 = vcmp.eq.f32.partialorder %v884, 1.0
      %vm1533 = vcmp.eq.f32.partialorder %v885, 1.0
      %vm1534 = vcmp.eq.f32.partialorder %v886, 1.0
      %vm1535 = vcmp.eq.f32.partialorder %v887, 1.0
      %vm1536 = vcmp.eq.f32.partialorder %v888, 1.0
      %vm1537 = vcmp.eq.f32.partialorder %v889, 1.0
      %vm1538 = vcmp.eq.f32.partialorder %v890, 1.0
      %vm1539 = vcmp.eq.f32.partialorder %v891, 1.0
      %vm1540 = vcmp.eq.f32.partialorder %v892, 1.0
      %vm1541 = vcmp.eq.f32.partialorder %v893, 1.0
      %vm1542 = vcmp.eq.f32.partialorder %v894, 1.0
      %vm1543 = vcmp.eq.f32.partialorder %v895, 1.0
      %vm1544 = vcmp.eq.f32.partialorder %v896, 1.0
      %vm1545 = vcmp.eq.f32.partialorder %v897, 1.0
      %v1546 = vsel %vm1402, 1, 0
      %v1547 = vsel %vm1403, 1, 0
      %v1548 = vsel %vm1404, 1, 0
      %v1549 = vsel %vm1405, 1, 0
      %v1550 = vsel %vm1406, 1, 0
      %v1551 = vsel %vm1407, 1, 0
      %v1552 = vsel %vm1408, 1, 0
      %v1553 = vsel %vm1409, 1, 0
      %v1554 = vsel %vm1410, 1, 0
      %v1555 = vsel %vm1411, 1, 0
      %v1556 = vsel %vm1412, 1, 0
      %v1557 = vsel %vm1413, 1, 0
      %v1558 = vsel %vm1414, 1, 0
      %v1559 = vsel %vm1415, 1, 0
      %v1560 = vsel %vm1416, 1, 0
      %v1561 = vsel %vm1417, 1, 0
      %v1562 = vsel %vm1418, 1, 0
      %v1563 = vsel %vm1419, 1, 0
      %v1564 = vsel %vm1420, 1, 0
      %v1565 = vsel %vm1421, 1, 0
      %v1566 = vsel %vm1422, 1, 0
      %v1567 = vsel %vm1423, 1, 0
      %v1568 = vsel %vm1424, 1, 0
      %v1569 = vsel %vm1425, 1, 0
      %v1570 = vsel %vm1426, 1, 0
      %v1571 = vsel %vm1427, 1, 0
      %v1572 = vsel %vm1428, 1, 0
      %v1573 = vsel %vm1429, 1, 0
      %v1574 = vsel %vm1430, 1, 0
      %v1575 = vsel %vm1431, 1, 0
      %v1576 = vsel %vm1432, 1, 0
      %v1577 = vsel %vm1433, 1, 0
      %v1578 = vsel %vm1434, 1, 0
      %v1579 = vsel %vm1435, 1, 0
      %v1580 = vsel %vm1436, 1, 0
      %v1581 = vsel %vm1437, 1, 0
      %v1582 = vsel %vm1438, 1, 0
      %v1583 = vsel %vm1439, 1, 0
      %v1584 = vsel %vm1440, 1, 0
      %v1585 = vsel %vm1441, 1, 0
      %v1586 = vsel %vm1442, 1, 0
      %v1587 = vsel %vm1443, 1, 0
      %v1588 = vsel %vm1444, 1, 0
      %v1589 = vsel %vm1445, 1, 0
      %v1590 = vsel %vm1446, 1, 0
      %v1591 = vsel %vm1447, 1, 0
      %v1592 = vsel %vm1448, 1, 0
      %v1593 = vsel %vm1449, 1, 0
      %v1594 = vsel %vm1450, 1, 0
      %v1595 = vsel %vm1451, 1, 0
      %v1596 = vsel %vm1452, 1, 0
      %v1597 = vsel %vm1453, 1, 0
      %v1598 = vsel %vm1454, 1, 0
      %v1599 = vsel %vm1455, 1, 0
      %v1600 = vsel %vm1456, 1, 0
      %v1601 = vsel %vm1457, 1, 0
      %v1602 = vsel %vm1458, 1, 0
      %v1603 = vsel %vm1459, 1, 0
      %v1604 = vsel %vm1460, 1, 0
      %v1605 = vsel %vm1461, 1, 0
      %v1606 = vsel %vm1462, 1, 0
      %v1607 = vsel %vm1463, 1, 0
      %v1608 = vsel %vm1464, 1, 0
      %v1609 = vsel %vm1465, 1, 0
      %v1610 = vsel %vm1466, 1, 0
      %v1611 = vsel %vm1467, 1, 0
      %v1612 = vsel %vm1468, 1, 0
      %v1613 = vsel %vm1469, 1, 0
      %v1614 = vsel %vm1470, 1, 0
      %v1615 = vsel %vm1471, 1, 0
      %v1616 = vsel %vm1472, 1, 0
      %v1617 = vsel %vm1473, 1, 0
      %v1618 = vsel %vm1474, 1, 0
      %v1619 = vsel %vm1475, 1, 0
      %v1620 = vsel %vm1476, 1, 0
      %v1621 = vsel %vm1477, 1, 0
      %v1622 = vsel %vm1478, 1, 0
      %v1623 = vsel %vm1479, 1, 0
      %v1624 = vsel %vm1480, 1, 0
      %v1625 = vsel %vm1481, 1, 0
      %v1626 = vsel %vm1482, 1, 0
      %v1627 = vsel %vm1483, 1, 0
      %v1628 = vsel %vm1484, 1, 0
      %v1629 = vsel %vm1485, 1, 0
      %v1630 = vsel %vm1486, 1, 0
      %v1631 = vsel %vm1487, 1, 0
      %v1632 = vsel %vm1488, 1, 0
      %v1633 = vsel %vm1489, 1, 0
      %v1634 = vsel %vm1490, 1, 0
      %v1635 = vsel %vm1491, 1, 0
      %v1636 = vsel %vm1492, 1, 0
      %v1637 = vsel %vm1493, 1, 0
      %v1638 = vsel %vm1494, 1, 0
      %v1639 = vsel %vm1495, 1, 0
      %v1640 = vsel %vm1496, 1, 0
      %v1641 = vsel %vm1497, 1, 0
      %v1642 = vsel %vm1498, 1, 0
      %v1643 = vsel %vm1499, 1, 0
      %v1644 = vsel %vm1500, 1, 0
      %v1645 = vsel %vm1501, 1, 0
      %v1646 = vsel %vm1502, 1, 0
      %v1647 = vsel %vm1503, 1, 0
      %v1648 = vsel %vm1504, 1, 0
      %v1649 = vsel %vm1505, 1, 0
      %v1650 = vsel %vm1506, 1, 0
      %v1651 = vsel %vm1507, 1, 0
      %v1652 = vsel %vm1508, 1, 0
      %v1653 = vsel %vm1509, 1, 0
      %v1654 = vsel %vm1510, 1, 0
      %v1655 = vsel %vm1511, 1, 0
      %v1656 = vsel %vm1512, 1, 0
      %v1657 = vsel %vm1513, 1, 0
      %v1658 = vsel %vm1514, 1, 0
      %v1659 = vsel %vm1515, 1, 0
      %v1660 = vsel %vm1516, 1, 0
      %v1661 = vsel %vm1517, 1, 0
      %v1662 = vsel %vm1518, 1, 0
      %v1663 = vsel %vm1519, 1, 0
      %v1664 = vsel %vm1520, 1, 0
      %v1665 = vsel %vm1521, 1, 0
      %v1666 = vsel %vm1522, 1, 0
      %v1667 = vsel %vm1523, 1, 0
      %v1668 = vsel %vm1524, 1, 0
      %v1669 = vsel %vm1525, 1, 0
      %v1670 = vsel %vm1526, 1, 0
      %v1671 = vsel %vm1527, 1, 0
      %v1672 = vsel %vm1528, 1, 0
      %v1673 = vsel %vm1529, 1, 0
      %v1674 = vsel %vm1530, 1, 0
      %v1675 = vsel %vm1531, 1, 0
      %v1676 = vsel %vm1532, 1, 0
      %v1677 = vsel %vm1533, 1, 0
      %v1678 = vsel %vm1534, 1, 0
      %v1679 = vsel %vm1535, 1, 0
      %v1680 = vsel %vm1536, 1, 0
      %v1681 = vsel %vm1537, 1, 0
      %v1682 = vsel %vm1538, 1, 0
      %v1683 = vsel %vm1539, 1, 0
      %v1684 = vsel %vm1540, 1, 0
      %v1685 = vsel %vm1541, 1, 0
      %v1686 = vsel %vm1542, 1, 0
      %v1687 = vsel %vm1543, 1, 0
      %v1688 = vsel %vm1544, 1, 0
      %v1689 = vsel %vm1545, 1, 0
      %v1690 = vcvt.s32.f32 %v1546
      %v1691 = vcvt.s32.f32 %v1547
      %v1692 = vcvt.s32.f32 %v1548
      %v1693 = vcvt.s32.f32 %v1549
      %v1694 = vcvt.s32.f32 %v1550
      %v1695 = vcvt.s32.f32 %v1551
      %v1696 = vcvt.s32.f32 %v1552
      %v1697 = vcvt.s32.f32 %v1553
      %v1698 = vcvt.s32.f32 %v1554
      %v1699 = vcvt.s32.f32 %v1555
      %v1700 = vcvt.s32.f32 %v1556
      %v1701 = vcvt.s32.f32 %v1557
      %v1702 = vcvt.s32.f32 %v1558
      %v1703 = vcvt.s32.f32 %v1559
      %v1704 = vcvt.s32.f32 %v1560
      %v1705 = vcvt.s32.f32 %v1561
      %v1706 = vcvt.s32.f32 %v1562
      %v1707 = vcvt.s32.f32 %v1563
      %v1708 = vcvt.s32.f32 %v1564
      %v1709 = vcvt.s32.f32 %v1565
      %v1710 = vcvt.s32.f32 %v1566
      %v1711 = vcvt.s32.f32 %v1567
      %v1712 = vcvt.s32.f32 %v1568
      %v1713 = vcvt.s32.f32 %v1569
      %v1714 = vcvt.s32.f32 %v1570
      %v1715 = vcvt.s32.f32 %v1571
      %v1716 = vcvt.s32.f32 %v1572
      %v1717 = vcvt.s32.f32 %v1573
      %v1718 = vcvt.s32.f32 %v1574
      %v1719 = vcvt.s32.f32 %v1575
      %v1720 = vcvt.s32.f32 %v1576
      %v1721 = vcvt.s32.f32 %v1577
      %v1722 = vcvt.s32.f32 %v1578
      %v1723 = vcvt.s32.f32 %v1579
      %v1724 = vcvt.s32.f32 %v1580
      %v1725 = vcvt.s32.f32 %v1581
      %v1726 = vcvt.s32.f32 %v1582
      %v1727 = vcvt.s32.f32 %v1583
      %v1728 = vcvt.s32.f32 %v1584
      %v1729 = vcvt.s32.f32 %v1585
      %v1730 = vcvt.s32.f32 %v1586
      %v1731 = vcvt.s32.f32 %v1587
      %v1732 = vcvt.s32.f32 %v1588
      %v1733 = vcvt.s32.f32 %v1589
      %v1734 = vcvt.s32.f32 %v1590
      %v1735 = vcvt.s32.f32 %v1591
      %v1736 = vcvt.s32.f32 %v1592
      %v1737 = vcvt.s32.f32 %v1593
      %v1738 = vcvt.s32.f32 %v1594
      %v1739 = vcvt.s32.f32 %v1595
      %v1740 = vcvt.s32.f32 %v1596
      %v1741 = vcvt.s32.f32 %v1597
      %v1742 = vcvt.s32.f32 %v1598
      %v1743 = vcvt.s32.f32 %v1599
      %v1744 = vcvt.s32.f32 %v1600
      %v1745 = vcvt.s32.f32 %v1601
      %v1746 = vcvt.s32.f32 %v1602
      %v1747 = vcvt.s32.f32 %v1603
      %v1748 = vcvt.s32.f32 %v1604
      %v1749 = vcvt.s32.f32 %v1605
      %v1750 = vcvt.s32.f32 %v1606
      %v1751 = vcvt.s32.f32 %v1607
      %v1752 = vcvt.s32.f32 %v1608
      %v1753 = vcvt.s32.f32 %v1609
      %v1754 = vcvt.s32.f32 %v1610
      %v1755 = vcvt.s32.f32 %v1611
      %v1756 = vcvt.s32.f32 %v1612
      %v1757 = vcvt.s32.f32 %v1613
      %v1758 = vcvt.s32.f32 %v1614
      %v1759 = vcvt.s32.f32 %v1615
      %v1760 = vcvt.s32.f32 %v1616
      %v1761 = vcvt.s32.f32 %v1617
      %v1762 = vcvt.s32.f32 %v1618
      %v1763 = vcvt.s32.f32 %v1619
      %v1764 = vcvt.s32.f32 %v1620
      %v1765 = vcvt.s32.f32 %v1621
      %v1766 = vcvt.s32.f32 %v1622
      %v1767 = vcvt.s32.f32 %v1623
      %v1768 = vcvt.s32.f32 %v1624
      %v1769 = vcvt.s32.f32 %v1625
      %v1770 = vcvt.s32.f32 %v1626
      %v1771 = vcvt.s32.f32 %v1627
      %v1772 = vcvt.s32.f32 %v1628
      %v1773 = vcvt.s32.f32 %v1629
      %v1774 = vcvt.s32.f32 %v1630
      %v1775 = vcvt.s32.f32 %v1631
      %v1776 = vcvt.s32.f32 %v1632
      %v1777 = vcvt.s32.f32 %v1633
      %v1778 = vcvt.s32.f32 %v1634
      %v1779 = vcvt.s32.f32 %v1635
      %v1780 = vcvt.s32.f32 %v1636
      %v1781 = vcvt.s32.f32 %v1637
      %v1782 = vcvt.s32.f32 %v1638
      %v1783 = vcvt.s32.f32 %v1639
      %v1784 = vcvt.s32.f32 %v1640
      %v1785 = vcvt.s32.f32 %v1641
      %v1786 = vcvt.s32.f32 %v1642
      %v1787 = vcvt.s32.f32 %v1643
      %v1788 = vcvt.s32.f32 %v1644
      %v1789 = vcvt.s32.f32 %v1645
      %v1790 = vcvt.s32.f32 %v1646
      %v1791 = vcvt.s32.f32 %v1647
      %v1792 = vcvt.s32.f32 %v1648
      %v1793 = vcvt.s32.f32 %v1649
      %v1794 = vcvt.s32.f32 %v1650
      %v1795 = vcvt.s32.f32 %v1651
      %v1796 = vcvt.s32.f32 %v1652
      %v1797 = vcvt.s32.f32 %v1653
      %v1798 = vcvt.s32.f32 %v1654
      %v1799 = vcvt.s32.f32 %v1655
      %v1800 = vcvt.s32.f32 %v1656
      %v1801 = vcvt.s32.f32 %v1657
      %v1802 = vcvt.s32.f32 %v1658
      %v1803 = vcvt.s32.f32 %v1659
      %v1804 = vcvt.s32.f32 %v1660
      %v1805 = vcvt.s32.f32 %v1661
      %v1806 = vcvt.s32.f32 %v1662
      %v1807 = vcvt.s32.f32 %v1663
      %v1808 = vcvt.s32.f32 %v1664
      %v1809 = vcvt.s32.f32 %v1665
      %v1810 = vcvt.s32.f32 %v1666
      %v1811 = vcvt.s32.f32 %v1667
      %v1812 = vcvt.s32.f32 %v1668
      %v1813 = vcvt.s32.f32 %v1669
      %v1814 = vcvt.s32.f32 %v1670
      %v1815 = vcvt.s32.f32 %v1671
      %v1816 = vcvt.s32.f32 %v1672
      %v1817 = vcvt.s32.f32 %v1673
      %v1818 = vcvt.s32.f32 %v1674
      %v1819 = vcvt.s32.f32 %v1675
      %v1820 = vcvt.s32.f32 %v1676
      %v1821 = vcvt.s32.f32 %v1677
      %v1822 = vcvt.s32.f32 %v1678
      %v1823 = vcvt.s32.f32 %v1679
      %v1824 = vcvt.s32.f32 %v1680
      %v1825 = vcvt.s32.f32 %v1681
      %v1826 = vcvt.s32.f32 %v1682
      %v1827 = vcvt.s32.f32 %v1683
      %v1828 = vcvt.s32.f32 %v1684
      %v1829 = vcvt.s32.f32 %v1685
      %v1830 = vcvt.s32.f32 %v1686
      %v1831 = vcvt.s32.f32 %v1687
      %v1832 = vcvt.s32.f32 %v1688
      %v1833 = vcvt.s32.f32 %v1689
      %v1834 = vpack.c.bf16 %v1691, %v1690
      %v1835 = vpack.c.bf16 %v1693, %v1692
      %v1836 = vpack.c.bf16 %v1695, %v1694
      %v1837 = vpack.c.bf16 %v1697, %v1696
      %v1838 = vpack.c.bf16 %v1699, %v1698
      %v1839 = vpack.c.bf16 %v1701, %v1700
      %v1840 = vpack.c.bf16 %v1703, %v1702
      %v1841 = vpack.c.bf16 %v1705, %v1704
      %v1842 = vpack.c.bf16 %v1707, %v1706
      %v1843 = vpack.c.bf16 %v1709, %v1708
      %v1844 = vpack.c.bf16 %v1711, %v1710
      %v1845 = vpack.c.bf16 %v1713, %v1712
      %v1846 = vpack.c.bf16 %v1715, %v1714
      %v1847 = vpack.c.bf16 %v1717, %v1716
      %v1848 = vpack.c.bf16 %v1719, %v1718
      %v1849 = vpack.c.bf16 %v1721, %v1720
      %v1850 = vpack.c.bf16 %v1723, %v1722
      %v1851 = vpack.c.bf16 %v1725, %v1724
      %v1852 = vpack.c.bf16 %v1727, %v1726
      %v1853 = vpack.c.bf16 %v1729, %v1728
      %v1854 = vpack.c.bf16 %v1731, %v1730
      %v1855 = vpack.c.bf16 %v1733, %v1732
      %v1856 = vpack.c.bf16 %v1735, %v1734
      %v1857 = vpack.c.bf16 %v1737, %v1736
      %v1858 = vpack.c.bf16 %v1739, %v1738
      %v1859 = vpack.c.bf16 %v1741, %v1740
      %v1860 = vpack.c.bf16 %v1743, %v1742
      %v1861 = vpack.c.bf16 %v1745, %v1744
      %v1862 = vpack.c.bf16 %v1747, %v1746
      %v1863 = vpack.c.bf16 %v1749, %v1748
      %v1864 = vpack.c.bf16 %v1751, %v1750
      %v1865 = vpack.c.bf16 %v1753, %v1752
      %v1866 = vpack.c.bf16 %v1755, %v1754
      %v1867 = vpack.c.bf16 %v1757, %v1756
      %v1868 = vpack.c.bf16 %v1759, %v1758
      %v1869 = vpack.c.bf16 %v1761, %v1760
      %v1870 = vpack.c.bf16 %v1763, %v1762
      %v1871 = vpack.c.bf16 %v1765, %v1764
      %v1872 = vpack.c.bf16 %v1767, %v1766
      %v1873 = vpack.c.bf16 %v1769, %v1768
      %v1874 = vpack.c.bf16 %v1771, %v1770
      %v1875 = vpack.c.bf16 %v1773, %v1772
      %v1876 = vpack.c.bf16 %v1775, %v1774
      %v1877 = vpack.c.bf16 %v1777, %v1776
      %v1878 = vpack.c.bf16 %v1779, %v1778
      %v1879 = vpack.c.bf16 %v1781, %v1780
      %v1880 = vpack.c.bf16 %v1783, %v1782
      %v1881 = vpack.c.bf16 %v1785, %v1784
      %v1882 = vpack.c.bf16 %v1787, %v1786
      %v1883 = vpack.c.bf16 %v1789, %v1788
      %v1884 = vpack.c.bf16 %v1791, %v1790
      %v1885 = vpack.c.bf16 %v1793, %v1792
      %v1886 = vpack.c.bf16 %v1795, %v1794
      %v1887 = vpack.c.bf16 %v1797, %v1796
      %v1888 = vpack.c.bf16 %v1799, %v1798
      %v1889 = vpack.c.bf16 %v1801, %v1800
      %v1890 = vpack.c.bf16 %v1803, %v1802
      %v1891 = vpack.c.bf16 %v1805, %v1804
      %v1892 = vpack.c.bf16 %v1807, %v1806
      %v1893 = vpack.c.bf16 %v1809, %v1808
      %v1894 = vpack.c.bf16 %v1811, %v1810
      %v1895 = vpack.c.bf16 %v1813, %v1812
      %v1896 = vpack.c.bf16 %v1815, %v1814
      %v1897 = vpack.c.bf16 %v1817, %v1816
      %v1898 = vpack.c.bf16 %v1819, %v1818
      %v1899 = vpack.c.bf16 %v1821, %v1820
      %v1900 = vpack.c.bf16 %v1823, %v1822
      %v1901 = vpack.c.bf16 %v1825, %v1824
      %v1902 = vpack.c.bf16 %v1827, %v1826
      %v1903 = vpack.c.bf16 %v1829, %v1828
      %v1904 = vpack.c.bf16 %v1831, %v1830
      %v1905 = vpack.c.bf16 %v1833, %v1832
      %vm1906 = vcmp.eq.f32.partialorder %v754, 2.0
      %vm1907 = vcmp.eq.f32.partialorder %v755, 2.0
      %vm1908 = vcmp.eq.f32.partialorder %v756, 2.0
      %vm1909 = vcmp.eq.f32.partialorder %v757, 2.0
      %vm1910 = vcmp.eq.f32.partialorder %v758, 2.0
      %vm1911 = vcmp.eq.f32.partialorder %v759, 2.0
      %vm1912 = vcmp.eq.f32.partialorder %v760, 2.0
      %vm1913 = vcmp.eq.f32.partialorder %v761, 2.0
      %vm1914 = vcmp.eq.f32.partialorder %v762, 2.0
      %vm1915 = vcmp.eq.f32.partialorder %v763, 2.0
      %vm1916 = vcmp.eq.f32.partialorder %v764, 2.0
      %vm1917 = vcmp.eq.f32.partialorder %v765, 2.0
      %vm1918 = vcmp.eq.f32.partialorder %v766, 2.0
      %vm1919 = vcmp.eq.f32.partialorder %v767, 2.0
      %vm1920 = vcmp.eq.f32.partialorder %v768, 2.0
      %vm1921 = vcmp.eq.f32.partialorder %v769, 2.0
      %vm1922 = vcmp.eq.f32.partialorder %v770, 2.0
      %vm1923 = vcmp.eq.f32.partialorder %v771, 2.0
      %vm1924 = vcmp.eq.f32.partialorder %v772, 2.0
      %vm1925 = vcmp.eq.f32.partialorder %v773, 2.0
      %vm1926 = vcmp.eq.f32.partialorder %v774, 2.0
      %vm1927 = vcmp.eq.f32.partialorder %v775, 2.0
      %vm1928 = vcmp.eq.f32.partialorder %v776, 2.0
      %vm1929 = vcmp.eq.f32.partialorder %v777, 2.0
      %vm1930 = vcmp.eq.f32.partialorder %v778, 2.0
      %vm1931 = vcmp.eq.f32.partialorder %v779, 2.0
      %vm1932 = vcmp.eq.f32.partialorder %v780, 2.0
      %vm1933 = vcmp.eq.f32.partialorder %v781, 2.0
      %vm1934 = vcmp.eq.f32.partialorder %v782, 2.0
      %vm1935 = vcmp.eq.f32.partialorder %v783, 2.0
      %vm1936 = vcmp.eq.f32.partialorder %v784, 2.0
      %vm1937 = vcmp.eq.f32.partialorder %v785, 2.0
      %vm1938 = vcmp.eq.f32.partialorder %v786, 2.0
      %vm1939 = vcmp.eq.f32.partialorder %v787, 2.0
      %vm1940 = vcmp.eq.f32.partialorder %v788, 2.0
      %vm1941 = vcmp.eq.f32.partialorder %v789, 2.0
      %vm1942 = vcmp.eq.f32.partialorder %v790, 2.0
      %vm1943 = vcmp.eq.f32.partialorder %v791, 2.0
      %vm1944 = vcmp.eq.f32.partialorder %v792, 2.0
      %vm1945 = vcmp.eq.f32.partialorder %v793, 2.0
      %vm1946 = vcmp.eq.f32.partialorder %v794, 2.0
      %vm1947 = vcmp.eq.f32.partialorder %v795, 2.0
      %vm1948 = vcmp.eq.f32.partialorder %v796, 2.0
      %vm1949 = vcmp.eq.f32.partialorder %v797, 2.0
      %vm1950 = vcmp.eq.f32.partialorder %v798, 2.0
      %vm1951 = vcmp.eq.f32.partialorder %v799, 2.0
      %vm1952 = vcmp.eq.f32.partialorder %v800, 2.0
      %vm1953 = vcmp.eq.f32.partialorder %v801, 2.0
      %vm1954 = vcmp.eq.f32.partialorder %v802, 2.0
      %vm1955 = vcmp.eq.f32.partialorder %v803, 2.0
      %vm1956 = vcmp.eq.f32.partialorder %v804, 2.0
      %vm1957 = vcmp.eq.f32.partialorder %v805, 2.0
      %vm1958 = vcmp.eq.f32.partialorder %v806, 2.0
      %vm1959 = vcmp.eq.f32.partialorder %v807, 2.0
      %vm1960 = vcmp.eq.f32.partialorder %v808, 2.0
      %vm1961 = vcmp.eq.f32.partialorder %v809, 2.0
      %vm1962 = vcmp.eq.f32.partialorder %v810, 2.0
      %vm1963 = vcmp.eq.f32.partialorder %v811, 2.0
      %vm1964 = vcmp.eq.f32.partialorder %v812, 2.0
      %vm1965 = vcmp.eq.f32.partialorder %v813, 2.0
      %vm1966 = vcmp.eq.f32.partialorder %v814, 2.0
      %vm1967 = vcmp.eq.f32.partialorder %v815, 2.0
      %vm1968 = vcmp.eq.f32.partialorder %v816, 2.0
      %vm1969 = vcmp.eq.f32.partialorder %v817, 2.0
      %vm1970 = vcmp.eq.f32.partialorder %v818, 2.0
      %vm1971 = vcmp.eq.f32.partialorder %v819, 2.0
      %vm1972 = vcmp.eq.f32.partialorder %v820, 2.0
      %vm1973 = vcmp.eq.f32.partialorder %v821, 2.0
      %vm1974 = vcmp.eq.f32.partialorder %v822, 2.0
      %vm1975 = vcmp.eq.f32.partialorder %v823, 2.0
      %vm1976 = vcmp.eq.f32.partialorder %v824, 2.0
      %vm1977 = vcmp.eq.f32.partialorder %v825, 2.0
      %vm1978 = vcmp.eq.f32.partialorder %v826, 2.0
      %vm1979 = vcmp.eq.f32.partialorder %v827, 2.0
      %vm1980 = vcmp.eq.f32.partialorder %v828, 2.0
      %vm1981 = vcmp.eq.f32.partialorder %v829, 2.0
      %vm1982 = vcmp.eq.f32.partialorder %v830, 2.0
      %vm1983 = vcmp.eq.f32.partialorder %v831, 2.0
      %vm1984 = vcmp.eq.f32.partialorder %v832, 2.0
      %vm1985 = vcmp.eq.f32.partialorder %v833, 2.0
      %vm1986 = vcmp.eq.f32.partialorder %v834, 2.0
      %vm1987 = vcmp.eq.f32.partialorder %v835, 2.0
      %vm1988 = vcmp.eq.f32.partialorder %v836, 2.0
      %vm1989 = vcmp.eq.f32.partialorder %v837, 2.0
      %vm1990 = vcmp.eq.f32.partialorder %v838, 2.0
      %vm1991 = vcmp.eq.f32.partialorder %v839, 2.0
      %vm1992 = vcmp.eq.f32.partialorder %v840, 2.0
      %vm1993 = vcmp.eq.f32.partialorder %v841, 2.0
      %vm1994 = vcmp.eq.f32.partialorder %v842, 2.0
      %vm1995 = vcmp.eq.f32.partialorder %v843, 2.0
      %vm1996 = vcmp.eq.f32.partialorder %v844, 2.0
      %vm1997 = vcmp.eq.f32.partialorder %v845, 2.0
      %vm1998 = vcmp.eq.f32.partialorder %v846, 2.0
      %vm1999 = vcmp.eq.f32.partialorder %v847, 2.0
      %vm2000 = vcmp.eq.f32.partialorder %v848, 2.0
      %vm2001 = vcmp.eq.f32.partialorder %v849, 2.0
      %vm2002 = vcmp.eq.f32.partialorder %v850, 2.0
      %vm2003 = vcmp.eq.f32.partialorder %v851, 2.0
      %vm2004 = vcmp.eq.f32.partialorder %v852, 2.0
      %vm2005 = vcmp.eq.f32.partialorder %v853, 2.0
      %vm2006 = vcmp.eq.f32.partialorder %v854, 2.0
      %vm2007 = vcmp.eq.f32.partialorder %v855, 2.0
      %vm2008 = vcmp.eq.f32.partialorder %v856, 2.0
      %vm2009 = vcmp.eq.f32.partialorder %v857, 2.0
      %vm2010 = vcmp.eq.f32.partialorder %v858, 2.0
      %vm2011 = vcmp.eq.f32.partialorder %v859, 2.0
      %vm2012 = vcmp.eq.f32.partialorder %v860, 2.0
      %vm2013 = vcmp.eq.f32.partialorder %v861, 2.0
      %vm2014 = vcmp.eq.f32.partialorder %v862, 2.0
      %vm2015 = vcmp.eq.f32.partialorder %v863, 2.0
      %vm2016 = vcmp.eq.f32.partialorder %v864, 2.0
      %vm2017 = vcmp.eq.f32.partialorder %v865, 2.0
      %vm2018 = vcmp.eq.f32.partialorder %v866, 2.0
      %vm2019 = vcmp.eq.f32.partialorder %v867, 2.0
      %vm2020 = vcmp.eq.f32.partialorder %v868, 2.0
      %vm2021 = vcmp.eq.f32.partialorder %v869, 2.0
      %vm2022 = vcmp.eq.f32.partialorder %v870, 2.0
      %vm2023 = vcmp.eq.f32.partialorder %v871, 2.0
      %vm2024 = vcmp.eq.f32.partialorder %v872, 2.0
      %vm2025 = vcmp.eq.f32.partialorder %v873, 2.0
      %vm2026 = vcmp.eq.f32.partialorder %v874, 2.0
      %vm2027 = vcmp.eq.f32.partialorder %v875, 2.0
      %vm2028 = vcmp.eq.f32.partialorder %v876, 2.0
      %vm2029 = vcmp.eq.f32.partialorder %v877, 2.0
      %vm2030 = vcmp.eq.f32.partialorder %v878, 2.0
      %vm2031 = vcmp.eq.f32.partialorder %v879, 2.0
      %vm2032 = vcmp.eq.f32.partialorder %v880, 2.0
      %vm2033 = vcmp.eq.f32.partialorder %v881, 2.0
      %vm2034 = vcmp.eq.f32.partialorder %v882, 2.0
      %vm2035 = vcmp.eq.f32.partialorder %v883, 2.0
      %vm2036 = vcmp.eq.f32.partialorder %v884, 2.0
      %vm2037 = vcmp.eq.f32.partialorder %v885, 2.0
      %vm2038 = vcmp.eq.f32.partialorder %v886, 2.0
      %vm2039 = vcmp.eq.f32.partialorder %v887, 2.0
      %vm2040 = vcmp.eq.f32.partialorder %v888, 2.0
      %vm2041 = vcmp.eq.f32.partialorder %v889, 2.0
      %vm2042 = vcmp.eq.f32.partialorder %v890, 2.0
      %vm2043 = vcmp.eq.f32.partialorder %v891, 2.0
      %vm2044 = vcmp.eq.f32.partialorder %v892, 2.0
      %vm2045 = vcmp.eq.f32.partialorder %v893, 2.0
      %vm2046 = vcmp.eq.f32.partialorder %v894, 2.0
      %vm2047 = vcmp.eq.f32.partialorder %v895, 2.0
      %vm2048 = vcmp.eq.f32.partialorder %v896, 2.0
      %vm2049 = vcmp.eq.f32.partialorder %v897, 2.0
      %v2050 = vsel %vm1906, 1, 0
      %v2051 = vsel %vm1907, 1, 0
      %v2052 = vsel %vm1908, 1, 0
      %v2053 = vsel %vm1909, 1, 0
      %v2054 = vsel %vm1910, 1, 0
      %v2055 = vsel %vm1911, 1, 0
      %v2056 = vsel %vm1912, 1, 0
      %v2057 = vsel %vm1913, 1, 0
      %v2058 = vsel %vm1914, 1, 0
      %v2059 = vsel %vm1915, 1, 0
      %v2060 = vsel %vm1916, 1, 0
      %v2061 = vsel %vm1917, 1, 0
      %v2062 = vsel %vm1918, 1, 0
      %v2063 = vsel %vm1919, 1, 0
      %v2064 = vsel %vm1920, 1, 0
      %v2065 = vsel %vm1921, 1, 0
      %v2066 = vsel %vm1922, 1, 0
      %v2067 = vsel %vm1923, 1, 0
      %v2068 = vsel %vm1924, 1, 0
      %v2069 = vsel %vm1925, 1, 0
      %v2070 = vsel %vm1926, 1, 0
      %v2071 = vsel %vm1927, 1, 0
      %v2072 = vsel %vm1928, 1, 0
      %v2073 = vsel %vm1929, 1, 0
      %v2074 = vsel %vm1930, 1, 0
      %v2075 = vsel %vm1931, 1, 0
      %v2076 = vsel %vm1932, 1, 0
      %v2077 = vsel %vm1933, 1, 0
      %v2078 = vsel %vm1934, 1, 0
      %v2079 = vsel %vm1935, 1, 0
      %v2080 = vsel %vm1936, 1, 0
      %v2081 = vsel %vm1937, 1, 0
      %v2082 = vsel %vm1938, 1, 0
      %v2083 = vsel %vm1939, 1, 0
      %v2084 = vsel %vm1940, 1, 0
      %v2085 = vsel %vm1941, 1, 0
      %v2086 = vsel %vm1942, 1, 0
      %v2087 = vsel %vm1943, 1, 0
      %v2088 = vsel %vm1944, 1, 0
      %v2089 = vsel %vm1945, 1, 0
      %v2090 = vsel %vm1946, 1, 0
      %v2091 = vsel %vm1947, 1, 0
      %v2092 = vsel %vm1948, 1, 0
      %v2093 = vsel %vm1949, 1, 0
      %v2094 = vsel %vm1950, 1, 0
      %v2095 = vsel %vm1951, 1, 0
      %v2096 = vsel %vm1952, 1, 0
      %v2097 = vsel %vm1953, 1, 0
      %v2098 = vsel %vm1954, 1, 0
      %v2099 = vsel %vm1955, 1, 0
      %v2100 = vsel %vm1956, 1, 0
      %v2101 = vsel %vm1957, 1, 0
      %v2102 = vsel %vm1958, 1, 0
      %v2103 = vsel %vm1959, 1, 0
      %v2104 = vsel %vm1960, 1, 0
      %v2105 = vsel %vm1961, 1, 0
      %v2106 = vsel %vm1962, 1, 0
      %v2107 = vsel %vm1963, 1, 0
      %v2108 = vsel %vm1964, 1, 0
      %v2109 = vsel %vm1965, 1, 0
      %v2110 = vsel %vm1966, 1, 0
      %v2111 = vsel %vm1967, 1, 0
      %v2112 = vsel %vm1968, 1, 0
      %v2113 = vsel %vm1969, 1, 0
      %v2114 = vsel %vm1970, 1, 0
      %v2115 = vsel %vm1971, 1, 0
      %v2116 = vsel %vm1972, 1, 0
      %v2117 = vsel %vm1973, 1, 0
      %v2118 = vsel %vm1974, 1, 0
      %v2119 = vsel %vm1975, 1, 0
      %v2120 = vsel %vm1976, 1, 0
      %v2121 = vsel %vm1977, 1, 0
      %v2122 = vsel %vm1978, 1, 0
      %v2123 = vsel %vm1979, 1, 0
      %v2124 = vsel %vm1980, 1, 0
      %v2125 = vsel %vm1981, 1, 0
      %v2126 = vsel %vm1982, 1, 0
      %v2127 = vsel %vm1983, 1, 0
      %v2128 = vsel %vm1984, 1, 0
      %v2129 = vsel %vm1985, 1, 0
      %v2130 = vsel %vm1986, 1, 0
      %v2131 = vsel %vm1987, 1, 0
      %v2132 = vsel %vm1988, 1, 0
      %v2133 = vsel %vm1989, 1, 0
      %v2134 = vsel %vm1990, 1, 0
      %v2135 = vsel %vm1991, 1, 0
      %v2136 = vsel %vm1992, 1, 0
      %v2137 = vsel %vm1993, 1, 0
      %v2138 = vsel %vm1994, 1, 0
      %v2139 = vsel %vm1995, 1, 0
      %v2140 = vsel %vm1996, 1, 0
      %v2141 = vsel %vm1997, 1, 0
      %v2142 = vsel %vm1998, 1, 0
      %v2143 = vsel %vm1999, 1, 0
      %v2144 = vsel %vm2000, 1, 0
      %v2145 = vsel %vm2001, 1, 0
      %v2146 = vsel %vm2002, 1, 0
      %v2147 = vsel %vm2003, 1, 0
      %v2148 = vsel %vm2004, 1, 0
      %v2149 = vsel %vm2005, 1, 0
      %v2150 = vsel %vm2006, 1, 0
      %v2151 = vsel %vm2007, 1, 0
      %v2152 = vsel %vm2008, 1, 0
      %v2153 = vsel %vm2009, 1, 0
      %v2154 = vsel %vm2010, 1, 0
      %v2155 = vsel %vm2011, 1, 0
      %v2156 = vsel %vm2012, 1, 0
      %v2157 = vsel %vm2013, 1, 0
      %v2158 = vsel %vm2014, 1, 0
      %v2159 = vsel %vm2015, 1, 0
      %v2160 = vsel %vm2016, 1, 0
      %v2161 = vsel %vm2017, 1, 0
      %v2162 = vsel %vm2018, 1, 0
      %v2163 = vsel %vm2019, 1, 0
      %v2164 = vsel %vm2020, 1, 0
      %v2165 = vsel %vm2021, 1, 0
      %v2166 = vsel %vm2022, 1, 0
      %v2167 = vsel %vm2023, 1, 0
      %v2168 = vsel %vm2024, 1, 0
      %v2169 = vsel %vm2025, 1, 0
      %v2170 = vsel %vm2026, 1, 0
      %v2171 = vsel %vm2027, 1, 0
      %v2172 = vsel %vm2028, 1, 0
      %v2173 = vsel %vm2029, 1, 0
      %v2174 = vsel %vm2030, 1, 0
      %v2175 = vsel %vm2031, 1, 0
      %v2176 = vsel %vm2032, 1, 0
      %v2177 = vsel %vm2033, 1, 0
      %v2178 = vsel %vm2034, 1, 0
      %v2179 = vsel %vm2035, 1, 0
      %v2180 = vsel %vm2036, 1, 0
      %v2181 = vsel %vm2037, 1, 0
      %v2182 = vsel %vm2038, 1, 0
      %v2183 = vsel %vm2039, 1, 0
      %v2184 = vsel %vm2040, 1, 0
      %v2185 = vsel %vm2041, 1, 0
      %v2186 = vsel %vm2042, 1, 0
      %v2187 = vsel %vm2043, 1, 0
      %v2188 = vsel %vm2044, 1, 0
      %v2189 = vsel %vm2045, 1, 0
      %v2190 = vsel %vm2046, 1, 0
      %v2191 = vsel %vm2047, 1, 0
      %v2192 = vsel %vm2048, 1, 0
      %v2193 = vsel %vm2049, 1, 0
      %v2194 = vcvt.s32.f32 %v2050
      %v2195 = vcvt.s32.f32 %v2051
      %v2196 = vcvt.s32.f32 %v2052
      %v2197 = vcvt.s32.f32 %v2053
      %v2198 = vcvt.s32.f32 %v2054
      %v2199 = vcvt.s32.f32 %v2055
      %v2200 = vcvt.s32.f32 %v2056
      %v2201 = vcvt.s32.f32 %v2057
      %v2202 = vcvt.s32.f32 %v2058
      %v2203 = vcvt.s32.f32 %v2059
      %v2204 = vcvt.s32.f32 %v2060
      %v2205 = vcvt.s32.f32 %v2061
      %v2206 = vcvt.s32.f32 %v2062
      %v2207 = vcvt.s32.f32 %v2063
      %v2208 = vcvt.s32.f32 %v2064
      %v2209 = vcvt.s32.f32 %v2065
      %v2210 = vcvt.s32.f32 %v2066
      %v2211 = vcvt.s32.f32 %v2067
      %v2212 = vcvt.s32.f32 %v2068
      %v2213 = vcvt.s32.f32 %v2069
      %v2214 = vcvt.s32.f32 %v2070
      %v2215 = vcvt.s32.f32 %v2071
      %v2216 = vcvt.s32.f32 %v2072
      %v2217 = vcvt.s32.f32 %v2073
      %v2218 = vcvt.s32.f32 %v2074
      %v2219 = vcvt.s32.f32 %v2075
      %v2220 = vcvt.s32.f32 %v2076
      %v2221 = vcvt.s32.f32 %v2077
      %v2222 = vcvt.s32.f32 %v2078
      %v2223 = vcvt.s32.f32 %v2079
      %v2224 = vcvt.s32.f32 %v2080
      %v2225 = vcvt.s32.f32 %v2081
      %v2226 = vcvt.s32.f32 %v2082
      %v2227 = vcvt.s32.f32 %v2083
      %v2228 = vcvt.s32.f32 %v2084
      %v2229 = vcvt.s32.f32 %v2085
      %v2230 = vcvt.s32.f32 %v2086
      %v2231 = vcvt.s32.f32 %v2087
      %v2232 = vcvt.s32.f32 %v2088
      %v2233 = vcvt.s32.f32 %v2089
      %v2234 = vcvt.s32.f32 %v2090
      %v2235 = vcvt.s32.f32 %v2091
      %v2236 = vcvt.s32.f32 %v2092
      %v2237 = vcvt.s32.f32 %v2093
      %v2238 = vcvt.s32.f32 %v2094
      %v2239 = vcvt.s32.f32 %v2095
      %v2240 = vcvt.s32.f32 %v2096
      %v2241 = vcvt.s32.f32 %v2097
      %v2242 = vcvt.s32.f32 %v2098
      %v2243 = vcvt.s32.f32 %v2099
      %v2244 = vcvt.s32.f32 %v2100
      %v2245 = vcvt.s32.f32 %v2101
      %v2246 = vcvt.s32.f32 %v2102
      %v2247 = vcvt.s32.f32 %v2103
      %v2248 = vcvt.s32.f32 %v2104
      %v2249 = vcvt.s32.f32 %v2105
      %v2250 = vcvt.s32.f32 %v2106
      %v2251 = vcvt.s32.f32 %v2107
      %v2252 = vcvt.s32.f32 %v2108
      %v2253 = vcvt.s32.f32 %v2109
      %v2254 = vcvt.s32.f32 %v2110
      %v2255 = vcvt.s32.f32 %v2111
      %v2256 = vcvt.s32.f32 %v2112
      %v2257 = vcvt.s32.f32 %v2113
      %v2258 = vcvt.s32.f32 %v2114
      %v2259 = vcvt.s32.f32 %v2115
      %v2260 = vcvt.s32.f32 %v2116
      %v2261 = vcvt.s32.f32 %v2117
      %v2262 = vcvt.s32.f32 %v2118
      %v2263 = vcvt.s32.f32 %v2119
      %v2264 = vcvt.s32.f32 %v2120
      %v2265 = vcvt.s32.f32 %v2121
      %v2266 = vcvt.s32.f32 %v2122
      %v2267 = vcvt.s32.f32 %v2123
      %v2268 = vcvt.s32.f32 %v2124
      %v2269 = vcvt.s32.f32 %v2125
      %v2270 = vcvt.s32.f32 %v2126
      %v2271 = vcvt.s32.f32 %v2127
      %v2272 = vcvt.s32.f32 %v2128
      %v2273 = vcvt.s32.f32 %v2129
      %v2274 = vcvt.s32.f32 %v2130
      %v2275 = vcvt.s32.f32 %v2131
      %v2276 = vcvt.s32.f32 %v2132
      %v2277 = vcvt.s32.f32 %v2133
      %v2278 = vcvt.s32.f32 %v2134
      %v2279 = vcvt.s32.f32 %v2135
      %v2280 = vcvt.s32.f32 %v2136
      %v2281 = vcvt.s32.f32 %v2137
      %v2282 = vcvt.s32.f32 %v2138
      %v2283 = vcvt.s32.f32 %v2139
      %v2284 = vcvt.s32.f32 %v2140
      %v2285 = vcvt.s32.f32 %v2141
      %v2286 = vcvt.s32.f32 %v2142
      %v2287 = vcvt.s32.f32 %v2143
      %v2288 = vcvt.s32.f32 %v2144
      %v2289 = vcvt.s32.f32 %v2145
      %v2290 = vcvt.s32.f32 %v2146
      %v2291 = vcvt.s32.f32 %v2147
      %v2292 = vcvt.s32.f32 %v2148
      %v2293 = vcvt.s32.f32 %v2149
      %v2294 = vcvt.s32.f32 %v2150
      %v2295 = vcvt.s32.f32 %v2151
      %v2296 = vcvt.s32.f32 %v2152
      %v2297 = vcvt.s32.f32 %v2153
      %v2298 = vcvt.s32.f32 %v2154
      %v2299 = vcvt.s32.f32 %v2155
      %v2300 = vcvt.s32.f32 %v2156
      %v2301 = vcvt.s32.f32 %v2157
      %v2302 = vcvt.s32.f32 %v2158
      %v2303 = vcvt.s32.f32 %v2159
      %v2304 = vcvt.s32.f32 %v2160
      %v2305 = vcvt.s32.f32 %v2161
      %v2306 = vcvt.s32.f32 %v2162
      %v2307 = vcvt.s32.f32 %v2163
      %v2308 = vcvt.s32.f32 %v2164
      %v2309 = vcvt.s32.f32 %v2165
      %v2310 = vcvt.s32.f32 %v2166
      %v2311 = vcvt.s32.f32 %v2167
      %v2312 = vcvt.s32.f32 %v2168
      %v2313 = vcvt.s32.f32 %v2169
      %v2314 = vcvt.s32.f32 %v2170
      %v2315 = vcvt.s32.f32 %v2171
      %v2316 = vcvt.s32.f32 %v2172
      %v2317 = vcvt.s32.f32 %v2173
      %v2318 = vcvt.s32.f32 %v2174
      %v2319 = vcvt.s32.f32 %v2175
      %v2320 = vcvt.s32.f32 %v2176
      %v2321 = vcvt.s32.f32 %v2177
      %v2322 = vcvt.s32.f32 %v2178
      %v2323 = vcvt.s32.f32 %v2179
      %v2324 = vcvt.s32.f32 %v2180
      %v2325 = vcvt.s32.f32 %v2181
      %v2326 = vcvt.s32.f32 %v2182
      %v2327 = vcvt.s32.f32 %v2183
      %v2328 = vcvt.s32.f32 %v2184
      %v2329 = vcvt.s32.f32 %v2185
      %v2330 = vcvt.s32.f32 %v2186
      %v2331 = vcvt.s32.f32 %v2187
      %v2332 = vcvt.s32.f32 %v2188
      %v2333 = vcvt.s32.f32 %v2189
      %v2334 = vcvt.s32.f32 %v2190
      %v2335 = vcvt.s32.f32 %v2191
      %v2336 = vcvt.s32.f32 %v2192
      %v2337 = vcvt.s32.f32 %v2193
      %v2338 = vpack.c.bf16 %v2195, %v2194
      %v2339 = vpack.c.bf16 %v2197, %v2196
      %v2340 = vpack.c.bf16 %v2199, %v2198
      %v2341 = vpack.c.bf16 %v2201, %v2200
      %v2342 = vpack.c.bf16 %v2203, %v2202
      %v2343 = vpack.c.bf16 %v2205, %v2204
      %v2344 = vpack.c.bf16 %v2207, %v2206
      %v2345 = vpack.c.bf16 %v2209, %v2208
      %v2346 = vpack.c.bf16 %v2211, %v2210
      %v2347 = vpack.c.bf16 %v2213, %v2212
      %v2348 = vpack.c.bf16 %v2215, %v2214
      %v2349 = vpack.c.bf16 %v2217, %v2216
      %v2350 = vpack.c.bf16 %v2219, %v2218
      %v2351 = vpack.c.bf16 %v2221, %v2220
      %v2352 = vpack.c.bf16 %v2223, %v2222
      %v2353 = vpack.c.bf16 %v2225, %v2224
      %v2354 = vpack.c.bf16 %v2227, %v2226
      %v2355 = vpack.c.bf16 %v2229, %v2228
      %v2356 = vpack.c.bf16 %v2231, %v2230
      %v2357 = vpack.c.bf16 %v2233, %v2232
      %v2358 = vpack.c.bf16 %v2235, %v2234
      %v2359 = vpack.c.bf16 %v2237, %v2236
      %v2360 = vpack.c.bf16 %v2239, %v2238
      %v2361 = vpack.c.bf16 %v2241, %v2240
      %v2362 = vpack.c.bf16 %v2243, %v2242
      %v2363 = vpack.c.bf16 %v2245, %v2244
      %v2364 = vpack.c.bf16 %v2247, %v2246
      %v2365 = vpack.c.bf16 %v2249, %v2248
      %v2366 = vpack.c.bf16 %v2251, %v2250
      %v2367 = vpack.c.bf16 %v2253, %v2252
      %v2368 = vpack.c.bf16 %v2255, %v2254
      %v2369 = vpack.c.bf16 %v2257, %v2256
      %v2370 = vpack.c.bf16 %v2259, %v2258
      %v2371 = vpack.c.bf16 %v2261, %v2260
      %v2372 = vpack.c.bf16 %v2263, %v2262
      %v2373 = vpack.c.bf16 %v2265, %v2264
      %v2374 = vpack.c.bf16 %v2267, %v2266
      %v2375 = vpack.c.bf16 %v2269, %v2268
      %v2376 = vpack.c.bf16 %v2271, %v2270
      %v2377 = vpack.c.bf16 %v2273, %v2272
      %v2378 = vpack.c.bf16 %v2275, %v2274
      %v2379 = vpack.c.bf16 %v2277, %v2276
      %v2380 = vpack.c.bf16 %v2279, %v2278
      %v2381 = vpack.c.bf16 %v2281, %v2280
      %v2382 = vpack.c.bf16 %v2283, %v2282
      %v2383 = vpack.c.bf16 %v2285, %v2284
      %v2384 = vpack.c.bf16 %v2287, %v2286
      %v2385 = vpack.c.bf16 %v2289, %v2288
      %v2386 = vpack.c.bf16 %v2291, %v2290
      %v2387 = vpack.c.bf16 %v2293, %v2292
      %v2388 = vpack.c.bf16 %v2295, %v2294
      %v2389 = vpack.c.bf16 %v2297, %v2296
      %v2390 = vpack.c.bf16 %v2299, %v2298
      %v2391 = vpack.c.bf16 %v2301, %v2300
      %v2392 = vpack.c.bf16 %v2303, %v2302
      %v2393 = vpack.c.bf16 %v2305, %v2304
      %v2394 = vpack.c.bf16 %v2307, %v2306
      %v2395 = vpack.c.bf16 %v2309, %v2308
      %v2396 = vpack.c.bf16 %v2311, %v2310
      %v2397 = vpack.c.bf16 %v2313, %v2312
      %v2398 = vpack.c.bf16 %v2315, %v2314
      %v2399 = vpack.c.bf16 %v2317, %v2316
      %v2400 = vpack.c.bf16 %v2319, %v2318
      %v2401 = vpack.c.bf16 %v2321, %v2320
      %v2402 = vpack.c.bf16 %v2323, %v2322
      %v2403 = vpack.c.bf16 %v2325, %v2324
      %v2404 = vpack.c.bf16 %v2327, %v2326
      %v2405 = vpack.c.bf16 %v2329, %v2328
      %v2406 = vpack.c.bf16 %v2331, %v2330
      %v2407 = vpack.c.bf16 %v2333, %v2332
      %v2408 = vpack.c.bf16 %v2335, %v2334
      %v2409 = vpack.c.bf16 %v2337, %v2336
      %vm2410 = vcmp.eq.f32.partialorder %v754, 3.0
      %vm2411 = vcmp.eq.f32.partialorder %v755, 3.0
      %vm2412 = vcmp.eq.f32.partialorder %v756, 3.0
      %vm2413 = vcmp.eq.f32.partialorder %v757, 3.0
      %vm2414 = vcmp.eq.f32.partialorder %v758, 3.0
      %vm2415 = vcmp.eq.f32.partialorder %v759, 3.0
      %vm2416 = vcmp.eq.f32.partialorder %v760, 3.0
      %vm2417 = vcmp.eq.f32.partialorder %v761, 3.0
      %vm2418 = vcmp.eq.f32.partialorder %v762, 3.0
      %vm2419 = vcmp.eq.f32.partialorder %v763, 3.0
      %vm2420 = vcmp.eq.f32.partialorder %v764, 3.0
      %vm2421 = vcmp.eq.f32.partialorder %v765, 3.0
      %vm2422 = vcmp.eq.f32.partialorder %v766, 3.0
      %vm2423 = vcmp.eq.f32.partialorder %v767, 3.0
      %vm2424 = vcmp.eq.f32.partialorder %v768, 3.0
      %vm2425 = vcmp.eq.f32.partialorder %v769, 3.0
      %vm2426 = vcmp.eq.f32.partialorder %v770, 3.0
      %vm2427 = vcmp.eq.f32.partialorder %v771, 3.0
      %vm2428 = vcmp.eq.f32.partialorder %v772, 3.0
      %vm2429 = vcmp.eq.f32.partialorder %v773, 3.0
      %vm2430 = vcmp.eq.f32.partialorder %v774, 3.0
      %vm2431 = vcmp.eq.f32.partialorder %v775, 3.0
      %vm2432 = vcmp.eq.f32.partialorder %v776, 3.0
      %vm2433 = vcmp.eq.f32.partialorder %v777, 3.0
      %vm2434 = vcmp.eq.f32.partialorder %v778, 3.0
      %vm2435 = vcmp.eq.f32.partialorder %v779, 3.0
      %vm2436 = vcmp.eq.f32.partialorder %v780, 3.0
      %vm2437 = vcmp.eq.f32.partialorder %v781, 3.0
      %vm2438 = vcmp.eq.f32.partialorder %v782, 3.0
      %vm2439 = vcmp.eq.f32.partialorder %v783, 3.0
      %vm2440 = vcmp.eq.f32.partialorder %v784, 3.0
      %vm2441 = vcmp.eq.f32.partialorder %v785, 3.0
      %vm2442 = vcmp.eq.f32.partialorder %v786, 3.0
      %vm2443 = vcmp.eq.f32.partialorder %v787, 3.0
      %vm2444 = vcmp.eq.f32.partialorder %v788, 3.0
      %vm2445 = vcmp.eq.f32.partialorder %v789, 3.0
      %vm2446 = vcmp.eq.f32.partialorder %v790, 3.0
      %vm2447 = vcmp.eq.f32.partialorder %v791, 3.0
      %vm2448 = vcmp.eq.f32.partialorder %v792, 3.0
      %vm2449 = vcmp.eq.f32.partialorder %v793, 3.0
      %vm2450 = vcmp.eq.f32.partialorder %v794, 3.0
      %vm2451 = vcmp.eq.f32.partialorder %v795, 3.0
      %vm2452 = vcmp.eq.f32.partialorder %v796, 3.0
      %vm2453 = vcmp.eq.f32.partialorder %v797, 3.0
      %vm2454 = vcmp.eq.f32.partialorder %v798, 3.0
      %vm2455 = vcmp.eq.f32.partialorder %v799, 3.0
      %vm2456 = vcmp.eq.f32.partialorder %v800, 3.0
      %vm2457 = vcmp.eq.f32.partialorder %v801, 3.0
      %vm2458 = vcmp.eq.f32.partialorder %v802, 3.0
      %vm2459 = vcmp.eq.f32.partialorder %v803, 3.0
      %vm2460 = vcmp.eq.f32.partialorder %v804, 3.0
      %vm2461 = vcmp.eq.f32.partialorder %v805, 3.0
      %vm2462 = vcmp.eq.f32.partialorder %v806, 3.0
      %vm2463 = vcmp.eq.f32.partialorder %v807, 3.0
      %vm2464 = vcmp.eq.f32.partialorder %v808, 3.0
      %vm2465 = vcmp.eq.f32.partialorder %v809, 3.0
      %vm2466 = vcmp.eq.f32.partialorder %v810, 3.0
      %vm2467 = vcmp.eq.f32.partialorder %v811, 3.0
      %vm2468 = vcmp.eq.f32.partialorder %v812, 3.0
      %vm2469 = vcmp.eq.f32.partialorder %v813, 3.0
      %vm2470 = vcmp.eq.f32.partialorder %v814, 3.0
      %vm2471 = vcmp.eq.f32.partialorder %v815, 3.0
      %vm2472 = vcmp.eq.f32.partialorder %v816, 3.0
      %vm2473 = vcmp.eq.f32.partialorder %v817, 3.0
      %vm2474 = vcmp.eq.f32.partialorder %v818, 3.0
      %vm2475 = vcmp.eq.f32.partialorder %v819, 3.0
      %vm2476 = vcmp.eq.f32.partialorder %v820, 3.0
      %vm2477 = vcmp.eq.f32.partialorder %v821, 3.0
      %vm2478 = vcmp.eq.f32.partialorder %v822, 3.0
      %vm2479 = vcmp.eq.f32.partialorder %v823, 3.0
      %vm2480 = vcmp.eq.f32.partialorder %v824, 3.0
      %vm2481 = vcmp.eq.f32.partialorder %v825, 3.0
      %vm2482 = vcmp.eq.f32.partialorder %v826, 3.0
      %vm2483 = vcmp.eq.f32.partialorder %v827, 3.0
      %vm2484 = vcmp.eq.f32.partialorder %v828, 3.0
      %vm2485 = vcmp.eq.f32.partialorder %v829, 3.0
      %vm2486 = vcmp.eq.f32.partialorder %v830, 3.0
      %vm2487 = vcmp.eq.f32.partialorder %v831, 3.0
      %vm2488 = vcmp.eq.f32.partialorder %v832, 3.0
      %vm2489 = vcmp.eq.f32.partialorder %v833, 3.0
      %vm2490 = vcmp.eq.f32.partialorder %v834, 3.0
      %vm2491 = vcmp.eq.f32.partialorder %v835, 3.0
      %vm2492 = vcmp.eq.f32.partialorder %v836, 3.0
      %vm2493 = vcmp.eq.f32.partialorder %v837, 3.0
      %vm2494 = vcmp.eq.f32.partialorder %v838, 3.0
      %vm2495 = vcmp.eq.f32.partialorder %v839, 3.0
      %vm2496 = vcmp.eq.f32.partialorder %v840, 3.0
      %vm2497 = vcmp.eq.f32.partialorder %v841, 3.0
      %vm2498 = vcmp.eq.f32.partialorder %v842, 3.0
      %vm2499 = vcmp.eq.f32.partialorder %v843, 3.0
      %vm2500 = vcmp.eq.f32.partialorder %v844, 3.0
      %vm2501 = vcmp.eq.f32.partialorder %v845, 3.0
      %vm2502 = vcmp.eq.f32.partialorder %v846, 3.0
      %vm2503 = vcmp.eq.f32.partialorder %v847, 3.0
      %vm2504 = vcmp.eq.f32.partialorder %v848, 3.0
      %vm2505 = vcmp.eq.f32.partialorder %v849, 3.0
      %vm2506 = vcmp.eq.f32.partialorder %v850, 3.0
      %vm2507 = vcmp.eq.f32.partialorder %v851, 3.0
      %vm2508 = vcmp.eq.f32.partialorder %v852, 3.0
      %vm2509 = vcmp.eq.f32.partialorder %v853, 3.0
      %vm2510 = vcmp.eq.f32.partialorder %v854, 3.0
      %vm2511 = vcmp.eq.f32.partialorder %v855, 3.0
      %vm2512 = vcmp.eq.f32.partialorder %v856, 3.0
      %vm2513 = vcmp.eq.f32.partialorder %v857, 3.0
      %vm2514 = vcmp.eq.f32.partialorder %v858, 3.0
      %vm2515 = vcmp.eq.f32.partialorder %v859, 3.0
      %vm2516 = vcmp.eq.f32.partialorder %v860, 3.0
      %vm2517 = vcmp.eq.f32.partialorder %v861, 3.0
      %vm2518 = vcmp.eq.f32.partialorder %v862, 3.0
      %vm2519 = vcmp.eq.f32.partialorder %v863, 3.0
      %vm2520 = vcmp.eq.f32.partialorder %v864, 3.0
      %vm2521 = vcmp.eq.f32.partialorder %v865, 3.0
      %vm2522 = vcmp.eq.f32.partialorder %v866, 3.0
      %vm2523 = vcmp.eq.f32.partialorder %v867, 3.0
      %vm2524 = vcmp.eq.f32.partialorder %v868, 3.0
      %vm2525 = vcmp.eq.f32.partialorder %v869, 3.0
      %vm2526 = vcmp.eq.f32.partialorder %v870, 3.0
      %vm2527 = vcmp.eq.f32.partialorder %v871, 3.0
      %vm2528 = vcmp.eq.f32.partialorder %v872, 3.0
      %vm2529 = vcmp.eq.f32.partialorder %v873, 3.0
      %vm2530 = vcmp.eq.f32.partialorder %v874, 3.0
      %vm2531 = vcmp.eq.f32.partialorder %v875, 3.0
      %vm2532 = vcmp.eq.f32.partialorder %v876, 3.0
      %vm2533 = vcmp.eq.f32.partialorder %v877, 3.0
      %vm2534 = vcmp.eq.f32.partialorder %v878, 3.0
      %vm2535 = vcmp.eq.f32.partialorder %v879, 3.0
      %vm2536 = vcmp.eq.f32.partialorder %v880, 3.0
      %vm2537 = vcmp.eq.f32.partialorder %v881, 3.0
      %vm2538 = vcmp.eq.f32.partialorder %v882, 3.0
      %vm2539 = vcmp.eq.f32.partialorder %v883, 3.0
      %vm2540 = vcmp.eq.f32.partialorder %v884, 3.0
      %vm2541 = vcmp.eq.f32.partialorder %v885, 3.0
      %vm2542 = vcmp.eq.f32.partialorder %v886, 3.0
      %vm2543 = vcmp.eq.f32.partialorder %v887, 3.0
      %vm2544 = vcmp.eq.f32.partialorder %v888, 3.0
      %vm2545 = vcmp.eq.f32.partialorder %v889, 3.0
      %vm2546 = vcmp.eq.f32.partialorder %v890, 3.0
      %vm2547 = vcmp.eq.f32.partialorder %v891, 3.0
      %vm2548 = vcmp.eq.f32.partialorder %v892, 3.0
      %vm2549 = vcmp.eq.f32.partialorder %v893, 3.0
      %vm2550 = vcmp.eq.f32.partialorder %v894, 3.0
      %vm2551 = vcmp.eq.f32.partialorder %v895, 3.0
      %vm2552 = vcmp.eq.f32.partialorder %v896, 3.0
      %vm2553 = vcmp.eq.f32.partialorder %v897, 3.0
      %v2554 = vsel %vm2410, 1, 0
      %v2555 = vsel %vm2411, 1, 0
      %v2556 = vsel %vm2412, 1, 0
      %v2557 = vsel %vm2413, 1, 0
      %v2558 = vsel %vm2414, 1, 0
      %v2559 = vsel %vm2415, 1, 0
      %v2560 = vsel %vm2416, 1, 0
      %v2561 = vsel %vm2417, 1, 0
      %v2562 = vsel %vm2418, 1, 0
      %v2563 = vsel %vm2419, 1, 0
      %v2564 = vsel %vm2420, 1, 0
      %v2565 = vsel %vm2421, 1, 0
      %v2566 = vsel %vm2422, 1, 0
      %v2567 = vsel %vm2423, 1, 0
      %v2568 = vsel %vm2424, 1, 0
      %v2569 = vsel %vm2425, 1, 0
      %v2570 = vsel %vm2426, 1, 0
      %v2571 = vsel %vm2427, 1, 0
      %v2572 = vsel %vm2428, 1, 0
      %v2573 = vsel %vm2429, 1, 0
      %v2574 = vsel %vm2430, 1, 0
      %v2575 = vsel %vm2431, 1, 0
      %v2576 = vsel %vm2432, 1, 0
      %v2577 = vsel %vm2433, 1, 0
      %v2578 = vsel %vm2434, 1, 0
      %v2579 = vsel %vm2435, 1, 0
      %v2580 = vsel %vm2436, 1, 0
      %v2581 = vsel %vm2437, 1, 0
      %v2582 = vsel %vm2438, 1, 0
      %v2583 = vsel %vm2439, 1, 0
      %v2584 = vsel %vm2440, 1, 0
      %v2585 = vsel %vm2441, 1, 0
      %v2586 = vsel %vm2442, 1, 0
      %v2587 = vsel %vm2443, 1, 0
      %v2588 = vsel %vm2444, 1, 0
      %v2589 = vsel %vm2445, 1, 0
      %v2590 = vsel %vm2446, 1, 0
      %v2591 = vsel %vm2447, 1, 0
      %v2592 = vsel %vm2448, 1, 0
      %v2593 = vsel %vm2449, 1, 0
      %v2594 = vsel %vm2450, 1, 0
      %v2595 = vsel %vm2451, 1, 0
      %v2596 = vsel %vm2452, 1, 0
      %v2597 = vsel %vm2453, 1, 0
      %v2598 = vsel %vm2454, 1, 0
      %v2599 = vsel %vm2455, 1, 0
      %v2600 = vsel %vm2456, 1, 0
      %v2601 = vsel %vm2457, 1, 0
      %v2602 = vsel %vm2458, 1, 0
      %v2603 = vsel %vm2459, 1, 0
      %v2604 = vsel %vm2460, 1, 0
      %v2605 = vsel %vm2461, 1, 0
      %v2606 = vsel %vm2462, 1, 0
      %v2607 = vsel %vm2463, 1, 0
      %v2608 = vsel %vm2464, 1, 0
      %v2609 = vsel %vm2465, 1, 0
      %v2610 = vsel %vm2466, 1, 0
      %v2611 = vsel %vm2467, 1, 0
      %v2612 = vsel %vm2468, 1, 0
      %v2613 = vsel %vm2469, 1, 0
      %v2614 = vsel %vm2470, 1, 0
      %v2615 = vsel %vm2471, 1, 0
      %v2616 = vsel %vm2472, 1, 0
      %v2617 = vsel %vm2473, 1, 0
      %v2618 = vsel %vm2474, 1, 0
      %v2619 = vsel %vm2475, 1, 0
      %v2620 = vsel %vm2476, 1, 0
      %v2621 = vsel %vm2477, 1, 0
      %v2622 = vsel %vm2478, 1, 0
      %v2623 = vsel %vm2479, 1, 0
      %v2624 = vsel %vm2480, 1, 0
      %v2625 = vsel %vm2481, 1, 0
      %v2626 = vsel %vm2482, 1, 0
      %v2627 = vsel %vm2483, 1, 0
      %v2628 = vsel %vm2484, 1, 0
      %v2629 = vsel %vm2485, 1, 0
      %v2630 = vsel %vm2486, 1, 0
      %v2631 = vsel %vm2487, 1, 0
      %v2632 = vsel %vm2488, 1, 0
      %v2633 = vsel %vm2489, 1, 0
      %v2634 = vsel %vm2490, 1, 0
      %v2635 = vsel %vm2491, 1, 0
      %v2636 = vsel %vm2492, 1, 0
      %v2637 = vsel %vm2493, 1, 0
      %v2638 = vsel %vm2494, 1, 0
      %v2639 = vsel %vm2495, 1, 0
      %v2640 = vsel %vm2496, 1, 0
      %v2641 = vsel %vm2497, 1, 0
      %v2642 = vsel %vm2498, 1, 0
      %v2643 = vsel %vm2499, 1, 0
      %v2644 = vsel %vm2500, 1, 0
      %v2645 = vsel %vm2501, 1, 0
      %v2646 = vsel %vm2502, 1, 0
      %v2647 = vsel %vm2503, 1, 0
      %v2648 = vsel %vm2504, 1, 0
      %v2649 = vsel %vm2505, 1, 0
      %v2650 = vsel %vm2506, 1, 0
      %v2651 = vsel %vm2507, 1, 0
      %v2652 = vsel %vm2508, 1, 0
      %v2653 = vsel %vm2509, 1, 0
      %v2654 = vsel %vm2510, 1, 0
      %v2655 = vsel %vm2511, 1, 0
      %v2656 = vsel %vm2512, 1, 0
      %v2657 = vsel %vm2513, 1, 0
      %v2658 = vsel %vm2514, 1, 0
      %v2659 = vsel %vm2515, 1, 0
      %v2660 = vsel %vm2516, 1, 0
      %v2661 = vsel %vm2517, 1, 0
      %v2662 = vsel %vm2518, 1, 0
      %v2663 = vsel %vm2519, 1, 0
      %v2664 = vsel %vm2520, 1, 0
      %v2665 = vsel %vm2521, 1, 0
      %v2666 = vsel %vm2522, 1, 0
      %v2667 = vsel %vm2523, 1, 0
      %v2668 = vsel %vm2524, 1, 0
      %v2669 = vsel %vm2525, 1, 0
      %v2670 = vsel %vm2526, 1, 0
      %v2671 = vsel %vm2527, 1, 0
      %v2672 = vsel %vm2528, 1, 0
      %v2673 = vsel %vm2529, 1, 0
      %v2674 = vsel %vm2530, 1, 0
      %v2675 = vsel %vm2531, 1, 0
      %v2676 = vsel %vm2532, 1, 0
      %v2677 = vsel %vm2533, 1, 0
      %v2678 = vsel %vm2534, 1, 0
      %v2679 = vsel %vm2535, 1, 0
      %v2680 = vsel %vm2536, 1, 0
      %v2681 = vsel %vm2537, 1, 0
      %v2682 = vsel %vm2538, 1, 0
      %v2683 = vsel %vm2539, 1, 0
      %v2684 = vsel %vm2540, 1, 0
      %v2685 = vsel %vm2541, 1, 0
      %v2686 = vsel %vm2542, 1, 0
      %v2687 = vsel %vm2543, 1, 0
      %v2688 = vsel %vm2544, 1, 0
      %v2689 = vsel %vm2545, 1, 0
      %v2690 = vsel %vm2546, 1, 0
      %v2691 = vsel %vm2547, 1, 0
      %v2692 = vsel %vm2548, 1, 0
      %v2693 = vsel %vm2549, 1, 0
      %v2694 = vsel %vm2550, 1, 0
      %v2695 = vsel %vm2551, 1, 0
      %v2696 = vsel %vm2552, 1, 0
      %v2697 = vsel %vm2553, 1, 0
      %v2698 = vcvt.s32.f32 %v2554
      %v2699 = vcvt.s32.f32 %v2555
      %v2700 = vcvt.s32.f32 %v2556
      %v2701 = vcvt.s32.f32 %v2557
      %v2702 = vcvt.s32.f32 %v2558
      %v2703 = vcvt.s32.f32 %v2559
      %v2704 = vcvt.s32.f32 %v2560
      %v2705 = vcvt.s32.f32 %v2561
      %v2706 = vcvt.s32.f32 %v2562
      %v2707 = vcvt.s32.f32 %v2563
      %v2708 = vcvt.s32.f32 %v2564
      %v2709 = vcvt.s32.f32 %v2565
      %v2710 = vcvt.s32.f32 %v2566
      %v2711 = vcvt.s32.f32 %v2567
      %v2712 = vcvt.s32.f32 %v2568
      %v2713 = vcvt.s32.f32 %v2569
      %v2714 = vcvt.s32.f32 %v2570
      %v2715 = vcvt.s32.f32 %v2571
      %v2716 = vcvt.s32.f32 %v2572
      %v2717 = vcvt.s32.f32 %v2573
      %v2718 = vcvt.s32.f32 %v2574
      %v2719 = vcvt.s32.f32 %v2575
      %v2720 = vcvt.s32.f32 %v2576
      %v2721 = vcvt.s32.f32 %v2577
      %v2722 = vcvt.s32.f32 %v2578
      %v2723 = vcvt.s32.f32 %v2579
      %v2724 = vcvt.s32.f32 %v2580
      %v2725 = vcvt.s32.f32 %v2581
      %v2726 = vcvt.s32.f32 %v2582
      %v2727 = vcvt.s32.f32 %v2583
      %v2728 = vcvt.s32.f32 %v2584
      %v2729 = vcvt.s32.f32 %v2585
      %v2730 = vcvt.s32.f32 %v2586
      %v2731 = vcvt.s32.f32 %v2587
      %v2732 = vcvt.s32.f32 %v2588
      %v2733 = vcvt.s32.f32 %v2589
      %v2734 = vcvt.s32.f32 %v2590
      %v2735 = vcvt.s32.f32 %v2591
      %v2736 = vcvt.s32.f32 %v2592
      %v2737 = vcvt.s32.f32 %v2593
      %v2738 = vcvt.s32.f32 %v2594
      %v2739 = vcvt.s32.f32 %v2595
      %v2740 = vcvt.s32.f32 %v2596
      %v2741 = vcvt.s32.f32 %v2597
      %v2742 = vcvt.s32.f32 %v2598
      %v2743 = vcvt.s32.f32 %v2599
      %v2744 = vcvt.s32.f32 %v2600
      %v2745 = vcvt.s32.f32 %v2601
      %v2746 = vcvt.s32.f32 %v2602
      %v2747 = vcvt.s32.f32 %v2603
      %v2748 = vcvt.s32.f32 %v2604
      %v2749 = vcvt.s32.f32 %v2605
      %v2750 = vcvt.s32.f32 %v2606
      %v2751 = vcvt.s32.f32 %v2607
      %v2752 = vcvt.s32.f32 %v2608
      %v2753 = vcvt.s32.f32 %v2609
      %v2754 = vcvt.s32.f32 %v2610
      %v2755 = vcvt.s32.f32 %v2611
      %v2756 = vcvt.s32.f32 %v2612
      %v2757 = vcvt.s32.f32 %v2613
      %v2758 = vcvt.s32.f32 %v2614
      %v2759 = vcvt.s32.f32 %v2615
      %v2760 = vcvt.s32.f32 %v2616
      %v2761 = vcvt.s32.f32 %v2617
      %v2762 = vcvt.s32.f32 %v2618
      %v2763 = vcvt.s32.f32 %v2619
      %v2764 = vcvt.s32.f32 %v2620
      %v2765 = vcvt.s32.f32 %v2621
      %v2766 = vcvt.s32.f32 %v2622
      %v2767 = vcvt.s32.f32 %v2623
      %v2768 = vcvt.s32.f32 %v2624
      %v2769 = vcvt.s32.f32 %v2625
      %v2770 = vcvt.s32.f32 %v2626
      %v2771 = vcvt.s32.f32 %v2627
      %v2772 = vcvt.s32.f32 %v2628
      %v2773 = vcvt.s32.f32 %v2629
      %v2774 = vcvt.s32.f32 %v2630
      %v2775 = vcvt.s32.f32 %v2631
      %v2776 = vcvt.s32.f32 %v2632
      %v2777 = vcvt.s32.f32 %v2633
      %v2778 = vcvt.s32.f32 %v2634
      %v2779 = vcvt.s32.f32 %v2635
      %v2780 = vcvt.s32.f32 %v2636
      %v2781 = vcvt.s32.f32 %v2637
      %v2782 = vcvt.s32.f32 %v2638
      %v2783 = vcvt.s32.f32 %v2639
      %v2784 = vcvt.s32.f32 %v2640
      %v2785 = vcvt.s32.f32 %v2641
      %v2786 = vcvt.s32.f32 %v2642
      %v2787 = vcvt.s32.f32 %v2643
      %v2788 = vcvt.s32.f32 %v2644
      %v2789 = vcvt.s32.f32 %v2645
      %v2790 = vcvt.s32.f32 %v2646
      %v2791 = vcvt.s32.f32 %v2647
      %v2792 = vcvt.s32.f32 %v2648
      %v2793 = vcvt.s32.f32 %v2649
      %v2794 = vcvt.s32.f32 %v2650
      %v2795 = vcvt.s32.f32 %v2651
      %v2796 = vcvt.s32.f32 %v2652
      %v2797 = vcvt.s32.f32 %v2653
      %v2798 = vcvt.s32.f32 %v2654
      %v2799 = vcvt.s32.f32 %v2655
      %v2800 = vcvt.s32.f32 %v2656
      %v2801 = vcvt.s32.f32 %v2657
      %v2802 = vcvt.s32.f32 %v2658
      %v2803 = vcvt.s32.f32 %v2659
      %v2804 = vcvt.s32.f32 %v2660
      %v2805 = vcvt.s32.f32 %v2661
      %v2806 = vcvt.s32.f32 %v2662
      %v2807 = vcvt.s32.f32 %v2663
      %v2808 = vcvt.s32.f32 %v2664
      %v2809 = vcvt.s32.f32 %v2665
      %v2810 = vcvt.s32.f32 %v2666
      %v2811 = vcvt.s32.f32 %v2667
      %v2812 = vcvt.s32.f32 %v2668
      %v2813 = vcvt.s32.f32 %v2669
      %v2814 = vcvt.s32.f32 %v2670
      %v2815 = vcvt.s32.f32 %v2671
      %v2816 = vcvt.s32.f32 %v2672
      %v2817 = vcvt.s32.f32 %v2673
      %v2818 = vcvt.s32.f32 %v2674
      %v2819 = vcvt.s32.f32 %v2675
      %v2820 = vcvt.s32.f32 %v2676
      %v2821 = vcvt.s32.f32 %v2677
      %v2822 = vcvt.s32.f32 %v2678
      %v2823 = vcvt.s32.f32 %v2679
      %v2824 = vcvt.s32.f32 %v2680
      %v2825 = vcvt.s32.f32 %v2681
      %v2826 = vcvt.s32.f32 %v2682
      %v2827 = vcvt.s32.f32 %v2683
      %v2828 = vcvt.s32.f32 %v2684
      %v2829 = vcvt.s32.f32 %v2685
      %v2830 = vcvt.s32.f32 %v2686
      %v2831 = vcvt.s32.f32 %v2687
      %v2832 = vcvt.s32.f32 %v2688
      %v2833 = vcvt.s32.f32 %v2689
      %v2834 = vcvt.s32.f32 %v2690
      %v2835 = vcvt.s32.f32 %v2691
      %v2836 = vcvt.s32.f32 %v2692
      %v2837 = vcvt.s32.f32 %v2693
      %v2838 = vcvt.s32.f32 %v2694
      %v2839 = vcvt.s32.f32 %v2695
      %v2840 = vcvt.s32.f32 %v2696
      %v2841 = vcvt.s32.f32 %v2697
      %v2842 = vpack.c.bf16 %v2699, %v2698
      %v2843 = vpack.c.bf16 %v2701, %v2700
      %v2844 = vpack.c.bf16 %v2703, %v2702
      %v2845 = vpack.c.bf16 %v2705, %v2704
      %v2846 = vpack.c.bf16 %v2707, %v2706
      %v2847 = vpack.c.bf16 %v2709, %v2708
      %v2848 = vpack.c.bf16 %v2711, %v2710
      %v2849 = vpack.c.bf16 %v2713, %v2712
      %v2850 = vpack.c.bf16 %v2715, %v2714
      %v2851 = vpack.c.bf16 %v2717, %v2716
      %v2852 = vpack.c.bf16 %v2719, %v2718
      %v2853 = vpack.c.bf16 %v2721, %v2720
      %v2854 = vpack.c.bf16 %v2723, %v2722
      %v2855 = vpack.c.bf16 %v2725, %v2724
      %v2856 = vpack.c.bf16 %v2727, %v2726
      %v2857 = vpack.c.bf16 %v2729, %v2728
      %v2858 = vpack.c.bf16 %v2731, %v2730
      %v2859 = vpack.c.bf16 %v2733, %v2732
      %v2860 = vpack.c.bf16 %v2735, %v2734
      %v2861 = vpack.c.bf16 %v2737, %v2736
      %v2862 = vpack.c.bf16 %v2739, %v2738
      %v2863 = vpack.c.bf16 %v2741, %v2740
      %v2864 = vpack.c.bf16 %v2743, %v2742
      %v2865 = vpack.c.bf16 %v2745, %v2744
      %v2866 = vpack.c.bf16 %v2747, %v2746
      %v2867 = vpack.c.bf16 %v2749, %v2748
      %v2868 = vpack.c.bf16 %v2751, %v2750
      %v2869 = vpack.c.bf16 %v2753, %v2752
      %v2870 = vpack.c.bf16 %v2755, %v2754
      %v2871 = vpack.c.bf16 %v2757, %v2756
      %v2872 = vpack.c.bf16 %v2759, %v2758
      %v2873 = vpack.c.bf16 %v2761, %v2760
      %v2874 = vpack.c.bf16 %v2763, %v2762
      %v2875 = vpack.c.bf16 %v2765, %v2764
      %v2876 = vpack.c.bf16 %v2767, %v2766
      %v2877 = vpack.c.bf16 %v2769, %v2768
      %v2878 = vpack.c.bf16 %v2771, %v2770
      %v2879 = vpack.c.bf16 %v2773, %v2772
      %v2880 = vpack.c.bf16 %v2775, %v2774
      %v2881 = vpack.c.bf16 %v2777, %v2776
      %v2882 = vpack.c.bf16 %v2779, %v2778
      %v2883 = vpack.c.bf16 %v2781, %v2780
      %v2884 = vpack.c.bf16 %v2783, %v2782
      %v2885 = vpack.c.bf16 %v2785, %v2784
      %v2886 = vpack.c.bf16 %v2787, %v2786
      %v2887 = vpack.c.bf16 %v2789, %v2788
      %v2888 = vpack.c.bf16 %v2791, %v2790
      %v2889 = vpack.c.bf16 %v2793, %v2792
      %v2890 = vpack.c.bf16 %v2795, %v2794
      %v2891 = vpack.c.bf16 %v2797, %v2796
      %v2892 = vpack.c.bf16 %v2799, %v2798
      %v2893 = vpack.c.bf16 %v2801, %v2800
      %v2894 = vpack.c.bf16 %v2803, %v2802
      %v2895 = vpack.c.bf16 %v2805, %v2804
      %v2896 = vpack.c.bf16 %v2807, %v2806
      %v2897 = vpack.c.bf16 %v2809, %v2808
      %v2898 = vpack.c.bf16 %v2811, %v2810
      %v2899 = vpack.c.bf16 %v2813, %v2812
      %v2900 = vpack.c.bf16 %v2815, %v2814
      %v2901 = vpack.c.bf16 %v2817, %v2816
      %v2902 = vpack.c.bf16 %v2819, %v2818
      %v2903 = vpack.c.bf16 %v2821, %v2820
      %v2904 = vpack.c.bf16 %v2823, %v2822
      %v2905 = vpack.c.bf16 %v2825, %v2824
      %v2906 = vpack.c.bf16 %v2827, %v2826
      %v2907 = vpack.c.bf16 %v2829, %v2828
      %v2908 = vpack.c.bf16 %v2831, %v2830
      %v2909 = vpack.c.bf16 %v2833, %v2832
      %v2910 = vpack.c.bf16 %v2835, %v2834
      %v2911 = vpack.c.bf16 %v2837, %v2836
      %v2912 = vpack.c.bf16 %v2839, %v2838
      %v2913 = vpack.c.bf16 %v2841, %v2840
      %vm2914 = vcmp.eq.f32.partialorder %v754, 4.0
      %vm2915 = vcmp.eq.f32.partialorder %v755, 4.0
      %vm2916 = vcmp.eq.f32.partialorder %v756, 4.0
      %vm2917 = vcmp.eq.f32.partialorder %v757, 4.0
      %vm2918 = vcmp.eq.f32.partialorder %v758, 4.0
      %vm2919 = vcmp.eq.f32.partialorder %v759, 4.0
      %vm2920 = vcmp.eq.f32.partialorder %v760, 4.0
      %vm2921 = vcmp.eq.f32.partialorder %v761, 4.0
      %vm2922 = vcmp.eq.f32.partialorder %v762, 4.0
      %vm2923 = vcmp.eq.f32.partialorder %v763, 4.0
      %vm2924 = vcmp.eq.f32.partialorder %v764, 4.0
      %vm2925 = vcmp.eq.f32.partialorder %v765, 4.0
      %vm2926 = vcmp.eq.f32.partialorder %v766, 4.0
      %vm2927 = vcmp.eq.f32.partialorder %v767, 4.0
      %vm2928 = vcmp.eq.f32.partialorder %v768, 4.0
      %vm2929 = vcmp.eq.f32.partialorder %v769, 4.0
      %vm2930 = vcmp.eq.f32.partialorder %v770, 4.0
      %vm2931 = vcmp.eq.f32.partialorder %v771, 4.0
      %vm2932 = vcmp.eq.f32.partialorder %v772, 4.0
      %vm2933 = vcmp.eq.f32.partialorder %v773, 4.0
      %vm2934 = vcmp.eq.f32.partialorder %v774, 4.0
      %vm2935 = vcmp.eq.f32.partialorder %v775, 4.0
      %vm2936 = vcmp.eq.f32.partialorder %v776, 4.0
      %vm2937 = vcmp.eq.f32.partialorder %v777, 4.0
      %vm2938 = vcmp.eq.f32.partialorder %v778, 4.0
      %vm2939 = vcmp.eq.f32.partialorder %v779, 4.0
      %vm2940 = vcmp.eq.f32.partialorder %v780, 4.0
      %vm2941 = vcmp.eq.f32.partialorder %v781, 4.0
      %vm2942 = vcmp.eq.f32.partialorder %v782, 4.0
      %vm2943 = vcmp.eq.f32.partialorder %v783, 4.0
      %vm2944 = vcmp.eq.f32.partialorder %v784, 4.0
      %vm2945 = vcmp.eq.f32.partialorder %v785, 4.0
      %vm2946 = vcmp.eq.f32.partialorder %v786, 4.0
      %vm2947 = vcmp.eq.f32.partialorder %v787, 4.0
      %vm2948 = vcmp.eq.f32.partialorder %v788, 4.0
      %vm2949 = vcmp.eq.f32.partialorder %v789, 4.0
      %vm2950 = vcmp.eq.f32.partialorder %v790, 4.0
      %vm2951 = vcmp.eq.f32.partialorder %v791, 4.0
      %vm2952 = vcmp.eq.f32.partialorder %v792, 4.0
      %vm2953 = vcmp.eq.f32.partialorder %v793, 4.0
      %vm2954 = vcmp.eq.f32.partialorder %v794, 4.0
      %vm2955 = vcmp.eq.f32.partialorder %v795, 4.0
      %vm2956 = vcmp.eq.f32.partialorder %v796, 4.0
      %vm2957 = vcmp.eq.f32.partialorder %v797, 4.0
      %vm2958 = vcmp.eq.f32.partialorder %v798, 4.0
      %vm2959 = vcmp.eq.f32.partialorder %v799, 4.0
      %vm2960 = vcmp.eq.f32.partialorder %v800, 4.0
      %vm2961 = vcmp.eq.f32.partialorder %v801, 4.0
      %vm2962 = vcmp.eq.f32.partialorder %v802, 4.0
      %vm2963 = vcmp.eq.f32.partialorder %v803, 4.0
      %vm2964 = vcmp.eq.f32.partialorder %v804, 4.0
      %vm2965 = vcmp.eq.f32.partialorder %v805, 4.0
      %vm2966 = vcmp.eq.f32.partialorder %v806, 4.0
      %vm2967 = vcmp.eq.f32.partialorder %v807, 4.0
      %vm2968 = vcmp.eq.f32.partialorder %v808, 4.0
      %vm2969 = vcmp.eq.f32.partialorder %v809, 4.0
      %vm2970 = vcmp.eq.f32.partialorder %v810, 4.0
      %vm2971 = vcmp.eq.f32.partialorder %v811, 4.0
      %vm2972 = vcmp.eq.f32.partialorder %v812, 4.0
      %vm2973 = vcmp.eq.f32.partialorder %v813, 4.0
      %vm2974 = vcmp.eq.f32.partialorder %v814, 4.0
      %vm2975 = vcmp.eq.f32.partialorder %v815, 4.0
      %vm2976 = vcmp.eq.f32.partialorder %v816, 4.0
      %vm2977 = vcmp.eq.f32.partialorder %v817, 4.0
      %vm2978 = vcmp.eq.f32.partialorder %v818, 4.0
      %vm2979 = vcmp.eq.f32.partialorder %v819, 4.0
      %vm2980 = vcmp.eq.f32.partialorder %v820, 4.0
      %vm2981 = vcmp.eq.f32.partialorder %v821, 4.0
      %vm2982 = vcmp.eq.f32.partialorder %v822, 4.0
      %vm2983 = vcmp.eq.f32.partialorder %v823, 4.0
      %vm2984 = vcmp.eq.f32.partialorder %v824, 4.0
      %vm2985 = vcmp.eq.f32.partialorder %v825, 4.0
      %vm2986 = vcmp.eq.f32.partialorder %v826, 4.0
      %vm2987 = vcmp.eq.f32.partialorder %v827, 4.0
      %vm2988 = vcmp.eq.f32.partialorder %v828, 4.0
      %vm2989 = vcmp.eq.f32.partialorder %v829, 4.0
      %vm2990 = vcmp.eq.f32.partialorder %v830, 4.0
      %vm2991 = vcmp.eq.f32.partialorder %v831, 4.0
      %vm2992 = vcmp.eq.f32.partialorder %v832, 4.0
      %vm2993 = vcmp.eq.f32.partialorder %v833, 4.0
      %vm2994 = vcmp.eq.f32.partialorder %v834, 4.0
      %vm2995 = vcmp.eq.f32.partialorder %v835, 4.0
      %vm2996 = vcmp.eq.f32.partialorder %v836, 4.0
      %vm2997 = vcmp.eq.f32.partialorder %v837, 4.0
      %vm2998 = vcmp.eq.f32.partialorder %v838, 4.0
      %vm2999 = vcmp.eq.f32.partialorder %v839, 4.0
      %vm3000 = vcmp.eq.f32.partialorder %v840, 4.0
      %vm3001 = vcmp.eq.f32.partialorder %v841, 4.0
      %vm3002 = vcmp.eq.f32.partialorder %v842, 4.0
      %vm3003 = vcmp.eq.f32.partialorder %v843, 4.0
      %vm3004 = vcmp.eq.f32.partialorder %v844, 4.0
      %vm3005 = vcmp.eq.f32.partialorder %v845, 4.0
      %vm3006 = vcmp.eq.f32.partialorder %v846, 4.0
      %vm3007 = vcmp.eq.f32.partialorder %v847, 4.0
      %vm3008 = vcmp.eq.f32.partialorder %v848, 4.0
      %vm3009 = vcmp.eq.f32.partialorder %v849, 4.0
      %vm3010 = vcmp.eq.f32.partialorder %v850, 4.0
      %vm3011 = vcmp.eq.f32.partialorder %v851, 4.0
      %vm3012 = vcmp.eq.f32.partialorder %v852, 4.0
      %vm3013 = vcmp.eq.f32.partialorder %v853, 4.0
      %vm3014 = vcmp.eq.f32.partialorder %v854, 4.0
      %vm3015 = vcmp.eq.f32.partialorder %v855, 4.0
      %vm3016 = vcmp.eq.f32.partialorder %v856, 4.0
      %vm3017 = vcmp.eq.f32.partialorder %v857, 4.0
      %vm3018 = vcmp.eq.f32.partialorder %v858, 4.0
      %vm3019 = vcmp.eq.f32.partialorder %v859, 4.0
      %vm3020 = vcmp.eq.f32.partialorder %v860, 4.0
      %vm3021 = vcmp.eq.f32.partialorder %v861, 4.0
      %vm3022 = vcmp.eq.f32.partialorder %v862, 4.0
      %vm3023 = vcmp.eq.f32.partialorder %v863, 4.0
      %vm3024 = vcmp.eq.f32.partialorder %v864, 4.0
      %vm3025 = vcmp.eq.f32.partialorder %v865, 4.0
      %vm3026 = vcmp.eq.f32.partialorder %v866, 4.0
      %vm3027 = vcmp.eq.f32.partialorder %v867, 4.0
      %vm3028 = vcmp.eq.f32.partialorder %v868, 4.0
      %vm3029 = vcmp.eq.f32.partialorder %v869, 4.0
      %vm3030 = vcmp.eq.f32.partialorder %v870, 4.0
      %vm3031 = vcmp.eq.f32.partialorder %v871, 4.0
      %vm3032 = vcmp.eq.f32.partialorder %v872, 4.0
      %vm3033 = vcmp.eq.f32.partialorder %v873, 4.0
      %vm3034 = vcmp.eq.f32.partialorder %v874, 4.0
      %vm3035 = vcmp.eq.f32.partialorder %v875, 4.0
      %vm3036 = vcmp.eq.f32.partialorder %v876, 4.0
      %vm3037 = vcmp.eq.f32.partialorder %v877, 4.0
      %vm3038 = vcmp.eq.f32.partialorder %v878, 4.0
      %vm3039 = vcmp.eq.f32.partialorder %v879, 4.0
      %vm3040 = vcmp.eq.f32.partialorder %v880, 4.0
      %vm3041 = vcmp.eq.f32.partialorder %v881, 4.0
      %vm3042 = vcmp.eq.f32.partialorder %v882, 4.0
      %vm3043 = vcmp.eq.f32.partialorder %v883, 4.0
      %vm3044 = vcmp.eq.f32.partialorder %v884, 4.0
      %vm3045 = vcmp.eq.f32.partialorder %v885, 4.0
      %vm3046 = vcmp.eq.f32.partialorder %v886, 4.0
      %vm3047 = vcmp.eq.f32.partialorder %v887, 4.0
      %vm3048 = vcmp.eq.f32.partialorder %v888, 4.0
      %vm3049 = vcmp.eq.f32.partialorder %v889, 4.0
      %vm3050 = vcmp.eq.f32.partialorder %v890, 4.0
      %vm3051 = vcmp.eq.f32.partialorder %v891, 4.0
      %vm3052 = vcmp.eq.f32.partialorder %v892, 4.0
      %vm3053 = vcmp.eq.f32.partialorder %v893, 4.0
      %vm3054 = vcmp.eq.f32.partialorder %v894, 4.0
      %vm3055 = vcmp.eq.f32.partialorder %v895, 4.0
      %vm3056 = vcmp.eq.f32.partialorder %v896, 4.0
      %vm3057 = vcmp.eq.f32.partialorder %v897, 4.0
      %v3058 = vsel %vm2914, 1, 0
      %v3059 = vsel %vm2915, 1, 0
      %v3060 = vsel %vm2916, 1, 0
      %v3061 = vsel %vm2917, 1, 0
      %v3062 = vsel %vm2918, 1, 0
      %v3063 = vsel %vm2919, 1, 0
      %v3064 = vsel %vm2920, 1, 0
      %v3065 = vsel %vm2921, 1, 0
      %v3066 = vsel %vm2922, 1, 0
      %v3067 = vsel %vm2923, 1, 0
      %v3068 = vsel %vm2924, 1, 0
      %v3069 = vsel %vm2925, 1, 0
      %v3070 = vsel %vm2926, 1, 0
      %v3071 = vsel %vm2927, 1, 0
      %v3072 = vsel %vm2928, 1, 0
      %v3073 = vsel %vm2929, 1, 0
      %v3074 = vsel %vm2930, 1, 0
      %v3075 = vsel %vm2931, 1, 0
      %v3076 = vsel %vm2932, 1, 0
      %v3077 = vsel %vm2933, 1, 0
      %v3078 = vsel %vm2934, 1, 0
      %v3079 = vsel %vm2935, 1, 0
      %v3080 = vsel %vm2936, 1, 0
      %v3081 = vsel %vm2937, 1, 0
      %v3082 = vsel %vm2938, 1, 0
      %v3083 = vsel %vm2939, 1, 0
      %v3084 = vsel %vm2940, 1, 0
      %v3085 = vsel %vm2941, 1, 0
      %v3086 = vsel %vm2942, 1, 0
      %v3087 = vsel %vm2943, 1, 0
      %v3088 = vsel %vm2944, 1, 0
      %v3089 = vsel %vm2945, 1, 0
      %v3090 = vsel %vm2946, 1, 0
      %v3091 = vsel %vm2947, 1, 0
      %v3092 = vsel %vm2948, 1, 0
      %v3093 = vsel %vm2949, 1, 0
      %v3094 = vsel %vm2950, 1, 0
      %v3095 = vsel %vm2951, 1, 0
      %v3096 = vsel %vm2952, 1, 0
      %v3097 = vsel %vm2953, 1, 0
      %v3098 = vsel %vm2954, 1, 0
      %v3099 = vsel %vm2955, 1, 0
      %v3100 = vsel %vm2956, 1, 0
      %v3101 = vsel %vm2957, 1, 0
      %v3102 = vsel %vm2958, 1, 0
      %v3103 = vsel %vm2959, 1, 0
      %v3104 = vsel %vm2960, 1, 0
      %v3105 = vsel %vm2961, 1, 0
      %v3106 = vsel %vm2962, 1, 0
      %v3107 = vsel %vm2963, 1, 0
      %v3108 = vsel %vm2964, 1, 0
      %v3109 = vsel %vm2965, 1, 0
      %v3110 = vsel %vm2966, 1, 0
      %v3111 = vsel %vm2967, 1, 0
      %v3112 = vsel %vm2968, 1, 0
      %v3113 = vsel %vm2969, 1, 0
      %v3114 = vsel %vm2970, 1, 0
      %v3115 = vsel %vm2971, 1, 0
      %v3116 = vsel %vm2972, 1, 0
      %v3117 = vsel %vm2973, 1, 0
      %v3118 = vsel %vm2974, 1, 0
      %v3119 = vsel %vm2975, 1, 0
      %v3120 = vsel %vm2976, 1, 0
      %v3121 = vsel %vm2977, 1, 0
      %v3122 = vsel %vm2978, 1, 0
      %v3123 = vsel %vm2979, 1, 0
      %v3124 = vsel %vm2980, 1, 0
      %v3125 = vsel %vm2981, 1, 0
      %v3126 = vsel %vm2982, 1, 0
      %v3127 = vsel %vm2983, 1, 0
      %v3128 = vsel %vm2984, 1, 0
      %v3129 = vsel %vm2985, 1, 0
      %v3130 = vsel %vm2986, 1, 0
      %v3131 = vsel %vm2987, 1, 0
      %v3132 = vsel %vm2988, 1, 0
      %v3133 = vsel %vm2989, 1, 0
      %v3134 = vsel %vm2990, 1, 0
      %v3135 = vsel %vm2991, 1, 0
      %v3136 = vsel %vm2992, 1, 0
      %v3137 = vsel %vm2993, 1, 0
      %v3138 = vsel %vm2994, 1, 0
      %v3139 = vsel %vm2995, 1, 0
      %v3140 = vsel %vm2996, 1, 0
      %v3141 = vsel %vm2997, 1, 0
      %v3142 = vsel %vm2998, 1, 0
      %v3143 = vsel %vm2999, 1, 0
      %v3144 = vsel %vm3000, 1, 0
      %v3145 = vsel %vm3001, 1, 0
      %v3146 = vsel %vm3002, 1, 0
      %v3147 = vsel %vm3003, 1, 0
      %v3148 = vsel %vm3004, 1, 0
      %v3149 = vsel %vm3005, 1, 0
      %v3150 = vsel %vm3006, 1, 0
      %v3151 = vsel %vm3007, 1, 0
      %v3152 = vsel %vm3008, 1, 0
      %v3153 = vsel %vm3009, 1, 0
      %v3154 = vsel %vm3010, 1, 0
      %v3155 = vsel %vm3011, 1, 0
      %v3156 = vsel %vm3012, 1, 0
      %v3157 = vsel %vm3013, 1, 0
      %v3158 = vsel %vm3014, 1, 0
      %v3159 = vsel %vm3015, 1, 0
      %v3160 = vsel %vm3016, 1, 0
      %v3161 = vsel %vm3017, 1, 0
      %v3162 = vsel %vm3018, 1, 0
      %v3163 = vsel %vm3019, 1, 0
      %v3164 = vsel %vm3020, 1, 0
      %v3165 = vsel %vm3021, 1, 0
      %v3166 = vsel %vm3022, 1, 0
      %v3167 = vsel %vm3023, 1, 0
      %v3168 = vsel %vm3024, 1, 0
      %v3169 = vsel %vm3025, 1, 0
      %v3170 = vsel %vm3026, 1, 0
      %v3171 = vsel %vm3027, 1, 0
      %v3172 = vsel %vm3028, 1, 0
      %v3173 = vsel %vm3029, 1, 0
      %v3174 = vsel %vm3030, 1, 0
      %v3175 = vsel %vm3031, 1, 0
      %v3176 = vsel %vm3032, 1, 0
      %v3177 = vsel %vm3033, 1, 0
      %v3178 = vsel %vm3034, 1, 0
      %v3179 = vsel %vm3035, 1, 0
      %v3180 = vsel %vm3036, 1, 0
      %v3181 = vsel %vm3037, 1, 0
      %v3182 = vsel %vm3038, 1, 0
      %v3183 = vsel %vm3039, 1, 0
      %v3184 = vsel %vm3040, 1, 0
      %v3185 = vsel %vm3041, 1, 0
      %v3186 = vsel %vm3042, 1, 0
      %v3187 = vsel %vm3043, 1, 0
      %v3188 = vsel %vm3044, 1, 0
      %v3189 = vsel %vm3045, 1, 0
      %v3190 = vsel %vm3046, 1, 0
      %v3191 = vsel %vm3047, 1, 0
      %v3192 = vsel %vm3048, 1, 0
      %v3193 = vsel %vm3049, 1, 0
      %v3194 = vsel %vm3050, 1, 0
      %v3195 = vsel %vm3051, 1, 0
      %v3196 = vsel %vm3052, 1, 0
      %v3197 = vsel %vm3053, 1, 0
      %v3198 = vsel %vm3054, 1, 0
      %v3199 = vsel %vm3055, 1, 0
      %v3200 = vsel %vm3056, 1, 0
      %v3201 = vsel %vm3057, 1, 0
      %v3202 = vcvt.s32.f32 %v3058
      %v3203 = vcvt.s32.f32 %v3059
      %v3204 = vcvt.s32.f32 %v3060
      %v3205 = vcvt.s32.f32 %v3061
      %v3206 = vcvt.s32.f32 %v3062
      %v3207 = vcvt.s32.f32 %v3063
      %v3208 = vcvt.s32.f32 %v3064
      %v3209 = vcvt.s32.f32 %v3065
      %v3210 = vcvt.s32.f32 %v3066
      %v3211 = vcvt.s32.f32 %v3067
      %v3212 = vcvt.s32.f32 %v3068
      %v3213 = vcvt.s32.f32 %v3069
      %v3214 = vcvt.s32.f32 %v3070
      %v3215 = vcvt.s32.f32 %v3071
      %v3216 = vcvt.s32.f32 %v3072
      %v3217 = vcvt.s32.f32 %v3073
      %v3218 = vcvt.s32.f32 %v3074
      %v3219 = vcvt.s32.f32 %v3075
      %v3220 = vcvt.s32.f32 %v3076
      %v3221 = vcvt.s32.f32 %v3077
      %v3222 = vcvt.s32.f32 %v3078
      %v3223 = vcvt.s32.f32 %v3079
      %v3224 = vcvt.s32.f32 %v3080
      %v3225 = vcvt.s32.f32 %v3081
      %v3226 = vcvt.s32.f32 %v3082
      %v3227 = vcvt.s32.f32 %v3083
      %v3228 = vcvt.s32.f32 %v3084
      %v3229 = vcvt.s32.f32 %v3085
      %v3230 = vcvt.s32.f32 %v3086
      %v3231 = vcvt.s32.f32 %v3087
      %v3232 = vcvt.s32.f32 %v3088
      %v3233 = vcvt.s32.f32 %v3089
      %v3234 = vcvt.s32.f32 %v3090
      %v3235 = vcvt.s32.f32 %v3091
      %v3236 = vcvt.s32.f32 %v3092
      %v3237 = vcvt.s32.f32 %v3093
      %v3238 = vcvt.s32.f32 %v3094
      %v3239 = vcvt.s32.f32 %v3095
      %v3240 = vcvt.s32.f32 %v3096
      %v3241 = vcvt.s32.f32 %v3097
      %v3242 = vcvt.s32.f32 %v3098
      %v3243 = vcvt.s32.f32 %v3099
      %v3244 = vcvt.s32.f32 %v3100
      %v3245 = vcvt.s32.f32 %v3101
      %v3246 = vcvt.s32.f32 %v3102
      %v3247 = vcvt.s32.f32 %v3103
      %v3248 = vcvt.s32.f32 %v3104
      %v3249 = vcvt.s32.f32 %v3105
      %v3250 = vcvt.s32.f32 %v3106
      %v3251 = vcvt.s32.f32 %v3107
      %v3252 = vcvt.s32.f32 %v3108
      %v3253 = vcvt.s32.f32 %v3109
      %v3254 = vcvt.s32.f32 %v3110
      %v3255 = vcvt.s32.f32 %v3111
      %v3256 = vcvt.s32.f32 %v3112
      %v3257 = vcvt.s32.f32 %v3113
      %v3258 = vcvt.s32.f32 %v3114
      %v3259 = vcvt.s32.f32 %v3115
      %v3260 = vcvt.s32.f32 %v3116
      %v3261 = vcvt.s32.f32 %v3117
      %v3262 = vcvt.s32.f32 %v3118
      %v3263 = vcvt.s32.f32 %v3119
      %v3264 = vcvt.s32.f32 %v3120
      %v3265 = vcvt.s32.f32 %v3121
      %v3266 = vcvt.s32.f32 %v3122
      %v3267 = vcvt.s32.f32 %v3123
      %v3268 = vcvt.s32.f32 %v3124
      %v3269 = vcvt.s32.f32 %v3125
      %v3270 = vcvt.s32.f32 %v3126
      %v3271 = vcvt.s32.f32 %v3127
      %v3272 = vcvt.s32.f32 %v3128
      %v3273 = vcvt.s32.f32 %v3129
      %v3274 = vcvt.s32.f32 %v3130
      %v3275 = vcvt.s32.f32 %v3131
      %v3276 = vcvt.s32.f32 %v3132
      %v3277 = vcvt.s32.f32 %v3133
      %v3278 = vcvt.s32.f32 %v3134
      %v3279 = vcvt.s32.f32 %v3135
      %v3280 = vcvt.s32.f32 %v3136
      %v3281 = vcvt.s32.f32 %v3137
      %v3282 = vcvt.s32.f32 %v3138
      %v3283 = vcvt.s32.f32 %v3139
      %v3284 = vcvt.s32.f32 %v3140
      %v3285 = vcvt.s32.f32 %v3141
      %v3286 = vcvt.s32.f32 %v3142
      %v3287 = vcvt.s32.f32 %v3143
      %v3288 = vcvt.s32.f32 %v3144
      %v3289 = vcvt.s32.f32 %v3145
      %v3290 = vcvt.s32.f32 %v3146
      %v3291 = vcvt.s32.f32 %v3147
      %v3292 = vcvt.s32.f32 %v3148
      %v3293 = vcvt.s32.f32 %v3149
      %v3294 = vcvt.s32.f32 %v3150
      %v3295 = vcvt.s32.f32 %v3151
      %v3296 = vcvt.s32.f32 %v3152
      %v3297 = vcvt.s32.f32 %v3153
      %v3298 = vcvt.s32.f32 %v3154
      %v3299 = vcvt.s32.f32 %v3155
      %v3300 = vcvt.s32.f32 %v3156
      %v3301 = vcvt.s32.f32 %v3157
      %v3302 = vcvt.s32.f32 %v3158
      %v3303 = vcvt.s32.f32 %v3159
      %v3304 = vcvt.s32.f32 %v3160
      %v3305 = vcvt.s32.f32 %v3161
      %v3306 = vcvt.s32.f32 %v3162
      %v3307 = vcvt.s32.f32 %v3163
      %v3308 = vcvt.s32.f32 %v3164
      %v3309 = vcvt.s32.f32 %v3165
      %v3310 = vcvt.s32.f32 %v3166
      %v3311 = vcvt.s32.f32 %v3167
      %v3312 = vcvt.s32.f32 %v3168
      %v3313 = vcvt.s32.f32 %v3169
      %v3314 = vcvt.s32.f32 %v3170
      %v3315 = vcvt.s32.f32 %v3171
      %v3316 = vcvt.s32.f32 %v3172
      %v3317 = vcvt.s32.f32 %v3173
      %v3318 = vcvt.s32.f32 %v3174
      %v3319 = vcvt.s32.f32 %v3175
      %v3320 = vcvt.s32.f32 %v3176
      %v3321 = vcvt.s32.f32 %v3177
      %v3322 = vcvt.s32.f32 %v3178
      %v3323 = vcvt.s32.f32 %v3179
      %v3324 = vcvt.s32.f32 %v3180
      %v3325 = vcvt.s32.f32 %v3181
      %v3326 = vcvt.s32.f32 %v3182
      %v3327 = vcvt.s32.f32 %v3183
      %v3328 = vcvt.s32.f32 %v3184
      %v3329 = vcvt.s32.f32 %v3185
      %v3330 = vcvt.s32.f32 %v3186
      %v3331 = vcvt.s32.f32 %v3187
      %v3332 = vcvt.s32.f32 %v3188
      %v3333 = vcvt.s32.f32 %v3189
      %v3334 = vcvt.s32.f32 %v3190
      %v3335 = vcvt.s32.f32 %v3191
      %v3336 = vcvt.s32.f32 %v3192
      %v3337 = vcvt.s32.f32 %v3193
      %v3338 = vcvt.s32.f32 %v3194
      %v3339 = vcvt.s32.f32 %v3195
      %v3340 = vcvt.s32.f32 %v3196
      %v3341 = vcvt.s32.f32 %v3197
      %v3342 = vcvt.s32.f32 %v3198
      %v3343 = vcvt.s32.f32 %v3199
      %v3344 = vcvt.s32.f32 %v3200
      %v3345 = vcvt.s32.f32 %v3201
      %v3346 = vpack.c.bf16 %v3203, %v3202
      %v3347 = vpack.c.bf16 %v3205, %v3204
      %v3348 = vpack.c.bf16 %v3207, %v3206
      %v3349 = vpack.c.bf16 %v3209, %v3208
      %v3350 = vpack.c.bf16 %v3211, %v3210
      %v3351 = vpack.c.bf16 %v3213, %v3212
      %v3352 = vpack.c.bf16 %v3215, %v3214
      %v3353 = vpack.c.bf16 %v3217, %v3216
      %v3354 = vpack.c.bf16 %v3219, %v3218
      %v3355 = vpack.c.bf16 %v3221, %v3220
      %v3356 = vpack.c.bf16 %v3223, %v3222
      %v3357 = vpack.c.bf16 %v3225, %v3224
      %v3358 = vpack.c.bf16 %v3227, %v3226
      %v3359 = vpack.c.bf16 %v3229, %v3228
      %v3360 = vpack.c.bf16 %v3231, %v3230
      %v3361 = vpack.c.bf16 %v3233, %v3232
      %v3362 = vpack.c.bf16 %v3235, %v3234
      %v3363 = vpack.c.bf16 %v3237, %v3236
      %v3364 = vpack.c.bf16 %v3239, %v3238
      %v3365 = vpack.c.bf16 %v3241, %v3240
      %v3366 = vpack.c.bf16 %v3243, %v3242
      %v3367 = vpack.c.bf16 %v3245, %v3244
      %v3368 = vpack.c.bf16 %v3247, %v3246
      %v3369 = vpack.c.bf16 %v3249, %v3248
      %v3370 = vpack.c.bf16 %v3251, %v3250
      %v3371 = vpack.c.bf16 %v3253, %v3252
      %v3372 = vpack.c.bf16 %v3255, %v3254
      %v3373 = vpack.c.bf16 %v3257, %v3256
      %v3374 = vpack.c.bf16 %v3259, %v3258
      %v3375 = vpack.c.bf16 %v3261, %v3260
      %v3376 = vpack.c.bf16 %v3263, %v3262
      %v3377 = vpack.c.bf16 %v3265, %v3264
      %v3378 = vpack.c.bf16 %v3267, %v3266
      %v3379 = vpack.c.bf16 %v3269, %v3268
      %v3380 = vpack.c.bf16 %v3271, %v3270
      %v3381 = vpack.c.bf16 %v3273, %v3272
      %v3382 = vpack.c.bf16 %v3275, %v3274
      %v3383 = vpack.c.bf16 %v3277, %v3276
      %v3384 = vpack.c.bf16 %v3279, %v3278
      %v3385 = vpack.c.bf16 %v3281, %v3280
      %v3386 = vpack.c.bf16 %v3283, %v3282
      %v3387 = vpack.c.bf16 %v3285, %v3284
      %v3388 = vpack.c.bf16 %v3287, %v3286
      %v3389 = vpack.c.bf16 %v3289, %v3288
      %v3390 = vpack.c.bf16 %v3291, %v3290
      %v3391 = vpack.c.bf16 %v3293, %v3292
      %v3392 = vpack.c.bf16 %v3295, %v3294
      %v3393 = vpack.c.bf16 %v3297, %v3296
      %v3394 = vpack.c.bf16 %v3299, %v3298
      %v3395 = vpack.c.bf16 %v3301, %v3300
      %v3396 = vpack.c.bf16 %v3303, %v3302
      %v3397 = vpack.c.bf16 %v3305, %v3304
      %v3398 = vpack.c.bf16 %v3307, %v3306
      %v3399 = vpack.c.bf16 %v3309, %v3308
      %v3400 = vpack.c.bf16 %v3311, %v3310
      %v3401 = vpack.c.bf16 %v3313, %v3312
      %v3402 = vpack.c.bf16 %v3315, %v3314
      %v3403 = vpack.c.bf16 %v3317, %v3316
      %v3404 = vpack.c.bf16 %v3319, %v3318
      %v3405 = vpack.c.bf16 %v3321, %v3320
      %v3406 = vpack.c.bf16 %v3323, %v3322
      %v3407 = vpack.c.bf16 %v3325, %v3324
      %v3408 = vpack.c.bf16 %v3327, %v3326
      %v3409 = vpack.c.bf16 %v3329, %v3328
      %v3410 = vpack.c.bf16 %v3331, %v3330
      %v3411 = vpack.c.bf16 %v3333, %v3332
      %v3412 = vpack.c.bf16 %v3335, %v3334
      %v3413 = vpack.c.bf16 %v3337, %v3336
      %v3414 = vpack.c.bf16 %v3339, %v3338
      %v3415 = vpack.c.bf16 %v3341, %v3340
      %v3416 = vpack.c.bf16 %v3343, %v3342
      %v3417 = vpack.c.bf16 %v3345, %v3344
      %vm3418 = vcmp.eq.f32.partialorder %v754, 5.0
      %vm3419 = vcmp.eq.f32.partialorder %v755, 5.0
      %vm3420 = vcmp.eq.f32.partialorder %v756, 5.0
      %vm3421 = vcmp.eq.f32.partialorder %v757, 5.0
      %vm3422 = vcmp.eq.f32.partialorder %v758, 5.0
      %vm3423 = vcmp.eq.f32.partialorder %v759, 5.0
      %vm3424 = vcmp.eq.f32.partialorder %v760, 5.0
      %vm3425 = vcmp.eq.f32.partialorder %v761, 5.0
      %vm3426 = vcmp.eq.f32.partialorder %v762, 5.0
      %vm3427 = vcmp.eq.f32.partialorder %v763, 5.0
      %vm3428 = vcmp.eq.f32.partialorder %v764, 5.0
      %vm3429 = vcmp.eq.f32.partialorder %v765, 5.0
      %vm3430 = vcmp.eq.f32.partialorder %v766, 5.0
      %vm3431 = vcmp.eq.f32.partialorder %v767, 5.0
      %vm3432 = vcmp.eq.f32.partialorder %v768, 5.0
      %vm3433 = vcmp.eq.f32.partialorder %v769, 5.0
      %vm3434 = vcmp.eq.f32.partialorder %v770, 5.0
      %vm3435 = vcmp.eq.f32.partialorder %v771, 5.0
      %vm3436 = vcmp.eq.f32.partialorder %v772, 5.0
      %vm3437 = vcmp.eq.f32.partialorder %v773, 5.0
      %vm3438 = vcmp.eq.f32.partialorder %v774, 5.0
      %vm3439 = vcmp.eq.f32.partialorder %v775, 5.0
      %vm3440 = vcmp.eq.f32.partialorder %v776, 5.0
      %vm3441 = vcmp.eq.f32.partialorder %v777, 5.0
      %vm3442 = vcmp.eq.f32.partialorder %v778, 5.0
      %vm3443 = vcmp.eq.f32.partialorder %v779, 5.0
      %vm3444 = vcmp.eq.f32.partialorder %v780, 5.0
      %vm3445 = vcmp.eq.f32.partialorder %v781, 5.0
      %vm3446 = vcmp.eq.f32.partialorder %v782, 5.0
      %vm3447 = vcmp.eq.f32.partialorder %v783, 5.0
      %vm3448 = vcmp.eq.f32.partialorder %v784, 5.0
      %vm3449 = vcmp.eq.f32.partialorder %v785, 5.0
      %vm3450 = vcmp.eq.f32.partialorder %v786, 5.0
      %vm3451 = vcmp.eq.f32.partialorder %v787, 5.0
      %vm3452 = vcmp.eq.f32.partialorder %v788, 5.0
      %vm3453 = vcmp.eq.f32.partialorder %v789, 5.0
      %vm3454 = vcmp.eq.f32.partialorder %v790, 5.0
      %vm3455 = vcmp.eq.f32.partialorder %v791, 5.0
      %vm3456 = vcmp.eq.f32.partialorder %v792, 5.0
      %vm3457 = vcmp.eq.f32.partialorder %v793, 5.0
      %vm3458 = vcmp.eq.f32.partialorder %v794, 5.0
      %vm3459 = vcmp.eq.f32.partialorder %v795, 5.0
      %vm3460 = vcmp.eq.f32.partialorder %v796, 5.0
      %vm3461 = vcmp.eq.f32.partialorder %v797, 5.0
      %vm3462 = vcmp.eq.f32.partialorder %v798, 5.0
      %vm3463 = vcmp.eq.f32.partialorder %v799, 5.0
      %vm3464 = vcmp.eq.f32.partialorder %v800, 5.0
      %vm3465 = vcmp.eq.f32.partialorder %v801, 5.0
      %vm3466 = vcmp.eq.f32.partialorder %v802, 5.0
      %vm3467 = vcmp.eq.f32.partialorder %v803, 5.0
      %vm3468 = vcmp.eq.f32.partialorder %v804, 5.0
      %vm3469 = vcmp.eq.f32.partialorder %v805, 5.0
      %vm3470 = vcmp.eq.f32.partialorder %v806, 5.0
      %vm3471 = vcmp.eq.f32.partialorder %v807, 5.0
      %vm3472 = vcmp.eq.f32.partialorder %v808, 5.0
      %vm3473 = vcmp.eq.f32.partialorder %v809, 5.0
      %vm3474 = vcmp.eq.f32.partialorder %v810, 5.0
      %vm3475 = vcmp.eq.f32.partialorder %v811, 5.0
      %vm3476 = vcmp.eq.f32.partialorder %v812, 5.0
      %vm3477 = vcmp.eq.f32.partialorder %v813, 5.0
      %vm3478 = vcmp.eq.f32.partialorder %v814, 5.0
      %vm3479 = vcmp.eq.f32.partialorder %v815, 5.0
      %vm3480 = vcmp.eq.f32.partialorder %v816, 5.0
      %vm3481 = vcmp.eq.f32.partialorder %v817, 5.0
      %vm3482 = vcmp.eq.f32.partialorder %v818, 5.0
      %vm3483 = vcmp.eq.f32.partialorder %v819, 5.0
      %vm3484 = vcmp.eq.f32.partialorder %v820, 5.0
      %vm3485 = vcmp.eq.f32.partialorder %v821, 5.0
      %vm3486 = vcmp.eq.f32.partialorder %v822, 5.0
      %vm3487 = vcmp.eq.f32.partialorder %v823, 5.0
      %vm3488 = vcmp.eq.f32.partialorder %v824, 5.0
      %vm3489 = vcmp.eq.f32.partialorder %v825, 5.0
      %vm3490 = vcmp.eq.f32.partialorder %v826, 5.0
      %vm3491 = vcmp.eq.f32.partialorder %v827, 5.0
      %vm3492 = vcmp.eq.f32.partialorder %v828, 5.0
      %vm3493 = vcmp.eq.f32.partialorder %v829, 5.0
      %vm3494 = vcmp.eq.f32.partialorder %v830, 5.0
      %vm3495 = vcmp.eq.f32.partialorder %v831, 5.0
      %vm3496 = vcmp.eq.f32.partialorder %v832, 5.0
      %vm3497 = vcmp.eq.f32.partialorder %v833, 5.0
      %vm3498 = vcmp.eq.f32.partialorder %v834, 5.0
      %vm3499 = vcmp.eq.f32.partialorder %v835, 5.0
      %vm3500 = vcmp.eq.f32.partialorder %v836, 5.0
      %vm3501 = vcmp.eq.f32.partialorder %v837, 5.0
      %vm3502 = vcmp.eq.f32.partialorder %v838, 5.0
      %vm3503 = vcmp.eq.f32.partialorder %v839, 5.0
      %vm3504 = vcmp.eq.f32.partialorder %v840, 5.0
      %vm3505 = vcmp.eq.f32.partialorder %v841, 5.0
      %vm3506 = vcmp.eq.f32.partialorder %v842, 5.0
      %vm3507 = vcmp.eq.f32.partialorder %v843, 5.0
      %vm3508 = vcmp.eq.f32.partialorder %v844, 5.0
      %vm3509 = vcmp.eq.f32.partialorder %v845, 5.0
      %vm3510 = vcmp.eq.f32.partialorder %v846, 5.0
      %vm3511 = vcmp.eq.f32.partialorder %v847, 5.0
      %vm3512 = vcmp.eq.f32.partialorder %v848, 5.0
      %vm3513 = vcmp.eq.f32.partialorder %v849, 5.0
      %vm3514 = vcmp.eq.f32.partialorder %v850, 5.0
      %vm3515 = vcmp.eq.f32.partialorder %v851, 5.0
      %vm3516 = vcmp.eq.f32.partialorder %v852, 5.0
      %vm3517 = vcmp.eq.f32.partialorder %v853, 5.0
      %vm3518 = vcmp.eq.f32.partialorder %v854, 5.0
      %vm3519 = vcmp.eq.f32.partialorder %v855, 5.0
      %vm3520 = vcmp.eq.f32.partialorder %v856, 5.0
      %vm3521 = vcmp.eq.f32.partialorder %v857, 5.0
      %vm3522 = vcmp.eq.f32.partialorder %v858, 5.0
      %vm3523 = vcmp.eq.f32.partialorder %v859, 5.0
      %vm3524 = vcmp.eq.f32.partialorder %v860, 5.0
      %vm3525 = vcmp.eq.f32.partialorder %v861, 5.0
      %vm3526 = vcmp.eq.f32.partialorder %v862, 5.0
      %vm3527 = vcmp.eq.f32.partialorder %v863, 5.0
      %vm3528 = vcmp.eq.f32.partialorder %v864, 5.0
      %vm3529 = vcmp.eq.f32.partialorder %v865, 5.0
      %vm3530 = vcmp.eq.f32.partialorder %v866, 5.0
      %vm3531 = vcmp.eq.f32.partialorder %v867, 5.0
      %vm3532 = vcmp.eq.f32.partialorder %v868, 5.0
      %vm3533 = vcmp.eq.f32.partialorder %v869, 5.0
      %vm3534 = vcmp.eq.f32.partialorder %v870, 5.0
      %vm3535 = vcmp.eq.f32.partialorder %v871, 5.0
      %vm3536 = vcmp.eq.f32.partialorder %v872, 5.0
      %vm3537 = vcmp.eq.f32.partialorder %v873, 5.0
      %vm3538 = vcmp.eq.f32.partialorder %v874, 5.0
      %vm3539 = vcmp.eq.f32.partialorder %v875, 5.0
      %vm3540 = vcmp.eq.f32.partialorder %v876, 5.0
      %vm3541 = vcmp.eq.f32.partialorder %v877, 5.0
      %vm3542 = vcmp.eq.f32.partialorder %v878, 5.0
      %vm3543 = vcmp.eq.f32.partialorder %v879, 5.0
      %vm3544 = vcmp.eq.f32.partialorder %v880, 5.0
      %vm3545 = vcmp.eq.f32.partialorder %v881, 5.0
      %vm3546 = vcmp.eq.f32.partialorder %v882, 5.0
      %vm3547 = vcmp.eq.f32.partialorder %v883, 5.0
      %vm3548 = vcmp.eq.f32.partialorder %v884, 5.0
      %vm3549 = vcmp.eq.f32.partialorder %v885, 5.0
      %vm3550 = vcmp.eq.f32.partialorder %v886, 5.0
      %vm3551 = vcmp.eq.f32.partialorder %v887, 5.0
      %vm3552 = vcmp.eq.f32.partialorder %v888, 5.0
      %vm3553 = vcmp.eq.f32.partialorder %v889, 5.0
      %vm3554 = vcmp.eq.f32.partialorder %v890, 5.0
      %vm3555 = vcmp.eq.f32.partialorder %v891, 5.0
      %vm3556 = vcmp.eq.f32.partialorder %v892, 5.0
      %vm3557 = vcmp.eq.f32.partialorder %v893, 5.0
      %vm3558 = vcmp.eq.f32.partialorder %v894, 5.0
      %vm3559 = vcmp.eq.f32.partialorder %v895, 5.0
      %vm3560 = vcmp.eq.f32.partialorder %v896, 5.0
      %vm3561 = vcmp.eq.f32.partialorder %v897, 5.0
      %v3562 = vsel %vm3418, 1, 0
      %v3563 = vsel %vm3419, 1, 0
      %v3564 = vsel %vm3420, 1, 0
      %v3565 = vsel %vm3421, 1, 0
      %v3566 = vsel %vm3422, 1, 0
      %v3567 = vsel %vm3423, 1, 0
      %v3568 = vsel %vm3424, 1, 0
      %v3569 = vsel %vm3425, 1, 0
      %v3570 = vsel %vm3426, 1, 0
      %v3571 = vsel %vm3427, 1, 0
      %v3572 = vsel %vm3428, 1, 0
      %v3573 = vsel %vm3429, 1, 0
      %v3574 = vsel %vm3430, 1, 0
      %v3575 = vsel %vm3431, 1, 0
      %v3576 = vsel %vm3432, 1, 0
      %v3577 = vsel %vm3433, 1, 0
      %v3578 = vsel %vm3434, 1, 0
      %v3579 = vsel %vm3435, 1, 0
      %v3580 = vsel %vm3436, 1, 0
      %v3581 = vsel %vm3437, 1, 0
      %v3582 = vsel %vm3438, 1, 0
      %v3583 = vsel %vm3439, 1, 0
      %v3584 = vsel %vm3440, 1, 0
      %v3585 = vsel %vm3441, 1, 0
      %v3586 = vsel %vm3442, 1, 0
      %v3587 = vsel %vm3443, 1, 0
      %v3588 = vsel %vm3444, 1, 0
      %v3589 = vsel %vm3445, 1, 0
      %v3590 = vsel %vm3446, 1, 0
      %v3591 = vsel %vm3447, 1, 0
      %v3592 = vsel %vm3448, 1, 0
      %v3593 = vsel %vm3449, 1, 0
      %v3594 = vsel %vm3450, 1, 0
      %v3595 = vsel %vm3451, 1, 0
      %v3596 = vsel %vm3452, 1, 0
      %v3597 = vsel %vm3453, 1, 0
      %v3598 = vsel %vm3454, 1, 0
      %v3599 = vsel %vm3455, 1, 0
      %v3600 = vsel %vm3456, 1, 0
      %v3601 = vsel %vm3457, 1, 0
      %v3602 = vsel %vm3458, 1, 0
      %v3603 = vsel %vm3459, 1, 0
      %v3604 = vsel %vm3460, 1, 0
      %v3605 = vsel %vm3461, 1, 0
      %v3606 = vsel %vm3462, 1, 0
      %v3607 = vsel %vm3463, 1, 0
      %v3608 = vsel %vm3464, 1, 0
      %v3609 = vsel %vm3465, 1, 0
      %v3610 = vsel %vm3466, 1, 0
      %v3611 = vsel %vm3467, 1, 0
      %v3612 = vsel %vm3468, 1, 0
      %v3613 = vsel %vm3469, 1, 0
      %v3614 = vsel %vm3470, 1, 0
      %v3615 = vsel %vm3471, 1, 0
      %v3616 = vsel %vm3472, 1, 0
      %v3617 = vsel %vm3473, 1, 0
      %v3618 = vsel %vm3474, 1, 0
      %v3619 = vsel %vm3475, 1, 0
      %v3620 = vsel %vm3476, 1, 0
      %v3621 = vsel %vm3477, 1, 0
      %v3622 = vsel %vm3478, 1, 0
      %v3623 = vsel %vm3479, 1, 0
      %v3624 = vsel %vm3480, 1, 0
      %v3625 = vsel %vm3481, 1, 0
      %v3626 = vsel %vm3482, 1, 0
      %v3627 = vsel %vm3483, 1, 0
      %v3628 = vsel %vm3484, 1, 0
      %v3629 = vsel %vm3485, 1, 0
      %v3630 = vsel %vm3486, 1, 0
      %v3631 = vsel %vm3487, 1, 0
      %v3632 = vsel %vm3488, 1, 0
      %v3633 = vsel %vm3489, 1, 0
      %v3634 = vsel %vm3490, 1, 0
      %v3635 = vsel %vm3491, 1, 0
      %v3636 = vsel %vm3492, 1, 0
      %v3637 = vsel %vm3493, 1, 0
      %v3638 = vsel %vm3494, 1, 0
      %v3639 = vsel %vm3495, 1, 0
      %v3640 = vsel %vm3496, 1, 0
      %v3641 = vsel %vm3497, 1, 0
      %v3642 = vsel %vm3498, 1, 0
      %v3643 = vsel %vm3499, 1, 0
      %v3644 = vsel %vm3500, 1, 0
      %v3645 = vsel %vm3501, 1, 0
      %v3646 = vsel %vm3502, 1, 0
      %v3647 = vsel %vm3503, 1, 0
      %v3648 = vsel %vm3504, 1, 0
      %v3649 = vsel %vm3505, 1, 0
      %v3650 = vsel %vm3506, 1, 0
      %v3651 = vsel %vm3507, 1, 0
      %v3652 = vsel %vm3508, 1, 0
      %v3653 = vsel %vm3509, 1, 0
      %v3654 = vsel %vm3510, 1, 0
      %v3655 = vsel %vm3511, 1, 0
      %v3656 = vsel %vm3512, 1, 0
      %v3657 = vsel %vm3513, 1, 0
      %v3658 = vsel %vm3514, 1, 0
      %v3659 = vsel %vm3515, 1, 0
      %v3660 = vsel %vm3516, 1, 0
      %v3661 = vsel %vm3517, 1, 0
      %v3662 = vsel %vm3518, 1, 0
      %v3663 = vsel %vm3519, 1, 0
      %v3664 = vsel %vm3520, 1, 0
      %v3665 = vsel %vm3521, 1, 0
      %v3666 = vsel %vm3522, 1, 0
      %v3667 = vsel %vm3523, 1, 0
      %v3668 = vsel %vm3524, 1, 0
      %v3669 = vsel %vm3525, 1, 0
      %v3670 = vsel %vm3526, 1, 0
      %v3671 = vsel %vm3527, 1, 0
      %v3672 = vsel %vm3528, 1, 0
      %v3673 = vsel %vm3529, 1, 0
      %v3674 = vsel %vm3530, 1, 0
      %v3675 = vsel %vm3531, 1, 0
      %v3676 = vsel %vm3532, 1, 0
      %v3677 = vsel %vm3533, 1, 0
      %v3678 = vsel %vm3534, 1, 0
      %v3679 = vsel %vm3535, 1, 0
      %v3680 = vsel %vm3536, 1, 0
      %v3681 = vsel %vm3537, 1, 0
      %v3682 = vsel %vm3538, 1, 0
      %v3683 = vsel %vm3539, 1, 0
      %v3684 = vsel %vm3540, 1, 0
      %v3685 = vsel %vm3541, 1, 0
      %v3686 = vsel %vm3542, 1, 0
      %v3687 = vsel %vm3543, 1, 0
      %v3688 = vsel %vm3544, 1, 0
      %v3689 = vsel %vm3545, 1, 0
      %v3690 = vsel %vm3546, 1, 0
      %v3691 = vsel %vm3547, 1, 0
      %v3692 = vsel %vm3548, 1, 0
      %v3693 = vsel %vm3549, 1, 0
      %v3694 = vsel %vm3550, 1, 0
      %v3695 = vsel %vm3551, 1, 0
      %v3696 = vsel %vm3552, 1, 0
      %v3697 = vsel %vm3553, 1, 0
      %v3698 = vsel %vm3554, 1, 0
      %v3699 = vsel %vm3555, 1, 0
      %v3700 = vsel %vm3556, 1, 0
      %v3701 = vsel %vm3557, 1, 0
      %v3702 = vsel %vm3558, 1, 0
      %v3703 = vsel %vm3559, 1, 0
      %v3704 = vsel %vm3560, 1, 0
      %v3705 = vsel %vm3561, 1, 0
      %v3706 = vcvt.s32.f32 %v3562
      %v3707 = vcvt.s32.f32 %v3563
      %v3708 = vcvt.s32.f32 %v3564
      %v3709 = vcvt.s32.f32 %v3565
      %v3710 = vcvt.s32.f32 %v3566
      %v3711 = vcvt.s32.f32 %v3567
      %v3712 = vcvt.s32.f32 %v3568
      %v3713 = vcvt.s32.f32 %v3569
      %v3714 = vcvt.s32.f32 %v3570
      %v3715 = vcvt.s32.f32 %v3571
      %v3716 = vcvt.s32.f32 %v3572
      %v3717 = vcvt.s32.f32 %v3573
      %v3718 = vcvt.s32.f32 %v3574
      %v3719 = vcvt.s32.f32 %v3575
      %v3720 = vcvt.s32.f32 %v3576
      %v3721 = vcvt.s32.f32 %v3577
      %v3722 = vcvt.s32.f32 %v3578
      %v3723 = vcvt.s32.f32 %v3579
      %v3724 = vcvt.s32.f32 %v3580
      %v3725 = vcvt.s32.f32 %v3581
      %v3726 = vcvt.s32.f32 %v3582
      %v3727 = vcvt.s32.f32 %v3583
      %v3728 = vcvt.s32.f32 %v3584
      %v3729 = vcvt.s32.f32 %v3585
      %v3730 = vcvt.s32.f32 %v3586
      %v3731 = vcvt.s32.f32 %v3587
      %v3732 = vcvt.s32.f32 %v3588
      %v3733 = vcvt.s32.f32 %v3589
      %v3734 = vcvt.s32.f32 %v3590
      %v3735 = vcvt.s32.f32 %v3591
      %v3736 = vcvt.s32.f32 %v3592
      %v3737 = vcvt.s32.f32 %v3593
      %v3738 = vcvt.s32.f32 %v3594
      %v3739 = vcvt.s32.f32 %v3595
      %v3740 = vcvt.s32.f32 %v3596
      %v3741 = vcvt.s32.f32 %v3597
      %v3742 = vcvt.s32.f32 %v3598
      %v3743 = vcvt.s32.f32 %v3599
      %v3744 = vcvt.s32.f32 %v3600
      %v3745 = vcvt.s32.f32 %v3601
      %v3746 = vcvt.s32.f32 %v3602
      %v3747 = vcvt.s32.f32 %v3603
      %v3748 = vcvt.s32.f32 %v3604
      %v3749 = vcvt.s32.f32 %v3605
      %v3750 = vcvt.s32.f32 %v3606
      %v3751 = vcvt.s32.f32 %v3607
      %v3752 = vcvt.s32.f32 %v3608
      %v3753 = vcvt.s32.f32 %v3609
      %v3754 = vcvt.s32.f32 %v3610
      %v3755 = vcvt.s32.f32 %v3611
      %v3756 = vcvt.s32.f32 %v3612
      %v3757 = vcvt.s32.f32 %v3613
      %v3758 = vcvt.s32.f32 %v3614
      %v3759 = vcvt.s32.f32 %v3615
      %v3760 = vcvt.s32.f32 %v3616
      %v3761 = vcvt.s32.f32 %v3617
      %v3762 = vcvt.s32.f32 %v3618
      %v3763 = vcvt.s32.f32 %v3619
      %v3764 = vcvt.s32.f32 %v3620
      %v3765 = vcvt.s32.f32 %v3621
      %v3766 = vcvt.s32.f32 %v3622
      %v3767 = vcvt.s32.f32 %v3623
      %v3768 = vcvt.s32.f32 %v3624
      %v3769 = vcvt.s32.f32 %v3625
      %v3770 = vcvt.s32.f32 %v3626
      %v3771 = vcvt.s32.f32 %v3627
      %v3772 = vcvt.s32.f32 %v3628
      %v3773 = vcvt.s32.f32 %v3629
      %v3774 = vcvt.s32.f32 %v3630
      %v3775 = vcvt.s32.f32 %v3631
      %v3776 = vcvt.s32.f32 %v3632
      %v3777 = vcvt.s32.f32 %v3633
      %v3778 = vcvt.s32.f32 %v3634
      %v3779 = vcvt.s32.f32 %v3635
      %v3780 = vcvt.s32.f32 %v3636
      %v3781 = vcvt.s32.f32 %v3637
      %v3782 = vcvt.s32.f32 %v3638
      %v3783 = vcvt.s32.f32 %v3639
      %v3784 = vcvt.s32.f32 %v3640
      %v3785 = vcvt.s32.f32 %v3641
      %v3786 = vcvt.s32.f32 %v3642
      %v3787 = vcvt.s32.f32 %v3643
      %v3788 = vcvt.s32.f32 %v3644
      %v3789 = vcvt.s32.f32 %v3645
      %v3790 = vcvt.s32.f32 %v3646
      %v3791 = vcvt.s32.f32 %v3647
      %v3792 = vcvt.s32.f32 %v3648
      %v3793 = vcvt.s32.f32 %v3649
      %v3794 = vcvt.s32.f32 %v3650
      %v3795 = vcvt.s32.f32 %v3651
      %v3796 = vcvt.s32.f32 %v3652
      %v3797 = vcvt.s32.f32 %v3653
      %v3798 = vcvt.s32.f32 %v3654
      %v3799 = vcvt.s32.f32 %v3655
      %v3800 = vcvt.s32.f32 %v3656
      %v3801 = vcvt.s32.f32 %v3657
      %v3802 = vcvt.s32.f32 %v3658
      %v3803 = vcvt.s32.f32 %v3659
      %v3804 = vcvt.s32.f32 %v3660
      %v3805 = vcvt.s32.f32 %v3661
      %v3806 = vcvt.s32.f32 %v3662
      %v3807 = vcvt.s32.f32 %v3663
      %v3808 = vcvt.s32.f32 %v3664
      %v3809 = vcvt.s32.f32 %v3665
      %v3810 = vcvt.s32.f32 %v3666
      %v3811 = vcvt.s32.f32 %v3667
      %v3812 = vcvt.s32.f32 %v3668
      %v3813 = vcvt.s32.f32 %v3669
      %v3814 = vcvt.s32.f32 %v3670
      %v3815 = vcvt.s32.f32 %v3671
      %v3816 = vcvt.s32.f32 %v3672
      %v3817 = vcvt.s32.f32 %v3673
      %v3818 = vcvt.s32.f32 %v3674
      %v3819 = vcvt.s32.f32 %v3675
      %v3820 = vcvt.s32.f32 %v3676
      %v3821 = vcvt.s32.f32 %v3677
      %v3822 = vcvt.s32.f32 %v3678
      %v3823 = vcvt.s32.f32 %v3679
      %v3824 = vcvt.s32.f32 %v3680
      %v3825 = vcvt.s32.f32 %v3681
      %v3826 = vcvt.s32.f32 %v3682
      %v3827 = vcvt.s32.f32 %v3683
      %v3828 = vcvt.s32.f32 %v3684
      %v3829 = vcvt.s32.f32 %v3685
      %v3830 = vcvt.s32.f32 %v3686
      %v3831 = vcvt.s32.f32 %v3687
      %v3832 = vcvt.s32.f32 %v3688
      %v3833 = vcvt.s32.f32 %v3689
      %v3834 = vcvt.s32.f32 %v3690
      %v3835 = vcvt.s32.f32 %v3691
      %v3836 = vcvt.s32.f32 %v3692
      %v3837 = vcvt.s32.f32 %v3693
      %v3838 = vcvt.s32.f32 %v3694
      %v3839 = vcvt.s32.f32 %v3695
      %v3840 = vcvt.s32.f32 %v3696
      %v3841 = vcvt.s32.f32 %v3697
      %v3842 = vcvt.s32.f32 %v3698
      %v3843 = vcvt.s32.f32 %v3699
      %v3844 = vcvt.s32.f32 %v3700
      %v3845 = vcvt.s32.f32 %v3701
      %v3846 = vcvt.s32.f32 %v3702
      %v3847 = vcvt.s32.f32 %v3703
      %v3848 = vcvt.s32.f32 %v3704
      %v3849 = vcvt.s32.f32 %v3705
      %v3850 = vpack.c.bf16 %v3707, %v3706
      %v3851 = vpack.c.bf16 %v3709, %v3708
      %v3852 = vpack.c.bf16 %v3711, %v3710
      %v3853 = vpack.c.bf16 %v3713, %v3712
      %v3854 = vpack.c.bf16 %v3715, %v3714
      %v3855 = vpack.c.bf16 %v3717, %v3716
      %v3856 = vpack.c.bf16 %v3719, %v3718
      %v3857 = vpack.c.bf16 %v3721, %v3720
      %v3858 = vpack.c.bf16 %v3723, %v3722
      %v3859 = vpack.c.bf16 %v3725, %v3724
      %v3860 = vpack.c.bf16 %v3727, %v3726
      %v3861 = vpack.c.bf16 %v3729, %v3728
      %v3862 = vpack.c.bf16 %v3731, %v3730
      %v3863 = vpack.c.bf16 %v3733, %v3732
      %v3864 = vpack.c.bf16 %v3735, %v3734
      %v3865 = vpack.c.bf16 %v3737, %v3736
      %v3866 = vpack.c.bf16 %v3739, %v3738
      %v3867 = vpack.c.bf16 %v3741, %v3740
      %v3868 = vpack.c.bf16 %v3743, %v3742
      %v3869 = vpack.c.bf16 %v3745, %v3744
      %v3870 = vpack.c.bf16 %v3747, %v3746
      %v3871 = vpack.c.bf16 %v3749, %v3748
      %v3872 = vpack.c.bf16 %v3751, %v3750
      %v3873 = vpack.c.bf16 %v3753, %v3752
      %v3874 = vpack.c.bf16 %v3755, %v3754
      %v3875 = vpack.c.bf16 %v3757, %v3756
      %v3876 = vpack.c.bf16 %v3759, %v3758
      %v3877 = vpack.c.bf16 %v3761, %v3760
      %v3878 = vpack.c.bf16 %v3763, %v3762
      %v3879 = vpack.c.bf16 %v3765, %v3764
      %v3880 = vpack.c.bf16 %v3767, %v3766
      %v3881 = vpack.c.bf16 %v3769, %v3768
      %v3882 = vpack.c.bf16 %v3771, %v3770
      %v3883 = vpack.c.bf16 %v3773, %v3772
      %v3884 = vpack.c.bf16 %v3775, %v3774
      %v3885 = vpack.c.bf16 %v3777, %v3776
      %v3886 = vpack.c.bf16 %v3779, %v3778
      %v3887 = vpack.c.bf16 %v3781, %v3780
      %v3888 = vpack.c.bf16 %v3783, %v3782
      %v3889 = vpack.c.bf16 %v3785, %v3784
      %v3890 = vpack.c.bf16 %v3787, %v3786
      %v3891 = vpack.c.bf16 %v3789, %v3788
      %v3892 = vpack.c.bf16 %v3791, %v3790
      %v3893 = vpack.c.bf16 %v3793, %v3792
      %v3894 = vpack.c.bf16 %v3795, %v3794
      %v3895 = vpack.c.bf16 %v3797, %v3796
      %v3896 = vpack.c.bf16 %v3799, %v3798
      %v3897 = vpack.c.bf16 %v3801, %v3800
      %v3898 = vpack.c.bf16 %v3803, %v3802
      %v3899 = vpack.c.bf16 %v3805, %v3804
      %v3900 = vpack.c.bf16 %v3807, %v3806
      %v3901 = vpack.c.bf16 %v3809, %v3808
      %v3902 = vpack.c.bf16 %v3811, %v3810
      %v3903 = vpack.c.bf16 %v3813, %v3812
      %v3904 = vpack.c.bf16 %v3815, %v3814
      %v3905 = vpack.c.bf16 %v3817, %v3816
      %v3906 = vpack.c.bf16 %v3819, %v3818
      %v3907 = vpack.c.bf16 %v3821, %v3820
      %v3908 = vpack.c.bf16 %v3823, %v3822
      %v3909 = vpack.c.bf16 %v3825, %v3824
      %v3910 = vpack.c.bf16 %v3827, %v3826
      %v3911 = vpack.c.bf16 %v3829, %v3828
      %v3912 = vpack.c.bf16 %v3831, %v3830
      %v3913 = vpack.c.bf16 %v3833, %v3832
      %v3914 = vpack.c.bf16 %v3835, %v3834
      %v3915 = vpack.c.bf16 %v3837, %v3836
      %v3916 = vpack.c.bf16 %v3839, %v3838
      %v3917 = vpack.c.bf16 %v3841, %v3840
      %v3918 = vpack.c.bf16 %v3843, %v3842
      %v3919 = vpack.c.bf16 %v3845, %v3844
      %v3920 = vpack.c.bf16 %v3847, %v3846
      %v3921 = vpack.c.bf16 %v3849, %v3848
      %vm3922 = vcmp.eq.f32.partialorder %v754, 6.0
      %vm3923 = vcmp.eq.f32.partialorder %v755, 6.0
      %vm3924 = vcmp.eq.f32.partialorder %v756, 6.0
      %vm3925 = vcmp.eq.f32.partialorder %v757, 6.0
      %vm3926 = vcmp.eq.f32.partialorder %v758, 6.0
      %vm3927 = vcmp.eq.f32.partialorder %v759, 6.0
      %vm3928 = vcmp.eq.f32.partialorder %v760, 6.0
      %vm3929 = vcmp.eq.f32.partialorder %v761, 6.0
      %vm3930 = vcmp.eq.f32.partialorder %v762, 6.0
      %vm3931 = vcmp.eq.f32.partialorder %v763, 6.0
      %vm3932 = vcmp.eq.f32.partialorder %v764, 6.0
      %vm3933 = vcmp.eq.f32.partialorder %v765, 6.0
      %vm3934 = vcmp.eq.f32.partialorder %v766, 6.0
      %vm3935 = vcmp.eq.f32.partialorder %v767, 6.0
      %vm3936 = vcmp.eq.f32.partialorder %v768, 6.0
      %vm3937 = vcmp.eq.f32.partialorder %v769, 6.0
      %vm3938 = vcmp.eq.f32.partialorder %v770, 6.0
      %vm3939 = vcmp.eq.f32.partialorder %v771, 6.0
      %vm3940 = vcmp.eq.f32.partialorder %v772, 6.0
      %vm3941 = vcmp.eq.f32.partialorder %v773, 6.0
      %vm3942 = vcmp.eq.f32.partialorder %v774, 6.0
      %vm3943 = vcmp.eq.f32.partialorder %v775, 6.0
      %vm3944 = vcmp.eq.f32.partialorder %v776, 6.0
      %vm3945 = vcmp.eq.f32.partialorder %v777, 6.0
      %vm3946 = vcmp.eq.f32.partialorder %v778, 6.0
      %vm3947 = vcmp.eq.f32.partialorder %v779, 6.0
      %vm3948 = vcmp.eq.f32.partialorder %v780, 6.0
      %vm3949 = vcmp.eq.f32.partialorder %v781, 6.0
      %vm3950 = vcmp.eq.f32.partialorder %v782, 6.0
      %vm3951 = vcmp.eq.f32.partialorder %v783, 6.0
      %vm3952 = vcmp.eq.f32.partialorder %v784, 6.0
      %vm3953 = vcmp.eq.f32.partialorder %v785, 6.0
      %vm3954 = vcmp.eq.f32.partialorder %v786, 6.0
      %vm3955 = vcmp.eq.f32.partialorder %v787, 6.0
      %vm3956 = vcmp.eq.f32.partialorder %v788, 6.0
      %vm3957 = vcmp.eq.f32.partialorder %v789, 6.0
      %vm3958 = vcmp.eq.f32.partialorder %v790, 6.0
      %vm3959 = vcmp.eq.f32.partialorder %v791, 6.0
      %vm3960 = vcmp.eq.f32.partialorder %v792, 6.0
      %vm3961 = vcmp.eq.f32.partialorder %v793, 6.0
      %vm3962 = vcmp.eq.f32.partialorder %v794, 6.0
      %vm3963 = vcmp.eq.f32.partialorder %v795, 6.0
      %vm3964 = vcmp.eq.f32.partialorder %v796, 6.0
      %vm3965 = vcmp.eq.f32.partialorder %v797, 6.0
      %vm3966 = vcmp.eq.f32.partialorder %v798, 6.0
      %vm3967 = vcmp.eq.f32.partialorder %v799, 6.0
      %vm3968 = vcmp.eq.f32.partialorder %v800, 6.0
      %vm3969 = vcmp.eq.f32.partialorder %v801, 6.0
      %vm3970 = vcmp.eq.f32.partialorder %v802, 6.0
      %vm3971 = vcmp.eq.f32.partialorder %v803, 6.0
      %vm3972 = vcmp.eq.f32.partialorder %v804, 6.0
      %vm3973 = vcmp.eq.f32.partialorder %v805, 6.0
      %vm3974 = vcmp.eq.f32.partialorder %v806, 6.0
      %vm3975 = vcmp.eq.f32.partialorder %v807, 6.0
      %vm3976 = vcmp.eq.f32.partialorder %v808, 6.0
      %vm3977 = vcmp.eq.f32.partialorder %v809, 6.0
      %vm3978 = vcmp.eq.f32.partialorder %v810, 6.0
      %vm3979 = vcmp.eq.f32.partialorder %v811, 6.0
      %vm3980 = vcmp.eq.f32.partialorder %v812, 6.0
      %vm3981 = vcmp.eq.f32.partialorder %v813, 6.0
      %vm3982 = vcmp.eq.f32.partialorder %v814, 6.0
      %vm3983 = vcmp.eq.f32.partialorder %v815, 6.0
      %vm3984 = vcmp.eq.f32.partialorder %v816, 6.0
      %vm3985 = vcmp.eq.f32.partialorder %v817, 6.0
      %vm3986 = vcmp.eq.f32.partialorder %v818, 6.0
      %vm3987 = vcmp.eq.f32.partialorder %v819, 6.0
      %vm3988 = vcmp.eq.f32.partialorder %v820, 6.0
      %vm3989 = vcmp.eq.f32.partialorder %v821, 6.0
      %vm3990 = vcmp.eq.f32.partialorder %v822, 6.0
      %vm3991 = vcmp.eq.f32.partialorder %v823, 6.0
      %vm3992 = vcmp.eq.f32.partialorder %v824, 6.0
      %vm3993 = vcmp.eq.f32.partialorder %v825, 6.0
      %vm3994 = vcmp.eq.f32.partialorder %v826, 6.0
      %vm3995 = vcmp.eq.f32.partialorder %v827, 6.0
      %vm3996 = vcmp.eq.f32.partialorder %v828, 6.0
      %vm3997 = vcmp.eq.f32.partialorder %v829, 6.0
      %vm3998 = vcmp.eq.f32.partialorder %v830, 6.0
      %vm3999 = vcmp.eq.f32.partialorder %v831, 6.0
      %vm4000 = vcmp.eq.f32.partialorder %v832, 6.0
      %vm4001 = vcmp.eq.f32.partialorder %v833, 6.0
      %vm4002 = vcmp.eq.f32.partialorder %v834, 6.0
      %vm4003 = vcmp.eq.f32.partialorder %v835, 6.0
      %vm4004 = vcmp.eq.f32.partialorder %v836, 6.0
      %vm4005 = vcmp.eq.f32.partialorder %v837, 6.0
      %vm4006 = vcmp.eq.f32.partialorder %v838, 6.0
      %vm4007 = vcmp.eq.f32.partialorder %v839, 6.0
      %vm4008 = vcmp.eq.f32.partialorder %v840, 6.0
      %vm4009 = vcmp.eq.f32.partialorder %v841, 6.0
      %vm4010 = vcmp.eq.f32.partialorder %v842, 6.0
      %vm4011 = vcmp.eq.f32.partialorder %v843, 6.0
      %vm4012 = vcmp.eq.f32.partialorder %v844, 6.0
      %vm4013 = vcmp.eq.f32.partialorder %v845, 6.0
      %vm4014 = vcmp.eq.f32.partialorder %v846, 6.0
      %vm4015 = vcmp.eq.f32.partialorder %v847, 6.0
      %vm4016 = vcmp.eq.f32.partialorder %v848, 6.0
      %vm4017 = vcmp.eq.f32.partialorder %v849, 6.0
      %vm4018 = vcmp.eq.f32.partialorder %v850, 6.0
      %vm4019 = vcmp.eq.f32.partialorder %v851, 6.0
      %vm4020 = vcmp.eq.f32.partialorder %v852, 6.0
      %vm4021 = vcmp.eq.f32.partialorder %v853, 6.0
      %vm4022 = vcmp.eq.f32.partialorder %v854, 6.0
      %vm4023 = vcmp.eq.f32.partialorder %v855, 6.0
      %vm4024 = vcmp.eq.f32.partialorder %v856, 6.0
      %vm4025 = vcmp.eq.f32.partialorder %v857, 6.0
      %vm4026 = vcmp.eq.f32.partialorder %v858, 6.0
      %vm4027 = vcmp.eq.f32.partialorder %v859, 6.0
      %vm4028 = vcmp.eq.f32.partialorder %v860, 6.0
      %vm4029 = vcmp.eq.f32.partialorder %v861, 6.0
      %vm4030 = vcmp.eq.f32.partialorder %v862, 6.0
      %vm4031 = vcmp.eq.f32.partialorder %v863, 6.0
      %vm4032 = vcmp.eq.f32.partialorder %v864, 6.0
      %vm4033 = vcmp.eq.f32.partialorder %v865, 6.0
      %vm4034 = vcmp.eq.f32.partialorder %v866, 6.0
      %vm4035 = vcmp.eq.f32.partialorder %v867, 6.0
      %vm4036 = vcmp.eq.f32.partialorder %v868, 6.0
      %vm4037 = vcmp.eq.f32.partialorder %v869, 6.0
      %vm4038 = vcmp.eq.f32.partialorder %v870, 6.0
      %vm4039 = vcmp.eq.f32.partialorder %v871, 6.0
      %vm4040 = vcmp.eq.f32.partialorder %v872, 6.0
      %vm4041 = vcmp.eq.f32.partialorder %v873, 6.0
      %vm4042 = vcmp.eq.f32.partialorder %v874, 6.0
      %vm4043 = vcmp.eq.f32.partialorder %v875, 6.0
      %vm4044 = vcmp.eq.f32.partialorder %v876, 6.0
      %vm4045 = vcmp.eq.f32.partialorder %v877, 6.0
      %vm4046 = vcmp.eq.f32.partialorder %v878, 6.0
      %vm4047 = vcmp.eq.f32.partialorder %v879, 6.0
      %vm4048 = vcmp.eq.f32.partialorder %v880, 6.0
      %vm4049 = vcmp.eq.f32.partialorder %v881, 6.0
      %vm4050 = vcmp.eq.f32.partialorder %v882, 6.0
      %vm4051 = vcmp.eq.f32.partialorder %v883, 6.0
      %vm4052 = vcmp.eq.f32.partialorder %v884, 6.0
      %vm4053 = vcmp.eq.f32.partialorder %v885, 6.0
      %vm4054 = vcmp.eq.f32.partialorder %v886, 6.0
      %vm4055 = vcmp.eq.f32.partialorder %v887, 6.0
      %vm4056 = vcmp.eq.f32.partialorder %v888, 6.0
      %vm4057 = vcmp.eq.f32.partialorder %v889, 6.0
      %vm4058 = vcmp.eq.f32.partialorder %v890, 6.0
      %vm4059 = vcmp.eq.f32.partialorder %v891, 6.0
      %vm4060 = vcmp.eq.f32.partialorder %v892, 6.0
      %vm4061 = vcmp.eq.f32.partialorder %v893, 6.0
      %vm4062 = vcmp.eq.f32.partialorder %v894, 6.0
      %vm4063 = vcmp.eq.f32.partialorder %v895, 6.0
      %vm4064 = vcmp.eq.f32.partialorder %v896, 6.0
      %vm4065 = vcmp.eq.f32.partialorder %v897, 6.0
      %v4066 = vsel %vm3922, 1, 0
      %v4067 = vsel %vm3923, 1, 0
      %v4068 = vsel %vm3924, 1, 0
      %v4069 = vsel %vm3925, 1, 0
      %v4070 = vsel %vm3926, 1, 0
      %v4071 = vsel %vm3927, 1, 0
      %v4072 = vsel %vm3928, 1, 0
      %v4073 = vsel %vm3929, 1, 0
      %v4074 = vsel %vm3930, 1, 0
      %v4075 = vsel %vm3931, 1, 0
      %v4076 = vsel %vm3932, 1, 0
      %v4077 = vsel %vm3933, 1, 0
      %v4078 = vsel %vm3934, 1, 0
      %v4079 = vsel %vm3935, 1, 0
      %v4080 = vsel %vm3936, 1, 0
      %v4081 = vsel %vm3937, 1, 0
      %v4082 = vsel %vm3938, 1, 0
      %v4083 = vsel %vm3939, 1, 0
      %v4084 = vsel %vm3940, 1, 0
      %v4085 = vsel %vm3941, 1, 0
      %v4086 = vsel %vm3942, 1, 0
      %v4087 = vsel %vm3943, 1, 0
      %v4088 = vsel %vm3944, 1, 0
      %v4089 = vsel %vm3945, 1, 0
      %v4090 = vsel %vm3946, 1, 0
      %v4091 = vsel %vm3947, 1, 0
      %v4092 = vsel %vm3948, 1, 0
      %v4093 = vsel %vm3949, 1, 0
      %v4094 = vsel %vm3950, 1, 0
      %v4095 = vsel %vm3951, 1, 0
      %v4096 = vsel %vm3952, 1, 0
      %v4097 = vsel %vm3953, 1, 0
      %v4098 = vsel %vm3954, 1, 0
      %v4099 = vsel %vm3955, 1, 0
      %v4100 = vsel %vm3956, 1, 0
      %v4101 = vsel %vm3957, 1, 0
      %v4102 = vsel %vm3958, 1, 0
      %v4103 = vsel %vm3959, 1, 0
      %v4104 = vsel %vm3960, 1, 0
      %v4105 = vsel %vm3961, 1, 0
      %v4106 = vsel %vm3962, 1, 0
      %v4107 = vsel %vm3963, 1, 0
      %v4108 = vsel %vm3964, 1, 0
      %v4109 = vsel %vm3965, 1, 0
      %v4110 = vsel %vm3966, 1, 0
      %v4111 = vsel %vm3967, 1, 0
      %v4112 = vsel %vm3968, 1, 0
      %v4113 = vsel %vm3969, 1, 0
      %v4114 = vsel %vm3970, 1, 0
      %v4115 = vsel %vm3971, 1, 0
      %v4116 = vsel %vm3972, 1, 0
      %v4117 = vsel %vm3973, 1, 0
      %v4118 = vsel %vm3974, 1, 0
      %v4119 = vsel %vm3975, 1, 0
      %v4120 = vsel %vm3976, 1, 0
      %v4121 = vsel %vm3977, 1, 0
      %v4122 = vsel %vm3978, 1, 0
      %v4123 = vsel %vm3979, 1, 0
      %v4124 = vsel %vm3980, 1, 0
      %v4125 = vsel %vm3981, 1, 0
      %v4126 = vsel %vm3982, 1, 0
      %v4127 = vsel %vm3983, 1, 0
      %v4128 = vsel %vm3984, 1, 0
      %v4129 = vsel %vm3985, 1, 0
      %v4130 = vsel %vm3986, 1, 0
      %v4131 = vsel %vm3987, 1, 0
      %v4132 = vsel %vm3988, 1, 0
      %v4133 = vsel %vm3989, 1, 0
      %v4134 = vsel %vm3990, 1, 0
      %v4135 = vsel %vm3991, 1, 0
      %v4136 = vsel %vm3992, 1, 0
      %v4137 = vsel %vm3993, 1, 0
      %v4138 = vsel %vm3994, 1, 0
      %v4139 = vsel %vm3995, 1, 0
      %v4140 = vsel %vm3996, 1, 0
      %v4141 = vsel %vm3997, 1, 0
      %v4142 = vsel %vm3998, 1, 0
      %v4143 = vsel %vm3999, 1, 0
      %v4144 = vsel %vm4000, 1, 0
      %v4145 = vsel %vm4001, 1, 0
      %v4146 = vsel %vm4002, 1, 0
      %v4147 = vsel %vm4003, 1, 0
      %v4148 = vsel %vm4004, 1, 0
      %v4149 = vsel %vm4005, 1, 0
      %v4150 = vsel %vm4006, 1, 0
      %v4151 = vsel %vm4007, 1, 0
      %v4152 = vsel %vm4008, 1, 0
      %v4153 = vsel %vm4009, 1, 0
      %v4154 = vsel %vm4010, 1, 0
      %v4155 = vsel %vm4011, 1, 0
      %v4156 = vsel %vm4012, 1, 0
      %v4157 = vsel %vm4013, 1, 0
      %v4158 = vsel %vm4014, 1, 0
      %v4159 = vsel %vm4015, 1, 0
      %v4160 = vsel %vm4016, 1, 0
      %v4161 = vsel %vm4017, 1, 0
      %v4162 = vsel %vm4018, 1, 0
      %v4163 = vsel %vm4019, 1, 0
      %v4164 = vsel %vm4020, 1, 0
      %v4165 = vsel %vm4021, 1, 0
      %v4166 = vsel %vm4022, 1, 0
      %v4167 = vsel %vm4023, 1, 0
      %v4168 = vsel %vm4024, 1, 0
      %v4169 = vsel %vm4025, 1, 0
      %v4170 = vsel %vm4026, 1, 0
      %v4171 = vsel %vm4027, 1, 0
      %v4172 = vsel %vm4028, 1, 0
      %v4173 = vsel %vm4029, 1, 0
      %v4174 = vsel %vm4030, 1, 0
      %v4175 = vsel %vm4031, 1, 0
      %v4176 = vsel %vm4032, 1, 0
      %v4177 = vsel %vm4033, 1, 0
      %v4178 = vsel %vm4034, 1, 0
      %v4179 = vsel %vm4035, 1, 0
      %v4180 = vsel %vm4036, 1, 0
      %v4181 = vsel %vm4037, 1, 0
      %v4182 = vsel %vm4038, 1, 0
      %v4183 = vsel %vm4039, 1, 0
      %v4184 = vsel %vm4040, 1, 0
      %v4185 = vsel %vm4041, 1, 0
      %v4186 = vsel %vm4042, 1, 0
      %v4187 = vsel %vm4043, 1, 0
      %v4188 = vsel %vm4044, 1, 0
      %v4189 = vsel %vm4045, 1, 0
      %v4190 = vsel %vm4046, 1, 0
      %v4191 = vsel %vm4047, 1, 0
      %v4192 = vsel %vm4048, 1, 0
      %v4193 = vsel %vm4049, 1, 0
      %v4194 = vsel %vm4050, 1, 0
      %v4195 = vsel %vm4051, 1, 0
      %v4196 = vsel %vm4052, 1, 0
      %v4197 = vsel %vm4053, 1, 0
      %v4198 = vsel %vm4054, 1, 0
      %v4199 = vsel %vm4055, 1, 0
      %v4200 = vsel %vm4056, 1, 0
      %v4201 = vsel %vm4057, 1, 0
      %v4202 = vsel %vm4058, 1, 0
      %v4203 = vsel %vm4059, 1, 0
      %v4204 = vsel %vm4060, 1, 0
      %v4205 = vsel %vm4061, 1, 0
      %v4206 = vsel %vm4062, 1, 0
      %v4207 = vsel %vm4063, 1, 0
      %v4208 = vsel %vm4064, 1, 0
      %v4209 = vsel %vm4065, 1, 0
      %v4210 = vcvt.s32.f32 %v4066
      %v4211 = vcvt.s32.f32 %v4067
      %v4212 = vcvt.s32.f32 %v4068
      %v4213 = vcvt.s32.f32 %v4069
      %v4214 = vcvt.s32.f32 %v4070
      %v4215 = vcvt.s32.f32 %v4071
      %v4216 = vcvt.s32.f32 %v4072
      %v4217 = vcvt.s32.f32 %v4073
      %v4218 = vcvt.s32.f32 %v4074
      %v4219 = vcvt.s32.f32 %v4075
      %v4220 = vcvt.s32.f32 %v4076
      %v4221 = vcvt.s32.f32 %v4077
      %v4222 = vcvt.s32.f32 %v4078
      %v4223 = vcvt.s32.f32 %v4079
      %v4224 = vcvt.s32.f32 %v4080
      %v4225 = vcvt.s32.f32 %v4081
      %v4226 = vcvt.s32.f32 %v4082
      %v4227 = vcvt.s32.f32 %v4083
      %v4228 = vcvt.s32.f32 %v4084
      %v4229 = vcvt.s32.f32 %v4085
      %v4230 = vcvt.s32.f32 %v4086
      %v4231 = vcvt.s32.f32 %v4087
      %v4232 = vcvt.s32.f32 %v4088
      %v4233 = vcvt.s32.f32 %v4089
      %v4234 = vcvt.s32.f32 %v4090
      %v4235 = vcvt.s32.f32 %v4091
      %v4236 = vcvt.s32.f32 %v4092
      %v4237 = vcvt.s32.f32 %v4093
      %v4238 = vcvt.s32.f32 %v4094
      %v4239 = vcvt.s32.f32 %v4095
      %v4240 = vcvt.s32.f32 %v4096
      %v4241 = vcvt.s32.f32 %v4097
      %v4242 = vcvt.s32.f32 %v4098
      %v4243 = vcvt.s32.f32 %v4099
      %v4244 = vcvt.s32.f32 %v4100
      %v4245 = vcvt.s32.f32 %v4101
      %v4246 = vcvt.s32.f32 %v4102
      %v4247 = vcvt.s32.f32 %v4103
      %v4248 = vcvt.s32.f32 %v4104
      %v4249 = vcvt.s32.f32 %v4105
      %v4250 = vcvt.s32.f32 %v4106
      %v4251 = vcvt.s32.f32 %v4107
      %v4252 = vcvt.s32.f32 %v4108
      %v4253 = vcvt.s32.f32 %v4109
      %v4254 = vcvt.s32.f32 %v4110
      %v4255 = vcvt.s32.f32 %v4111
      %v4256 = vcvt.s32.f32 %v4112
      %v4257 = vcvt.s32.f32 %v4113
      %v4258 = vcvt.s32.f32 %v4114
      %v4259 = vcvt.s32.f32 %v4115
      %v4260 = vcvt.s32.f32 %v4116
      %v4261 = vcvt.s32.f32 %v4117
      %v4262 = vcvt.s32.f32 %v4118
      %v4263 = vcvt.s32.f32 %v4119
      %v4264 = vcvt.s32.f32 %v4120
      %v4265 = vcvt.s32.f32 %v4121
      %v4266 = vcvt.s32.f32 %v4122
      %v4267 = vcvt.s32.f32 %v4123
      %v4268 = vcvt.s32.f32 %v4124
      %v4269 = vcvt.s32.f32 %v4125
      %v4270 = vcvt.s32.f32 %v4126
      %v4271 = vcvt.s32.f32 %v4127
      %v4272 = vcvt.s32.f32 %v4128
      %v4273 = vcvt.s32.f32 %v4129
      %v4274 = vcvt.s32.f32 %v4130
      %v4275 = vcvt.s32.f32 %v4131
      %v4276 = vcvt.s32.f32 %v4132
      %v4277 = vcvt.s32.f32 %v4133
      %v4278 = vcvt.s32.f32 %v4134
      %v4279 = vcvt.s32.f32 %v4135
      %v4280 = vcvt.s32.f32 %v4136
      %v4281 = vcvt.s32.f32 %v4137
      %v4282 = vcvt.s32.f32 %v4138
      %v4283 = vcvt.s32.f32 %v4139
      %v4284 = vcvt.s32.f32 %v4140
      %v4285 = vcvt.s32.f32 %v4141
      %v4286 = vcvt.s32.f32 %v4142
      %v4287 = vcvt.s32.f32 %v4143
      %v4288 = vcvt.s32.f32 %v4144
      %v4289 = vcvt.s32.f32 %v4145
      %v4290 = vcvt.s32.f32 %v4146
      %v4291 = vcvt.s32.f32 %v4147
      %v4292 = vcvt.s32.f32 %v4148
      %v4293 = vcvt.s32.f32 %v4149
      %v4294 = vcvt.s32.f32 %v4150
      %v4295 = vcvt.s32.f32 %v4151
      %v4296 = vcvt.s32.f32 %v4152
      %v4297 = vcvt.s32.f32 %v4153
      %v4298 = vcvt.s32.f32 %v4154
      %v4299 = vcvt.s32.f32 %v4155
      %v4300 = vcvt.s32.f32 %v4156
      %v4301 = vcvt.s32.f32 %v4157
      %v4302 = vcvt.s32.f32 %v4158
      %v4303 = vcvt.s32.f32 %v4159
      %v4304 = vcvt.s32.f32 %v4160
      %v4305 = vcvt.s32.f32 %v4161
      %v4306 = vcvt.s32.f32 %v4162
      %v4307 = vcvt.s32.f32 %v4163
      %v4308 = vcvt.s32.f32 %v4164
      %v4309 = vcvt.s32.f32 %v4165
      %v4310 = vcvt.s32.f32 %v4166
      %v4311 = vcvt.s32.f32 %v4167
      %v4312 = vcvt.s32.f32 %v4168
      %v4313 = vcvt.s32.f32 %v4169
      %v4314 = vcvt.s32.f32 %v4170
      %v4315 = vcvt.s32.f32 %v4171
      %v4316 = vcvt.s32.f32 %v4172
      %v4317 = vcvt.s32.f32 %v4173
      %v4318 = vcvt.s32.f32 %v4174
      %v4319 = vcvt.s32.f32 %v4175
      %v4320 = vcvt.s32.f32 %v4176
      %v4321 = vcvt.s32.f32 %v4177
      %v4322 = vcvt.s32.f32 %v4178
      %v4323 = vcvt.s32.f32 %v4179
      %v4324 = vcvt.s32.f32 %v4180
      %v4325 = vcvt.s32.f32 %v4181
      %v4326 = vcvt.s32.f32 %v4182
      %v4327 = vcvt.s32.f32 %v4183
      %v4328 = vcvt.s32.f32 %v4184
      %v4329 = vcvt.s32.f32 %v4185
      %v4330 = vcvt.s32.f32 %v4186
      %v4331 = vcvt.s32.f32 %v4187
      %v4332 = vcvt.s32.f32 %v4188
      %v4333 = vcvt.s32.f32 %v4189
      %v4334 = vcvt.s32.f32 %v4190
      %v4335 = vcvt.s32.f32 %v4191
      %v4336 = vcvt.s32.f32 %v4192
      %v4337 = vcvt.s32.f32 %v4193
      %v4338 = vcvt.s32.f32 %v4194
      %v4339 = vcvt.s32.f32 %v4195
      %v4340 = vcvt.s32.f32 %v4196
      %v4341 = vcvt.s32.f32 %v4197
      %v4342 = vcvt.s32.f32 %v4198
      %v4343 = vcvt.s32.f32 %v4199
      %v4344 = vcvt.s32.f32 %v4200
      %v4345 = vcvt.s32.f32 %v4201
      %v4346 = vcvt.s32.f32 %v4202
      %v4347 = vcvt.s32.f32 %v4203
      %v4348 = vcvt.s32.f32 %v4204
      %v4349 = vcvt.s32.f32 %v4205
      %v4350 = vcvt.s32.f32 %v4206
      %v4351 = vcvt.s32.f32 %v4207
      %v4352 = vcvt.s32.f32 %v4208
      %v4353 = vcvt.s32.f32 %v4209
      %v4354 = vpack.c.bf16 %v4211, %v4210
      %v4355 = vpack.c.bf16 %v4213, %v4212
      %v4356 = vpack.c.bf16 %v4215, %v4214
      %v4357 = vpack.c.bf16 %v4217, %v4216
      %v4358 = vpack.c.bf16 %v4219, %v4218
      %v4359 = vpack.c.bf16 %v4221, %v4220
      %v4360 = vpack.c.bf16 %v4223, %v4222
      %v4361 = vpack.c.bf16 %v4225, %v4224
      %v4362 = vpack.c.bf16 %v4227, %v4226
      %v4363 = vpack.c.bf16 %v4229, %v4228
      %v4364 = vpack.c.bf16 %v4231, %v4230
      %v4365 = vpack.c.bf16 %v4233, %v4232
      %v4366 = vpack.c.bf16 %v4235, %v4234
      %v4367 = vpack.c.bf16 %v4237, %v4236
      %v4368 = vpack.c.bf16 %v4239, %v4238
      %v4369 = vpack.c.bf16 %v4241, %v4240
      %v4370 = vpack.c.bf16 %v4243, %v4242
      %v4371 = vpack.c.bf16 %v4245, %v4244
      %v4372 = vpack.c.bf16 %v4247, %v4246
      %v4373 = vpack.c.bf16 %v4249, %v4248
      %v4374 = vpack.c.bf16 %v4251, %v4250
      %v4375 = vpack.c.bf16 %v4253, %v4252
      %v4376 = vpack.c.bf16 %v4255, %v4254
      %v4377 = vpack.c.bf16 %v4257, %v4256
      %v4378 = vpack.c.bf16 %v4259, %v4258
      %v4379 = vpack.c.bf16 %v4261, %v4260
      %v4380 = vpack.c.bf16 %v4263, %v4262
      %v4381 = vpack.c.bf16 %v4265, %v4264
      %v4382 = vpack.c.bf16 %v4267, %v4266
      %v4383 = vpack.c.bf16 %v4269, %v4268
      %v4384 = vpack.c.bf16 %v4271, %v4270
      %v4385 = vpack.c.bf16 %v4273, %v4272
      %v4386 = vpack.c.bf16 %v4275, %v4274
      %v4387 = vpack.c.bf16 %v4277, %v4276
      %v4388 = vpack.c.bf16 %v4279, %v4278
      %v4389 = vpack.c.bf16 %v4281, %v4280
      %v4390 = vpack.c.bf16 %v4283, %v4282
      %v4391 = vpack.c.bf16 %v4285, %v4284
      %v4392 = vpack.c.bf16 %v4287, %v4286
      %v4393 = vpack.c.bf16 %v4289, %v4288
      %v4394 = vpack.c.bf16 %v4291, %v4290
      %v4395 = vpack.c.bf16 %v4293, %v4292
      %v4396 = vpack.c.bf16 %v4295, %v4294
      %v4397 = vpack.c.bf16 %v4297, %v4296
      %v4398 = vpack.c.bf16 %v4299, %v4298
      %v4399 = vpack.c.bf16 %v4301, %v4300
      %v4400 = vpack.c.bf16 %v4303, %v4302
      %v4401 = vpack.c.bf16 %v4305, %v4304
      %v4402 = vpack.c.bf16 %v4307, %v4306
      %v4403 = vpack.c.bf16 %v4309, %v4308
      %v4404 = vpack.c.bf16 %v4311, %v4310
      %v4405 = vpack.c.bf16 %v4313, %v4312
      %v4406 = vpack.c.bf16 %v4315, %v4314
      %v4407 = vpack.c.bf16 %v4317, %v4316
      %v4408 = vpack.c.bf16 %v4319, %v4318
      %v4409 = vpack.c.bf16 %v4321, %v4320
      %v4410 = vpack.c.bf16 %v4323, %v4322
      %v4411 = vpack.c.bf16 %v4325, %v4324
      %v4412 = vpack.c.bf16 %v4327, %v4326
      %v4413 = vpack.c.bf16 %v4329, %v4328
      %v4414 = vpack.c.bf16 %v4331, %v4330
      %v4415 = vpack.c.bf16 %v4333, %v4332
      %v4416 = vpack.c.bf16 %v4335, %v4334
      %v4417 = vpack.c.bf16 %v4337, %v4336
      %v4418 = vpack.c.bf16 %v4339, %v4338
      %v4419 = vpack.c.bf16 %v4341, %v4340
      %v4420 = vpack.c.bf16 %v4343, %v4342
      %v4421 = vpack.c.bf16 %v4345, %v4344
      %v4422 = vpack.c.bf16 %v4347, %v4346
      %v4423 = vpack.c.bf16 %v4349, %v4348
      %v4424 = vpack.c.bf16 %v4351, %v4350
      %v4425 = vpack.c.bf16 %v4353, %v4352
      %vm4426 = vcmp.eq.f32.partialorder %v754, 7.0
      %vm4427 = vcmp.eq.f32.partialorder %v755, 7.0
      %vm4428 = vcmp.eq.f32.partialorder %v756, 7.0
      %vm4429 = vcmp.eq.f32.partialorder %v757, 7.0
      %vm4430 = vcmp.eq.f32.partialorder %v758, 7.0
      %vm4431 = vcmp.eq.f32.partialorder %v759, 7.0
      %vm4432 = vcmp.eq.f32.partialorder %v760, 7.0
      %vm4433 = vcmp.eq.f32.partialorder %v761, 7.0
      %vm4434 = vcmp.eq.f32.partialorder %v762, 7.0
      %vm4435 = vcmp.eq.f32.partialorder %v763, 7.0
      %vm4436 = vcmp.eq.f32.partialorder %v764, 7.0
      %vm4437 = vcmp.eq.f32.partialorder %v765, 7.0
      %vm4438 = vcmp.eq.f32.partialorder %v766, 7.0
      %vm4439 = vcmp.eq.f32.partialorder %v767, 7.0
      %vm4440 = vcmp.eq.f32.partialorder %v768, 7.0
      %vm4441 = vcmp.eq.f32.partialorder %v769, 7.0
      %vm4442 = vcmp.eq.f32.partialorder %v770, 7.0
      %vm4443 = vcmp.eq.f32.partialorder %v771, 7.0
      %vm4444 = vcmp.eq.f32.partialorder %v772, 7.0
      %vm4445 = vcmp.eq.f32.partialorder %v773, 7.0
      %vm4446 = vcmp.eq.f32.partialorder %v774, 7.0
      %vm4447 = vcmp.eq.f32.partialorder %v775, 7.0
      %vm4448 = vcmp.eq.f32.partialorder %v776, 7.0
      %vm4449 = vcmp.eq.f32.partialorder %v777, 7.0
      %vm4450 = vcmp.eq.f32.partialorder %v778, 7.0
      %vm4451 = vcmp.eq.f32.partialorder %v779, 7.0
      %vm4452 = vcmp.eq.f32.partialorder %v780, 7.0
      %vm4453 = vcmp.eq.f32.partialorder %v781, 7.0
      %vm4454 = vcmp.eq.f32.partialorder %v782, 7.0
      %vm4455 = vcmp.eq.f32.partialorder %v783, 7.0
      %vm4456 = vcmp.eq.f32.partialorder %v784, 7.0
      %vm4457 = vcmp.eq.f32.partialorder %v785, 7.0
      %vm4458 = vcmp.eq.f32.partialorder %v786, 7.0
      %vm4459 = vcmp.eq.f32.partialorder %v787, 7.0
      %vm4460 = vcmp.eq.f32.partialorder %v788, 7.0
      %vm4461 = vcmp.eq.f32.partialorder %v789, 7.0
      %vm4462 = vcmp.eq.f32.partialorder %v790, 7.0
      %vm4463 = vcmp.eq.f32.partialorder %v791, 7.0
      %vm4464 = vcmp.eq.f32.partialorder %v792, 7.0
      %vm4465 = vcmp.eq.f32.partialorder %v793, 7.0
      %vm4466 = vcmp.eq.f32.partialorder %v794, 7.0
      %vm4467 = vcmp.eq.f32.partialorder %v795, 7.0
      %vm4468 = vcmp.eq.f32.partialorder %v796, 7.0
      %vm4469 = vcmp.eq.f32.partialorder %v797, 7.0
      %vm4470 = vcmp.eq.f32.partialorder %v798, 7.0
      %vm4471 = vcmp.eq.f32.partialorder %v799, 7.0
      %vm4472 = vcmp.eq.f32.partialorder %v800, 7.0
      %vm4473 = vcmp.eq.f32.partialorder %v801, 7.0
      %vm4474 = vcmp.eq.f32.partialorder %v802, 7.0
      %vm4475 = vcmp.eq.f32.partialorder %v803, 7.0
      %vm4476 = vcmp.eq.f32.partialorder %v804, 7.0
      %vm4477 = vcmp.eq.f32.partialorder %v805, 7.0
      %vm4478 = vcmp.eq.f32.partialorder %v806, 7.0
      %vm4479 = vcmp.eq.f32.partialorder %v807, 7.0
      %vm4480 = vcmp.eq.f32.partialorder %v808, 7.0
      %vm4481 = vcmp.eq.f32.partialorder %v809, 7.0
      %vm4482 = vcmp.eq.f32.partialorder %v810, 7.0
      %vm4483 = vcmp.eq.f32.partialorder %v811, 7.0
      %vm4484 = vcmp.eq.f32.partialorder %v812, 7.0
      %vm4485 = vcmp.eq.f32.partialorder %v813, 7.0
      %vm4486 = vcmp.eq.f32.partialorder %v814, 7.0
      %vm4487 = vcmp.eq.f32.partialorder %v815, 7.0
      %vm4488 = vcmp.eq.f32.partialorder %v816, 7.0
      %vm4489 = vcmp.eq.f32.partialorder %v817, 7.0
      %vm4490 = vcmp.eq.f32.partialorder %v818, 7.0
      %vm4491 = vcmp.eq.f32.partialorder %v819, 7.0
      %vm4492 = vcmp.eq.f32.partialorder %v820, 7.0
      %vm4493 = vcmp.eq.f32.partialorder %v821, 7.0
      %vm4494 = vcmp.eq.f32.partialorder %v822, 7.0
      %vm4495 = vcmp.eq.f32.partialorder %v823, 7.0
      %vm4496 = vcmp.eq.f32.partialorder %v824, 7.0
      %vm4497 = vcmp.eq.f32.partialorder %v825, 7.0
      %vm4498 = vcmp.eq.f32.partialorder %v826, 7.0
      %vm4499 = vcmp.eq.f32.partialorder %v827, 7.0
      %vm4500 = vcmp.eq.f32.partialorder %v828, 7.0
      %vm4501 = vcmp.eq.f32.partialorder %v829, 7.0
      %vm4502 = vcmp.eq.f32.partialorder %v830, 7.0
      %vm4503 = vcmp.eq.f32.partialorder %v831, 7.0
      %vm4504 = vcmp.eq.f32.partialorder %v832, 7.0
      %vm4505 = vcmp.eq.f32.partialorder %v833, 7.0
      %vm4506 = vcmp.eq.f32.partialorder %v834, 7.0
      %vm4507 = vcmp.eq.f32.partialorder %v835, 7.0
      %vm4508 = vcmp.eq.f32.partialorder %v836, 7.0
      %vm4509 = vcmp.eq.f32.partialorder %v837, 7.0
      %vm4510 = vcmp.eq.f32.partialorder %v838, 7.0
      %vm4511 = vcmp.eq.f32.partialorder %v839, 7.0
      %vm4512 = vcmp.eq.f32.partialorder %v840, 7.0
      %vm4513 = vcmp.eq.f32.partialorder %v841, 7.0
      %vm4514 = vcmp.eq.f32.partialorder %v842, 7.0
      %vm4515 = vcmp.eq.f32.partialorder %v843, 7.0
      %vm4516 = vcmp.eq.f32.partialorder %v844, 7.0
      %vm4517 = vcmp.eq.f32.partialorder %v845, 7.0
      %vm4518 = vcmp.eq.f32.partialorder %v846, 7.0
      %vm4519 = vcmp.eq.f32.partialorder %v847, 7.0
      %vm4520 = vcmp.eq.f32.partialorder %v848, 7.0
      %vm4521 = vcmp.eq.f32.partialorder %v849, 7.0
      %vm4522 = vcmp.eq.f32.partialorder %v850, 7.0
      %vm4523 = vcmp.eq.f32.partialorder %v851, 7.0
      %vm4524 = vcmp.eq.f32.partialorder %v852, 7.0
      %vm4525 = vcmp.eq.f32.partialorder %v853, 7.0
      %vm4526 = vcmp.eq.f32.partialorder %v854, 7.0
      %vm4527 = vcmp.eq.f32.partialorder %v855, 7.0
      %vm4528 = vcmp.eq.f32.partialorder %v856, 7.0
      %vm4529 = vcmp.eq.f32.partialorder %v857, 7.0
      %vm4530 = vcmp.eq.f32.partialorder %v858, 7.0
      %vm4531 = vcmp.eq.f32.partialorder %v859, 7.0
      %vm4532 = vcmp.eq.f32.partialorder %v860, 7.0
      %vm4533 = vcmp.eq.f32.partialorder %v861, 7.0
      %vm4534 = vcmp.eq.f32.partialorder %v862, 7.0
      %vm4535 = vcmp.eq.f32.partialorder %v863, 7.0
      %vm4536 = vcmp.eq.f32.partialorder %v864, 7.0
      %vm4537 = vcmp.eq.f32.partialorder %v865, 7.0
      %vm4538 = vcmp.eq.f32.partialorder %v866, 7.0
      %vm4539 = vcmp.eq.f32.partialorder %v867, 7.0
      %vm4540 = vcmp.eq.f32.partialorder %v868, 7.0
      %vm4541 = vcmp.eq.f32.partialorder %v869, 7.0
      %vm4542 = vcmp.eq.f32.partialorder %v870, 7.0
      %vm4543 = vcmp.eq.f32.partialorder %v871, 7.0
      %vm4544 = vcmp.eq.f32.partialorder %v872, 7.0
      %vm4545 = vcmp.eq.f32.partialorder %v873, 7.0
      %vm4546 = vcmp.eq.f32.partialorder %v874, 7.0
      %vm4547 = vcmp.eq.f32.partialorder %v875, 7.0
      %vm4548 = vcmp.eq.f32.partialorder %v876, 7.0
      %vm4549 = vcmp.eq.f32.partialorder %v877, 7.0
      %vm4550 = vcmp.eq.f32.partialorder %v878, 7.0
      %vm4551 = vcmp.eq.f32.partialorder %v879, 7.0
      %vm4552 = vcmp.eq.f32.partialorder %v880, 7.0
      %vm4553 = vcmp.eq.f32.partialorder %v881, 7.0
      %vm4554 = vcmp.eq.f32.partialorder %v882, 7.0
      %vm4555 = vcmp.eq.f32.partialorder %v883, 7.0
      %vm4556 = vcmp.eq.f32.partialorder %v884, 7.0
      %vm4557 = vcmp.eq.f32.partialorder %v885, 7.0
      %vm4558 = vcmp.eq.f32.partialorder %v886, 7.0
      %vm4559 = vcmp.eq.f32.partialorder %v887, 7.0
      %vm4560 = vcmp.eq.f32.partialorder %v888, 7.0
      %vm4561 = vcmp.eq.f32.partialorder %v889, 7.0
      %vm4562 = vcmp.eq.f32.partialorder %v890, 7.0
      %vm4563 = vcmp.eq.f32.partialorder %v891, 7.0
      %vm4564 = vcmp.eq.f32.partialorder %v892, 7.0
      %vm4565 = vcmp.eq.f32.partialorder %v893, 7.0
      %vm4566 = vcmp.eq.f32.partialorder %v894, 7.0
      %vm4567 = vcmp.eq.f32.partialorder %v895, 7.0
      %vm4568 = vcmp.eq.f32.partialorder %v896, 7.0
      %vm4569 = vcmp.eq.f32.partialorder %v897, 7.0
      %v4570 = vsel %vm4426, 1, 0
      %v4571 = vsel %vm4427, 1, 0
      %v4572 = vsel %vm4428, 1, 0
      %v4573 = vsel %vm4429, 1, 0
      %v4574 = vsel %vm4430, 1, 0
      %v4575 = vsel %vm4431, 1, 0
      %v4576 = vsel %vm4432, 1, 0
      %v4577 = vsel %vm4433, 1, 0
      %v4578 = vsel %vm4434, 1, 0
      %v4579 = vsel %vm4435, 1, 0
      %v4580 = vsel %vm4436, 1, 0
      %v4581 = vsel %vm4437, 1, 0
      %v4582 = vsel %vm4438, 1, 0
      %v4583 = vsel %vm4439, 1, 0
      %v4584 = vsel %vm4440, 1, 0
      %v4585 = vsel %vm4441, 1, 0
      %v4586 = vsel %vm4442, 1, 0
      %v4587 = vsel %vm4443, 1, 0
      %v4588 = vsel %vm4444, 1, 0
      %v4589 = vsel %vm4445, 1, 0
      %v4590 = vsel %vm4446, 1, 0
      %v4591 = vsel %vm4447, 1, 0
      %v4592 = vsel %vm4448, 1, 0
      %v4593 = vsel %vm4449, 1, 0
      %v4594 = vsel %vm4450, 1, 0
      %v4595 = vsel %vm4451, 1, 0
      %v4596 = vsel %vm4452, 1, 0
      %v4597 = vsel %vm4453, 1, 0
      %v4598 = vsel %vm4454, 1, 0
      %v4599 = vsel %vm4455, 1, 0
      %v4600 = vsel %vm4456, 1, 0
      %v4601 = vsel %vm4457, 1, 0
      %v4602 = vsel %vm4458, 1, 0
      %v4603 = vsel %vm4459, 1, 0
      %v4604 = vsel %vm4460, 1, 0
      %v4605 = vsel %vm4461, 1, 0
      %v4606 = vsel %vm4462, 1, 0
      %v4607 = vsel %vm4463, 1, 0
      %v4608 = vsel %vm4464, 1, 0
      %v4609 = vsel %vm4465, 1, 0
      %v4610 = vsel %vm4466, 1, 0
      %v4611 = vsel %vm4467, 1, 0
      %v4612 = vsel %vm4468, 1, 0
      %v4613 = vsel %vm4469, 1, 0
      %v4614 = vsel %vm4470, 1, 0
      %v4615 = vsel %vm4471, 1, 0
      %v4616 = vsel %vm4472, 1, 0
      %v4617 = vsel %vm4473, 1, 0
      %v4618 = vsel %vm4474, 1, 0
      %v4619 = vsel %vm4475, 1, 0
      %v4620 = vsel %vm4476, 1, 0
      %v4621 = vsel %vm4477, 1, 0
      %v4622 = vsel %vm4478, 1, 0
      %v4623 = vsel %vm4479, 1, 0
      %v4624 = vsel %vm4480, 1, 0
      %v4625 = vsel %vm4481, 1, 0
      %v4626 = vsel %vm4482, 1, 0
      %v4627 = vsel %vm4483, 1, 0
      %v4628 = vsel %vm4484, 1, 0
      %v4629 = vsel %vm4485, 1, 0
      %v4630 = vsel %vm4486, 1, 0
      %v4631 = vsel %vm4487, 1, 0
      %v4632 = vsel %vm4488, 1, 0
      %v4633 = vsel %vm4489, 1, 0
      %v4634 = vsel %vm4490, 1, 0
      %v4635 = vsel %vm4491, 1, 0
      %v4636 = vsel %vm4492, 1, 0
      %v4637 = vsel %vm4493, 1, 0
      %v4638 = vsel %vm4494, 1, 0
      %v4639 = vsel %vm4495, 1, 0
      %v4640 = vsel %vm4496, 1, 0
      %v4641 = vsel %vm4497, 1, 0
      %v4642 = vsel %vm4498, 1, 0
      %v4643 = vsel %vm4499, 1, 0
      %v4644 = vsel %vm4500, 1, 0
      %v4645 = vsel %vm4501, 1, 0
      %v4646 = vsel %vm4502, 1, 0
      %v4647 = vsel %vm4503, 1, 0
      %v4648 = vsel %vm4504, 1, 0
      %v4649 = vsel %vm4505, 1, 0
      %v4650 = vsel %vm4506, 1, 0
      %v4651 = vsel %vm4507, 1, 0
      %v4652 = vsel %vm4508, 1, 0
      %v4653 = vsel %vm4509, 1, 0
      %v4654 = vsel %vm4510, 1, 0
      %v4655 = vsel %vm4511, 1, 0
      %v4656 = vsel %vm4512, 1, 0
      %v4657 = vsel %vm4513, 1, 0
      %v4658 = vsel %vm4514, 1, 0
      %v4659 = vsel %vm4515, 1, 0
      %v4660 = vsel %vm4516, 1, 0
      %v4661 = vsel %vm4517, 1, 0
      %v4662 = vsel %vm4518, 1, 0
      %v4663 = vsel %vm4519, 1, 0
      %v4664 = vsel %vm4520, 1, 0
      %v4665 = vsel %vm4521, 1, 0
      %v4666 = vsel %vm4522, 1, 0
      %v4667 = vsel %vm4523, 1, 0
      %v4668 = vsel %vm4524, 1, 0
      %v4669 = vsel %vm4525, 1, 0
      %v4670 = vsel %vm4526, 1, 0
      %v4671 = vsel %vm4527, 1, 0
      %v4672 = vsel %vm4528, 1, 0
      %v4673 = vsel %vm4529, 1, 0
      %v4674 = vsel %vm4530, 1, 0
      %v4675 = vsel %vm4531, 1, 0
      %v4676 = vsel %vm4532, 1, 0
      %v4677 = vsel %vm4533, 1, 0
      %v4678 = vsel %vm4534, 1, 0
      %v4679 = vsel %vm4535, 1, 0
      %v4680 = vsel %vm4536, 1, 0
      %v4681 = vsel %vm4537, 1, 0
      %v4682 = vsel %vm4538, 1, 0
      %v4683 = vsel %vm4539, 1, 0
      %v4684 = vsel %vm4540, 1, 0
      %v4685 = vsel %vm4541, 1, 0
      %v4686 = vsel %vm4542, 1, 0
      %v4687 = vsel %vm4543, 1, 0
      %v4688 = vsel %vm4544, 1, 0
      %v4689 = vsel %vm4545, 1, 0
      %v4690 = vsel %vm4546, 1, 0
      %v4691 = vsel %vm4547, 1, 0
      %v4692 = vsel %vm4548, 1, 0
      %v4693 = vsel %vm4549, 1, 0
      %v4694 = vsel %vm4550, 1, 0
      %v4695 = vsel %vm4551, 1, 0
      %v4696 = vsel %vm4552, 1, 0
      %v4697 = vsel %vm4553, 1, 0
      %v4698 = vsel %vm4554, 1, 0
      %v4699 = vsel %vm4555, 1, 0
      %v4700 = vsel %vm4556, 1, 0
      %v4701 = vsel %vm4557, 1, 0
      %v4702 = vsel %vm4558, 1, 0
      %v4703 = vsel %vm4559, 1, 0
      %v4704 = vsel %vm4560, 1, 0
      %v4705 = vsel %vm4561, 1, 0
      %v4706 = vsel %vm4562, 1, 0
      %v4707 = vsel %vm4563, 1, 0
      %v4708 = vsel %vm4564, 1, 0
      %v4709 = vsel %vm4565, 1, 0
      %v4710 = vsel %vm4566, 1, 0
      %v4711 = vsel %vm4567, 1, 0
      %v4712 = vsel %vm4568, 1, 0
      %v4713 = vsel %vm4569, 1, 0
      %v4714 = vcvt.s32.f32 %v4570
      %v4715 = vcvt.s32.f32 %v4571
      %v4716 = vcvt.s32.f32 %v4572
      %v4717 = vcvt.s32.f32 %v4573
      %v4718 = vcvt.s32.f32 %v4574
      %v4719 = vcvt.s32.f32 %v4575
      %v4720 = vcvt.s32.f32 %v4576
      %v4721 = vcvt.s32.f32 %v4577
      %v4722 = vcvt.s32.f32 %v4578
      %v4723 = vcvt.s32.f32 %v4579
      %v4724 = vcvt.s32.f32 %v4580
      %v4725 = vcvt.s32.f32 %v4581
      %v4726 = vcvt.s32.f32 %v4582
      %v4727 = vcvt.s32.f32 %v4583
      %v4728 = vcvt.s32.f32 %v4584
      %v4729 = vcvt.s32.f32 %v4585
      %v4730 = vcvt.s32.f32 %v4586
      %v4731 = vcvt.s32.f32 %v4587
      %v4732 = vcvt.s32.f32 %v4588
      %v4733 = vcvt.s32.f32 %v4589
      %v4734 = vcvt.s32.f32 %v4590
      %v4735 = vcvt.s32.f32 %v4591
      %v4736 = vcvt.s32.f32 %v4592
      %v4737 = vcvt.s32.f32 %v4593
      %v4738 = vcvt.s32.f32 %v4594
      %v4739 = vcvt.s32.f32 %v4595
      %v4740 = vcvt.s32.f32 %v4596
      %v4741 = vcvt.s32.f32 %v4597
      %v4742 = vcvt.s32.f32 %v4598
      %v4743 = vcvt.s32.f32 %v4599
      %v4744 = vcvt.s32.f32 %v4600
      %v4745 = vcvt.s32.f32 %v4601
      %v4746 = vcvt.s32.f32 %v4602
      %v4747 = vcvt.s32.f32 %v4603
      %v4748 = vcvt.s32.f32 %v4604
      %v4749 = vcvt.s32.f32 %v4605
      %v4750 = vcvt.s32.f32 %v4606
      %v4751 = vcvt.s32.f32 %v4607
      %v4752 = vcvt.s32.f32 %v4608
      %v4753 = vcvt.s32.f32 %v4609
      %v4754 = vcvt.s32.f32 %v4610
      %v4755 = vcvt.s32.f32 %v4611
      %v4756 = vcvt.s32.f32 %v4612
      %v4757 = vcvt.s32.f32 %v4613
      %v4758 = vcvt.s32.f32 %v4614
      %v4759 = vcvt.s32.f32 %v4615
      %v4760 = vcvt.s32.f32 %v4616
      %v4761 = vcvt.s32.f32 %v4617
      %v4762 = vcvt.s32.f32 %v4618
      %v4763 = vcvt.s32.f32 %v4619
      %v4764 = vcvt.s32.f32 %v4620
      %v4765 = vcvt.s32.f32 %v4621
      %v4766 = vcvt.s32.f32 %v4622
      %v4767 = vcvt.s32.f32 %v4623
      %v4768 = vcvt.s32.f32 %v4624
      %v4769 = vcvt.s32.f32 %v4625
      %v4770 = vcvt.s32.f32 %v4626
      %v4771 = vcvt.s32.f32 %v4627
      %v4772 = vcvt.s32.f32 %v4628
      %v4773 = vcvt.s32.f32 %v4629
      %v4774 = vcvt.s32.f32 %v4630
      %v4775 = vcvt.s32.f32 %v4631
      %v4776 = vcvt.s32.f32 %v4632
      %v4777 = vcvt.s32.f32 %v4633
      %v4778 = vcvt.s32.f32 %v4634
      %v4779 = vcvt.s32.f32 %v4635
      %v4780 = vcvt.s32.f32 %v4636
      %v4781 = vcvt.s32.f32 %v4637
      %v4782 = vcvt.s32.f32 %v4638
      %v4783 = vcvt.s32.f32 %v4639
      %v4784 = vcvt.s32.f32 %v4640
      %v4785 = vcvt.s32.f32 %v4641
      %v4786 = vcvt.s32.f32 %v4642
      %v4787 = vcvt.s32.f32 %v4643
      %v4788 = vcvt.s32.f32 %v4644
      %v4789 = vcvt.s32.f32 %v4645
      %v4790 = vcvt.s32.f32 %v4646
      %v4791 = vcvt.s32.f32 %v4647
      %v4792 = vcvt.s32.f32 %v4648
      %v4793 = vcvt.s32.f32 %v4649
      %v4794 = vcvt.s32.f32 %v4650
      %v4795 = vcvt.s32.f32 %v4651
      %v4796 = vcvt.s32.f32 %v4652
      %v4797 = vcvt.s32.f32 %v4653
      %v4798 = vcvt.s32.f32 %v4654
      %v4799 = vcvt.s32.f32 %v4655
      %v4800 = vcvt.s32.f32 %v4656
      %v4801 = vcvt.s32.f32 %v4657
      %v4802 = vcvt.s32.f32 %v4658
      %v4803 = vcvt.s32.f32 %v4659
      %v4804 = vcvt.s32.f32 %v4660
      %v4805 = vcvt.s32.f32 %v4661
      %v4806 = vcvt.s32.f32 %v4662
      %v4807 = vcvt.s32.f32 %v4663
      %v4808 = vcvt.s32.f32 %v4664
      %v4809 = vcvt.s32.f32 %v4665
      %v4810 = vcvt.s32.f32 %v4666
      %v4811 = vcvt.s32.f32 %v4667
      %v4812 = vcvt.s32.f32 %v4668
      %v4813 = vcvt.s32.f32 %v4669
      %v4814 = vcvt.s32.f32 %v4670
      %v4815 = vcvt.s32.f32 %v4671
      %v4816 = vcvt.s32.f32 %v4672
      %v4817 = vcvt.s32.f32 %v4673
      %v4818 = vcvt.s32.f32 %v4674
      %v4819 = vcvt.s32.f32 %v4675
      %v4820 = vcvt.s32.f32 %v4676
      %v4821 = vcvt.s32.f32 %v4677
      %v4822 = vcvt.s32.f32 %v4678
      %v4823 = vcvt.s32.f32 %v4679
      %v4824 = vcvt.s32.f32 %v4680
      %v4825 = vcvt.s32.f32 %v4681
      %v4826 = vcvt.s32.f32 %v4682
      %v4827 = vcvt.s32.f32 %v4683
      %v4828 = vcvt.s32.f32 %v4684
      %v4829 = vcvt.s32.f32 %v4685
      %v4830 = vcvt.s32.f32 %v4686
      %v4831 = vcvt.s32.f32 %v4687
      %v4832 = vcvt.s32.f32 %v4688
      %v4833 = vcvt.s32.f32 %v4689
      %v4834 = vcvt.s32.f32 %v4690
      %v4835 = vcvt.s32.f32 %v4691
      %v4836 = vcvt.s32.f32 %v4692
      %v4837 = vcvt.s32.f32 %v4693
      %v4838 = vcvt.s32.f32 %v4694
      %v4839 = vcvt.s32.f32 %v4695
      %v4840 = vcvt.s32.f32 %v4696
      %v4841 = vcvt.s32.f32 %v4697
      %v4842 = vcvt.s32.f32 %v4698
      %v4843 = vcvt.s32.f32 %v4699
      %v4844 = vcvt.s32.f32 %v4700
      %v4845 = vcvt.s32.f32 %v4701
      %v4846 = vcvt.s32.f32 %v4702
      %v4847 = vcvt.s32.f32 %v4703
      %v4848 = vcvt.s32.f32 %v4704
      %v4849 = vcvt.s32.f32 %v4705
      %v4850 = vcvt.s32.f32 %v4706
      %v4851 = vcvt.s32.f32 %v4707
      %v4852 = vcvt.s32.f32 %v4708
      %v4853 = vcvt.s32.f32 %v4709
      %v4854 = vcvt.s32.f32 %v4710
      %v4855 = vcvt.s32.f32 %v4711
      %v4856 = vcvt.s32.f32 %v4712
      %v4857 = vcvt.s32.f32 %v4713
      %v4858 = vpack.c.bf16 %v4715, %v4714
      %v4859 = vpack.c.bf16 %v4717, %v4716
      %v4860 = vpack.c.bf16 %v4719, %v4718
      %v4861 = vpack.c.bf16 %v4721, %v4720
      %v4862 = vpack.c.bf16 %v4723, %v4722
      %v4863 = vpack.c.bf16 %v4725, %v4724
      %v4864 = vpack.c.bf16 %v4727, %v4726
      %v4865 = vpack.c.bf16 %v4729, %v4728
      %v4866 = vpack.c.bf16 %v4731, %v4730
      %v4867 = vpack.c.bf16 %v4733, %v4732
      %v4868 = vpack.c.bf16 %v4735, %v4734
      %v4869 = vpack.c.bf16 %v4737, %v4736
      %v4870 = vpack.c.bf16 %v4739, %v4738
      %v4871 = vpack.c.bf16 %v4741, %v4740
      %v4872 = vpack.c.bf16 %v4743, %v4742
      %v4873 = vpack.c.bf16 %v4745, %v4744
      %v4874 = vpack.c.bf16 %v4747, %v4746
      %v4875 = vpack.c.bf16 %v4749, %v4748
      %v4876 = vpack.c.bf16 %v4751, %v4750
      %v4877 = vpack.c.bf16 %v4753, %v4752
      %v4878 = vpack.c.bf16 %v4755, %v4754
      %v4879 = vpack.c.bf16 %v4757, %v4756
      %v4880 = vpack.c.bf16 %v4759, %v4758
      %v4881 = vpack.c.bf16 %v4761, %v4760
      %v4882 = vpack.c.bf16 %v4763, %v4762
      %v4883 = vpack.c.bf16 %v4765, %v4764
      %v4884 = vpack.c.bf16 %v4767, %v4766
      %v4885 = vpack.c.bf16 %v4769, %v4768
      %v4886 = vpack.c.bf16 %v4771, %v4770
      %v4887 = vpack.c.bf16 %v4773, %v4772
      %v4888 = vpack.c.bf16 %v4775, %v4774
      %v4889 = vpack.c.bf16 %v4777, %v4776
      %v4890 = vpack.c.bf16 %v4779, %v4778
      %v4891 = vpack.c.bf16 %v4781, %v4780
      %v4892 = vpack.c.bf16 %v4783, %v4782
      %v4893 = vpack.c.bf16 %v4785, %v4784
      %v4894 = vpack.c.bf16 %v4787, %v4786
      %v4895 = vpack.c.bf16 %v4789, %v4788
      %v4896 = vpack.c.bf16 %v4791, %v4790
      %v4897 = vpack.c.bf16 %v4793, %v4792
      %v4898 = vpack.c.bf16 %v4795, %v4794
      %v4899 = vpack.c.bf16 %v4797, %v4796
      %v4900 = vpack.c.bf16 %v4799, %v4798
      %v4901 = vpack.c.bf16 %v4801, %v4800
      %v4902 = vpack.c.bf16 %v4803, %v4802
      %v4903 = vpack.c.bf16 %v4805, %v4804
      %v4904 = vpack.c.bf16 %v4807, %v4806
      %v4905 = vpack.c.bf16 %v4809, %v4808
      %v4906 = vpack.c.bf16 %v4811, %v4810
      %v4907 = vpack.c.bf16 %v4813, %v4812
      %v4908 = vpack.c.bf16 %v4815, %v4814
      %v4909 = vpack.c.bf16 %v4817, %v4816
      %v4910 = vpack.c.bf16 %v4819, %v4818
      %v4911 = vpack.c.bf16 %v4821, %v4820
      %v4912 = vpack.c.bf16 %v4823, %v4822
      %v4913 = vpack.c.bf16 %v4825, %v4824
      %v4914 = vpack.c.bf16 %v4827, %v4826
      %v4915 = vpack.c.bf16 %v4829, %v4828
      %v4916 = vpack.c.bf16 %v4831, %v4830
      %v4917 = vpack.c.bf16 %v4833, %v4832
      %v4918 = vpack.c.bf16 %v4835, %v4834
      %v4919 = vpack.c.bf16 %v4837, %v4836
      %v4920 = vpack.c.bf16 %v4839, %v4838
      %v4921 = vpack.c.bf16 %v4841, %v4840
      %v4922 = vpack.c.bf16 %v4843, %v4842
      %v4923 = vpack.c.bf16 %v4845, %v4844
      %v4924 = vpack.c.bf16 %v4847, %v4846
      %v4925 = vpack.c.bf16 %v4849, %v4848
      %v4926 = vpack.c.bf16 %v4851, %v4850
      %v4927 = vpack.c.bf16 %v4853, %v4852
      %v4928 = vpack.c.bf16 %v4855, %v4854
      %v4929 = vpack.c.bf16 %v4857, %v4856
      %v4930 = vld [vmem:[%s1] sm:$0xff]
      %v4931 = vld [vmem:[%s1 + $0x8] sm:$0xff]
      %v4932 = vld [vmem:[%s1 + $0x10] sm:$0xff]
      %v4933 = vld [vmem:[%s1 + $0x18] sm:$0xff]
      %v4934 = vld [vmem:[%s1 + $0x20] sm:$0xf]
      %v4935 = vld [vmem:[%s1 + $0x24] sm:$0xff]
      %v4936 = vld [vmem:[%s1 + $0x2c] sm:$0xff]
      %v4937 = vld [vmem:[%s1 + $0x34] sm:$0xff]
      %v4938 = vld [vmem:[%s1 + $0x3c] sm:$0xff]
      %v4939 = vld [vmem:[%s1 + $0x44] sm:$0xf]
      %v4940 = vld [vmem:[%s1 + $0x48] sm:$0xff]
      %v4941 = vld [vmem:[%s1 + $0x50] sm:$0xff]
      %v4942 = vld [vmem:[%s1 + $0x58] sm:$0xff]
      %v4943 = vld [vmem:[%s1 + $0x60] sm:$0xff]
      %v4944 = vld [vmem:[%s1 + $0x68] sm:$0xf]
      %v4945 = vld [vmem:[%s1 + $0x6c] sm:$0xff]
      %v4946 = vld [vmem:[%s1 + $0x74] sm:$0xff]
      %v4947 = vld [vmem:[%s1 + $0x7c] sm:$0xff]
      %v4948 = vld [vmem:[%s1 + $0x84] sm:$0xff]
      %v4949 = vld [vmem:[%s1 + $0x8c] sm:$0xf]
      %v4950 = vld [vmem:[%s1 + $0x90] sm:$0xff]
      %v4951 = vld [vmem:[%s1 + $0x98] sm:$0xff]
      %v4952 = vld [vmem:[%s1 + $0xa0] sm:$0xff]
      %v4953 = vld [vmem:[%s1 + $0xa8] sm:$0xff]
      %v4954 = vld [vmem:[%s1 + $0xb0] sm:$0xf]
      %v4955 = vld [vmem:[%s1 + $0xb4] sm:$0xff]
      %v4956 = vld [vmem:[%s1 + $0xbc] sm:$0xff]
      %v4957 = vld [vmem:[%s1 + $0xc4] sm:$0xff]
      %v4958 = vld [vmem:[%s1 + $0xcc] sm:$0xff]
      %v4959 = vld [vmem:[%s1 + $0xd4] sm:$0xf]
      %v4960 = vld [vmem:[%s1 + $0xd8] sm:$0xff]
      %v4961 = vld [vmem:[%s1 + $0xe0] sm:$0xff]
      %v4962 = vld [vmem:[%s1 + $0xe8] sm:$0xff]
      %v4963 = vld [vmem:[%s1 + $0xf0] sm:$0xff]
      %v4964 = vld [vmem:[%s1 + $0xf8] sm:$0xf]
      %v4965 = vld [vmem:[%s1 + $0xfc] sm:$0xff]
      %v4966 = vld [vmem:[%s1 + $0x104] sm:$0xff]
      %v4967 = vld [vmem:[%s1 + $0x10c] sm:$0xff]
      %v4968 = vld [vmem:[%s1 + $0x114] sm:$0xff]
      %v4969 = vld [vmem:[%s1 + $0x11c] sm:$0xf]
      %v4970 = vld [vmem:[%s1 + $0x120] sm:$0xff]
      %v4971 = vld [vmem:[%s1 + $0x128] sm:$0xff]
      %v4972 = vld [vmem:[%s1 + $0x130] sm:$0xff]
      %v4973 = vld [vmem:[%s1 + $0x138] sm:$0xff]
      %v4974 = vld [vmem:[%s1 + $0x140] sm:$0xf]
      %v5020 = vunpack.c.l.b16 %v4930
      %v5021 = vunpack.c.h.b16 %v4930
      %v5022 = vunpack.c.l.b16 %v4931
      %v5023 = vunpack.c.h.b16 %v4931
      %v5024 = vunpack.c.l.b16 %v4932
      %v5025 = vunpack.c.h.b16 %v4932
      %v5026 = vunpack.c.l.b16 %v4933
      %v5027 = vunpack.c.h.b16 %v4933
      %v5028 = vunpack.c.l.b16 %v4934
      %v5029 = vunpack.c.l.b16 %v4935
      %v5030 = vunpack.c.h.b16 %v4935
      %v5031 = vunpack.c.l.b16 %v4936
      %v5032 = vunpack.c.h.b16 %v4936
      %v5033 = vunpack.c.l.b16 %v4937
      %v5034 = vunpack.c.h.b16 %v4937
      %v5035 = vunpack.c.l.b16 %v4938
      %v5036 = vunpack.c.h.b16 %v4938
      %v5037 = vunpack.c.l.b16 %v4939
      %v5038 = vunpack.c.l.b16 %v4940
      %v5039 = vunpack.c.h.b16 %v4940
      %v5040 = vunpack.c.l.b16 %v4941
      %v5041 = vunpack.c.h.b16 %v4941
      %v5042 = vunpack.c.l.b16 %v4942
      %v5043 = vunpack.c.h.b16 %v4942
      %v5044 = vunpack.c.l.b16 %v4943
      %v5045 = vunpack.c.h.b16 %v4943
      %v5046 = vunpack.c.l.b16 %v4944
      %v5047 = vunpack.c.l.b16 %v4945
      %v5048 = vunpack.c.h.b16 %v4945
      %v5049 = vunpack.c.l.b16 %v4946
      %v5050 = vunpack.c.h.b16 %v4946
      %v5051 = vunpack.c.l.b16 %v4947
      %v5052 = vunpack.c.h.b16 %v4947
      %v5053 = vunpack.c.l.b16 %v4948
      %v5054 = vunpack.c.h.b16 %v4948
      %v5055 = vunpack.c.l.b16 %v4949
      %v5056 = vunpack.c.l.b16 %v4950
      %v5057 = vunpack.c.h.b16 %v4950
      %v5058 = vunpack.c.l.b16 %v4951
      %v5059 = vunpack.c.h.b16 %v4951
      %v5060 = vunpack.c.l.b16 %v4952
      %v5061 = vunpack.c.h.b16 %v4952
      %v5062 = vunpack.c.l.b16 %v4953
      %v5063 = vunpack.c.h.b16 %v4953
      %v5064 = vunpack.c.l.b16 %v4954
      %v5065 = vunpack.c.l.b16 %v4955
      %v5066 = vunpack.c.h.b16 %v4955
      %v5067 = vunpack.c.l.b16 %v4956
      %v5068 = vunpack.c.h.b16 %v4956
      %v5069 = vunpack.c.l.b16 %v4957
      %v5070 = vunpack.c.h.b16 %v4957
      %v5071 = vunpack.c.l.b16 %v4958
      %v5072 = vunpack.c.h.b16 %v4958
      %v5073 = vunpack.c.l.b16 %v4959
      %v5074 = vunpack.c.l.b16 %v4960
      %v5075 = vunpack.c.h.b16 %v4960
      %v5076 = vunpack.c.l.b16 %v4961
      %v5077 = vunpack.c.h.b16 %v4961
      %v5078 = vunpack.c.l.b16 %v4962
      %v5079 = vunpack.c.h.b16 %v4962
      %v5080 = vunpack.c.l.b16 %v4963
      %v5081 = vunpack.c.h.b16 %v4963
      %v5082 = vunpack.c.l.b16 %v4964
      %v5083 = vunpack.c.l.b16 %v4965
      %v5084 = vunpack.c.h.b16 %v4965
      %v5085 = vunpack.c.l.b16 %v4966
      %v5086 = vunpack.c.h.b16 %v4966
      %v5087 = vunpack.c.l.b16 %v4967
      %v5088 = vunpack.c.h.b16 %v4967
      %v5089 = vunpack.c.l.b16 %v4968
      %v5090 = vunpack.c.h.b16 %v4968
      %v5091 = vunpack.c.l.b16 %v4969
      %v5092 = vunpack.c.l.b16 %v4970
      %v5093 = vunpack.c.h.b16 %v4970
      %v5094 = vunpack.c.l.b16 %v4971
      %v5095 = vunpack.c.h.b16 %v4971
      %v5096 = vunpack.c.l.b16 %v4972
      %v5097 = vunpack.c.h.b16 %v4972
      %v5098 = vunpack.c.l.b16 %v4973
      %v5099 = vunpack.c.h.b16 %v4973
      %v5100 = vunpack.c.l.b16 %v4974
      %v5101 = vpack.c.b16 %v5029, %v5020
      %v5102 = vpack.c.b16 %v5030, %v5021
      %v5103 = vpack.c.b16 %v5031, %v5022
      %v5104 = vpack.c.b16 %v5032, %v5023
      %v5105 = vpack.c.b16 %v5033, %v5024
      %v5106 = vpack.c.b16 %v5034, %v5025
      %v5107 = vpack.c.b16 %v5035, %v5026
      %v5108 = vpack.c.b16 %v5036, %v5027
      %v5109 = vpack.c.b16 %v5037, %v5028
      %v5110 = vpack.c.b16 %v5047, %v5038
      %v5111 = vpack.c.b16 %v5048, %v5039
      %v5112 = vpack.c.b16 %v5049, %v5040
      %v5113 = vpack.c.b16 %v5050, %v5041
      %v5114 = vpack.c.b16 %v5051, %v5042
      %v5115 = vpack.c.b16 %v5052, %v5043
      %v5116 = vpack.c.b16 %v5053, %v5044
      %v5117 = vpack.c.b16 %v5054, %v5045
      %v5118 = vpack.c.b16 %v5055, %v5046
      %v5119 = vpack.c.b16 %v5065, %v5056
      %v5120 = vpack.c.b16 %v5066, %v5057
      %v5121 = vpack.c.b16 %v5067, %v5058
      %v5122 = vpack.c.b16 %v5068, %v5059
      %v5123 = vpack.c.b16 %v5069, %v5060
      %v5124 = vpack.c.b16 %v5070, %v5061
      %v5125 = vpack.c.b16 %v5071, %v5062
      %v5126 = vpack.c.b16 %v5072, %v5063
      %v5127 = vpack.c.b16 %v5073, %v5064
      %v5128 = vpack.c.b16 %v5083, %v5074
      %v5129 = vpack.c.b16 %v5084, %v5075
      %v5130 = vpack.c.b16 %v5085, %v5076
      %v5131 = vpack.c.b16 %v5086, %v5077
      %v5132 = vpack.c.b16 %v5087, %v5078
      %v5133 = vpack.c.b16 %v5088, %v5079
      %v5134 = vpack.c.b16 %v5089, %v5080
      %v5135 = vpack.c.b16 %v5090, %v5081
      %v5136 = vpack.c.b16 %v5091, %v5082
      %v5137 = vpack.c.b16 %v5092, %v5092
      %v5138 = vpack.c.b16 %v5093, %v5093
      %v5139 = vpack.c.b16 %v5094, %v5094
      %v5140 = vpack.c.b16 %v5095, %v5095
      %v5141 = vpack.c.b16 %v5096, %v5096
      %v5142 = vpack.c.b16 %v5097, %v5097
      %v5143 = vpack.c.b16 %v5098, %v5098
      %v5144 = vpack.c.b16 %v5099, %v5099
      %v5145 = vpack.c.b16 %v5100, %v5100
      %5191 = vmatprep.subr.bf16.mxu0 %v1841
      %5192 = vmatpush1.bf16.msra.mxu0 %v1337
      %5193 = vmatprep.subr.bf16.mxu0 %v1840
      %5194 = vmatpush1.bf16.msra.mxu0 %v1336
      %5195 = vmatprep.subr.bf16.mxu0 %v1839
      %5196 = vmatpush1.bf16.msra.mxu0 %v1335
      %5197 = vmatprep.subr.bf16.mxu0 %v1838
      %5198 = vmatpush1.bf16.msra.mxu0 %v1334
      %5199 = vmatprep.subr.bf16.mxu0 %v1837
      %5200 = vmatpush1.bf16.msra.mxu0 %v1333
      %5201 = vmatprep.subr.bf16.mxu0 %v1836
      %5202 = vmatpush1.bf16.msra.mxu0 %v1332
      %5203 = vmatprep.subr.bf16.mxu0 %v1835
      %5204 = vmatpush1.bf16.msra.mxu0 %v1331
      %5205 = vmatprep.subr.bf16.mxu0 %v1834
      %5206 = vmatpush1.bf16.msra.mxu0 %v1330
      %5207 = vmatprep.subr.bf16.mxu0 %v1849
      %5208 = vmatpush2.bf16.msra.mxu0 %v1345
      %5209 = vmatprep.subr.bf16.mxu0 %v1848
      %5210 = vmatpush2.bf16.msra.mxu0 %v1344
      %5211 = vmatprep.subr.bf16.mxu0 %v1847
      %5212 = vmatpush2.bf16.msra.mxu0 %v1343
      %5213 = vmatprep.subr.bf16.mxu0 %v1846
      %5214 = vmatpush2.bf16.msra.mxu0 %v1342
      %5215 = vmatprep.subr.bf16.mxu0 %v1845
      %5216 = vmatpush2.bf16.msra.mxu0 %v1341
      %5217 = vmatprep.subr.bf16.mxu0 %v1844
      %5218 = vmatpush2.bf16.msra.mxu0 %v1340
      %5219 = vmatprep.subr.bf16.mxu0 %v1843
      %5220 = vmatpush2.bf16.msra.mxu0 %v1339
      %5221 = vmatprep.subr.bf16.mxu0 %v1842
      %5222 = vmatpush2.bf16.msra.mxu0 %v1338
      %5223 = vmatprep.mubr.bf16.mxu0 %v5102
      %5224 = vmatmul.mubr.bf16.gmra.mxu0 %v5101
      %v5225 = vpop.f32.mrf.mxu0
      %v5226 = vadd.f32 0.0, %v5225
      %v5227 = vpop.f32.mrf.mxu0
      %v5228 = vadd.f32 0.0, %v5227
      %v5229 = vpop.f32.mrf.mxu0
      %v5230 = vadd.f32 0.0, %v5229
      %v5231 = vpop.f32.mrf.mxu0
      %v5232 = vadd.f32 0.0, %v5231
      %5233 = vmatprep.mubr.bf16.mxu0 %v5111
      %5234 = vmatmul.mubr.bf16.gmra.mxu0 %v5110
      %v5235 = vpop.f32.mrf.mxu0
      %v5236 = vadd.f32 0.0, %v5235
      %v5237 = vpop.f32.mrf.mxu0
      %v5238 = vadd.f32 0.0, %v5237
      %v5239 = vpop.f32.mrf.mxu0
      %v5240 = vadd.f32 0.0, %v5239
      %v5241 = vpop.f32.mrf.mxu0
      %v5242 = vadd.f32 0.0, %v5241
      %5243 = vmatprep.mubr.bf16.mxu0 %v5120
      %5244 = vmatmul.mubr.bf16.gmra.mxu0 %v5119
      %v5245 = vpop.f32.mrf.mxu0
      %v5246 = vadd.f32 0.0, %v5245
      %v5247 = vpop.f32.mrf.mxu0
      %v5248 = vadd.f32 0.0, %v5247
      %v5249 = vpop.f32.mrf.mxu0
      %v5250 = vadd.f32 0.0, %v5249
      %v5251 = vpop.f32.mrf.mxu0
      %v5252 = vadd.f32 0.0, %v5251
      %5253 = vmatprep.mubr.bf16.mxu0 %v5129
      %5254 = vmatmul.mubr.bf16.gmra.mxu0 %v5128
      %v5255 = vpop.f32.mrf.mxu0
      %v5256 = vadd.f32 0.0, %v5255
      %v5257 = vpop.f32.mrf.mxu0
      %v5258 = vadd.f32 0.0, %v5257
      %v5259 = vpop.f32.mrf.mxu0
      %v5260 = vadd.f32 0.0, %v5259
      %v5261 = vpop.f32.mrf.mxu0
      %v5262 = vadd.f32 0.0, %v5261
      %5263 = vmatprep.mubr.bf16.mxu0 %v5138
      %5264 = vmatmul.mubr.bf16.gmra.mxu0 %v5137
      %v5265 = vpop.f32.mrf.mxu0
      %v5266 = vadd.f32 0.0, %v5265
      %v5267 = vpop.f32.mrf.mxu0
      %v5268 = vadd.f32 0.0, %v5267
      %v5269 = vpop.f32.mrf.mxu0
      %v5270 = vpop.f32.mrf.mxu0
      %5271 = vdwg.mxu0
      %5272 = vmatprep.subr.bf16.mxu0 %v1857
      %5273 = vmatpush1.bf16.msra.mxu0 %v1353
      %5274 = vmatprep.subr.bf16.mxu0 %v1856
      %5275 = vmatpush1.bf16.msra.mxu0 %v1352
      %5276 = vmatprep.subr.bf16.mxu0 %v1855
      %5277 = vmatpush1.bf16.msra.mxu0 %v1351
      %5278 = vmatprep.subr.bf16.mxu0 %v1854
      %5279 = vmatpush1.bf16.msra.mxu0 %v1350
      %5280 = vmatprep.subr.bf16.mxu0 %v1853
      %5281 = vmatpush1.bf16.msra.mxu0 %v1349
      %5282 = vmatprep.subr.bf16.mxu0 %v1852
      %5283 = vmatpush1.bf16.msra.mxu0 %v1348
      %5284 = vmatprep.subr.bf16.mxu0 %v1851
      %5285 = vmatpush1.bf16.msra.mxu0 %v1347
      %5286 = vmatprep.subr.bf16.mxu0 %v1850
      %5287 = vmatpush1.bf16.msra.mxu0 %v1346
      %5288 = vmatprep.subr.bf16.mxu0 %v1865
      %5289 = vmatpush2.bf16.msra.mxu0 %v1361
      %5290 = vmatprep.subr.bf16.mxu0 %v1864
      %5291 = vmatpush2.bf16.msra.mxu0 %v1360
      %5292 = vmatprep.subr.bf16.mxu0 %v1863
      %5293 = vmatpush2.bf16.msra.mxu0 %v1359
      %5294 = vmatprep.subr.bf16.mxu0 %v1862
      %5295 = vmatpush2.bf16.msra.mxu0 %v1358
      %5296 = vmatprep.subr.bf16.mxu0 %v1861
      %5297 = vmatpush2.bf16.msra.mxu0 %v1357
      %5298 = vmatprep.subr.bf16.mxu0 %v1860
      %5299 = vmatpush2.bf16.msra.mxu0 %v1356
      %5300 = vmatprep.subr.bf16.mxu0 %v1859
      %5301 = vmatpush2.bf16.msra.mxu0 %v1355
      %5302 = vmatprep.subr.bf16.mxu0 %v1858
      %5303 = vmatpush2.bf16.msra.mxu0 %v1354
      %5304 = vmatprep.mubr.bf16.mxu0 %v5104
      %5305 = vmatmul.mubr.bf16.gmra.mxu0 %v5103
      %v5306 = vpop.f32.mrf.mxu0
      %v5307 = vadd.f32 %v5226, %v5306
      %v5308 = vpop.f32.mrf.mxu0
      %v5309 = vadd.f32 %v5228, %v5308
      %v5310 = vpop.f32.mrf.mxu0
      %v5311 = vadd.f32 %v5230, %v5310
      %v5312 = vpop.f32.mrf.mxu0
      %v5313 = vadd.f32 %v5232, %v5312
      %5314 = vmatprep.mubr.bf16.mxu0 %v5113
      %5315 = vmatmul.mubr.bf16.gmra.mxu0 %v5112
      %v5316 = vpop.f32.mrf.mxu0
      %v5317 = vadd.f32 %v5236, %v5316
      %v5318 = vpop.f32.mrf.mxu0
      %v5319 = vadd.f32 %v5238, %v5318
      %v5320 = vpop.f32.mrf.mxu0
      %v5321 = vadd.f32 %v5240, %v5320
      %v5322 = vpop.f32.mrf.mxu0
      %v5323 = vadd.f32 %v5242, %v5322
      %5324 = vmatprep.mubr.bf16.mxu0 %v5122
      %5325 = vmatmul.mubr.bf16.gmra.mxu0 %v5121
      %v5326 = vpop.f32.mrf.mxu0
      %v5327 = vadd.f32 %v5246, %v5326
      %v5328 = vpop.f32.mrf.mxu0
      %v5329 = vadd.f32 %v5248, %v5328
      %v5330 = vpop.f32.mrf.mxu0
      %v5331 = vadd.f32 %v5250, %v5330
      %v5332 = vpop.f32.mrf.mxu0
      %v5333 = vadd.f32 %v5252, %v5332
      %5334 = vmatprep.mubr.bf16.mxu0 %v5131
      %5335 = vmatmul.mubr.bf16.gmra.mxu0 %v5130
      %v5336 = vpop.f32.mrf.mxu0
      %v5337 = vadd.f32 %v5256, %v5336
      %v5338 = vpop.f32.mrf.mxu0
      %v5339 = vadd.f32 %v5258, %v5338
      %v5340 = vpop.f32.mrf.mxu0
      %v5341 = vadd.f32 %v5260, %v5340
      %v5342 = vpop.f32.mrf.mxu0
      %v5343 = vadd.f32 %v5262, %v5342
      %5344 = vmatprep.mubr.bf16.mxu0 %v5140
      %5345 = vmatmul.mubr.bf16.gmra.mxu0 %v5139
      %v5346 = vpop.f32.mrf.mxu0
      %v5347 = vadd.f32 %v5266, %v5346
      %v5348 = vpop.f32.mrf.mxu0
      %v5349 = vadd.f32 %v5268, %v5348
      %v5350 = vpop.f32.mrf.mxu0
      %v5351 = vpop.f32.mrf.mxu0
      %5352 = vdwg.mxu0
      %5353 = vmatprep.subr.bf16.mxu0 %v1873
      %5354 = vmatpush1.bf16.msra.mxu0 %v1369
      %5355 = vmatprep.subr.bf16.mxu0 %v1872
      %5356 = vmatpush1.bf16.msra.mxu0 %v1368
      %5357 = vmatprep.subr.bf16.mxu0 %v1871
      %5358 = vmatpush1.bf16.msra.mxu0 %v1367
      %5359 = vmatprep.subr.bf16.mxu0 %v1870
      %5360 = vmatpush1.bf16.msra.mxu0 %v1366
      %5361 = vmatprep.subr.bf16.mxu0 %v1869
      %5362 = vmatpush1.bf16.msra.mxu0 %v1365
      %5363 = vmatprep.subr.bf16.mxu0 %v1868
      %5364 = vmatpush1.bf16.msra.mxu0 %v1364
      %5365 = vmatprep.subr.bf16.mxu0 %v1867
      %5366 = vmatpush1.bf16.msra.mxu0 %v1363
      %5367 = vmatprep.subr.bf16.mxu0 %v1866
      %5368 = vmatpush1.bf16.msra.mxu0 %v1362
      %5369 = vmatprep.subr.bf16.mxu0 %v1881
      %5370 = vmatpush2.bf16.msra.mxu0 %v1377
      %5371 = vmatprep.subr.bf16.mxu0 %v1880
      %5372 = vmatpush2.bf16.msra.mxu0 %v1376
      %5373 = vmatprep.subr.bf16.mxu0 %v1879
      %5374 = vmatpush2.bf16.msra.mxu0 %v1375
      %5375 = vmatprep.subr.bf16.mxu0 %v1878
      %5376 = vmatpush2.bf16.msra.mxu0 %v1374
      %5377 = vmatprep.subr.bf16.mxu0 %v1877
      %5378 = vmatpush2.bf16.msra.mxu0 %v1373
      %5379 = vmatprep.subr.bf16.mxu0 %v1876
      %5380 = vmatpush2.bf16.msra.mxu0 %v1372
      %5381 = vmatprep.subr.bf16.mxu0 %v1875
      %5382 = vmatpush2.bf16.msra.mxu0 %v1371
      %5383 = vmatprep.subr.bf16.mxu0 %v1874
      %5384 = vmatpush2.bf16.msra.mxu0 %v1370
      %5385 = vmatprep.mubr.bf16.mxu0 %v5106
      %5386 = vmatmul.mubr.bf16.gmra.mxu0 %v5105
      %v5387 = vpop.f32.mrf.mxu0
      %v5388 = vadd.f32 %v5307, %v5387
      %v5389 = vpop.f32.mrf.mxu0
      %v5390 = vadd.f32 %v5309, %v5389
      %v5391 = vpop.f32.mrf.mxu0
      %v5392 = vadd.f32 %v5311, %v5391
      %v5393 = vpop.f32.mrf.mxu0
      %v5394 = vadd.f32 %v5313, %v5393
      %5395 = vmatprep.mubr.bf16.mxu0 %v5115
      %5396 = vmatmul.mubr.bf16.gmra.mxu0 %v5114
      %v5397 = vpop.f32.mrf.mxu0
      %v5398 = vadd.f32 %v5317, %v5397
      %v5399 = vpop.f32.mrf.mxu0
      %v5400 = vadd.f32 %v5319, %v5399
      %v5401 = vpop.f32.mrf.mxu0
      %v5402 = vadd.f32 %v5321, %v5401
      %v5403 = vpop.f32.mrf.mxu0
      %v5404 = vadd.f32 %v5323, %v5403
      %5405 = vmatprep.mubr.bf16.mxu0 %v5124
      %5406 = vmatmul.mubr.bf16.gmra.mxu0 %v5123
      %v5407 = vpop.f32.mrf.mxu0
      %v5408 = vadd.f32 %v5327, %v5407
      %v5409 = vpop.f32.mrf.mxu0
      %v5410 = vadd.f32 %v5329, %v5409
      %v5411 = vpop.f32.mrf.mxu0
      %v5412 = vadd.f32 %v5331, %v5411
      %v5413 = vpop.f32.mrf.mxu0
      %v5414 = vadd.f32 %v5333, %v5413
      %5415 = vmatprep.mubr.bf16.mxu0 %v5133
      %5416 = vmatmul.mubr.bf16.gmra.mxu0 %v5132
      %v5417 = vpop.f32.mrf.mxu0
      %v5418 = vadd.f32 %v5337, %v5417
      %v5419 = vpop.f32.mrf.mxu0
      %v5420 = vadd.f32 %v5339, %v5419
      %v5421 = vpop.f32.mrf.mxu0
      %v5422 = vadd.f32 %v5341, %v5421
      %v5423 = vpop.f32.mrf.mxu0
      %v5424 = vadd.f32 %v5343, %v5423
      %5425 = vmatprep.mubr.bf16.mxu0 %v5142
      %5426 = vmatmul.mubr.bf16.gmra.mxu0 %v5141
      %v5427 = vpop.f32.mrf.mxu0
      %v5428 = vadd.f32 %v5347, %v5427
      %v5429 = vpop.f32.mrf.mxu0
      %v5430 = vadd.f32 %v5349, %v5429
      %v5431 = vpop.f32.mrf.mxu0
      %v5432 = vpop.f32.mrf.mxu0
      %5433 = vdwg.mxu0
      %5434 = vmatprep.subr.bf16.mxu0 %v1889
      %5435 = vmatpush1.bf16.msra.mxu0 %v1385
      %5436 = vmatprep.subr.bf16.mxu0 %v1888
      %5437 = vmatpush1.bf16.msra.mxu0 %v1384
      %5438 = vmatprep.subr.bf16.mxu0 %v1887
      %5439 = vmatpush1.bf16.msra.mxu0 %v1383
      %5440 = vmatprep.subr.bf16.mxu0 %v1886
      %5441 = vmatpush1.bf16.msra.mxu0 %v1382
      %5442 = vmatprep.subr.bf16.mxu0 %v1885
      %5443 = vmatpush1.bf16.msra.mxu0 %v1381
      %5444 = vmatprep.subr.bf16.mxu0 %v1884
      %5445 = vmatpush1.bf16.msra.mxu0 %v1380
      %5446 = vmatprep.subr.bf16.mxu0 %v1883
      %5447 = vmatpush1.bf16.msra.mxu0 %v1379
      %5448 = vmatprep.subr.bf16.mxu0 %v1882
      %5449 = vmatpush1.bf16.msra.mxu0 %v1378
      %5450 = vmatprep.subr.bf16.mxu0 %v1897
      %5451 = vmatpush2.bf16.msra.mxu0 %v1393
      %5452 = vmatprep.subr.bf16.mxu0 %v1896
      %5453 = vmatpush2.bf16.msra.mxu0 %v1392
      %5454 = vmatprep.subr.bf16.mxu0 %v1895
      %5455 = vmatpush2.bf16.msra.mxu0 %v1391
      %5456 = vmatprep.subr.bf16.mxu0 %v1894
      %5457 = vmatpush2.bf16.msra.mxu0 %v1390
      %5458 = vmatprep.subr.bf16.mxu0 %v1893
      %5459 = vmatpush2.bf16.msra.mxu0 %v1389
      %5460 = vmatprep.subr.bf16.mxu0 %v1892
      %5461 = vmatpush2.bf16.msra.mxu0 %v1388
      %5462 = vmatprep.subr.bf16.mxu0 %v1891
      %5463 = vmatpush2.bf16.msra.mxu0 %v1387
      %5464 = vmatprep.subr.bf16.mxu0 %v1890
      %5465 = vmatpush2.bf16.msra.mxu0 %v1386
      %5466 = vmatprep.mubr.bf16.mxu0 %v5108
      %5467 = vmatmul.mubr.bf16.gmra.mxu0 %v5107
      %v5468 = vpop.f32.mrf.mxu0
      %v5469 = vadd.f32 %v5388, %v5468
      %v5470 = vpop.f32.mrf.mxu0
      %v5471 = vadd.f32 %v5390, %v5470
      %v5472 = vpop.f32.mrf.mxu0
      %v5473 = vadd.f32 %v5392, %v5472
      %v5474 = vpop.f32.mrf.mxu0
      %v5475 = vadd.f32 %v5394, %v5474
      %5476 = vmatprep.mubr.bf16.mxu0 %v5117
      %5477 = vmatmul.mubr.bf16.gmra.mxu0 %v5116
      %v5478 = vpop.f32.mrf.mxu0
      %v5479 = vadd.f32 %v5398, %v5478
      %v5480 = vpop.f32.mrf.mxu0
      %v5481 = vadd.f32 %v5400, %v5480
      %v5482 = vpop.f32.mrf.mxu0
      %v5483 = vadd.f32 %v5402, %v5482
      %v5484 = vpop.f32.mrf.mxu0
      %v5485 = vadd.f32 %v5404, %v5484
      %5486 = vmatprep.mubr.bf16.mxu0 %v5126
      %5487 = vmatmul.mubr.bf16.gmra.mxu0 %v5125
      %v5488 = vpop.f32.mrf.mxu0
      %v5489 = vadd.f32 %v5408, %v5488
      %v5490 = vpop.f32.mrf.mxu0
      %v5491 = vadd.f32 %v5410, %v5490
      %v5492 = vpop.f32.mrf.mxu0
      %v5493 = vadd.f32 %v5412, %v5492
      %v5494 = vpop.f32.mrf.mxu0
      %v5495 = vadd.f32 %v5414, %v5494
      %5496 = vmatprep.mubr.bf16.mxu0 %v5135
      %5497 = vmatmul.mubr.bf16.gmra.mxu0 %v5134
      %v5498 = vpop.f32.mrf.mxu0
      %v5499 = vadd.f32 %v5418, %v5498
      %v5500 = vpop.f32.mrf.mxu0
      %v5501 = vadd.f32 %v5420, %v5500
      %v5502 = vpop.f32.mrf.mxu0
      %v5503 = vadd.f32 %v5422, %v5502
      %v5504 = vpop.f32.mrf.mxu0
      %v5505 = vadd.f32 %v5424, %v5504
      %5506 = vmatprep.mubr.bf16.mxu0 %v5144
      %5507 = vmatmul.mubr.bf16.gmra.mxu0 %v5143
      %v5508 = vpop.f32.mrf.mxu0
      %v5509 = vadd.f32 %v5428, %v5508
      %v5510 = vpop.f32.mrf.mxu0
      %v5511 = vadd.f32 %v5430, %v5510
      %v5512 = vpop.f32.mrf.mxu0
      %v5513 = vpop.f32.mrf.mxu0
      %5514 = vdwg.mxu0
      %5515 = vmatprep.subr.bf16.mxu0 %v1905
      %5516 = vmatpush1.bf16.msra.mxu0 %v1401
      %5517 = vmatprep.subr.bf16.mxu0 %v1904
      %5518 = vmatpush1.bf16.msra.mxu0 %v1400
      %5519 = vmatprep.subr.bf16.mxu0 %v1903
      %5520 = vmatpush1.bf16.msra.mxu0 %v1399
      %5521 = vmatprep.subr.bf16.mxu0 %v1902
      %5522 = vmatpush1.bf16.msra.mxu0 %v1398
      %5523 = vmatprep.subr.bf16.mxu0 %v1901
      %5524 = vmatpush1.bf16.msra.mxu0 %v1397
      %5525 = vmatprep.subr.bf16.mxu0 %v1900
      %5526 = vmatpush1.bf16.msra.mxu0 %v1396
      %5527 = vmatprep.subr.bf16.mxu0 %v1899
      %5528 = vmatpush1.bf16.msra.mxu0 %v1395
      %5529 = vmatprep.subr.bf16.mxu0 %v1898
      %5530 = vmatpush1.bf16.msra.mxu0 %v1394
      %5531 = vmatprep.subr.bf16.mxu0 0
      %5532 = vmatpush2.bf16.msra.mxu0 0
      %5533 = vmatprep.subr.bf16.mxu0 0
      %5534 = vmatpush2.bf16.msra.mxu0 0
      %5535 = vmatprep.subr.bf16.mxu0 0
      %5536 = vmatpush2.bf16.msra.mxu0 0
      %5537 = vmatprep.subr.bf16.mxu0 0
      %5538 = vmatpush2.bf16.msra.mxu0 0
      %5539 = vmatprep.subr.bf16.mxu0 0
      %5540 = vmatpush2.bf16.msra.mxu0 0
      %5541 = vmatprep.subr.bf16.mxu0 0
      %5542 = vmatpush2.bf16.msra.mxu0 0
      %5543 = vmatprep.subr.bf16.mxu0 0
      %5544 = vmatpush2.bf16.msra.mxu0 0
      %5545 = vmatprep.subr.bf16.mxu0 0
      %5546 = vmatpush2.bf16.msra.mxu0 0
      %5547 = vmatprep.mubr.bf16.mxu0 0
      %5548 = vmatmul.mubr.bf16.gmra.mxu0 %v5109
      %v5549 = vpop.f32.mrf.mxu0
      %v5550 = vadd.f32 %v5469, %v5549
      %v5551 = vpop.f32.mrf.mxu0
      %v5552 = vadd.f32 %v5471, %v5551
      %v5553 = vpop.f32.mrf.mxu0
      %v5554 = vadd.f32 %v5473, %v5553
      %v5555 = vpop.f32.mrf.mxu0
      %v5556 = vadd.f32 %v5475, %v5555
      %5557 = vmatprep.mubr.bf16.mxu0 0
      %5558 = vmatmul.mubr.bf16.gmra.mxu0 %v5118
      %v5559 = vpop.f32.mrf.mxu0
      %v5560 = vadd.f32 %v5479, %v5559
      %v5561 = vpop.f32.mrf.mxu0
      %v5562 = vadd.f32 %v5481, %v5561
      %v5563 = vpop.f32.mrf.mxu0
      %v5564 = vadd.f32 %v5483, %v5563
      %v5565 = vpop.f32.mrf.mxu0
      %v5566 = vadd.f32 %v5485, %v5565
      %5567 = vmatprep.mubr.bf16.mxu0 0
      %5568 = vmatmul.mubr.bf16.gmra.mxu0 %v5127
      %v5569 = vpop.f32.mrf.mxu0
      %v5570 = vadd.f32 %v5489, %v5569
      %v5571 = vpop.f32.mrf.mxu0
      %v5572 = vadd.f32 %v5491, %v5571
      %v5573 = vpop.f32.mrf.mxu0
      %v5574 = vadd.f32 %v5493, %v5573
      %v5575 = vpop.f32.mrf.mxu0
      %v5576 = vadd.f32 %v5495, %v5575
      %5577 = vmatprep.mubr.bf16.mxu0 0
      %5578 = vmatmul.mubr.bf16.gmra.mxu0 %v5136
      %v5579 = vpop.f32.mrf.mxu0
      %v5580 = vadd.f32 %v5499, %v5579
      %v5581 = vpop.f32.mrf.mxu0
      %v5582 = vadd.f32 %v5501, %v5581
      %v5583 = vpop.f32.mrf.mxu0
      %v5584 = vadd.f32 %v5503, %v5583
      %v5585 = vpop.f32.mrf.mxu0
      %v5586 = vadd.f32 %v5505, %v5585
      %5587 = vmatprep.mubr.bf16.mxu0 0
      %5588 = vmatmul.mubr.bf16.gmra.mxu0 %v5145
      %v5589 = vpop.f32.mrf.mxu0
      %v5590 = vadd.f32 %v5509, %v5589
      %v5591 = vpop.f32.mrf.mxu0
      %v5592 = vadd.f32 %v5511, %v5591
      %v5593 = vpop.f32.mrf.mxu0
      %v5594 = vpop.f32.mrf.mxu0
      %5595 = vdwg.mxu0
      %5596 = vmatprep.subr.bf16.mxu0 %v2849
      %5597 = vmatpush1.bf16.msra.mxu0 %v2345
      %5598 = vmatprep.subr.bf16.mxu0 %v2848
      %5599 = vmatpush1.bf16.msra.mxu0 %v2344
      %5600 = vmatprep.subr.bf16.mxu0 %v2847
      %5601 = vmatpush1.bf16.msra.mxu0 %v2343
      %5602 = vmatprep.subr.bf16.mxu0 %v2846
      %5603 = vmatpush1.bf16.msra.mxu0 %v2342
      %5604 = vmatprep.subr.bf16.mxu0 %v2845
      %5605 = vmatpush1.bf16.msra.mxu0 %v2341
      %5606 = vmatprep.subr.bf16.mxu0 %v2844
      %5607 = vmatpush1.bf16.msra.mxu0 %v2340
      %5608 = vmatprep.subr.bf16.mxu0 %v2843
      %5609 = vmatpush1.bf16.msra.mxu0 %v2339
      %5610 = vmatprep.subr.bf16.mxu0 %v2842
      %5611 = vmatpush1.bf16.msra.mxu0 %v2338
      %5612 = vmatprep.subr.bf16.mxu0 %v2857
      %5613 = vmatpush2.bf16.msra.mxu0 %v2353
      %5614 = vmatprep.subr.bf16.mxu0 %v2856
      %5615 = vmatpush2.bf16.msra.mxu0 %v2352
      %5616 = vmatprep.subr.bf16.mxu0 %v2855
      %5617 = vmatpush2.bf16.msra.mxu0 %v2351
      %5618 = vmatprep.subr.bf16.mxu0 %v2854
      %5619 = vmatpush2.bf16.msra.mxu0 %v2350
      %5620 = vmatprep.subr.bf16.mxu0 %v2853
      %5621 = vmatpush2.bf16.msra.mxu0 %v2349
      %5622 = vmatprep.subr.bf16.mxu0 %v2852
      %5623 = vmatpush2.bf16.msra.mxu0 %v2348
      %5624 = vmatprep.subr.bf16.mxu0 %v2851
      %5625 = vmatpush2.bf16.msra.mxu0 %v2347
      %5626 = vmatprep.subr.bf16.mxu0 %v2850
      %5627 = vmatpush2.bf16.msra.mxu0 %v2346
      %5628 = vmatprep.mubr.bf16.mxu0 %v5102
      %5629 = vmatmul.mubr.bf16.gmra.mxu0 %v5101
      %v5630 = vpop.f32.mrf.mxu0
      %v5631 = vadd.f32 0.0, %v5630
      %v5632 = vpop.f32.mrf.mxu0
      %v5633 = vadd.f32 0.0, %v5632
      %v5634 = vpop.f32.mrf.mxu0
      %v5635 = vadd.f32 0.0, %v5634
      %v5636 = vpop.f32.mrf.mxu0
      %v5637 = vadd.f32 0.0, %v5636
      %5638 = vmatprep.mubr.bf16.mxu0 %v5111
      %5639 = vmatmul.mubr.bf16.gmra.mxu0 %v5110
      %v5640 = vpop.f32.mrf.mxu0
      %v5641 = vadd.f32 0.0, %v5640
      %v5642 = vpop.f32.mrf.mxu0
      %v5643 = vadd.f32 0.0, %v5642
      %v5644 = vpop.f32.mrf.mxu0
      %v5645 = vadd.f32 0.0, %v5644
      %v5646 = vpop.f32.mrf.mxu0
      %v5647 = vadd.f32 0.0, %v5646
      %5648 = vmatprep.mubr.bf16.mxu0 %v5120
      %5649 = vmatmul.mubr.bf16.gmra.mxu0 %v5119
      %v5650 = vpop.f32.mrf.mxu0
      %v5651 = vadd.f32 0.0, %v5650
      %v5652 = vpop.f32.mrf.mxu0
      %v5653 = vadd.f32 0.0, %v5652
      %v5654 = vpop.f32.mrf.mxu0
      %v5655 = vadd.f32 0.0, %v5654
      %v5656 = vpop.f32.mrf.mxu0
      %v5657 = vadd.f32 0.0, %v5656
      %5658 = vmatprep.mubr.bf16.mxu0 %v5129
      %5659 = vmatmul.mubr.bf16.gmra.mxu0 %v5128
      %v5660 = vpop.f32.mrf.mxu0
      %v5661 = vadd.f32 0.0, %v5660
      %v5662 = vpop.f32.mrf.mxu0
      %v5663 = vadd.f32 0.0, %v5662
      %v5664 = vpop.f32.mrf.mxu0
      %v5665 = vadd.f32 0.0, %v5664
      %v5666 = vpop.f32.mrf.mxu0
      %v5667 = vadd.f32 0.0, %v5666
      %5668 = vmatprep.mubr.bf16.mxu0 %v5138
      %5669 = vmatmul.mubr.bf16.gmra.mxu0 %v5137
      %v5670 = vpop.f32.mrf.mxu0
      %v5671 = vadd.f32 0.0, %v5670
      %v5672 = vpop.f32.mrf.mxu0
      %v5673 = vadd.f32 0.0, %v5672
      %v5674 = vpop.f32.mrf.mxu0
      %v5675 = vpop.f32.mrf.mxu0
      %5676 = vdwg.mxu0
      %5677 = vmatprep.subr.bf16.mxu0 %v2865
      %5678 = vmatpush1.bf16.msra.mxu0 %v2361
      %5679 = vmatprep.subr.bf16.mxu0 %v2864
      %5680 = vmatpush1.bf16.msra.mxu0 %v2360
      %5681 = vmatprep.subr.bf16.mxu0 %v2863
      %5682 = vmatpush1.bf16.msra.mxu0 %v2359
      %5683 = vmatprep.subr.bf16.mxu0 %v2862
      %5684 = vmatpush1.bf16.msra.mxu0 %v2358
      %5685 = vmatprep.subr.bf16.mxu0 %v2861
      %5686 = vmatpush1.bf16.msra.mxu0 %v2357
      %5687 = vmatprep.subr.bf16.mxu0 %v2860
      %5688 = vmatpush1.bf16.msra.mxu0 %v2356
      %5689 = vmatprep.subr.bf16.mxu0 %v2859
      %5690 = vmatpush1.bf16.msra.mxu0 %v2355
      %5691 = vmatprep.subr.bf16.mxu0 %v2858
      %5692 = vmatpush1.bf16.msra.mxu0 %v2354
      %5693 = vmatprep.subr.bf16.mxu0 %v2873
      %5694 = vmatpush2.bf16.msra.mxu0 %v2369
      %5695 = vmatprep.subr.bf16.mxu0 %v2872
      %5696 = vmatpush2.bf16.msra.mxu0 %v2368
      %5697 = vmatprep.subr.bf16.mxu0 %v2871
      %5698 = vmatpush2.bf16.msra.mxu0 %v2367
      %5699 = vmatprep.subr.bf16.mxu0 %v2870
      %5700 = vmatpush2.bf16.msra.mxu0 %v2366
      %5701 = vmatprep.subr.bf16.mxu0 %v2869
      %5702 = vmatpush2.bf16.msra.mxu0 %v2365
      %5703 = vmatprep.subr.bf16.mxu0 %v2868
      %5704 = vmatpush2.bf16.msra.mxu0 %v2364
      %5705 = vmatprep.subr.bf16.mxu0 %v2867
      %5706 = vmatpush2.bf16.msra.mxu0 %v2363
      %5707 = vmatprep.subr.bf16.mxu0 %v2866
      %5708 = vmatpush2.bf16.msra.mxu0 %v2362
      %5709 = vmatprep.mubr.bf16.mxu0 %v5104
      %5710 = vmatmul.mubr.bf16.gmra.mxu0 %v5103
      %v5711 = vpop.f32.mrf.mxu0
      %v5712 = vadd.f32 %v5631, %v5711
      %v5713 = vpop.f32.mrf.mxu0
      %v5714 = vadd.f32 %v5633, %v5713
      %v5715 = vpop.f32.mrf.mxu0
      %v5716 = vadd.f32 %v5635, %v5715
      %v5717 = vpop.f32.mrf.mxu0
      %v5718 = vadd.f32 %v5637, %v5717
      %5719 = vmatprep.mubr.bf16.mxu0 %v5113
      %5720 = vmatmul.mubr.bf16.gmra.mxu0 %v5112
      %v5721 = vpop.f32.mrf.mxu0
      %v5722 = vadd.f32 %v5641, %v5721
      %v5723 = vpop.f32.mrf.mxu0
      %v5724 = vadd.f32 %v5643, %v5723
      %v5725 = vpop.f32.mrf.mxu0
      %v5726 = vadd.f32 %v5645, %v5725
      %v5727 = vpop.f32.mrf.mxu0
      %v5728 = vadd.f32 %v5647, %v5727
      %5729 = vmatprep.mubr.bf16.mxu0 %v5122
      %5730 = vmatmul.mubr.bf16.gmra.mxu0 %v5121
      %v5731 = vpop.f32.mrf.mxu0
      %v5732 = vadd.f32 %v5651, %v5731
      %v5733 = vpop.f32.mrf.mxu0
      %v5734 = vadd.f32 %v5653, %v5733
      %v5735 = vpop.f32.mrf.mxu0
      %v5736 = vadd.f32 %v5655, %v5735
      %v5737 = vpop.f32.mrf.mxu0
      %v5738 = vadd.f32 %v5657, %v5737
      %5739 = vmatprep.mubr.bf16.mxu0 %v5131
      %5740 = vmatmul.mubr.bf16.gmra.mxu0 %v5130
      %v5741 = vpop.f32.mrf.mxu0
      %v5742 = vadd.f32 %v5661, %v5741
      %v5743 = vpop.f32.mrf.mxu0
      %v5744 = vadd.f32 %v5663, %v5743
      %v5745 = vpop.f32.mrf.mxu0
      %v5746 = vadd.f32 %v5665, %v5745
      %v5747 = vpop.f32.mrf.mxu0
      %v5748 = vadd.f32 %v5667, %v5747
      %5749 = vmatprep.mubr.bf16.mxu0 %v5140
      %5750 = vmatmul.mubr.bf16.gmra.mxu0 %v5139
      %v5751 = vpop.f32.mrf.mxu0
      %v5752 = vadd.f32 %v5671, %v5751
      %v5753 = vpop.f32.mrf.mxu0
      %v5754 = vadd.f32 %v5673, %v5753
      %v5755 = vpop.f32.mrf.mxu0
      %v5756 = vpop.f32.mrf.mxu0
      %5757 = vdwg.mxu0
      %5758 = vmatprep.subr.bf16.mxu0 %v2881
      %5759 = vmatpush1.bf16.msra.mxu0 %v2377
      %5760 = vmatprep.subr.bf16.mxu0 %v2880
      %5761 = vmatpush1.bf16.msra.mxu0 %v2376
      %5762 = vmatprep.subr.bf16.mxu0 %v2879
      %5763 = vmatpush1.bf16.msra.mxu0 %v2375
      %5764 = vmatprep.subr.bf16.mxu0 %v2878
      %5765 = vmatpush1.bf16.msra.mxu0 %v2374
      %5766 = vmatprep.subr.bf16.mxu0 %v2877
      %5767 = vmatpush1.bf16.msra.mxu0 %v2373
      %5768 = vmatprep.subr.bf16.mxu0 %v2876
      %5769 = vmatpush1.bf16.msra.mxu0 %v2372
      %5770 = vmatprep.subr.bf16.mxu0 %v2875
      %5771 = vmatpush1.bf16.msra.mxu0 %v2371
      %5772 = vmatprep.subr.bf16.mxu0 %v2874
      %5773 = vmatpush1.bf16.msra.mxu0 %v2370
      %5774 = vmatprep.subr.bf16.mxu0 %v2889
      %5775 = vmatpush2.bf16.msra.mxu0 %v2385
      %5776 = vmatprep.subr.bf16.mxu0 %v2888
      %5777 = vmatpush2.bf16.msra.mxu0 %v2384
      %5778 = vmatprep.subr.bf16.mxu0 %v2887
      %5779 = vmatpush2.bf16.msra.mxu0 %v2383
      %5780 = vmatprep.subr.bf16.mxu0 %v2886
      %5781 = vmatpush2.bf16.msra.mxu0 %v2382
      %5782 = vmatprep.subr.bf16.mxu0 %v2885
      %5783 = vmatpush2.bf16.msra.mxu0 %v2381
      %5784 = vmatprep.subr.bf16.mxu0 %v2884
      %5785 = vmatpush2.bf16.msra.mxu0 %v2380
      %5786 = vmatprep.subr.bf16.mxu0 %v2883
      %5787 = vmatpush2.bf16.msra.mxu0 %v2379
      %5788 = vmatprep.subr.bf16.mxu0 %v2882
      %5789 = vmatpush2.bf16.msra.mxu0 %v2378
      %5790 = vmatprep.mubr.bf16.mxu0 %v5106
      %5791 = vmatmul.mubr.bf16.gmra.mxu0 %v5105
      %v5792 = vpop.f32.mrf.mxu0
      %v5793 = vadd.f32 %v5712, %v5792
      %v5794 = vpop.f32.mrf.mxu0
      %v5795 = vadd.f32 %v5714, %v5794
      %v5796 = vpop.f32.mrf.mxu0
      %v5797 = vadd.f32 %v5716, %v5796
      %v5798 = vpop.f32.mrf.mxu0
      %v5799 = vadd.f32 %v5718, %v5798
      %5800 = vmatprep.mubr.bf16.mxu0 %v5115
      %5801 = vmatmul.mubr.bf16.gmra.mxu0 %v5114
      %v5802 = vpop.f32.mrf.mxu0
      %v5803 = vadd.f32 %v5722, %v5802
      %v5804 = vpop.f32.mrf.mxu0
      %v5805 = vadd.f32 %v5724, %v5804
      %v5806 = vpop.f32.mrf.mxu0
      %v5807 = vadd.f32 %v5726, %v5806
      %v5808 = vpop.f32.mrf.mxu0
      %v5809 = vadd.f32 %v5728, %v5808
      %5810 = vmatprep.mubr.bf16.mxu0 %v5124
      %5811 = vmatmul.mubr.bf16.gmra.mxu0 %v5123
      %v5812 = vpop.f32.mrf.mxu0
      %v5813 = vadd.f32 %v5732, %v5812
      %v5814 = vpop.f32.mrf.mxu0
      %v5815 = vadd.f32 %v5734, %v5814
      %v5816 = vpop.f32.mrf.mxu0
      %v5817 = vadd.f32 %v5736, %v5816
      %v5818 = vpop.f32.mrf.mxu0
      %v5819 = vadd.f32 %v5738, %v5818
      %5820 = vmatprep.mubr.bf16.mxu0 %v5133
      %5821 = vmatmul.mubr.bf16.gmra.mxu0 %v5132
      %v5822 = vpop.f32.mrf.mxu0
      %v5823 = vadd.f32 %v5742, %v5822
      %v5824 = vpop.f32.mrf.mxu0
      %v5825 = vadd.f32 %v5744, %v5824
      %v5826 = vpop.f32.mrf.mxu0
      %v5827 = vadd.f32 %v5746, %v5826
      %v5828 = vpop.f32.mrf.mxu0
      %v5829 = vadd.f32 %v5748, %v5828
      %5830 = vmatprep.mubr.bf16.mxu0 %v5142
      %5831 = vmatmul.mubr.bf16.gmra.mxu0 %v5141
      %v5832 = vpop.f32.mrf.mxu0
      %v5833 = vadd.f32 %v5752, %v5832
      %v5834 = vpop.f32.mrf.mxu0
      %v5835 = vadd.f32 %v5754, %v5834
      %v5836 = vpop.f32.mrf.mxu0
      %v5837 = vpop.f32.mrf.mxu0
      %5838 = vdwg.mxu0
      %5839 = vmatprep.subr.bf16.mxu0 %v2897
      %5840 = vmatpush1.bf16.msra.mxu0 %v2393
      %5841 = vmatprep.subr.bf16.mxu0 %v2896
      %5842 = vmatpush1.bf16.msra.mxu0 %v2392
      %5843 = vmatprep.subr.bf16.mxu0 %v2895
      %5844 = vmatpush1.bf16.msra.mxu0 %v2391
      %5845 = vmatprep.subr.bf16.mxu0 %v2894
      %5846 = vmatpush1.bf16.msra.mxu0 %v2390
      %5847 = vmatprep.subr.bf16.mxu0 %v2893
      %5848 = vmatpush1.bf16.msra.mxu0 %v2389
      %5849 = vmatprep.subr.bf16.mxu0 %v2892
      %5850 = vmatpush1.bf16.msra.mxu0 %v2388
      %5851 = vmatprep.subr.bf16.mxu0 %v2891
      %5852 = vmatpush1.bf16.msra.mxu0 %v2387
      %5853 = vmatprep.subr.bf16.mxu0 %v2890
      %5854 = vmatpush1.bf16.msra.mxu0 %v2386
      %5855 = vmatprep.subr.bf16.mxu0 %v2905
      %5856 = vmatpush2.bf16.msra.mxu0 %v2401
      %5857 = vmatprep.subr.bf16.mxu0 %v2904
      %5858 = vmatpush2.bf16.msra.mxu0 %v2400
      %5859 = vmatprep.subr.bf16.mxu0 %v2903
      %5860 = vmatpush2.bf16.msra.mxu0 %v2399
      %5861 = vmatprep.subr.bf16.mxu0 %v2902
      %5862 = vmatpush2.bf16.msra.mxu0 %v2398
      %5863 = vmatprep.subr.bf16.mxu0 %v2901
      %5864 = vmatpush2.bf16.msra.mxu0 %v2397
      %5865 = vmatprep.subr.bf16.mxu0 %v2900
      %5866 = vmatpush2.bf16.msra.mxu0 %v2396
      %5867 = vmatprep.subr.bf16.mxu0 %v2899
      %5868 = vmatpush2.bf16.msra.mxu0 %v2395
      %5869 = vmatprep.subr.bf16.mxu0 %v2898
      %5870 = vmatpush2.bf16.msra.mxu0 %v2394
      %5871 = vmatprep.mubr.bf16.mxu0 %v5108
      %5872 = vmatmul.mubr.bf16.gmra.mxu0 %v5107
      %v5873 = vpop.f32.mrf.mxu0
      %v5874 = vadd.f32 %v5793, %v5873
      %v5875 = vpop.f32.mrf.mxu0
      %v5876 = vadd.f32 %v5795, %v5875
      %v5877 = vpop.f32.mrf.mxu0
      %v5878 = vadd.f32 %v5797, %v5877
      %v5879 = vpop.f32.mrf.mxu0
      %v5880 = vadd.f32 %v5799, %v5879
      %5881 = vmatprep.mubr.bf16.mxu0 %v5117
      %5882 = vmatmul.mubr.bf16.gmra.mxu0 %v5116
      %v5883 = vpop.f32.mrf.mxu0
      %v5884 = vadd.f32 %v5803, %v5883
      %v5885 = vpop.f32.mrf.mxu0
      %v5886 = vadd.f32 %v5805, %v5885
      %v5887 = vpop.f32.mrf.mxu0
      %v5888 = vadd.f32 %v5807, %v5887
      %v5889 = vpop.f32.mrf.mxu0
      %v5890 = vadd.f32 %v5809, %v5889
      %5891 = vmatprep.mubr.bf16.mxu0 %v5126
      %5892 = vmatmul.mubr.bf16.gmra.mxu0 %v5125
      %v5893 = vpop.f32.mrf.mxu0
      %v5894 = vadd.f32 %v5813, %v5893
      %v5895 = vpop.f32.mrf.mxu0
      %v5896 = vadd.f32 %v5815, %v5895
      %v5897 = vpop.f32.mrf.mxu0
      %v5898 = vadd.f32 %v5817, %v5897
      %v5899 = vpop.f32.mrf.mxu0
      %v5900 = vadd.f32 %v5819, %v5899
      %5901 = vmatprep.mubr.bf16.mxu0 %v5135
      %5902 = vmatmul.mubr.bf16.gmra.mxu0 %v5134
      %v5903 = vpop.f32.mrf.mxu0
      %v5904 = vadd.f32 %v5823, %v5903
      %v5905 = vpop.f32.mrf.mxu0
      %v5906 = vadd.f32 %v5825, %v5905
      %v5907 = vpop.f32.mrf.mxu0
      %v5908 = vadd.f32 %v5827, %v5907
      %v5909 = vpop.f32.mrf.mxu0
      %v5910 = vadd.f32 %v5829, %v5909
      %5911 = vmatprep.mubr.bf16.mxu0 %v5144
      %5912 = vmatmul.mubr.bf16.gmra.mxu0 %v5143
      %v5913 = vpop.f32.mrf.mxu0
      %v5914 = vadd.f32 %v5833, %v5913
      %v5915 = vpop.f32.mrf.mxu0
      %v5916 = vadd.f32 %v5835, %v5915
      %v5917 = vpop.f32.mrf.mxu0
      %v5918 = vpop.f32.mrf.mxu0
      %5919 = vdwg.mxu0
      %5920 = vmatprep.subr.bf16.mxu0 %v2913
      %5921 = vmatpush1.bf16.msra.mxu0 %v2409
      %5922 = vmatprep.subr.bf16.mxu0 %v2912
      %5923 = vmatpush1.bf16.msra.mxu0 %v2408
      %5924 = vmatprep.subr.bf16.mxu0 %v2911
      %5925 = vmatpush1.bf16.msra.mxu0 %v2407
      %5926 = vmatprep.subr.bf16.mxu0 %v2910
      %5927 = vmatpush1.bf16.msra.mxu0 %v2406
      %5928 = vmatprep.subr.bf16.mxu0 %v2909
      %5929 = vmatpush1.bf16.msra.mxu0 %v2405
      %5930 = vmatprep.subr.bf16.mxu0 %v2908
      %5931 = vmatpush1.bf16.msra.mxu0 %v2404
      %5932 = vmatprep.subr.bf16.mxu0 %v2907
      %5933 = vmatpush1.bf16.msra.mxu0 %v2403
      %5934 = vmatprep.subr.bf16.mxu0 %v2906
      %5935 = vmatpush1.bf16.msra.mxu0 %v2402
      %5936 = vmatprep.subr.bf16.mxu0 0
      %5937 = vmatpush2.bf16.msra.mxu0 0
      %5938 = vmatprep.subr.bf16.mxu0 0
      %5939 = vmatpush2.bf16.msra.mxu0 0
      %5940 = vmatprep.subr.bf16.mxu0 0
      %5941 = vmatpush2.bf16.msra.mxu0 0
      %5942 = vmatprep.subr.bf16.mxu0 0
      %5943 = vmatpush2.bf16.msra.mxu0 0
      %5944 = vmatprep.subr.bf16.mxu0 0
      %5945 = vmatpush2.bf16.msra.mxu0 0
      %5946 = vmatprep.subr.bf16.mxu0 0
      %5947 = vmatpush2.bf16.msra.mxu0 0
      %5948 = vmatprep.subr.bf16.mxu0 0
      %5949 = vmatpush2.bf16.msra.mxu0 0
      %5950 = vmatprep.subr.bf16.mxu0 0
      %5951 = vmatpush2.bf16.msra.mxu0 0
      %5952 = vmatprep.mubr.bf16.mxu0 0
      %5953 = vmatmul.mubr.bf16.gmra.mxu0 %v5109
      %v5954 = vpop.f32.mrf.mxu0
      %v5955 = vadd.f32 %v5874, %v5954
      %v5956 = vpop.f32.mrf.mxu0
      %v5957 = vadd.f32 %v5876, %v5956
      %v5958 = vpop.f32.mrf.mxu0
      %v5959 = vadd.f32 %v5878, %v5958
      %v5960 = vpop.f32.mrf.mxu0
      %v5961 = vadd.f32 %v5880, %v5960
      %5962 = vmatprep.mubr.bf16.mxu0 0
      %5963 = vmatmul.mubr.bf16.gmra.mxu0 %v5118
      %v5964 = vpop.f32.mrf.mxu0
      %v5965 = vadd.f32 %v5884, %v5964
      %v5966 = vpop.f32.mrf.mxu0
      %v5967 = vadd.f32 %v5886, %v5966
      %v5968 = vpop.f32.mrf.mxu0
      %v5969 = vadd.f32 %v5888, %v5968
      %v5970 = vpop.f32.mrf.mxu0
      %v5971 = vadd.f32 %v5890, %v5970
      %5972 = vmatprep.mubr.bf16.mxu0 0
      %5973 = vmatmul.mubr.bf16.gmra.mxu0 %v5127
      %v5974 = vpop.f32.mrf.mxu0
      %v5975 = vadd.f32 %v5894, %v5974
      %v5976 = vpop.f32.mrf.mxu0
      %v5977 = vadd.f32 %v5896, %v5976
      %v5978 = vpop.f32.mrf.mxu0
      %v5979 = vadd.f32 %v5898, %v5978
      %v5980 = vpop.f32.mrf.mxu0
      %v5981 = vadd.f32 %v5900, %v5980
      %5982 = vmatprep.mubr.bf16.mxu0 0
      %5983 = vmatmul.mubr.bf16.gmra.mxu0 %v5136
      %v5984 = vpop.f32.mrf.mxu0
      %v5985 = vadd.f32 %v5904, %v5984
      %v5986 = vpop.f32.mrf.mxu0
      %v5987 = vadd.f32 %v5906, %v5986
      %v5988 = vpop.f32.mrf.mxu0
      %v5989 = vadd.f32 %v5908, %v5988
      %v5990 = vpop.f32.mrf.mxu0
      %v5991 = vadd.f32 %v5910, %v5990
      %5992 = vmatprep.mubr.bf16.mxu0 0
      %5993 = vmatmul.mubr.bf16.gmra.mxu0 %v5145
      %v5994 = vpop.f32.mrf.mxu0
      %v5995 = vadd.f32 %v5914, %v5994
      %v5996 = vpop.f32.mrf.mxu0
      %v5997 = vadd.f32 %v5916, %v5996
      %v5998 = vpop.f32.mrf.mxu0
      %v5999 = vpop.f32.mrf.mxu0
      %6000 = vdwg.mxu0
      %6001 = vmatprep.subr.bf16.mxu0 %v3857
      %6002 = vmatpush1.bf16.msra.mxu0 %v3353
      %6003 = vmatprep.subr.bf16.mxu0 %v3856
      %6004 = vmatpush1.bf16.msra.mxu0 %v3352
      %6005 = vmatprep.subr.bf16.mxu0 %v3855
      %6006 = vmatpush1.bf16.msra.mxu0 %v3351
      %6007 = vmatprep.subr.bf16.mxu0 %v3854
      %6008 = vmatpush1.bf16.msra.mxu0 %v3350
      %6009 = vmatprep.subr.bf16.mxu0 %v3853
      %6010 = vmatpush1.bf16.msra.mxu0 %v3349
      %6011 = vmatprep.subr.bf16.mxu0 %v3852
      %6012 = vmatpush1.bf16.msra.mxu0 %v3348
      %6013 = vmatprep.subr.bf16.mxu0 %v3851
      %6014 = vmatpush1.bf16.msra.mxu0 %v3347
      %6015 = vmatprep.subr.bf16.mxu0 %v3850
      %6016 = vmatpush1.bf16.msra.mxu0 %v3346
      %6017 = vmatprep.subr.bf16.mxu0 %v3865
      %6018 = vmatpush2.bf16.msra.mxu0 %v3361
      %6019 = vmatprep.subr.bf16.mxu0 %v3864
      %6020 = vmatpush2.bf16.msra.mxu0 %v3360
      %6021 = vmatprep.subr.bf16.mxu0 %v3863
      %6022 = vmatpush2.bf16.msra.mxu0 %v3359
      %6023 = vmatprep.subr.bf16.mxu0 %v3862
      %6024 = vmatpush2.bf16.msra.mxu0 %v3358
      %6025 = vmatprep.subr.bf16.mxu0 %v3861
      %6026 = vmatpush2.bf16.msra.mxu0 %v3357
      %6027 = vmatprep.subr.bf16.mxu0 %v3860
      %6028 = vmatpush2.bf16.msra.mxu0 %v3356
      %6029 = vmatprep.subr.bf16.mxu0 %v3859
      %6030 = vmatpush2.bf16.msra.mxu0 %v3355
      %6031 = vmatprep.subr.bf16.mxu0 %v3858
      %6032 = vmatpush2.bf16.msra.mxu0 %v3354
      %6033 = vmatprep.mubr.bf16.mxu0 %v5102
      %6034 = vmatmul.mubr.bf16.gmra.mxu0 %v5101
      %v6035 = vpop.f32.mrf.mxu0
      %v6036 = vadd.f32 0.0, %v6035
      %v6037 = vpop.f32.mrf.mxu0
      %v6038 = vadd.f32 0.0, %v6037
      %v6039 = vpop.f32.mrf.mxu0
      %v6040 = vadd.f32 0.0, %v6039
      %v6041 = vpop.f32.mrf.mxu0
      %v6042 = vadd.f32 0.0, %v6041
      %6043 = vmatprep.mubr.bf16.mxu0 %v5111
      %6044 = vmatmul.mubr.bf16.gmra.mxu0 %v5110
      %v6045 = vpop.f32.mrf.mxu0
      %v6046 = vadd.f32 0.0, %v6045
      %v6047 = vpop.f32.mrf.mxu0
      %v6048 = vadd.f32 0.0, %v6047
      %v6049 = vpop.f32.mrf.mxu0
      %v6050 = vadd.f32 0.0, %v6049
      %v6051 = vpop.f32.mrf.mxu0
      %v6052 = vadd.f32 0.0, %v6051
      %6053 = vmatprep.mubr.bf16.mxu0 %v5120
      %6054 = vmatmul.mubr.bf16.gmra.mxu0 %v5119
      %v6055 = vpop.f32.mrf.mxu0
      %v6056 = vadd.f32 0.0, %v6055
      %v6057 = vpop.f32.mrf.mxu0
      %v6058 = vadd.f32 0.0, %v6057
      %v6059 = vpop.f32.mrf.mxu0
      %v6060 = vadd.f32 0.0, %v6059
      %v6061 = vpop.f32.mrf.mxu0
      %v6062 = vadd.f32 0.0, %v6061
      %6063 = vmatprep.mubr.bf16.mxu0 %v5129
      %6064 = vmatmul.mubr.bf16.gmra.mxu0 %v5128
      %v6065 = vpop.f32.mrf.mxu0
      %v6066 = vadd.f32 0.0, %v6065
      %v6067 = vpop.f32.mrf.mxu0
      %v6068 = vadd.f32 0.0, %v6067
      %v6069 = vpop.f32.mrf.mxu0
      %v6070 = vadd.f32 0.0, %v6069
      %v6071 = vpop.f32.mrf.mxu0
      %v6072 = vadd.f32 0.0, %v6071
      %6073 = vmatprep.mubr.bf16.mxu0 %v5138
      %6074 = vmatmul.mubr.bf16.gmra.mxu0 %v5137
      %v6075 = vpop.f32.mrf.mxu0
      %v6076 = vadd.f32 0.0, %v6075
      %v6077 = vpop.f32.mrf.mxu0
      %v6078 = vadd.f32 0.0, %v6077
      %v6079 = vpop.f32.mrf.mxu0
      %v6080 = vpop.f32.mrf.mxu0
      %6081 = vdwg.mxu0
      %6082 = vmatprep.subr.bf16.mxu0 %v3873
      %6083 = vmatpush1.bf16.msra.mxu0 %v3369
      %6084 = vmatprep.subr.bf16.mxu0 %v3872
      %6085 = vmatpush1.bf16.msra.mxu0 %v3368
      %6086 = vmatprep.subr.bf16.mxu0 %v3871
      %6087 = vmatpush1.bf16.msra.mxu0 %v3367
      %6088 = vmatprep.subr.bf16.mxu0 %v3870
      %6089 = vmatpush1.bf16.msra.mxu0 %v3366
      %6090 = vmatprep.subr.bf16.mxu0 %v3869
      %6091 = vmatpush1.bf16.msra.mxu0 %v3365
      %6092 = vmatprep.subr.bf16.mxu0 %v3868
      %6093 = vmatpush1.bf16.msra.mxu0 %v3364
      %6094 = vmatprep.subr.bf16.mxu0 %v3867
      %6095 = vmatpush1.bf16.msra.mxu0 %v3363
      %6096 = vmatprep.subr.bf16.mxu0 %v3866
      %6097 = vmatpush1.bf16.msra.mxu0 %v3362
      %6098 = vmatprep.subr.bf16.mxu0 %v3881
      %6099 = vmatpush2.bf16.msra.mxu0 %v3377
      %6100 = vmatprep.subr.bf16.mxu0 %v3880
      %6101 = vmatpush2.bf16.msra.mxu0 %v3376
      %6102 = vmatprep.subr.bf16.mxu0 %v3879
      %6103 = vmatpush2.bf16.msra.mxu0 %v3375
      %6104 = vmatprep.subr.bf16.mxu0 %v3878
      %6105 = vmatpush2.bf16.msra.mxu0 %v3374
      %6106 = vmatprep.subr.bf16.mxu0 %v3877
      %6107 = vmatpush2.bf16.msra.mxu0 %v3373
      %6108 = vmatprep.subr.bf16.mxu0 %v3876
      %6109 = vmatpush2.bf16.msra.mxu0 %v3372
      %6110 = vmatprep.subr.bf16.mxu0 %v3875
      %6111 = vmatpush2.bf16.msra.mxu0 %v3371
      %6112 = vmatprep.subr.bf16.mxu0 %v3874
      %6113 = vmatpush2.bf16.msra.mxu0 %v3370
      %6114 = vmatprep.mubr.bf16.mxu0 %v5104
      %6115 = vmatmul.mubr.bf16.gmra.mxu0 %v5103
      %v6116 = vpop.f32.mrf.mxu0
      %v6117 = vadd.f32 %v6036, %v6116
      %v6118 = vpop.f32.mrf.mxu0
      %v6119 = vadd.f32 %v6038, %v6118
      %v6120 = vpop.f32.mrf.mxu0
      %v6121 = vadd.f32 %v6040, %v6120
      %v6122 = vpop.f32.mrf.mxu0
      %v6123 = vadd.f32 %v6042, %v6122
      %6124 = vmatprep.mubr.bf16.mxu0 %v5113
      %6125 = vmatmul.mubr.bf16.gmra.mxu0 %v5112
      %v6126 = vpop.f32.mrf.mxu0
      %v6127 = vadd.f32 %v6046, %v6126
      %v6128 = vpop.f32.mrf.mxu0
      %v6129 = vadd.f32 %v6048, %v6128
      %v6130 = vpop.f32.mrf.mxu0
      %v6131 = vadd.f32 %v6050, %v6130
      %v6132 = vpop.f32.mrf.mxu0
      %v6133 = vadd.f32 %v6052, %v6132
      %6134 = vmatprep.mubr.bf16.mxu0 %v5122
      %6135 = vmatmul.mubr.bf16.gmra.mxu0 %v5121
      %v6136 = vpop.f32.mrf.mxu0
      %v6137 = vadd.f32 %v6056, %v6136
      %v6138 = vpop.f32.mrf.mxu0
      %v6139 = vadd.f32 %v6058, %v6138
      %v6140 = vpop.f32.mrf.mxu0
      %v6141 = vadd.f32 %v6060, %v6140
      %v6142 = vpop.f32.mrf.mxu0
      %v6143 = vadd.f32 %v6062, %v6142
      %6144 = vmatprep.mubr.bf16.mxu0 %v5131
      %6145 = vmatmul.mubr.bf16.gmra.mxu0 %v5130
      %v6146 = vpop.f32.mrf.mxu0
      %v6147 = vadd.f32 %v6066, %v6146
      %v6148 = vpop.f32.mrf.mxu0
      %v6149 = vadd.f32 %v6068, %v6148
      %v6150 = vpop.f32.mrf.mxu0
      %v6151 = vadd.f32 %v6070, %v6150
      %v6152 = vpop.f32.mrf.mxu0
      %v6153 = vadd.f32 %v6072, %v6152
      %6154 = vmatprep.mubr.bf16.mxu0 %v5140
      %6155 = vmatmul.mubr.bf16.gmra.mxu0 %v5139
      %v6156 = vpop.f32.mrf.mxu0
      %v6157 = vadd.f32 %v6076, %v6156
      %v6158 = vpop.f32.mrf.mxu0
      %v6159 = vadd.f32 %v6078, %v6158
      %v6160 = vpop.f32.mrf.mxu0
      %v6161 = vpop.f32.mrf.mxu0
      %6162 = vdwg.mxu0
      %6163 = vmatprep.subr.bf16.mxu0 %v3889
      %6164 = vmatpush1.bf16.msra.mxu0 %v3385
      %6165 = vmatprep.subr.bf16.mxu0 %v3888
      %6166 = vmatpush1.bf16.msra.mxu0 %v3384
      %6167 = vmatprep.subr.bf16.mxu0 %v3887
      %6168 = vmatpush1.bf16.msra.mxu0 %v3383
      %6169 = vmatprep.subr.bf16.mxu0 %v3886
      %6170 = vmatpush1.bf16.msra.mxu0 %v3382
      %6171 = vmatprep.subr.bf16.mxu0 %v3885
      %6172 = vmatpush1.bf16.msra.mxu0 %v3381
      %6173 = vmatprep.subr.bf16.mxu0 %v3884
      %6174 = vmatpush1.bf16.msra.mxu0 %v3380
      %6175 = vmatprep.subr.bf16.mxu0 %v3883
      %6176 = vmatpush1.bf16.msra.mxu0 %v3379
      %6177 = vmatprep.subr.bf16.mxu0 %v3882
      %6178 = vmatpush1.bf16.msra.mxu0 %v3378
      %6179 = vmatprep.subr.bf16.mxu0 %v3897
      %6180 = vmatpush2.bf16.msra.mxu0 %v3393
      %6181 = vmatprep.subr.bf16.mxu0 %v3896
      %6182 = vmatpush2.bf16.msra.mxu0 %v3392
      %6183 = vmatprep.subr.bf16.mxu0 %v3895
      %6184 = vmatpush2.bf16.msra.mxu0 %v3391
      %6185 = vmatprep.subr.bf16.mxu0 %v3894
      %6186 = vmatpush2.bf16.msra.mxu0 %v3390
      %6187 = vmatprep.subr.bf16.mxu0 %v3893
      %6188 = vmatpush2.bf16.msra.mxu0 %v3389
      %6189 = vmatprep.subr.bf16.mxu0 %v3892
      %6190 = vmatpush2.bf16.msra.mxu0 %v3388
      %6191 = vmatprep.subr.bf16.mxu0 %v3891
      %6192 = vmatpush2.bf16.msra.mxu0 %v3387
      %6193 = vmatprep.subr.bf16.mxu0 %v3890
      %6194 = vmatpush2.bf16.msra.mxu0 %v3386
      %6195 = vmatprep.mubr.bf16.mxu0 %v5106
      %6196 = vmatmul.mubr.bf16.gmra.mxu0 %v5105
      %v6197 = vpop.f32.mrf.mxu0
      %v6198 = vadd.f32 %v6117, %v6197
      %v6199 = vpop.f32.mrf.mxu0
      %v6200 = vadd.f32 %v6119, %v6199
      %v6201 = vpop.f32.mrf.mxu0
      %v6202 = vadd.f32 %v6121, %v6201
      %v6203 = vpop.f32.mrf.mxu0
      %v6204 = vadd.f32 %v6123, %v6203
      %6205 = vmatprep.mubr.bf16.mxu0 %v5115
      %6206 = vmatmul.mubr.bf16.gmra.mxu0 %v5114
      %v6207 = vpop.f32.mrf.mxu0
      %v6208 = vadd.f32 %v6127, %v6207
      %v6209 = vpop.f32.mrf.mxu0
      %v6210 = vadd.f32 %v6129, %v6209
      %v6211 = vpop.f32.mrf.mxu0
      %v6212 = vadd.f32 %v6131, %v6211
      %v6213 = vpop.f32.mrf.mxu0
      %v6214 = vadd.f32 %v6133, %v6213
      %6215 = vmatprep.mubr.bf16.mxu0 %v5124
      %6216 = vmatmul.mubr.bf16.gmra.mxu0 %v5123
      %v6217 = vpop.f32.mrf.mxu0
      %v6218 = vadd.f32 %v6137, %v6217
      %v6219 = vpop.f32.mrf.mxu0
      %v6220 = vadd.f32 %v6139, %v6219
      %v6221 = vpop.f32.mrf.mxu0
      %v6222 = vadd.f32 %v6141, %v6221
      %v6223 = vpop.f32.mrf.mxu0
      %v6224 = vadd.f32 %v6143, %v6223
      %6225 = vmatprep.mubr.bf16.mxu0 %v5133
      %6226 = vmatmul.mubr.bf16.gmra.mxu0 %v5132
      %v6227 = vpop.f32.mrf.mxu0
      %v6228 = vadd.f32 %v6147, %v6227
      %v6229 = vpop.f32.mrf.mxu0
      %v6230 = vadd.f32 %v6149, %v6229
      %v6231 = vpop.f32.mrf.mxu0
      %v6232 = vadd.f32 %v6151, %v6231
      %v6233 = vpop.f32.mrf.mxu0
      %v6234 = vadd.f32 %v6153, %v6233
      %6235 = vmatprep.mubr.bf16.mxu0 %v5142
      %6236 = vmatmul.mubr.bf16.gmra.mxu0 %v5141
      %v6237 = vpop.f32.mrf.mxu0
      %v6238 = vadd.f32 %v6157, %v6237
      %v6239 = vpop.f32.mrf.mxu0
      %v6240 = vadd.f32 %v6159, %v6239
      %v6241 = vpop.f32.mrf.mxu0
      %v6242 = vpop.f32.mrf.mxu0
      %6243 = vdwg.mxu0
      %6244 = vmatprep.subr.bf16.mxu0 %v3905
      %6245 = vmatpush1.bf16.msra.mxu0 %v3401
      %6246 = vmatprep.subr.bf16.mxu0 %v3904
      %6247 = vmatpush1.bf16.msra.mxu0 %v3400
      %6248 = vmatprep.subr.bf16.mxu0 %v3903
      %6249 = vmatpush1.bf16.msra.mxu0 %v3399
      %6250 = vmatprep.subr.bf16.mxu0 %v3902
      %6251 = vmatpush1.bf16.msra.mxu0 %v3398
      %6252 = vmatprep.subr.bf16.mxu0 %v3901
      %6253 = vmatpush1.bf16.msra.mxu0 %v3397
      %6254 = vmatprep.subr.bf16.mxu0 %v3900
      %6255 = vmatpush1.bf16.msra.mxu0 %v3396
      %6256 = vmatprep.subr.bf16.mxu0 %v3899
      %6257 = vmatpush1.bf16.msra.mxu0 %v3395
      %6258 = vmatprep.subr.bf16.mxu0 %v3898
      %6259 = vmatpush1.bf16.msra.mxu0 %v3394
      %6260 = vmatprep.subr.bf16.mxu0 %v3913
      %6261 = vmatpush2.bf16.msra.mxu0 %v3409
      %6262 = vmatprep.subr.bf16.mxu0 %v3912
      %6263 = vmatpush2.bf16.msra.mxu0 %v3408
      %6264 = vmatprep.subr.bf16.mxu0 %v3911
      %6265 = vmatpush2.bf16.msra.mxu0 %v3407
      %6266 = vmatprep.subr.bf16.mxu0 %v3910
      %6267 = vmatpush2.bf16.msra.mxu0 %v3406
      %6268 = vmatprep.subr.bf16.mxu0 %v3909
      %6269 = vmatpush2.bf16.msra.mxu0 %v3405
      %6270 = vmatprep.subr.bf16.mxu0 %v3908
      %6271 = vmatpush2.bf16.msra.mxu0 %v3404
      %6272 = vmatprep.subr.bf16.mxu0 %v3907
      %6273 = vmatpush2.bf16.msra.mxu0 %v3403
      %6274 = vmatprep.subr.bf16.mxu0 %v3906
      %6275 = vmatpush2.bf16.msra.mxu0 %v3402
      %6276 = vmatprep.mubr.bf16.mxu0 %v5108
      %6277 = vmatmul.mubr.bf16.gmra.mxu0 %v5107
      %v6278 = vpop.f32.mrf.mxu0
      %v6279 = vadd.f32 %v6198, %v6278
      %v6280 = vpop.f32.mrf.mxu0
      %v6281 = vadd.f32 %v6200, %v6280
      %v6282 = vpop.f32.mrf.mxu0
      %v6283 = vadd.f32 %v6202, %v6282
      %v6284 = vpop.f32.mrf.mxu0
      %v6285 = vadd.f32 %v6204, %v6284
      %6286 = vmatprep.mubr.bf16.mxu0 %v5117
      %6287 = vmatmul.mubr.bf16.gmra.mxu0 %v5116
      %v6288 = vpop.f32.mrf.mxu0
      %v6289 = vadd.f32 %v6208, %v6288
      %v6290 = vpop.f32.mrf.mxu0
      %v6291 = vadd.f32 %v6210, %v6290
      %v6292 = vpop.f32.mrf.mxu0
      %v6293 = vadd.f32 %v6212, %v6292
      %v6294 = vpop.f32.mrf.mxu0
      %v6295 = vadd.f32 %v6214, %v6294
      %6296 = vmatprep.mubr.bf16.mxu0 %v5126
      %6297 = vmatmul.mubr.bf16.gmra.mxu0 %v5125
      %v6298 = vpop.f32.mrf.mxu0
      %v6299 = vadd.f32 %v6218, %v6298
      %v6300 = vpop.f32.mrf.mxu0
      %v6301 = vadd.f32 %v6220, %v6300
      %v6302 = vpop.f32.mrf.mxu0
      %v6303 = vadd.f32 %v6222, %v6302
      %v6304 = vpop.f32.mrf.mxu0
      %v6305 = vadd.f32 %v6224, %v6304
      %6306 = vmatprep.mubr.bf16.mxu0 %v5135
      %6307 = vmatmul.mubr.bf16.gmra.mxu0 %v5134
      %v6308 = vpop.f32.mrf.mxu0
      %v6309 = vadd.f32 %v6228, %v6308
      %v6310 = vpop.f32.mrf.mxu0
      %v6311 = vadd.f32 %v6230, %v6310
      %v6312 = vpop.f32.mrf.mxu0
      %v6313 = vadd.f32 %v6232, %v6312
      %v6314 = vpop.f32.mrf.mxu0
      %v6315 = vadd.f32 %v6234, %v6314
      %6316 = vmatprep.mubr.bf16.mxu0 %v5144
      %6317 = vmatmul.mubr.bf16.gmra.mxu0 %v5143
      %v6318 = vpop.f32.mrf.mxu0
      %v6319 = vadd.f32 %v6238, %v6318
      %v6320 = vpop.f32.mrf.mxu0
      %v6321 = vadd.f32 %v6240, %v6320
      %v6322 = vpop.f32.mrf.mxu0
      %v6323 = vpop.f32.mrf.mxu0
      %6324 = vdwg.mxu0
      %6325 = vmatprep.subr.bf16.mxu0 %v3921
      %6326 = vmatpush1.bf16.msra.mxu0 %v3417
      %6327 = vmatprep.subr.bf16.mxu0 %v3920
      %6328 = vmatpush1.bf16.msra.mxu0 %v3416
      %6329 = vmatprep.subr.bf16.mxu0 %v3919
      %6330 = vmatpush1.bf16.msra.mxu0 %v3415
      %6331 = vmatprep.subr.bf16.mxu0 %v3918
      %6332 = vmatpush1.bf16.msra.mxu0 %v3414
      %6333 = vmatprep.subr.bf16.mxu0 %v3917
      %6334 = vmatpush1.bf16.msra.mxu0 %v3413
      %6335 = vmatprep.subr.bf16.mxu0 %v3916
      %6336 = vmatpush1.bf16.msra.mxu0 %v3412
      %6337 = vmatprep.subr.bf16.mxu0 %v3915
      %6338 = vmatpush1.bf16.msra.mxu0 %v3411
      %6339 = vmatprep.subr.bf16.mxu0 %v3914
      %6340 = vmatpush1.bf16.msra.mxu0 %v3410
      %6341 = vmatprep.subr.bf16.mxu0 0
      %6342 = vmatpush2.bf16.msra.mxu0 0
      %6343 = vmatprep.subr.bf16.mxu0 0
      %6344 = vmatpush2.bf16.msra.mxu0 0
      %6345 = vmatprep.subr.bf16.mxu0 0
      %6346 = vmatpush2.bf16.msra.mxu0 0
      %6347 = vmatprep.subr.bf16.mxu0 0
      %6348 = vmatpush2.bf16.msra.mxu0 0
      %6349 = vmatprep.subr.bf16.mxu0 0
      %6350 = vmatpush2.bf16.msra.mxu0 0
      %6351 = vmatprep.subr.bf16.mxu0 0
      %6352 = vmatpush2.bf16.msra.mxu0 0
      %6353 = vmatprep.subr.bf16.mxu0 0
      %6354 = vmatpush2.bf16.msra.mxu0 0
      %6355 = vmatprep.subr.bf16.mxu0 0
      %6356 = vmatpush2.bf16.msra.mxu0 0
      %6357 = vmatprep.mubr.bf16.mxu0 0
      %6358 = vmatmul.mubr.bf16.gmra.mxu0 %v5109
      %v6359 = vpop.f32.mrf.mxu0
      %v6360 = vadd.f32 %v6279, %v6359
      %v6361 = vpop.f32.mrf.mxu0
      %v6362 = vadd.f32 %v6281, %v6361
      %v6363 = vpop.f32.mrf.mxu0
      %v6364 = vadd.f32 %v6283, %v6363
      %v6365 = vpop.f32.mrf.mxu0
      %v6366 = vadd.f32 %v6285, %v6365
      %6367 = vmatprep.mubr.bf16.mxu0 0
      %6368 = vmatmul.mubr.bf16.gmra.mxu0 %v5118
      %v6369 = vpop.f32.mrf.mxu0
      %v6370 = vadd.f32 %v6289, %v6369
      %v6371 = vpop.f32.mrf.mxu0
      %v6372 = vadd.f32 %v6291, %v6371
      %v6373 = vpop.f32.mrf.mxu0
      %v6374 = vadd.f32 %v6293, %v6373
      %v6375 = vpop.f32.mrf.mxu0
      %v6376 = vadd.f32 %v6295, %v6375
      %6377 = vmatprep.mubr.bf16.mxu0 0
      %6378 = vmatmul.mubr.bf16.gmra.mxu0 %v5127
      %v6379 = vpop.f32.mrf.mxu0
      %v6380 = vadd.f32 %v6299, %v6379
      %v6381 = vpop.f32.mrf.mxu0
      %v6382 = vadd.f32 %v6301, %v6381
      %v6383 = vpop.f32.mrf.mxu0
      %v6384 = vadd.f32 %v6303, %v6383
      %v6385 = vpop.f32.mrf.mxu0
      %v6386 = vadd.f32 %v6305, %v6385
      %6387 = vmatprep.mubr.bf16.mxu0 0
      %6388 = vmatmul.mubr.bf16.gmra.mxu0 %v5136
      %v6389 = vpop.f32.mrf.mxu0
      %v6390 = vadd.f32 %v6309, %v6389
      %v6391 = vpop.f32.mrf.mxu0
      %v6392 = vadd.f32 %v6311, %v6391
      %v6393 = vpop.f32.mrf.mxu0
      %v6394 = vadd.f32 %v6313, %v6393
      %v6395 = vpop.f32.mrf.mxu0
      %v6396 = vadd.f32 %v6315, %v6395
      %6397 = vmatprep.mubr.bf16.mxu0 0
      %6398 = vmatmul.mubr.bf16.gmra.mxu0 %v5145
      %v6399 = vpop.f32.mrf.mxu0
      %v6400 = vadd.f32 %v6319, %v6399
      %v6401 = vpop.f32.mrf.mxu0
      %v6402 = vadd.f32 %v6321, %v6401
      %v6403 = vpop.f32.mrf.mxu0
      %v6404 = vpop.f32.mrf.mxu0
      %6405 = vdwg.mxu0
      %6406 = vmatprep.subr.bf16.mxu0 %v4865
      %6407 = vmatpush1.bf16.msra.mxu0 %v4361
      %6408 = vmatprep.subr.bf16.mxu0 %v4864
      %6409 = vmatpush1.bf16.msra.mxu0 %v4360
      %6410 = vmatprep.subr.bf16.mxu0 %v4863
      %6411 = vmatpush1.bf16.msra.mxu0 %v4359
      %6412 = vmatprep.subr.bf16.mxu0 %v4862
      %6413 = vmatpush1.bf16.msra.mxu0 %v4358
      %6414 = vmatprep.subr.bf16.mxu0 %v4861
      %6415 = vmatpush1.bf16.msra.mxu0 %v4357
      %6416 = vmatprep.subr.bf16.mxu0 %v4860
      %6417 = vmatpush1.bf16.msra.mxu0 %v4356
      %6418 = vmatprep.subr.bf16.mxu0 %v4859
      %6419 = vmatpush1.bf16.msra.mxu0 %v4355
      %6420 = vmatprep.subr.bf16.mxu0 %v4858
      %6421 = vmatpush1.bf16.msra.mxu0 %v4354
      %6422 = vmatprep.subr.bf16.mxu0 %v4873
      %6423 = vmatpush2.bf16.msra.mxu0 %v4369
      %6424 = vmatprep.subr.bf16.mxu0 %v4872
      %6425 = vmatpush2.bf16.msra.mxu0 %v4368
      %6426 = vmatprep.subr.bf16.mxu0 %v4871
      %6427 = vmatpush2.bf16.msra.mxu0 %v4367
      %6428 = vmatprep.subr.bf16.mxu0 %v4870
      %6429 = vmatpush2.bf16.msra.mxu0 %v4366
      %6430 = vmatprep.subr.bf16.mxu0 %v4869
      %6431 = vmatpush2.bf16.msra.mxu0 %v4365
      %6432 = vmatprep.subr.bf16.mxu0 %v4868
      %6433 = vmatpush2.bf16.msra.mxu0 %v4364
      %6434 = vmatprep.subr.bf16.mxu0 %v4867
      %6435 = vmatpush2.bf16.msra.mxu0 %v4363
      %6436 = vmatprep.subr.bf16.mxu0 %v4866
      %6437 = vmatpush2.bf16.msra.mxu0 %v4362
      %6438 = vmatprep.mubr.bf16.mxu0 %v5102
      %6439 = vmatmul.mubr.bf16.gmra.mxu0 %v5101
      %v6440 = vpop.f32.mrf.mxu0
      %v6441 = vadd.f32 0.0, %v6440
      %v6442 = vpop.f32.mrf.mxu0
      %v6443 = vadd.f32 0.0, %v6442
      %v6444 = vpop.f32.mrf.mxu0
      %v6445 = vadd.f32 0.0, %v6444
      %v6446 = vpop.f32.mrf.mxu0
      %v6447 = vadd.f32 0.0, %v6446
      %6448 = vmatprep.mubr.bf16.mxu0 %v5111
      %6449 = vmatmul.mubr.bf16.gmra.mxu0 %v5110
      %v6450 = vpop.f32.mrf.mxu0
      %v6451 = vadd.f32 0.0, %v6450
      %v6452 = vpop.f32.mrf.mxu0
      %v6453 = vadd.f32 0.0, %v6452
      %v6454 = vpop.f32.mrf.mxu0
      %v6455 = vadd.f32 0.0, %v6454
      %v6456 = vpop.f32.mrf.mxu0
      %v6457 = vadd.f32 0.0, %v6456
      %6458 = vmatprep.mubr.bf16.mxu0 %v5120
      %6459 = vmatmul.mubr.bf16.gmra.mxu0 %v5119
      %v6460 = vpop.f32.mrf.mxu0
      %v6461 = vadd.f32 0.0, %v6460
      %v6462 = vpop.f32.mrf.mxu0
      %v6463 = vadd.f32 0.0, %v6462
      %v6464 = vpop.f32.mrf.mxu0
      %v6465 = vadd.f32 0.0, %v6464
      %v6466 = vpop.f32.mrf.mxu0
      %v6467 = vadd.f32 0.0, %v6466
      %6468 = vmatprep.mubr.bf16.mxu0 %v5129
      %6469 = vmatmul.mubr.bf16.gmra.mxu0 %v5128
      %v6470 = vpop.f32.mrf.mxu0
      %v6471 = vadd.f32 0.0, %v6470
      %v6472 = vpop.f32.mrf.mxu0
      %v6473 = vadd.f32 0.0, %v6472
      %v6474 = vpop.f32.mrf.mxu0
      %v6475 = vadd.f32 0.0, %v6474
      %v6476 = vpop.f32.mrf.mxu0
      %v6477 = vadd.f32 0.0, %v6476
      %6478 = vmatprep.mubr.bf16.mxu0 %v5138
      %6479 = vmatmul.mubr.bf16.gmra.mxu0 %v5137
      %v6480 = vpop.f32.mrf.mxu0
      %v6481 = vadd.f32 0.0, %v6480
      %v6482 = vpop.f32.mrf.mxu0
      %v6483 = vadd.f32 0.0, %v6482
      %v6484 = vpop.f32.mrf.mxu0
      %v6485 = vpop.f32.mrf.mxu0
      %6486 = vdwg.mxu0
      %6487 = vmatprep.subr.bf16.mxu0 %v4881
      %6488 = vmatpush1.bf16.msra.mxu0 %v4377
      %6489 = vmatprep.subr.bf16.mxu0 %v4880
      %6490 = vmatpush1.bf16.msra.mxu0 %v4376
      %6491 = vmatprep.subr.bf16.mxu0 %v4879
      %6492 = vmatpush1.bf16.msra.mxu0 %v4375
      %6493 = vmatprep.subr.bf16.mxu0 %v4878
      %6494 = vmatpush1.bf16.msra.mxu0 %v4374
      %6495 = vmatprep.subr.bf16.mxu0 %v4877
      %6496 = vmatpush1.bf16.msra.mxu0 %v4373
      %6497 = vmatprep.subr.bf16.mxu0 %v4876
      %6498 = vmatpush1.bf16.msra.mxu0 %v4372
      %6499 = vmatprep.subr.bf16.mxu0 %v4875
      %6500 = vmatpush1.bf16.msra.mxu0 %v4371
      %6501 = vmatprep.subr.bf16.mxu0 %v4874
      %6502 = vmatpush1.bf16.msra.mxu0 %v4370
      %6503 = vmatprep.subr.bf16.mxu0 %v4889
      %6504 = vmatpush2.bf16.msra.mxu0 %v4385
      %6505 = vmatprep.subr.bf16.mxu0 %v4888
      %6506 = vmatpush2.bf16.msra.mxu0 %v4384
      %6507 = vmatprep.subr.bf16.mxu0 %v4887
      %6508 = vmatpush2.bf16.msra.mxu0 %v4383
      %6509 = vmatprep.subr.bf16.mxu0 %v4886
      %6510 = vmatpush2.bf16.msra.mxu0 %v4382
      %6511 = vmatprep.subr.bf16.mxu0 %v4885
      %6512 = vmatpush2.bf16.msra.mxu0 %v4381
      %6513 = vmatprep.subr.bf16.mxu0 %v4884
      %6514 = vmatpush2.bf16.msra.mxu0 %v4380
      %6515 = vmatprep.subr.bf16.mxu0 %v4883
      %6516 = vmatpush2.bf16.msra.mxu0 %v4379
      %6517 = vmatprep.subr.bf16.mxu0 %v4882
      %6518 = vmatpush2.bf16.msra.mxu0 %v4378
      %6519 = vmatprep.mubr.bf16.mxu0 %v5104
      %6520 = vmatmul.mubr.bf16.gmra.mxu0 %v5103
      %v6521 = vpop.f32.mrf.mxu0
      %v6522 = vadd.f32 %v6441, %v6521
      %v6523 = vpop.f32.mrf.mxu0
      %v6524 = vadd.f32 %v6443, %v6523
      %v6525 = vpop.f32.mrf.mxu0
      %v6526 = vadd.f32 %v6445, %v6525
      %v6527 = vpop.f32.mrf.mxu0
      %v6528 = vadd.f32 %v6447, %v6527
      %6529 = vmatprep.mubr.bf16.mxu0 %v5113
      %6530 = vmatmul.mubr.bf16.gmra.mxu0 %v5112
      %v6531 = vpop.f32.mrf.mxu0
      %v6532 = vadd.f32 %v6451, %v6531
      %v6533 = vpop.f32.mrf.mxu0
      %v6534 = vadd.f32 %v6453, %v6533
      %v6535 = vpop.f32.mrf.mxu0
      %v6536 = vadd.f32 %v6455, %v6535
      %v6537 = vpop.f32.mrf.mxu0
      %v6538 = vadd.f32 %v6457, %v6537
      %6539 = vmatprep.mubr.bf16.mxu0 %v5122
      %6540 = vmatmul.mubr.bf16.gmra.mxu0 %v5121
      %v6541 = vpop.f32.mrf.mxu0
      %v6542 = vadd.f32 %v6461, %v6541
      %v6543 = vpop.f32.mrf.mxu0
      %v6544 = vadd.f32 %v6463, %v6543
      %v6545 = vpop.f32.mrf.mxu0
      %v6546 = vadd.f32 %v6465, %v6545
      %v6547 = vpop.f32.mrf.mxu0
      %v6548 = vadd.f32 %v6467, %v6547
      %6549 = vmatprep.mubr.bf16.mxu0 %v5131
      %6550 = vmatmul.mubr.bf16.gmra.mxu0 %v5130
      %v6551 = vpop.f32.mrf.mxu0
      %v6552 = vadd.f32 %v6471, %v6551
      %v6553 = vpop.f32.mrf.mxu0
      %v6554 = vadd.f32 %v6473, %v6553
      %v6555 = vpop.f32.mrf.mxu0
      %v6556 = vadd.f32 %v6475, %v6555
      %v6557 = vpop.f32.mrf.mxu0
      %v6558 = vadd.f32 %v6477, %v6557
      %6559 = vmatprep.mubr.bf16.mxu0 %v5140
      %6560 = vmatmul.mubr.bf16.gmra.mxu0 %v5139
      %v6561 = vpop.f32.mrf.mxu0
      %v6562 = vadd.f32 %v6481, %v6561
      %v6563 = vpop.f32.mrf.mxu0
      %v6564 = vadd.f32 %v6483, %v6563
      %v6565 = vpop.f32.mrf.mxu0
      %v6566 = vpop.f32.mrf.mxu0
      %6567 = vdwg.mxu0
      %6568 = vmatprep.subr.bf16.mxu0 %v4897
      %6569 = vmatpush1.bf16.msra.mxu0 %v4393
      %6570 = vmatprep.subr.bf16.mxu0 %v4896
      %6571 = vmatpush1.bf16.msra.mxu0 %v4392
      %6572 = vmatprep.subr.bf16.mxu0 %v4895
      %6573 = vmatpush1.bf16.msra.mxu0 %v4391
      %6574 = vmatprep.subr.bf16.mxu0 %v4894
      %6575 = vmatpush1.bf16.msra.mxu0 %v4390
      %6576 = vmatprep.subr.bf16.mxu0 %v4893
      %6577 = vmatpush1.bf16.msra.mxu0 %v4389
      %6578 = vmatprep.subr.bf16.mxu0 %v4892
      %6579 = vmatpush1.bf16.msra.mxu0 %v4388
      %6580 = vmatprep.subr.bf16.mxu0 %v4891
      %6581 = vmatpush1.bf16.msra.mxu0 %v4387
      %6582 = vmatprep.subr.bf16.mxu0 %v4890
      %6583 = vmatpush1.bf16.msra.mxu0 %v4386
      %6584 = vmatprep.subr.bf16.mxu0 %v4905
      %6585 = vmatpush2.bf16.msra.mxu0 %v4401
      %6586 = vmatprep.subr.bf16.mxu0 %v4904
      %6587 = vmatpush2.bf16.msra.mxu0 %v4400
      %6588 = vmatprep.subr.bf16.mxu0 %v4903
      %6589 = vmatpush2.bf16.msra.mxu0 %v4399
      %6590 = vmatprep.subr.bf16.mxu0 %v4902
      %6591 = vmatpush2.bf16.msra.mxu0 %v4398
      %6592 = vmatprep.subr.bf16.mxu0 %v4901
      %6593 = vmatpush2.bf16.msra.mxu0 %v4397
      %6594 = vmatprep.subr.bf16.mxu0 %v4900
      %6595 = vmatpush2.bf16.msra.mxu0 %v4396
      %6596 = vmatprep.subr.bf16.mxu0 %v4899
      %6597 = vmatpush2.bf16.msra.mxu0 %v4395
      %6598 = vmatprep.subr.bf16.mxu0 %v4898
      %6599 = vmatpush2.bf16.msra.mxu0 %v4394
      %6600 = vmatprep.mubr.bf16.mxu0 %v5106
      %6601 = vmatmul.mubr.bf16.gmra.mxu0 %v5105
      %v6602 = vpop.f32.mrf.mxu0
      %v6603 = vadd.f32 %v6522, %v6602
      %v6604 = vpop.f32.mrf.mxu0
      %v6605 = vadd.f32 %v6524, %v6604
      %v6606 = vpop.f32.mrf.mxu0
      %v6607 = vadd.f32 %v6526, %v6606
      %v6608 = vpop.f32.mrf.mxu0
      %v6609 = vadd.f32 %v6528, %v6608
      %6610 = vmatprep.mubr.bf16.mxu0 %v5115
      %6611 = vmatmul.mubr.bf16.gmra.mxu0 %v5114
      %v6612 = vpop.f32.mrf.mxu0
      %v6613 = vadd.f32 %v6532, %v6612
      %v6614 = vpop.f32.mrf.mxu0
      %v6615 = vadd.f32 %v6534, %v6614
      %v6616 = vpop.f32.mrf.mxu0
      %v6617 = vadd.f32 %v6536, %v6616
      %v6618 = vpop.f32.mrf.mxu0
      %v6619 = vadd.f32 %v6538, %v6618
      %6620 = vmatprep.mubr.bf16.mxu0 %v5124
      %6621 = vmatmul.mubr.bf16.gmra.mxu0 %v5123
      %v6622 = vpop.f32.mrf.mxu0
      %v6623 = vadd.f32 %v6542, %v6622
      %v6624 = vpop.f32.mrf.mxu0
      %v6625 = vadd.f32 %v6544, %v6624
      %v6626 = vpop.f32.mrf.mxu0
      %v6627 = vadd.f32 %v6546, %v6626
      %v6628 = vpop.f32.mrf.mxu0
      %v6629 = vadd.f32 %v6548, %v6628
      %6630 = vmatprep.mubr.bf16.mxu0 %v5133
      %6631 = vmatmul.mubr.bf16.gmra.mxu0 %v5132
      %v6632 = vpop.f32.mrf.mxu0
      %v6633 = vadd.f32 %v6552, %v6632
      %v6634 = vpop.f32.mrf.mxu0
      %v6635 = vadd.f32 %v6554, %v6634
      %v6636 = vpop.f32.mrf.mxu0
      %v6637 = vadd.f32 %v6556, %v6636
      %v6638 = vpop.f32.mrf.mxu0
      %v6639 = vadd.f32 %v6558, %v6638
      %6640 = vmatprep.mubr.bf16.mxu0 %v5142
      %6641 = vmatmul.mubr.bf16.gmra.mxu0 %v5141
      %v6642 = vpop.f32.mrf.mxu0
      %v6643 = vadd.f32 %v6562, %v6642
      %v6644 = vpop.f32.mrf.mxu0
      %v6645 = vadd.f32 %v6564, %v6644
      %v6646 = vpop.f32.mrf.mxu0
      %v6647 = vpop.f32.mrf.mxu0
      %6648 = vdwg.mxu0
      %6649 = vmatprep.subr.bf16.mxu0 %v4913
      %6650 = vmatpush1.bf16.msra.mxu0 %v4409
      %6651 = vmatprep.subr.bf16.mxu0 %v4912
      %6652 = vmatpush1.bf16.msra.mxu0 %v4408
      %6653 = vmatprep.subr.bf16.mxu0 %v4911
      %6654 = vmatpush1.bf16.msra.mxu0 %v4407
      %6655 = vmatprep.subr.bf16.mxu0 %v4910
      %6656 = vmatpush1.bf16.msra.mxu0 %v4406
      %6657 = vmatprep.subr.bf16.mxu0 %v4909
      %6658 = vmatpush1.bf16.msra.mxu0 %v4405
      %6659 = vmatprep.subr.bf16.mxu0 %v4908
      %6660 = vmatpush1.bf16.msra.mxu0 %v4404
      %6661 = vmatprep.subr.bf16.mxu0 %v4907
      %6662 = vmatpush1.bf16.msra.mxu0 %v4403
      %6663 = vmatprep.subr.bf16.mxu0 %v4906
      %6664 = vmatpush1.bf16.msra.mxu0 %v4402
      %6665 = vmatprep.subr.bf16.mxu0 %v4921
      %6666 = vmatpush2.bf16.msra.mxu0 %v4417
      %6667 = vmatprep.subr.bf16.mxu0 %v4920
      %6668 = vmatpush2.bf16.msra.mxu0 %v4416
      %6669 = vmatprep.subr.bf16.mxu0 %v4919
      %6670 = vmatpush2.bf16.msra.mxu0 %v4415
      %6671 = vmatprep.subr.bf16.mxu0 %v4918
      %6672 = vmatpush2.bf16.msra.mxu0 %v4414
      %6673 = vmatprep.subr.bf16.mxu0 %v4917
      %6674 = vmatpush2.bf16.msra.mxu0 %v4413
      %6675 = vmatprep.subr.bf16.mxu0 %v4916
      %6676 = vmatpush2.bf16.msra.mxu0 %v4412
      %6677 = vmatprep.subr.bf16.mxu0 %v4915
      %6678 = vmatpush2.bf16.msra.mxu0 %v4411
      %6679 = vmatprep.subr.bf16.mxu0 %v4914
      %6680 = vmatpush2.bf16.msra.mxu0 %v4410
      %6681 = vmatprep.mubr.bf16.mxu0 %v5108
      %6682 = vmatmul.mubr.bf16.gmra.mxu0 %v5107
      %v6683 = vpop.f32.mrf.mxu0
      %v6684 = vadd.f32 %v6603, %v6683
      %v6685 = vpop.f32.mrf.mxu0
      %v6686 = vadd.f32 %v6605, %v6685
      %v6687 = vpop.f32.mrf.mxu0
      %v6688 = vadd.f32 %v6607, %v6687
      %v6689 = vpop.f32.mrf.mxu0
      %v6690 = vadd.f32 %v6609, %v6689
      %6691 = vmatprep.mubr.bf16.mxu0 %v5117
      %6692 = vmatmul.mubr.bf16.gmra.mxu0 %v5116
      %v6693 = vpop.f32.mrf.mxu0
      %v6694 = vadd.f32 %v6613, %v6693
      %v6695 = vpop.f32.mrf.mxu0
      %v6696 = vadd.f32 %v6615, %v6695
      %v6697 = vpop.f32.mrf.mxu0
      %v6698 = vadd.f32 %v6617, %v6697
      %v6699 = vpop.f32.mrf.mxu0
      %v6700 = vadd.f32 %v6619, %v6699
      %6701 = vmatprep.mubr.bf16.mxu0 %v5126
      %6702 = vmatmul.mubr.bf16.gmra.mxu0 %v5125
      %v6703 = vpop.f32.mrf.mxu0
      %v6704 = vadd.f32 %v6623, %v6703
      %v6705 = vpop.f32.mrf.mxu0
      %v6706 = vadd.f32 %v6625, %v6705
      %v6707 = vpop.f32.mrf.mxu0
      %v6708 = vadd.f32 %v6627, %v6707
      %v6709 = vpop.f32.mrf.mxu0
      %v6710 = vadd.f32 %v6629, %v6709
      %6711 = vmatprep.mubr.bf16.mxu0 %v5135
      %6712 = vmatmul.mubr.bf16.gmra.mxu0 %v5134
      %v6713 = vpop.f32.mrf.mxu0
      %v6714 = vadd.f32 %v6633, %v6713
      %v6715 = vpop.f32.mrf.mxu0
      %v6716 = vadd.f32 %v6635, %v6715
      %v6717 = vpop.f32.mrf.mxu0
      %v6718 = vadd.f32 %v6637, %v6717
      %v6719 = vpop.f32.mrf.mxu0
      %v6720 = vadd.f32 %v6639, %v6719
      %6721 = vmatprep.mubr.bf16.mxu0 %v5144
      %6722 = vmatmul.mubr.bf16.gmra.mxu0 %v5143
      %v6723 = vpop.f32.mrf.mxu0
      %v6724 = vadd.f32 %v6643, %v6723
      %v6725 = vpop.f32.mrf.mxu0
      %v6726 = vadd.f32 %v6645, %v6725
      %v6727 = vpop.f32.mrf.mxu0
      %v6728 = vpop.f32.mrf.mxu0
      %6729 = vdwg.mxu0
      %6730 = vmatprep.subr.bf16.mxu0 %v4929
      %6731 = vmatpush1.bf16.msra.mxu0 %v4425
      %6732 = vmatprep.subr.bf16.mxu0 %v4928
      %6733 = vmatpush1.bf16.msra.mxu0 %v4424
      %6734 = vmatprep.subr.bf16.mxu0 %v4927
      %6735 = vmatpush1.bf16.msra.mxu0 %v4423
      %6736 = vmatprep.subr.bf16.mxu0 %v4926
      %6737 = vmatpush1.bf16.msra.mxu0 %v4422
      %6738 = vmatprep.subr.bf16.mxu0 %v4925
      %6739 = vmatpush1.bf16.msra.mxu0 %v4421
      %6740 = vmatprep.subr.bf16.mxu0 %v4924
      %6741 = vmatpush1.bf16.msra.mxu0 %v4420
      %6742 = vmatprep.subr.bf16.mxu0 %v4923
      %6743 = vmatpush1.bf16.msra.mxu0 %v4419
      %6744 = vmatprep.subr.bf16.mxu0 %v4922
      %6745 = vmatpush1.bf16.msra.mxu0 %v4418
      %6746 = vmatprep.subr.bf16.mxu0 0
      %6747 = vmatpush2.bf16.msra.mxu0 0
      %6748 = vmatprep.subr.bf16.mxu0 0
      %6749 = vmatpush2.bf16.msra.mxu0 0
      %6750 = vmatprep.subr.bf16.mxu0 0
      %6751 = vmatpush2.bf16.msra.mxu0 0
      %6752 = vmatprep.subr.bf16.mxu0 0
      %6753 = vmatpush2.bf16.msra.mxu0 0
      %6754 = vmatprep.subr.bf16.mxu0 0
      %6755 = vmatpush2.bf16.msra.mxu0 0
      %6756 = vmatprep.subr.bf16.mxu0 0
      %6757 = vmatpush2.bf16.msra.mxu0 0
      %6758 = vmatprep.subr.bf16.mxu0 0
      %6759 = vmatpush2.bf16.msra.mxu0 0
      %6760 = vmatprep.subr.bf16.mxu0 0
      %6761 = vmatpush2.bf16.msra.mxu0 0
      %6762 = vmatprep.mubr.bf16.mxu0 0
      %6763 = vmatmul.mubr.bf16.gmra.mxu0 %v5109
      %v6764 = vpop.f32.mrf.mxu0
      %v6765 = vadd.f32 %v6684, %v6764
      %v6766 = vpop.f32.mrf.mxu0
      %v6767 = vadd.f32 %v6686, %v6766
      %v6768 = vpop.f32.mrf.mxu0
      %v6769 = vadd.f32 %v6688, %v6768
      %v6770 = vpop.f32.mrf.mxu0
      %v6771 = vadd.f32 %v6690, %v6770
      %6772 = vmatprep.mubr.bf16.mxu0 0
      %6773 = vmatmul.mubr.bf16.gmra.mxu0 %v5118
      %v6774 = vpop.f32.mrf.mxu0
      %v6775 = vadd.f32 %v6694, %v6774
      %v6776 = vpop.f32.mrf.mxu0
      %v6777 = vadd.f32 %v6696, %v6776
      %v6778 = vpop.f32.mrf.mxu0
      %v6779 = vadd.f32 %v6698, %v6778
      %v6780 = vpop.f32.mrf.mxu0
      %v6781 = vadd.f32 %v6700, %v6780
      %6782 = vmatprep.mubr.bf16.mxu0 0
      %6783 = vmatmul.mubr.bf16.gmra.mxu0 %v5127
      %v6784 = vpop.f32.mrf.mxu0
      %v6785 = vadd.f32 %v6704, %v6784
      %v6786 = vpop.f32.mrf.mxu0
      %v6787 = vadd.f32 %v6706, %v6786
      %v6788 = vpop.f32.mrf.mxu0
      %v6789 = vadd.f32 %v6708, %v6788
      %v6790 = vpop.f32.mrf.mxu0
      %v6791 = vadd.f32 %v6710, %v6790
      %6792 = vmatprep.mubr.bf16.mxu0 0
      %6793 = vmatmul.mubr.bf16.gmra.mxu0 %v5136
      %v6794 = vpop.f32.mrf.mxu0
      %v6795 = vadd.f32 %v6714, %v6794
      %v6796 = vpop.f32.mrf.mxu0
      %v6797 = vadd.f32 %v6716, %v6796
      %v6798 = vpop.f32.mrf.mxu0
      %v6799 = vadd.f32 %v6718, %v6798
      %v6800 = vpop.f32.mrf.mxu0
      %v6801 = vadd.f32 %v6720, %v6800
      %6802 = vmatprep.mubr.bf16.mxu0 0
      %6803 = vmatmul.mubr.bf16.gmra.mxu0 %v5145
      %v6804 = vpop.f32.mrf.mxu0
      %v6805 = vadd.f32 %v6724, %v6804
      %v6806 = vpop.f32.mrf.mxu0
      %v6807 = vadd.f32 %v6726, %v6806
      %v6808 = vpop.f32.mrf.mxu0
      %v6809 = vpop.f32.mrf.mxu0
      %6810 = vdwg.mxu0
      %v6811 = vpack.c.bf16 %v5554, %v5550
      %v6812 = vpack.c.bf16 %v5556, %v5552
      %v6813 = vpack.c.bf16 %v5959, %v5955
      %v6814 = vpack.c.bf16 %v5961, %v5957
      %v6815 = vpack.c.bf16 %v6364, %v6360
      %v6816 = vpack.c.bf16 %v6366, %v6362
      %v6817 = vpack.c.bf16 %v6769, %v6765
      %v6818 = vpack.c.bf16 %v6771, %v6767
      %v6819 = vpack.c.bf16 %v5564, %v5560
      %v6820 = vpack.c.bf16 %v5566, %v5562
      %v6821 = vpack.c.bf16 %v5969, %v5965
      %v6822 = vpack.c.bf16 %v5971, %v5967
      %v6823 = vpack.c.bf16 %v6374, %v6370
      %v6824 = vpack.c.bf16 %v6376, %v6372
      %v6825 = vpack.c.bf16 %v6779, %v6775
      %v6826 = vpack.c.bf16 %v6781, %v6777
      %v6827 = vpack.c.bf16 %v5574, %v5570
      %v6828 = vpack.c.bf16 %v5576, %v5572
      %v6829 = vpack.c.bf16 %v5979, %v5975
      %v6830 = vpack.c.bf16 %v5981, %v5977
      %v6831 = vpack.c.bf16 %v6384, %v6380
      %v6832 = vpack.c.bf16 %v6386, %v6382
      %v6833 = vpack.c.bf16 %v6789, %v6785
      %v6834 = vpack.c.bf16 %v6791, %v6787
      %v6835 = vpack.c.bf16 %v5584, %v5580
      %v6836 = vpack.c.bf16 %v5586, %v5582
      %v6837 = vpack.c.bf16 %v5989, %v5985
      %v6838 = vpack.c.bf16 %v5991, %v5987
      %v6839 = vpack.c.bf16 %v6394, %v6390
      %v6840 = vpack.c.bf16 %v6396, %v6392
      %v6841 = vpack.c.bf16 %v6799, %v6795
      %v6842 = vpack.c.bf16 %v6801, %v6797
      %v6843 = vpack.c.bf16 %v5590, %v5590
      %v6844 = vpack.c.bf16 %v5592, %v5592
      %v6845 = vpack.c.bf16 %v5995, %v5995
      %v6846 = vpack.c.bf16 %v5997, %v5997
      %v6847 = vpack.c.bf16 %v6400, %v6400
      %v6848 = vpack.c.bf16 %v6402, %v6402
      %v6849 = vpack.c.bf16 %v6805, %v6805
      %v6850 = vpack.c.bf16 %v6807, %v6807
      %v6851 = vld [vmem:[%s2] sm:$0xf]
      %v6852 = vld [vmem:[%s2 + $0x4] sm:$0xf]
      %v6853 = vld [vmem:[%s2 + $0x8] sm:$0xf]
      %v6854 = vld [vmem:[%s2 + $0xc] sm:$0xf]
      %v6855 = vld [vmem:[%s2 + $0x10] sm:$0xf]
      %v6856 = vld [vmem:[%s2 + $0x14] sm:$0xf]
      %v6857 = vld [vmem:[%s2 + $0x18] sm:$0xf]
      %v6858 = vld [vmem:[%s2 + $0x1c] sm:$0xf]
      %v6859 = vld [vmem:[%s2 + $0x20] sm:$0xf]
      %v6860 = vld [vmem:[%s2 + $0x24] sm:$0xf]
      %v6861 = vld [vmem:[%s2 + $0x28] sm:$0xf]
      %v6862 = vld [vmem:[%s2 + $0x2c] sm:$0xf]
      %v6863 = vld [vmem:[%s2 + $0x30] sm:$0xf]
      %v6864 = vld [vmem:[%s2 + $0x34] sm:$0xf]
      %v6865 = vld [vmem:[%s2 + $0x38] sm:$0xf]
      %v6866 = vld [vmem:[%s2 + $0x3c] sm:$0xf]
      %v6867 = vld [vmem:[%s2 + $0x40] sm:$0xf]
      %v6868 = vld [vmem:[%s2 + $0x44] sm:$0xf]
      %v6869 = vld [vmem:[%s2 + $0x48] sm:$0xf]
      %v6870 = vld [vmem:[%s2 + $0x4c] sm:$0xf]
      %v6871 = vld [vmem:[%s2 + $0x50] sm:$0xf]
      %v6872 = vld [vmem:[%s2 + $0x54] sm:$0xf]
      %v6873 = vld [vmem:[%s2 + $0x58] sm:$0xf]
      %v6874 = vld [vmem:[%s2 + $0x5c] sm:$0xf]
      %v6875 = vld [vmem:[%s2 + $0x60] sm:$0xf]
      %v6876 = vld [vmem:[%s2 + $0x64] sm:$0xf]
      %v6877 = vld [vmem:[%s2 + $0x68] sm:$0xf]
      %v6878 = vld [vmem:[%s2 + $0x6c] sm:$0xf]
      %v6879 = vld [vmem:[%s2 + $0x70] sm:$0xf]
      %v6880 = vld [vmem:[%s2 + $0x74] sm:$0xf]
      %v6881 = vld [vmem:[%s2 + $0x78] sm:$0xf]
      %v6882 = vld [vmem:[%s2 + $0x7c] sm:$0xf]
      %v6883 = vld [vmem:[%s2 + $0x80] sm:$0xf]
      %v6884 = vld [vmem:[%s2 + $0x84] sm:$0xf]
      %v6885 = vld [vmem:[%s2 + $0x88] sm:$0xf]
      %v6886 = vld [vmem:[%s2 + $0x8c] sm:$0xf]
      %v6887 = vld [vmem:[%s2 + $0x90] sm:$0xf]
      %v6888 = vld [vmem:[%s2 + $0x94] sm:$0xf]
      %v6889 = vld [vmem:[%s2 + $0x98] sm:$0xf]
      %v6890 = vld [vmem:[%s2 + $0x9c] sm:$0xf]
      %v6891 = vld [vmem:[%s2 + $0xa0] sm:$0xf]
      %v6892 = vld [vmem:[%s2 + $0xa4] sm:$0xf]
      %v6893 = vld [vmem:[%s2 + $0xa8] sm:$0xf]
      %v6894 = vld [vmem:[%s2 + $0xac] sm:$0xf]
      %v6895 = vld [vmem:[%s2 + $0xb0] sm:$0xf]
      %v6896 = vld [vmem:[%s2 + $0xb4] sm:$0xf]
      %v6897 = vld [vmem:[%s2 + $0xb8] sm:$0xf]
      %v6898 = vld [vmem:[%s2 + $0xbc] sm:$0xf]
      %v6899 = vld [vmem:[%s2 + $0xc0] sm:$0xf]
      %v6900 = vld [vmem:[%s2 + $0xc4] sm:$0xf]
      %v6901 = vld [vmem:[%s2 + $0xc8] sm:$0xf]
      %v6902 = vld [vmem:[%s2 + $0xcc] sm:$0xf]
      %v6903 = vld [vmem:[%s2 + $0xd0] sm:$0xf]
      %v6904 = vld [vmem:[%s2 + $0xd4] sm:$0xf]
      %v6905 = vld [vmem:[%s2 + $0xd8] sm:$0xf]
      %v6906 = vld [vmem:[%s2 + $0xdc] sm:$0xf]
      %v6907 = vld [vmem:[%s2 + $0xe0] sm:$0xf]
      %v6908 = vld [vmem:[%s2 + $0xe4] sm:$0xf]
      %v6909 = vld [vmem:[%s2 + $0xe8] sm:$0xf]
      %v6910 = vld [vmem:[%s2 + $0xec] sm:$0xf]
      %v6911 = vld [vmem:[%s2 + $0xf0] sm:$0xf]
      %v6912 = vld [vmem:[%s2 + $0xf4] sm:$0xf]
      %v6913 = vld [vmem:[%s2 + $0xf8] sm:$0xf]
      %v6914 = vld [vmem:[%s2 + $0xfc] sm:$0xf]
      %v6915 = vld [vmem:[%s2 + $0x100] sm:$0xf]
      %v6916 = vld [vmem:[%s2 + $0x104] sm:$0xf]
      %v6917 = vld [vmem:[%s2 + $0x108] sm:$0xf]
      %v6918 = vld [vmem:[%s2 + $0x10c] sm:$0xf]
      %v6919 = vld [vmem:[%s2 + $0x110] sm:$0xf]
      %v6920 = vld [vmem:[%s2 + $0x114] sm:$0xf]
      %v6921 = vld [vmem:[%s2 + $0x118] sm:$0xf]
      %v6922 = vld [vmem:[%s2 + $0x11c] sm:$0xf]
      %v6923 = vld [vmem:[%s2 + $0x120] sm:$0xf]
      %v6924 = vld [vmem:[%s2 + $0x124] sm:$0xf]
      %v6925 = vld [vmem:[%s2 + $0x128] sm:$0xf]
      %v6926 = vld [vmem:[%s2 + $0x12c] sm:$0xf]
      %v6927 = vld [vmem:[%s2 + $0x130] sm:$0xf]
      %v6928 = vld [vmem:[%s2 + $0x134] sm:$0xf]
      %v6929 = vld [vmem:[%s2 + $0x138] sm:$0xf]
      %v6930 = vld [vmem:[%s2 + $0x13c] sm:$0xf]
      %v6931 = vld [vmem:[%s2 + $0x140] sm:$0xf]
      %v6932 = vld [vmem:[%s2 + $0x144] sm:$0xf]
      %v6933 = vld [vmem:[%s2 + $0x148] sm:$0xf]
      %v6934 = vld [vmem:[%s2 + $0x14c] sm:$0xf]
      %v6935 = vld [vmem:[%s2 + $0x150] sm:$0xf]
      %v6936 = vld [vmem:[%s2 + $0x154] sm:$0xf]
      %v6937 = vld [vmem:[%s2 + $0x158] sm:$0xf]
      %v6938 = vld [vmem:[%s2 + $0x15c] sm:$0xf]
      %v6939 = vld [vmem:[%s2 + $0x160] sm:$0xf]
      %v6940 = vld [vmem:[%s2 + $0x164] sm:$0xf]
      %v6941 = vld [vmem:[%s2 + $0x168] sm:$0xf]
      %v6942 = vld [vmem:[%s2 + $0x16c] sm:$0xf]
      %v6943 = vld [vmem:[%s2 + $0x170] sm:$0xf]
      %v6944 = vld [vmem:[%s2 + $0x174] sm:$0xf]
      %v6945 = vld [vmem:[%s2 + $0x178] sm:$0xf]
      %v6946 = vld [vmem:[%s2 + $0x17c] sm:$0xf]
      %v6947 = vld [vmem:[%s2 + $0x180] sm:$0xf]
      %v6948 = vld [vmem:[%s2 + $0x184] sm:$0xf]
      %v6949 = vld [vmem:[%s2 + $0x188] sm:$0xf]
      %v6950 = vld [vmem:[%s2 + $0x18c] sm:$0xf]
      %v6951 = vld [vmem:[%s2 + $0x190] sm:$0xf]
      %v6952 = vld [vmem:[%s2 + $0x194] sm:$0xf]
      %v6953 = vld [vmem:[%s2 + $0x198] sm:$0xf]
      %v6954 = vld [vmem:[%s2 + $0x19c] sm:$0xf]
      %v6955 = vld [vmem:[%s2 + $0x1a0] sm:$0xf]
      %v6956 = vld [vmem:[%s2 + $0x1a4] sm:$0xf]
      %v6957 = vld [vmem:[%s2 + $0x1a8] sm:$0xf]
      %v6958 = vld [vmem:[%s2 + $0x1ac] sm:$0xf]
      %v6959 = vld [vmem:[%s2 + $0x1b0] sm:$0xf]
      %v6960 = vld [vmem:[%s2 + $0x1b4] sm:$0xf]
      %v6961 = vld [vmem:[%s2 + $0x1b8] sm:$0xf]
      %v6962 = vld [vmem:[%s2 + $0x1bc] sm:$0xf]
      %v6963 = vld [vmem:[%s2 + $0x1c0] sm:$0xf]
      %v6964 = vld [vmem:[%s2 + $0x1c4] sm:$0xf]
      %v6965 = vld [vmem:[%s2 + $0x1c8] sm:$0xf]
      %v6966 = vld [vmem:[%s2 + $0x1cc] sm:$0xf]
      %v6967 = vld [vmem:[%s2 + $0x1d0] sm:$0xf]
      %v6968 = vld [vmem:[%s2 + $0x1d4] sm:$0xf]
      %v6969 = vld [vmem:[%s2 + $0x1d8] sm:$0xf]
      %v6970 = vld [vmem:[%s2 + $0x1dc] sm:$0xf]
      %v6971 = vld [vmem:[%s2 + $0x1e0] sm:$0xf]
      %v6972 = vld [vmem:[%s2 + $0x1e4] sm:$0xf]
      %v6973 = vld [vmem:[%s2 + $0x1e8] sm:$0xf]
      %v6974 = vld [vmem:[%s2 + $0x1ec] sm:$0xf]
      %v6975 = vld [vmem:[%s2 + $0x1f0] sm:$0xf]
      %v6976 = vld [vmem:[%s2 + $0x1f4] sm:$0xf]
      %v6977 = vld [vmem:[%s2 + $0x1f8] sm:$0xf]
      %v6978 = vld [vmem:[%s2 + $0x1fc] sm:$0xf]
      %v7107 = vunpack.c.l.b16 %v6851
      %v7108 = vunpack.c.l.b16 %v6852
      %v7109 = vunpack.c.l.b16 %v6853
      %v7110 = vunpack.c.l.b16 %v6854
      %v7111 = vunpack.c.l.b16 %v6855
      %v7112 = vunpack.c.l.b16 %v6856
      %v7113 = vunpack.c.l.b16 %v6857
      %v7114 = vunpack.c.l.b16 %v6858
      %v7115 = vunpack.c.l.b16 %v6859
      %v7116 = vunpack.c.l.b16 %v6860
      %v7117 = vunpack.c.l.b16 %v6861
      %v7118 = vunpack.c.l.b16 %v6862
      %v7119 = vunpack.c.l.b16 %v6863
      %v7120 = vunpack.c.l.b16 %v6864
      %v7121 = vunpack.c.l.b16 %v6865
      %v7122 = vunpack.c.l.b16 %v6866
      %v7123 = vunpack.c.l.b16 %v6867
      %v7124 = vunpack.c.l.b16 %v6868
      %v7125 = vunpack.c.l.b16 %v6869
      %v7126 = vunpack.c.l.b16 %v6870
      %v7127 = vunpack.c.l.b16 %v6871
      %v7128 = vunpack.c.l.b16 %v6872
      %v7129 = vunpack.c.l.b16 %v6873
      %v7130 = vunpack.c.l.b16 %v6874
      %v7131 = vunpack.c.l.b16 %v6875
      %v7132 = vunpack.c.l.b16 %v6876
      %v7133 = vunpack.c.l.b16 %v6877
      %v7134 = vunpack.c.l.b16 %v6878
      %v7135 = vunpack.c.l.b16 %v6879
      %v7136 = vunpack.c.l.b16 %v6880
      %v7137 = vunpack.c.l.b16 %v6881
      %v7138 = vunpack.c.l.b16 %v6882
      %v7139 = vunpack.c.l.b16 %v6883
      %v7140 = vunpack.c.l.b16 %v6884
      %v7141 = vunpack.c.l.b16 %v6885
      %v7142 = vunpack.c.l.b16 %v6886
      %v7143 = vunpack.c.l.b16 %v6887
      %v7144 = vunpack.c.l.b16 %v6888
      %v7145 = vunpack.c.l.b16 %v6889
      %v7146 = vunpack.c.l.b16 %v6890
      %v7147 = vunpack.c.l.b16 %v6891
      %v7148 = vunpack.c.l.b16 %v6892
      %v7149 = vunpack.c.l.b16 %v6893
      %v7150 = vunpack.c.l.b16 %v6894
      %v7151 = vunpack.c.l.b16 %v6895
      %v7152 = vunpack.c.l.b16 %v6896
      %v7153 = vunpack.c.l.b16 %v6897
      %v7154 = vunpack.c.l.b16 %v6898
      %v7155 = vunpack.c.l.b16 %v6899
      %v7156 = vunpack.c.l.b16 %v6900
      %v7157 = vunpack.c.l.b16 %v6901
      %v7158 = vunpack.c.l.b16 %v6902
      %v7159 = vunpack.c.l.b16 %v6903
      %v7160 = vunpack.c.l.b16 %v6904
      %v7161 = vunpack.c.l.b16 %v6905
      %v7162 = vunpack.c.l.b16 %v6906
      %v7163 = vunpack.c.l.b16 %v6907
      %v7164 = vunpack.c.l.b16 %v6908
      %v7165 = vunpack.c.l.b16 %v6909
      %v7166 = vunpack.c.l.b16 %v6910
      %v7167 = vunpack.c.l.b16 %v6911
      %v7168 = vunpack.c.l.b16 %v6912
      %v7169 = vunpack.c.l.b16 %v6913
      %v7170 = vunpack.c.l.b16 %v6914
      %v7171 = vunpack.c.l.b16 %v6915
      %v7172 = vunpack.c.l.b16 %v6916
      %v7173 = vunpack.c.l.b16 %v6917
      %v7174 = vunpack.c.l.b16 %v6918
      %v7175 = vunpack.c.l.b16 %v6919
      %v7176 = vunpack.c.l.b16 %v6920
      %v7177 = vunpack.c.l.b16 %v6921
      %v7178 = vunpack.c.l.b16 %v6922
      %v7179 = vunpack.c.l.b16 %v6923
      %v7180 = vunpack.c.l.b16 %v6924
      %v7181 = vunpack.c.l.b16 %v6925
      %v7182 = vunpack.c.l.b16 %v6926
      %v7183 = vunpack.c.l.b16 %v6927
      %v7184 = vunpack.c.l.b16 %v6928
      %v7185 = vunpack.c.l.b16 %v6929
      %v7186 = vunpack.c.l.b16 %v6930
      %v7187 = vunpack.c.l.b16 %v6931
      %v7188 = vunpack.c.l.b16 %v6932
      %v7189 = vunpack.c.l.b16 %v6933
      %v7190 = vunpack.c.l.b16 %v6934
      %v7191 = vunpack.c.l.b16 %v6935
      %v7192 = vunpack.c.l.b16 %v6936
      %v7193 = vunpack.c.l.b16 %v6937
      %v7194 = vunpack.c.l.b16 %v6938
      %v7195 = vunpack.c.l.b16 %v6939
      %v7196 = vunpack.c.l.b16 %v6940
      %v7197 = vunpack.c.l.b16 %v6941
      %v7198 = vunpack.c.l.b16 %v6942
      %v7199 = vunpack.c.l.b16 %v6943
      %v7200 = vunpack.c.l.b16 %v6944
      %v7201 = vunpack.c.l.b16 %v6945
      %v7202 = vunpack.c.l.b16 %v6946
      %v7203 = vunpack.c.l.b16 %v6947
      %v7204 = vunpack.c.l.b16 %v6948
      %v7205 = vunpack.c.l.b16 %v6949
      %v7206 = vunpack.c.l.b16 %v6950
      %v7207 = vunpack.c.l.b16 %v6951
      %v7208 = vunpack.c.l.b16 %v6952
      %v7209 = vunpack.c.l.b16 %v6953
      %v7210 = vunpack.c.l.b16 %v6954
      %v7211 = vunpack.c.l.b16 %v6955
      %v7212 = vunpack.c.l.b16 %v6956
      %v7213 = vunpack.c.l.b16 %v6957
      %v7214 = vunpack.c.l.b16 %v6958
      %v7215 = vunpack.c.l.b16 %v6959
      %v7216 = vunpack.c.l.b16 %v6960
      %v7217 = vunpack.c.l.b16 %v6961
      %v7218 = vunpack.c.l.b16 %v6962
      %v7219 = vunpack.c.l.b16 %v6963
      %v7220 = vunpack.c.l.b16 %v6964
      %v7221 = vunpack.c.l.b16 %v6965
      %v7222 = vunpack.c.l.b16 %v6966
      %v7223 = vunpack.c.l.b16 %v6967
      %v7224 = vunpack.c.l.b16 %v6968
      %v7225 = vunpack.c.l.b16 %v6969
      %v7226 = vunpack.c.l.b16 %v6970
      %v7227 = vunpack.c.l.b16 %v6971
      %v7228 = vunpack.c.l.b16 %v6972
      %v7229 = vunpack.c.l.b16 %v6973
      %v7230 = vunpack.c.l.b16 %v6974
      %v7231 = vunpack.c.l.b16 %v6975
      %v7232 = vunpack.c.l.b16 %v6976
      %v7233 = vunpack.c.l.b16 %v6977
      %v7234 = vunpack.c.l.b16 %v6978
      %v7235 = vpack.c.b16 %v7108, %v7107
      %v7236 = vpack.c.b16 %v7110, %v7109
      %v7237 = vpack.c.b16 %v7112, %v7111
      %v7238 = vpack.c.b16 %v7114, %v7113
      %v7239 = vpack.c.b16 %v7116, %v7115
      %v7240 = vpack.c.b16 %v7118, %v7117
      %v7241 = vpack.c.b16 %v7120, %v7119
      %v7242 = vpack.c.b16 %v7122, %v7121
      %v7243 = vpack.c.b16 %v7124, %v7123
      %v7244 = vpack.c.b16 %v7126, %v7125
      %v7245 = vpack.c.b16 %v7128, %v7127
      %v7246 = vpack.c.b16 %v7130, %v7129
      %v7247 = vpack.c.b16 %v7132, %v7131
      %v7248 = vpack.c.b16 %v7134, %v7133
      %v7249 = vpack.c.b16 %v7136, %v7135
      %v7250 = vpack.c.b16 %v7138, %v7137
      %v7251 = vpack.c.b16 %v7140, %v7139
      %v7252 = vpack.c.b16 %v7142, %v7141
      %v7253 = vpack.c.b16 %v7144, %v7143
      %v7254 = vpack.c.b16 %v7146, %v7145
      %v7255 = vpack.c.b16 %v7148, %v7147
      %v7256 = vpack.c.b16 %v7150, %v7149
      %v7257 = vpack.c.b16 %v7152, %v7151
      %v7258 = vpack.c.b16 %v7154, %v7153
      %v7259 = vpack.c.b16 %v7156, %v7155
      %v7260 = vpack.c.b16 %v7158, %v7157
      %v7261 = vpack.c.b16 %v7160, %v7159
      %v7262 = vpack.c.b16 %v7162, %v7161
      %v7263 = vpack.c.b16 %v7164, %v7163
      %v7264 = vpack.c.b16 %v7166, %v7165
      %v7265 = vpack.c.b16 %v7168, %v7167
      %v7266 = vpack.c.b16 %v7170, %v7169
      %v7267 = vpack.c.b16 %v7172, %v7171
      %v7268 = vpack.c.b16 %v7174, %v7173
      %v7269 = vpack.c.b16 %v7176, %v7175
      %v7270 = vpack.c.b16 %v7178, %v7177
      %v7271 = vpack.c.b16 %v7180, %v7179
      %v7272 = vpack.c.b16 %v7182, %v7181
      %v7273 = vpack.c.b16 %v7184, %v7183
      %v7274 = vpack.c.b16 %v7186, %v7185
      %v7275 = vpack.c.b16 %v7188, %v7187
      %v7276 = vpack.c.b16 %v7190, %v7189
      %v7277 = vpack.c.b16 %v7192, %v7191
      %v7278 = vpack.c.b16 %v7194, %v7193
      %v7279 = vpack.c.b16 %v7196, %v7195
      %v7280 = vpack.c.b16 %v7198, %v7197
      %v7281 = vpack.c.b16 %v7200, %v7199
      %v7282 = vpack.c.b16 %v7202, %v7201
      %v7283 = vpack.c.b16 %v7204, %v7203
      %v7284 = vpack.c.b16 %v7206, %v7205
      %v7285 = vpack.c.b16 %v7208, %v7207
      %v7286 = vpack.c.b16 %v7210, %v7209
      %v7287 = vpack.c.b16 %v7212, %v7211
      %v7288 = vpack.c.b16 %v7214, %v7213
      %v7289 = vpack.c.b16 %v7216, %v7215
      %v7290 = vpack.c.b16 %v7218, %v7217
      %v7291 = vpack.c.b16 %v7220, %v7219
      %v7292 = vpack.c.b16 %v7222, %v7221
      %v7293 = vpack.c.b16 %v7224, %v7223
      %v7294 = vpack.c.b16 %v7226, %v7225
      %v7295 = vpack.c.b16 %v7228, %v7227
      %v7296 = vpack.c.b16 %v7230, %v7229
      %v7297 = vpack.c.b16 %v7232, %v7231
      %v7298 = vpack.c.b16 %v7234, %v7233
      %7363 = vmatprep.subr.bf16.mxu0 0
      %7364 = vmatpush1.bf16.msra.mxu0 %v7242
      %7365 = vmatprep.subr.bf16.mxu0 0
      %7366 = vmatpush1.bf16.msra.mxu0 %v7241
      %7367 = vmatprep.subr.bf16.mxu0 0
      %7368 = vmatpush1.bf16.msra.mxu0 %v7240
      %7369 = vmatprep.subr.bf16.mxu0 0
      %7370 = vmatpush1.bf16.msra.mxu0 %v7239
      %7371 = vmatprep.subr.bf16.mxu0 0
      %7372 = vmatpush1.bf16.msra.mxu0 %v7238
      %7373 = vmatprep.subr.bf16.mxu0 0
      %7374 = vmatpush1.bf16.msra.mxu0 %v7237
      %7375 = vmatprep.subr.bf16.mxu0 0
      %7376 = vmatpush1.bf16.msra.mxu0 %v7236
      %7377 = vmatprep.subr.bf16.mxu0 0
      %7378 = vmatpush1.bf16.msra.mxu0 %v7235
      %7379 = vmatprep.subr.bf16.mxu0 0
      %7380 = vmatpush2.bf16.msra.mxu0 %v7250
      %7381 = vmatprep.subr.bf16.mxu0 0
      %7382 = vmatpush2.bf16.msra.mxu0 %v7249
      %7383 = vmatprep.subr.bf16.mxu0 0
      %7384 = vmatpush2.bf16.msra.mxu0 %v7248
      %7385 = vmatprep.subr.bf16.mxu0 0
      %7386 = vmatpush2.bf16.msra.mxu0 %v7247
      %7387 = vmatprep.subr.bf16.mxu0 0
      %7388 = vmatpush2.bf16.msra.mxu0 %v7246
      %7389 = vmatprep.subr.bf16.mxu0 0
      %7390 = vmatpush2.bf16.msra.mxu0 %v7245
      %7391 = vmatprep.subr.bf16.mxu0 0
      %7392 = vmatpush2.bf16.msra.mxu0 %v7244
      %7393 = vmatprep.subr.bf16.mxu0 0
      %7394 = vmatpush2.bf16.msra.mxu0 %v7243
      %7395 = vmatprep.mubr.bf16.mxu0 %v6812
      %7396 = vmatmul.mubr.bf16.gmra.mxu0 %v6811
      %v7397 = vpop.f32.mrf.mxu0
      %v7398 = vadd.f32 0.0, %v7397
      %v7399 = vpop.f32.mrf.mxu0
      %v7400 = vpop.f32.mrf.mxu0
      %v7401 = vadd.f32 0.0, %v7400
      %v7402 = vpop.f32.mrf.mxu0
      %7403 = vmatprep.mubr.bf16.mxu0 %v6820
      %7404 = vmatmul.mubr.bf16.gmra.mxu0 %v6819
      %v7405 = vpop.f32.mrf.mxu0
      %v7406 = vadd.f32 0.0, %v7405
      %v7407 = vpop.f32.mrf.mxu0
      %v7408 = vpop.f32.mrf.mxu0
      %v7409 = vadd.f32 0.0, %v7408
      %v7410 = vpop.f32.mrf.mxu0
      %7411 = vmatprep.mubr.bf16.mxu0 %v6828
      %7412 = vmatmul.mubr.bf16.gmra.mxu0 %v6827
      %v7413 = vpop.f32.mrf.mxu0
      %v7414 = vadd.f32 0.0, %v7413
      %v7415 = vpop.f32.mrf.mxu0
      %v7416 = vpop.f32.mrf.mxu0
      %v7417 = vadd.f32 0.0, %v7416
      %v7418 = vpop.f32.mrf.mxu0
      %7419 = vmatprep.mubr.bf16.mxu0 %v6836
      %7420 = vmatmul.mubr.bf16.gmra.mxu0 %v6835
      %v7421 = vpop.f32.mrf.mxu0
      %v7422 = vadd.f32 0.0, %v7421
      %v7423 = vpop.f32.mrf.mxu0
      %v7424 = vpop.f32.mrf.mxu0
      %v7425 = vadd.f32 0.0, %v7424
      %v7426 = vpop.f32.mrf.mxu0
      %7427 = vmatprep.mubr.bf16.mxu0 %v6844
      %7428 = vmatmul.mubr.bf16.gmra.mxu0 %v6843
      %v7429 = vpop.f32.mrf.mxu0
      %v7430 = vadd.f32 0.0, %v7429
      %v7431 = vpop.f32.mrf.mxu0
      %v7432 = vpop.f32.mrf.mxu0
      %v7433 = vpop.f32.mrf.mxu0
      %7434 = vdwg.mxu0
      %7435 = vmatprep.subr.bf16.mxu0 0
      %7436 = vmatpush1.bf16.msra.mxu0 %v7258
      %7437 = vmatprep.subr.bf16.mxu0 0
      %7438 = vmatpush1.bf16.msra.mxu0 %v7257
      %7439 = vmatprep.subr.bf16.mxu0 0
      %7440 = vmatpush1.bf16.msra.mxu0 %v7256
      %7441 = vmatprep.subr.bf16.mxu0 0
      %7442 = vmatpush1.bf16.msra.mxu0 %v7255
      %7443 = vmatprep.subr.bf16.mxu0 0
      %7444 = vmatpush1.bf16.msra.mxu0 %v7254
      %7445 = vmatprep.subr.bf16.mxu0 0
      %7446 = vmatpush1.bf16.msra.mxu0 %v7253
      %7447 = vmatprep.subr.bf16.mxu0 0
      %7448 = vmatpush1.bf16.msra.mxu0 %v7252
      %7449 = vmatprep.subr.bf16.mxu0 0
      %7450 = vmatpush1.bf16.msra.mxu0 %v7251
      %7451 = vmatprep.subr.bf16.mxu0 0
      %7452 = vmatpush2.bf16.msra.mxu0 %v7266
      %7453 = vmatprep.subr.bf16.mxu0 0
      %7454 = vmatpush2.bf16.msra.mxu0 %v7265
      %7455 = vmatprep.subr.bf16.mxu0 0
      %7456 = vmatpush2.bf16.msra.mxu0 %v7264
      %7457 = vmatprep.subr.bf16.mxu0 0
      %7458 = vmatpush2.bf16.msra.mxu0 %v7263
      %7459 = vmatprep.subr.bf16.mxu0 0
      %7460 = vmatpush2.bf16.msra.mxu0 %v7262
      %7461 = vmatprep.subr.bf16.mxu0 0
      %7462 = vmatpush2.bf16.msra.mxu0 %v7261
      %7463 = vmatprep.subr.bf16.mxu0 0
      %7464 = vmatpush2.bf16.msra.mxu0 %v7260
      %7465 = vmatprep.subr.bf16.mxu0 0
      %7466 = vmatpush2.bf16.msra.mxu0 %v7259
      %7467 = vmatprep.mubr.bf16.mxu0 %v6814
      %7468 = vmatmul.mubr.bf16.gmra.mxu0 %v6813
      %v7469 = vpop.f32.mrf.mxu0
      %v7470 = vadd.f32 %v7398, %v7469
      %v7471 = vpop.f32.mrf.mxu0
      %v7472 = vpop.f32.mrf.mxu0
      %v7473 = vadd.f32 %v7401, %v7472
      %v7474 = vpop.f32.mrf.mxu0
      %7475 = vmatprep.mubr.bf16.mxu0 %v6822
      %7476 = vmatmul.mubr.bf16.gmra.mxu0 %v6821
      %v7477 = vpop.f32.mrf.mxu0
      %v7478 = vadd.f32 %v7406, %v7477
      %v7479 = vpop.f32.mrf.mxu0
      %v7480 = vpop.f32.mrf.mxu0
      %v7481 = vadd.f32 %v7409, %v7480
      %v7482 = vpop.f32.mrf.mxu0
      %7483 = vmatprep.mubr.bf16.mxu0 %v6830
      %7484 = vmatmul.mubr.bf16.gmra.mxu0 %v6829
      %v7485 = vpop.f32.mrf.mxu0
      %v7486 = vadd.f32 %v7414, %v7485
      %v7487 = vpop.f32.mrf.mxu0
      %v7488 = vpop.f32.mrf.mxu0
      %v7489 = vadd.f32 %v7417, %v7488
      %v7490 = vpop.f32.mrf.mxu0
      %7491 = vmatprep.mubr.bf16.mxu0 %v6838
      %7492 = vmatmul.mubr.bf16.gmra.mxu0 %v6837
      %v7493 = vpop.f32.mrf.mxu0
      %v7494 = vadd.f32 %v7422, %v7493
      %v7495 = vpop.f32.mrf.mxu0
      %v7496 = vpop.f32.mrf.mxu0
      %v7497 = vadd.f32 %v7425, %v7496
      %v7498 = vpop.f32.mrf.mxu0
      %7499 = vmatprep.mubr.bf16.mxu0 %v6846
      %7500 = vmatmul.mubr.bf16.gmra.mxu0 %v6845
      %v7501 = vpop.f32.mrf.mxu0
      %v7502 = vadd.f32 %v7430, %v7501
      %v7503 = vpop.f32.mrf.mxu0
      %v7504 = vpop.f32.mrf.mxu0
      %v7505 = vpop.f32.mrf.mxu0
      %7506 = vdwg.mxu0
      %7507 = vmatprep.subr.bf16.mxu0 0
      %7508 = vmatpush1.bf16.msra.mxu0 %v7274
      %7509 = vmatprep.subr.bf16.mxu0 0
      %7510 = vmatpush1.bf16.msra.mxu0 %v7273
      %7511 = vmatprep.subr.bf16.mxu0 0
      %7512 = vmatpush1.bf16.msra.mxu0 %v7272
      %7513 = vmatprep.subr.bf16.mxu0 0
      %7514 = vmatpush1.bf16.msra.mxu0 %v7271
      %7515 = vmatprep.subr.bf16.mxu0 0
      %7516 = vmatpush1.bf16.msra.mxu0 %v7270
      %7517 = vmatprep.subr.bf16.mxu0 0
      %7518 = vmatpush1.bf16.msra.mxu0 %v7269
      %7519 = vmatprep.subr.bf16.mxu0 0
      %7520 = vmatpush1.bf16.msra.mxu0 %v7268
      %7521 = vmatprep.subr.bf16.mxu0 0
      %7522 = vmatpush1.bf16.msra.mxu0 %v7267
      %7523 = vmatprep.subr.bf16.mxu0 0
      %7524 = vmatpush2.bf16.msra.mxu0 %v7282
      %7525 = vmatprep.subr.bf16.mxu0 0
      %7526 = vmatpush2.bf16.msra.mxu0 %v7281
      %7527 = vmatprep.subr.bf16.mxu0 0
      %7528 = vmatpush2.bf16.msra.mxu0 %v7280
      %7529 = vmatprep.subr.bf16.mxu0 0
      %7530 = vmatpush2.bf16.msra.mxu0 %v7279
      %7531 = vmatprep.subr.bf16.mxu0 0
      %7532 = vmatpush2.bf16.msra.mxu0 %v7278
      %7533 = vmatprep.subr.bf16.mxu0 0
      %7534 = vmatpush2.bf16.msra.mxu0 %v7277
      %7535 = vmatprep.subr.bf16.mxu0 0
      %7536 = vmatpush2.bf16.msra.mxu0 %v7276
      %7537 = vmatprep.subr.bf16.mxu0 0
      %7538 = vmatpush2.bf16.msra.mxu0 %v7275
      %7539 = vmatprep.mubr.bf16.mxu0 %v6816
      %7540 = vmatmul.mubr.bf16.gmra.mxu0 %v6815
      %v7541 = vpop.f32.mrf.mxu0
      %v7542 = vadd.f32 %v7470, %v7541
      %v7543 = vpop.f32.mrf.mxu0
      %v7544 = vpop.f32.mrf.mxu0
      %v7545 = vadd.f32 %v7473, %v7544
      %v7546 = vpop.f32.mrf.mxu0
      %7547 = vmatprep.mubr.bf16.mxu0 %v6824
      %7548 = vmatmul.mubr.bf16.gmra.mxu0 %v6823
      %v7549 = vpop.f32.mrf.mxu0
      %v7550 = vadd.f32 %v7478, %v7549
      %v7551 = vpop.f32.mrf.mxu0
      %v7552 = vpop.f32.mrf.mxu0
      %v7553 = vadd.f32 %v7481, %v7552
      %v7554 = vpop.f32.mrf.mxu0
      %7555 = vmatprep.mubr.bf16.mxu0 %v6832
      %7556 = vmatmul.mubr.bf16.gmra.mxu0 %v6831
      %v7557 = vpop.f32.mrf.mxu0
      %v7558 = vadd.f32 %v7486, %v7557
      %v7559 = vpop.f32.mrf.mxu0
      %v7560 = vpop.f32.mrf.mxu0
      %v7561 = vadd.f32 %v7489, %v7560
      %v7562 = vpop.f32.mrf.mxu0
      %7563 = vmatprep.mubr.bf16.mxu0 %v6840
      %7564 = vmatmul.mubr.bf16.gmra.mxu0 %v6839
      %v7565 = vpop.f32.mrf.mxu0
      %v7566 = vadd.f32 %v7494, %v7565
      %v7567 = vpop.f32.mrf.mxu0
      %v7568 = vpop.f32.mrf.mxu0
      %v7569 = vadd.f32 %v7497, %v7568
      %v7570 = vpop.f32.mrf.mxu0
      %7571 = vmatprep.mubr.bf16.mxu0 %v6848
      %7572 = vmatmul.mubr.bf16.gmra.mxu0 %v6847
      %v7573 = vpop.f32.mrf.mxu0
      %v7574 = vadd.f32 %v7502, %v7573
      %v7575 = vpop.f32.mrf.mxu0
      %v7576 = vpop.f32.mrf.mxu0
      %v7577 = vpop.f32.mrf.mxu0
      %7578 = vdwg.mxu0
      %7579 = vmatprep.subr.bf16.mxu0 0
      %7580 = vmatpush1.bf16.msra.mxu0 %v7290
      %7581 = vmatprep.subr.bf16.mxu0 0
      %7582 = vmatpush1.bf16.msra.mxu0 %v7289
      %7583 = vmatprep.subr.bf16.mxu0 0
      %7584 = vmatpush1.bf16.msra.mxu0 %v7288
      %7585 = vmatprep.subr.bf16.mxu0 0
      %7586 = vmatpush1.bf16.msra.mxu0 %v7287
      %7587 = vmatprep.subr.bf16.mxu0 0
      %7588 = vmatpush1.bf16.msra.mxu0 %v7286
      %7589 = vmatprep.subr.bf16.mxu0 0
      %7590 = vmatpush1.bf16.msra.mxu0 %v7285
      %7591 = vmatprep.subr.bf16.mxu0 0
      %7592 = vmatpush1.bf16.msra.mxu0 %v7284
      %7593 = vmatprep.subr.bf16.mxu0 0
      %7594 = vmatpush1.bf16.msra.mxu0 %v7283
      %7595 = vmatprep.subr.bf16.mxu0 0
      %7596 = vmatpush2.bf16.msra.mxu0 %v7298
      %7597 = vmatprep.subr.bf16.mxu0 0
      %7598 = vmatpush2.bf16.msra.mxu0 %v7297
      %7599 = vmatprep.subr.bf16.mxu0 0
      %7600 = vmatpush2.bf16.msra.mxu0 %v7296
      %7601 = vmatprep.subr.bf16.mxu0 0
      %7602 = vmatpush2.bf16.msra.mxu0 %v7295
      %7603 = vmatprep.subr.bf16.mxu0 0
      %7604 = vmatpush2.bf16.msra.mxu0 %v7294
      %7605 = vmatprep.subr.bf16.mxu0 0
      %7606 = vmatpush2.bf16.msra.mxu0 %v7293
      %7607 = vmatprep.subr.bf16.mxu0 0
      %7608 = vmatpush2.bf16.msra.mxu0 %v7292
      %7609 = vmatprep.subr.bf16.mxu0 0
      %7610 = vmatpush2.bf16.msra.mxu0 %v7291
      %7611 = vmatprep.mubr.bf16.mxu0 %v6818
      %7612 = vmatmul.mubr.bf16.gmra.mxu0 %v6817
      %v7613 = vpop.f32.mrf.mxu0
      %v7614 = vadd.f32 %v7542, %v7613
      %v7615 = vpop.f32.mrf.mxu0
      %v7616 = vpop.f32.mrf.mxu0
      %v7617 = vadd.f32 %v7545, %v7616
      %v7618 = vpop.f32.mrf.mxu0
      %7619 = vmatprep.mubr.bf16.mxu0 %v6826
      %7620 = vmatmul.mubr.bf16.gmra.mxu0 %v6825
      %v7621 = vpop.f32.mrf.mxu0
      %v7622 = vadd.f32 %v7550, %v7621
      %v7623 = vpop.f32.mrf.mxu0
      %v7624 = vpop.f32.mrf.mxu0
      %v7625 = vadd.f32 %v7553, %v7624
      %v7626 = vpop.f32.mrf.mxu0
      %7627 = vmatprep.mubr.bf16.mxu0 %v6834
      %7628 = vmatmul.mubr.bf16.gmra.mxu0 %v6833
      %v7629 = vpop.f32.mrf.mxu0
      %v7630 = vadd.f32 %v7558, %v7629
      %v7631 = vpop.f32.mrf.mxu0
      %v7632 = vpop.f32.mrf.mxu0
      %v7633 = vadd.f32 %v7561, %v7632
      %v7634 = vpop.f32.mrf.mxu0
      %7635 = vmatprep.mubr.bf16.mxu0 %v6842
      %7636 = vmatmul.mubr.bf16.gmra.mxu0 %v6841
      %v7637 = vpop.f32.mrf.mxu0
      %v7638 = vadd.f32 %v7566, %v7637
      %v7639 = vpop.f32.mrf.mxu0
      %v7640 = vpop.f32.mrf.mxu0
      %v7641 = vadd.f32 %v7569, %v7640
      %v7642 = vpop.f32.mrf.mxu0
      %7643 = vmatprep.mubr.bf16.mxu0 %v6850
      %7644 = vmatmul.mubr.bf16.gmra.mxu0 %v6849
      %v7645 = vpop.f32.mrf.mxu0
      %v7646 = vadd.f32 %v7574, %v7645
      %v7647 = vpop.f32.mrf.mxu0
      %v7648 = vpop.f32.mrf.mxu0
      %v7649 = vpop.f32.mrf.mxu0
      %7650 = vdwg.mxu0
      %vm7651 = vcmask 523264
      %7652 = vst.msk [vmem:[%s175] sm:$0xff] %vm7651, %v7614
      %7653 = vst.msk [vmem:[%s175 + $0x8] sm:$0xff] %vm7651, %v7617
      %7654 = vst.msk [vmem:[%s175 + $0x10] sm:$0xff] %vm7651, %v7622
      %7655 = vst.msk [vmem:[%s175 + $0x18] sm:$0xff] %vm7651, %v7625
      %7656 = vst.msk [vmem:[%s175 + $0x20] sm:$0xff] %vm7651, %v7630
      %7657 = vst.msk [vmem:[%s175 + $0x28] sm:$0xff] %vm7651, %v7633
      %7658 = vst.msk [vmem:[%s175 + $0x30] sm:$0xff] %vm7651, %v7638
      %7659 = vst.msk [vmem:[%s175 + $0x38] sm:$0xff] %vm7651, %v7641
      %7660 = vst.msk [vmem:[%s175 + $0x40] sm:$0xff] %vm7651, %v7646
      %s7661 = smul.u32 9, %s14
      %p7662 = scmp.lt.s32.totalorder %s7661, 17
      %s7663 = scalar_select %p7662, %s7661, 17
      %s7664 = smul.addr %s7663, 8
      %s7665 = scalar_lea.vmem %s3, %s7664
      // Predicated region
      $region33: #{loss_fn.2} parent=31 // pred_check
        %p7666 = pneg %p100
      $region34: #{loss_fn.2} parent=31 // pred_check_branch
        %7668 = sbr.rel (%p7666) target = $region36
      $region35: #{loss_fn.2} parent=31 // pred_region
        %s7669 = smul.u32 9, %s14
      $region36: #{loss_fn.2} parent=31 // pred_fallthru
        _
    $region32: #{loss_fn.2} parent=5 // pred_fallthru
      _
    %p7670 = scmp.le.s32.totalorder 2, %s9
    // Predicated region
    $region37: #{loss_fn.2} parent=5 // pred_check
      %p7671 = pneg %p7670
    $region38: #{loss_fn.2} parent=5 // pred_check_branch
      %7673 = sbr.rel (%p7671) target = $region40
    $region39: #{loss_fn.2} parent=5 // pred_region
      %s7674 = ssub.s32 %s9, 2
      // Predicated region
      $region41: #{loss_fn.2} parent=39 // pred_check
        %p7675 = pneg %p106
      $region42: #{loss_fn.2} parent=39 // pred_check_branch
        %7677 = sbr.rel (%p7675) target = $region44
      $region43: #{loss_fn.2} parent=39 // pred_region
        %s7678 = smul.u32 9, %s15
        %p7679 = scmp.lt.s32.totalorder %s7678, 17
        %s7680 = scalar_select %p7679, %s7678, 17
        %s7681 = smul.addr %s7680, 8
        %s7682 = scalar_lea.vmem %s3, %s7681
      $region44: #{loss_fn.2} parent=39 // pred_fallthru
        _
    $region40: #{loss_fn.2} parent=5 // pred_fallthru
      _
  $region6: #{loss_fn.2} parent=0 // loop_footer
    %s13 = sadd.s32 1, %s9
  $region7: #{loss_fn.2} parent=0 // loop_footer_branch
    %8 = sbr.rel target = $region3
  $region8: #{loss_fn.2} parent=0 // loop_exit
    _

</llo_original>
